<compile_context>
chip_gen: v5e
topology: v5e:2x2
jax: 0.10.0
libtpu: 0.0.40
codegen_flags: <defaults>
</compile_context>

<pallas_src>
import functools

import numpy as np

import jax
import jax.numpy as jnp
from jax.experimental import pallas as pl
from jax.experimental.pallas import tpu as pltpu


# --------------------------------------------------------------------------
# Precomputed spatial operator matrices (host side, one time, tiny)
# --------------------------------------------------------------------------

def _round8(x):
    return ((x + 7) // 8) * 8


def _dw_cat_op(h, w, stride):
    """Concatenated 3x3 depthwise-conv shift operator  [S0 | S1 | ... | S8].

    out = [S0|...|S8] @ concat_t(x * w_t) + b   ->  ONE MXU matmul per conv
    (S_t are 0/1 subsample/shift matrices, padding=1, optional stride).
    """
    oh, ow = h // stride, w // stride
    n_in = h * w
    m = np.zeros((_round8(oh * ow), 9 * n_in), np.float32)
    for ki in range(3):
        for kj in range(3):
            t = ki * 3 + kj
            for oi in range(oh):
                ii = oi * stride + ki - 1
                if not 0 <= ii < h:
                    continue
                for oj in range(ow):
                    ij = oj * stride + kj - 1
                    if 0 <= ij < w:
                        m[oi * ow + oj, t * n_in + ii * w + ij] = 1.0
    return jnp.asarray(m, jnp.bfloat16)


def _interp_matrix(dst, src):
    """1-D bilinear, align_corners=True interpolation matrix (dst, src)."""
    m = np.zeros((dst, src), np.float64)
    if src == 1:
        m[:, 0] = 1.0
        return m
    coord = np.zeros((1,)) if dst == 1 else np.arange(dst) * (src - 1) / (dst - 1)
    i0 = np.clip(np.floor(coord).astype(np.int64), 0, src - 2)
    frac = coord - i0
    for r in range(dst):
        m[r, i0[r]] += 1.0 - frac[r]
        m[r, i0[r] + 1] += frac[r]
    return m


def _bilinear_op(out_h, out_w, in_h, in_w):
    """Separable bilinear (align_corners=True) as one (out_HW, in_HW) operator."""
    u = np.kron(_interp_matrix(out_h, in_h), _interp_matrix(out_w, in_w))
    up = np.zeros((_round8(u.shape[0]), _round8(u.shape[1])), np.float32)
    up[:u.shape[0], :u.shape[1]] = u
    return jnp.asarray(up, jnp.bfloat16)


def build_spatial_operators(fh, fw):
    fh2, fw2 = fh // 2, fw // 2
    assert fh % 4 == 0 and fw % 4 == 0
    assert (fh * fw) % 8 == 0 and (fh2 * fw2) % 8 == 0
    return {
        "Sf":   _dw_cat_op(fh, fw, 1),                     # full-res 3x3 dw conv
        "Sf2":  _dw_cat_op(fh, fw, 2),                     # full -> 1/2 (stride 2)
        "Sh":   _dw_cat_op(fh2, fw2, 1),                   # 1/2-res 3x3 dw conv
        "Sh2":  _dw_cat_op(fh2, fw2, 2),                   # 1/2 -> 1/4
        "Uq2h": _bilinear_op(fh2, fw2, fh // 4, fw // 4),  # 1/4 -> 1/2 upsample
        "Uh2f": _bilinear_op(fh, fw, fh2, fw2),            # 1/2 -> full upsample
    }


# --------------------------------------------------------------------------
# Grid encoder: Conv2d(2, dim, 3, groups=2, padding=1) on the normalized
# coordinate grid. Input-independent -> precomputed ONCE (hoisted).
# --------------------------------------------------------------------------

def _im2col3x3(img2d):
    h, w = img2d.shape
    pad = jnp.pad(img2d, ((1, 1), (1, 1)))
    cols = [pad[ki:ki + h, kj:kj + w] for ki in range(3) for kj in range(3)]
    return jnp.stack(cols, axis=-1).reshape(h * w, 9)


def compute_grid_encoding(params, fh, fw):
    xs = jnp.linspace(0.0, fh - 1, fh) / (fh - 1)
    ys = jnp.linspace(0.0, fw - 1, fw) / (fw - 1)
    gx, gy = jnp.meshgrid(xs, ys, indexing="ij")
    half = params["grid_w"].shape[-1]
    parts = []
    for g, plane in enumerate((gx, gy)):
        col = _im2col3x3(plane)                               # (fh*fw, 9)
        bias = params["grid_b"][:, g * half:(g + 1) * half]
        parts.append(col @ params["grid_w"][g] + bias)
    return jnp.concatenate(parts, axis=-1).astype(jnp.float32)  # (fh*fw, dim)


# --------------------------------------------------------------------------
# Packed bias-table layout (one (n_bias, dim) f32 array instead of ~17 inputs)
# --------------------------------------------------------------------------

def bias_layout(depths):
    names = ["emb"] + [f"apc{i}" for i in range(depths + 1)]
    for i in range(depths):
        names += [f"om{i}_dw", f"om{i}_b1", f"om{i}_b2"]
    names += [f"fpn{j}" for j in range(5)] + ["gac_b1", "gac_b2"]
    return {nm: r for r, nm in enumerate(names)}


# --------------------------------------------------------------------------
# The fused Pallas kernel (one grid step == B_BLK batch elements)
# --------------------------------------------------------------------------

def fused_forward_kernel(patches_ref, grid_ref, sf_ref, sf2_ref, sh_ref, sh2_ref,
                         uq2h_ref, uh2f_ref, emb_w_ref, apc_w_ref, om_w1_ref,
                         om_w2_ref, dw_w_ref, gac_w1_ref, gac_w2_ref, bias_ref,
                         o_ref, *, depths, b_blk, hwf, dim, bidx):
    C = dim
    bh = b_blk * hwf

    def bias(name):
        r = bidx[name]
        return bias_ref[r:r + 1, :]                         # (1, C) f32, static slice

    def mm(x, w_bf):                                        # bf16 operands, f32 MXU acc
        return jnp.dot(x.astype(jnp.bfloat16), w_bf,
                       preferred_element_type=jnp.float32)

    def dwconv(x2d, s_ref, w9, b_row):
        # fused 3x3 depthwise conv: ONE matmul, K = 9*HW_in
        #   out = [S0|...|S8] @ concat_t(x * w_t) + b
        hw_in = x2d.shape[0]
        xw = (x2d[None, :, :] * w9[:, None, :]).astype(jnp.bfloat16)   # (9,HW,C)
        xw = xw.reshape(9 * hw_in, C)
        return jnp.dot(s_ref[...], xw, preferred_element_type=jnp.float32) + b_row

    def upsample(u_ref, x2d):
        return jnp.dot(u_ref[...], x2d.astype(jnp.bfloat16),
                       preferred_element_type=jnp.float32)

    grid_enc = grid_ref[...]                                # (bh, C) f32, batch-tiled

    # embedding: Conv2d(1, dim, 8, stride=8) + folded eval-mode BN == patch matmul
    x = mm(patches_ref[...].reshape(bh, 64), emb_w_ref[...]) + bias("emb")

    # backbone: depths x (APC gate, grid FMA, OMBlock)
    for i in range(depths):
        at = jax.nn.sigmoid(mm(x, apc_w_ref[i]) + bias(f"apc{i}"))
        x = at * grid_enc + x
        # OMBlock: depthwise conv + MLP residual (reconstruction)
        w9 = dw_w_ref[i]                                    # (9, C) f32
        hs = [dwconv(x[b * hwf:(b + 1) * hwf], sf_ref, w9, bias(f"om{i}_dw"))
              for b in range(b_blk)]
        h = jnp.concatenate(hs, axis=0) if b_blk > 1 else hs[0]
        # TODO(synk): torch nn.GELU default is the exact erf form
        y = jax.nn.gelu(mm(h, om_w1_ref[i]) + bias(f"om{i}_b1"), approximate=True)
        y = mm(y, om_w2_ref[i]) + bias(f"om{i}_b2")
        x = x + y

    # FPN (spatial ops only -> per-image loop;
    # TODO(synk): fold batch into lanes for even better v6e MXU fill)
    d0 = depths
    fouts = []
    for b in range(b_blk):
        xb = x[b * hwf:(b + 1) * hwf]                       # (HWf, C)
        x16 = dwconv(xb, sf2_ref, dw_w_ref[d0 + 0], bias("fpn0"))        # (HWh, C)
        x32 = dwconv(x16, sh2_ref, dw_w_ref[d0 + 1], bias("fpn1"))       # (HWq_pad, C)
        x32u = upsample(uq2h_ref, x32)                                   # (HWh, C)
        x32o = dwconv(x16 + x32u, sh_ref, dw_w_ref[d0 + 2], bias("fpn2"))
        x16u = upsample(uh2f_ref, x32o)                                  # (HWf, C)
        xf = dwconv(xb + x16u, sf_ref, dw_w_ref[d0 + 3], bias("fpn3"))
        xf = dwconv(xf, sf_ref, dw_w_ref[d0 + 4], bias("fpn4")) + xf
        fouts.append(xf)
    x = jnp.concatenate(fouts, axis=0) if b_blk > 1 else fouts[0]

    # final APC + grid fusion, then GAC global gate (squeeze-excite reconstruction)
    at = jax.nn.sigmoid(mm(x, apc_w_ref[depths]) + bias(f"apc{depths}"))
    x = at * grid_enc + x

    xr = x.reshape(b_blk, hwf, C)
    pooled = jnp.mean(xr, axis=1)                           # (b_blk, C) f32 pooling
    g = jax.nn.gelu(mm(pooled, gac_w1_ref[...]) + bias("gac_b1")[:, :C // 4],
                    approximate=True)
    g = jax.nn.sigmoid(mm(g, gac_w2_ref[...]) + bias("gac_b2"))          # (b_blk, C)

    o_ref[...] = (xr * g[:, None, :]).astype(o_ref.dtype)


# --------------------------------------------------------------------------
# Forward wrapper (single pallas_call, grid over batch blocks)
# --------------------------------------------------------------------------

def feature_extraction_forward(params, consts, x_nchw, *, dim, depths, b_blk=None):
    n = x_nchw.shape[0]
    x = jnp.transpose(x_nchw, (0, 2, 3, 1)).astype(jnp.float32)       # NHWC (N,H,W,1)
    _, H, W, _ = x.shape
    fh, fw = H // 8, W // 8
    hwf = fh * fw
    assert hwf % 8 == 0

    if b_blk is None:
        # Raise matmul M by stacking images per grid step, but keep the grid
        # length even so both v7x TensorCores stay busy ("parallel" batch axis).
        b_blk = 2 if n % 4 == 0 else 1
    assert n % b_blk == 0

    # patchify glue for the 8x8 / stride-8 embedding conv (bf16 for the MXU)
    patches = (x[..., 0]
               .reshape(n, fh, 8, fw, 8)
               .transpose(0, 1, 3, 2, 4)
               .reshape(n, hwf, 64)
               .astype(jnp.bfloat16))

    # grid encoding tiled over the batch block (shared across images)
    grid_rep = jnp.tile(consts["grid_enc"].astype(jnp.float32), (b_blk, 1))

    const_arrays = [
        grid_rep,
        consts["Sf"], consts["Sf2"], consts["Sh"], consts["Sh2"],
        consts["Uq2h"], consts["Uh2f"],
        params["emb_w"], params["apc_w"], params["om_w1"], params["om_w2"],
        params["dw_w"], params["gac_w1"], params["gac_w2"], params["bias"],
    ]

    def _const_spec(a):
        nd = a.ndim
        # block index never changes -> single buffer (no double-buffer waste)
        return pl.BlockSpec(a.shape, lambda g: (0,) * nd,
                            pipeline_mode=pl.Buffered(1))

    out = pl.pallas_call(
        functools.partial(fused_forward_kernel, depths=depths, b_blk=b_blk,
                          hwf=hwf, dim=dim, bidx=bias_layout(depths)),
        out_shape=jax.ShapeDtypeStruct((n, hwf, dim), jnp.float32),
        grid=(n // b_blk,),
        in_specs=[pl.BlockSpec((b_blk, hwf, 64), lambda g: (g, 0, 0))]
                 + [_const_spec(a) for a in const_arrays],
        out_specs=pl.BlockSpec((b_blk, hwf, dim), lambda g: (g, 0, 0)),
        compiler_params=pltpu.CompilerParams(
            dimension_semantics=("parallel",)),   # batch blocks sharded over v7x TCs
    )(patches, *const_arrays)

    return out.reshape(n, fh, fw, dim).transpose(0, 3, 1, 2)          # NCHW


# --------------------------------------------------------------------------
# Parameters (deterministic, synthetic), pre-packed into few stacked arrays
# --------------------------------------------------------------------------

def init_params(key, dim, depths):
    keys = iter(jax.random.split(key, 256))

    def nrm(shape, scale=0.05):
        return scale * jax.random.normal(next(keys), shape, jnp.float32)

    bn_scale = 1.0 / jnp.sqrt(1.0 + 1e-5)   # eval-mode BN (fresh stats) folded in

    bidx = bias_layout(depths)
    biases = jnp.zeros((_round8(len(bidx)), dim), jnp.float32)

    def put(b, name, val):
        return b.at[bidx[name], :val.shape[-1]].set(val)

    p = {}
    p["emb_w"] = (nrm((64, dim)) * bn_scale).astype(jnp.bfloat16)
    biases = put(biases, "emb", nrm((dim,), 0.01) * bn_scale)
    p["grid_w"] = nrm((2, 9, dim // 2))              # grouped 3x3 conv, per-group (9, dim/2)
    p["grid_b"] = nrm((1, dim), 0.01)
    p["apc_w"] = nrm((depths + 1, dim, dim)).astype(jnp.bfloat16)
    for i in range(depths + 1):
        biases = put(biases, f"apc{i}", nrm((dim,), 0.01))
    p["om_w1"] = nrm((depths, dim, dim)).astype(jnp.bfloat16)
    p["om_w2"] = nrm((depths, dim, dim)).astype(jnp.bfloat16)
    dw_w = []
    for i in range(depths):                          # OMBlock depthwise 3x3 taps (tap-major)
        dw_w.append(nrm((9, dim)))
        biases = put(biases, f"om{i}_dw", nrm((dim,), 0.01))
        biases = put(biases, f"om{i}_b1", nrm((dim,), 0.01))
        biases = put(biases, f"om{i}_b2", nrm((dim,), 0.01))
    for j in range(5):                               # FPN depthwise convs
        dw_w.append(nrm((9, dim)))
        biases = put(biases, f"fpn{j}", nrm((dim,), 0.01))
    p["dw_w"] = jnp.stack(dw_w, axis=0)              # (depths+5, 9, dim) f32
    p["gac_w1"] = nrm((dim, dim // 4)).astype(jnp.bfloat16)
    biases = put(biases, "gac_b1", nrm((dim // 4,), 0.01))
    p["gac_w2"] = nrm((dim // 4, dim)).astype(jnp.bfloat16)
    biases = put(biases, "gac_b2", nrm((dim,), 0.01))
    p["bias"] = biases                               # packed (n_bias, dim) f32 bias table
    return p


# --------------------------------------------------------------------------

if __name__ == "__main__":
    dim, depths = 128, 2
    input_size = (64, 64)                 # (W, H) -> 8x8 feature grid
    H, W = input_size[1], input_size[0]
    fh, fw = H // 8, W // 8

    key = jax.random.PRNGKey(0)
    params = init_params(key, dim, depths)

    # One-time, input-independent setup (hoisted out of the forward pass).
    consts = build_spatial_operators(fh, fw)
    consts["grid_enc"] = compute_grid_encoding(params, fh, fw)

    # n=4 with B_BLK=2 -> grid=(2,): M=128 channel matmuls AND an even grid for v7x.
    x = jax.random.normal(jax.random.PRNGKey(0), (4, 1, H, W), jnp.float32)

    fwd = jax.jit(functools.partial(feature_extraction_forward, dim=dim, depths=depths))
    out = jax.block_until_ready(fwd(params, consts, x))

    assert out.shape == (4, dim, fh, fw)
    assert bool(jnp.all(jnp.isfinite(out)))
    print("KERNEL_OK")
</pallas_src>

<mosaic_0001>
module attributes {stable_mosaic.version = 11 : i64} {
  func.func @fused_forward_kernel(%arg0: i32, %arg1: memref<2x64x64xbf16, #tpu.memory_space<vmem>>, %arg2: memref<128x128xf32, #tpu.memory_space<vmem>>, %arg3: memref<64x576xbf16, #tpu.memory_space<vmem>>, %arg4: memref<16x576xbf16, #tpu.memory_space<vmem>>, %arg5: memref<16x144xbf16, #tpu.memory_space<vmem>>, %arg6: memref<8x144xbf16, #tpu.memory_space<vmem>>, %arg7: memref<16x8xbf16, #tpu.memory_space<vmem>>, %arg8: memref<64x16xbf16, #tpu.memory_space<vmem>>, %arg9: memref<64x128xbf16, #tpu.memory_space<vmem>>, %arg10: memref<3x128x128xbf16, #tpu.memory_space<vmem>>, %arg11: memref<2x128x128xbf16, #tpu.memory_space<vmem>>, %arg12: memref<2x128x128xbf16, #tpu.memory_space<vmem>>, %arg13: memref<7x9x128xf32, #tpu.memory_space<vmem>>, %arg14: memref<128x32xbf16, #tpu.memory_space<vmem>>, %arg15: memref<32x128xbf16, #tpu.memory_space<vmem>>, %arg16: memref<24x128xf32, #tpu.memory_space<vmem>>, %arg17: memref<2x64x128xf32, #tpu.memory_space<vmem>>) attributes {dimension_semantics = [#tpu.dimension_semantics<parallel>], iteration_bounds = array<i64: 2>, scalar_prefetch = 0 : i64, scratch_operands = 0 : i64, tpu.core_type = #tpu.core_type<tc>, window_params = [{transform_indices = @transform_0, window_bounds = array<i64: 2, 64, 64>}, {pipeline_mode = #tpu.pipeline_mode<synchronous>, transform_indices = @transform_1, window_bounds = array<i64: 128, 128>}, {pipeline_mode = #tpu.pipeline_mode<synchronous>, transform_indices = @transform_2, window_bounds = array<i64: 64, 576>}, {pipeline_mode = #tpu.pipeline_mode<synchronous>, transform_indices = @transform_3, window_bounds = array<i64: 16, 576>}, {pipeline_mode = #tpu.pipeline_mode<synchronous>, transform_indices = @transform_4, window_bounds = array<i64: 16, 144>}, {pipeline_mode = #tpu.pipeline_mode<synchronous>, transform_indices = @transform_5, window_bounds = array<i64: 8, 144>}, {pipeline_mode = #tpu.pipeline_mode<synchronous>, transform_indices = @transform_6, window_bounds = array<i64: 16, 8>}, {pipeline_mode = #tpu.pipeline_mode<synchronous>, transform_indices = @transform_7, window_bounds = array<i64: 64, 16>}, {pipeline_mode = #tpu.pipeline_mode<synchronous>, transform_indices = @transform_8, window_bounds = array<i64: 64, 128>}, {pipeline_mode = #tpu.pipeline_mode<synchronous>, transform_indices = @transform_9, window_bounds = array<i64: 3, 128, 128>}, {pipeline_mode = #tpu.pipeline_mode<synchronous>, transform_indices = @transform_10, window_bounds = array<i64: 2, 128, 128>}, {pipeline_mode = #tpu.pipeline_mode<synchronous>, transform_indices = @transform_11, window_bounds = array<i64: 2, 128, 128>}, {pipeline_mode = #tpu.pipeline_mode<synchronous>, transform_indices = @transform_12, window_bounds = array<i64: 7, 9, 128>}, {pipeline_mode = #tpu.pipeline_mode<synchronous>, transform_indices = @transform_13, window_bounds = array<i64: 128, 32>}, {pipeline_mode = #tpu.pipeline_mode<synchronous>, transform_indices = @transform_14, window_bounds = array<i64: 32, 128>}, {pipeline_mode = #tpu.pipeline_mode<synchronous>, transform_indices = @transform_15, window_bounds = array<i64: 24, 128>}, {transform_indices = @transform_16, window_bounds = array<i64: 2, 64, 128>}]} {
    %c0 = arith.constant 0 : index
    %c0_0 = arith.constant 0 : index
    %0 = vector.load %arg2[%c0, %c0_0] : memref<128x128xf32, #tpu.memory_space<vmem>>, vector<128x128xf32>
    %c0_1 = arith.constant 0 : index
    %c0_2 = arith.constant 0 : index
    %c0_3 = arith.constant 0 : index
    %1 = vector.load %arg1[%c0_1, %c0_2, %c0_3] : memref<2x64x64xbf16, #tpu.memory_space<vmem>>, vector<2x64x64xbf16>
    %2 = vector.shape_cast %1 : vector<2x64x64xbf16> to vector<128x64xbf16>
    %c0_4 = arith.constant 0 : index
    %c0_5 = arith.constant 0 : index
    %3 = vector.load %arg9[%c0_4, %c0_5] : memref<64x128xbf16, #tpu.memory_space<vmem>>, vector<64x128xbf16>
    %cst = arith.constant dense<0.000000e+00> : vector<128x128xf32>
    %4 = tpu.matmul %2, %3, %cst {dimension_numbers = #tpu.dot_dimension_numbers<[1], [0], [0], [1], [0, 0, 1, 1], [], []>} : vector<128x64xbf16>, vector<64x128xbf16>, vector<128x128xf32> -> vector<128x128xf32>
    %c0_6 = arith.constant 0 : index
    %c0_7 = arith.constant 0 : index
    %5 = vector.load %arg16[%c0_6, %c0_7] : memref<24x128xf32, #tpu.memory_space<vmem>>, vector<1x128xf32>
    %6 = vector.broadcast %5 : vector<1x128xf32> to vector<128x128xf32>
    %7 = arith.addf %4, %6 : vector<128x128xf32>
    %c0_8 = arith.constant 0 : index
    %c0_9 = arith.constant 0 : index
    %c0_10 = arith.constant 0 : index
    %8 = vector.load %arg10[%c0_8, %c0_9, %c0_10] : memref<3x128x128xbf16, #tpu.memory_space<vmem>>, vector<1x128x128xbf16>
    %9 = vector.shape_cast %8 : vector<1x128x128xbf16> to vector<128x128xbf16>
    %10 = arith.truncf %7 : vector<128x128xf32> to vector<128x128xbf16>
    %cst_11 = arith.constant dense<0.000000e+00> : vector<128x128xf32>
    %11 = tpu.matmul %10, %9, %cst_11 {dimension_numbers = #tpu.dot_dimension_numbers<[1], [0], [0], [1], [0, 0, 1, 1], [], []>} : vector<128x128xbf16>, vector<128x128xbf16>, vector<128x128xf32> -> vector<128x128xf32>
    %c1 = arith.constant 1 : index
    %c0_12 = arith.constant 0 : index
    %12 = vector.load %arg16[%c1, %c0_12] : memref<24x128xf32, #tpu.memory_space<vmem>>, vector<1x128xf32>
    %13 = vector.broadcast %12 : vector<1x128xf32> to vector<128x128xf32>
    %14 = arith.addf %11, %13 : vector<128x128xf32>
    %15 = arith.negf %14 : vector<128x128xf32>
    %16 = math.exp %15 : vector<128x128xf32>
    %cst_13 = arith.constant 1.000000e+00 : f32
    %17 = vector.broadcast %cst_13 : f32 to vector<128x128xf32>
    %18 = arith.addf %17, %16 : vector<128x128xf32>
    %19 = arith.divf %17, %18 : vector<128x128xf32>
    %20 = arith.mulf %19, %0 : vector<128x128xf32>
    %21 = arith.addf %20, %7 : vector<128x128xf32>
    %c0_14 = arith.constant 0 : index
    %c0_15 = arith.constant 0 : index
    %c0_16 = arith.constant 0 : index
    %22 = vector.load %arg13[%c0_14, %c0_15, %c0_16] : memref<7x9x128xf32, #tpu.memory_space<vmem>>, vector<1x9x128xf32>
    %23 = vector.shape_cast %22 : vector<1x9x128xf32> to vector<9x128xf32>
    %24 = vector.extract_strided_slice %21 {offsets = [0, 0], sizes = [64, 128], strides = [1, 1]} : vector<128x128xf32> to vector<64x128xf32>
    %c4 = arith.constant 4 : index
    %c0_17 = arith.constant 0 : index
    %25 = vector.load %arg16[%c4, %c0_17] : memref<24x128xf32, #tpu.memory_space<vmem>>, vector<1x128xf32>
    %26 = vector.shape_cast %24 : vector<64x128xf32> to vector<1x64x128xf32>
    %27 = vector.shape_cast %23 : vector<9x128xf32> to vector<9x1x128xf32>
    %28 = vector.broadcast %26 : vector<1x64x128xf32> to vector<9x64x128xf32>
    %29 = vector.broadcast %27 : vector<9x1x128xf32> to vector<9x64x128xf32>
    %30 = arith.mulf %28, %29 : vector<9x64x128xf32>
    %31 = arith.truncf %30 : vector<9x64x128xf32> to vector<9x64x128xbf16>
    %32 = vector.shape_cast %31 : vector<9x64x128xbf16> to vector<576x128xbf16>
    %c0_18 = arith.constant 0 : index
    %c0_19 = arith.constant 0 : index
    %33 = vector.load %arg3[%c0_18, %c0_19] : memref<64x576xbf16, #tpu.memory_space<vmem>>, vector<64x576xbf16>
    %cst_20 = arith.constant dense<0.000000e+00> : vector<64x128xf32>
    %34 = tpu.matmul %33, %32, %cst_20 {dimension_numbers = #tpu.dot_dimension_numbers<[1], [0], [0], [1], [0, 0, 1, 1], [], []>} : vector<64x576xbf16>, vector<576x128xbf16>, vector<64x128xf32> -> vector<64x128xf32>
    %35 = vector.broadcast %25 : vector<1x128xf32> to vector<64x128xf32>
    %36 = arith.addf %34, %35 : vector<64x128xf32>
    %37 = vector.extract_strided_slice %21 {offsets = [64, 0], sizes = [64, 128], strides = [1, 1]} : vector<128x128xf32> to vector<64x128xf32>
    %c4_21 = arith.constant 4 : index
    %c0_22 = arith.constant 0 : index
    %38 = vector.load %arg16[%c4_21, %c0_22] : memref<24x128xf32, #tpu.memory_space<vmem>>, vector<1x128xf32>
    %39 = vector.shape_cast %37 : vector<64x128xf32> to vector<1x64x128xf32>
    %40 = vector.shape_cast %23 : vector<9x128xf32> to vector<9x1x128xf32>
    %41 = vector.broadcast %39 : vector<1x64x128xf32> to vector<9x64x128xf32>
    %42 = vector.broadcast %40 : vector<9x1x128xf32> to vector<9x64x128xf32>
    %43 = arith.mulf %41, %42 : vector<9x64x128xf32>
    %44 = arith.truncf %43 : vector<9x64x128xf32> to vector<9x64x128xbf16>
    %45 = vector.shape_cast %44 : vector<9x64x128xbf16> to vector<576x128xbf16>
    %c0_23 = arith.constant 0 : index
    %c0_24 = arith.constant 0 : index
    %46 = vector.load %arg3[%c0_23, %c0_24] : memref<64x576xbf16, #tpu.memory_space<vmem>>, vector<64x576xbf16>
    %cst_25 = arith.constant dense<0.000000e+00> : vector<64x128xf32>
    %47 = tpu.matmul %46, %45, %cst_25 {dimension_numbers = #tpu.dot_dimension_numbers<[1], [0], [0], [1], [0, 0, 1, 1], [], []>} : vector<64x576xbf16>, vector<576x128xbf16>, vector<64x128xf32> -> vector<64x128xf32>
    %48 = vector.broadcast %38 : vector<1x128xf32> to vector<64x128xf32>
    %49 = arith.addf %47, %48 : vector<64x128xf32>
    %50 = tpu.concatenate %36, %49 in 0 : vector<64x128xf32>, vector<64x128xf32> -> vector<128x128xf32>
    %c0_26 = arith.constant 0 : index
    %c0_27 = arith.constant 0 : index
    %c0_28 = arith.constant 0 : index
    %51 = vector.load %arg11[%c0_26, %c0_27, %c0_28] : memref<2x128x128xbf16, #tpu.memory_space<vmem>>, vector<1x128x128xbf16>
    %52 = vector.shape_cast %51 : vector<1x128x128xbf16> to vector<128x128xbf16>
    %53 = arith.truncf %50 : vector<128x128xf32> to vector<128x128xbf16>
    %cst_29 = arith.constant dense<0.000000e+00> : vector<128x128xf32>
    %54 = tpu.matmul %53, %52, %cst_29 {dimension_numbers = #tpu.dot_dimension_numbers<[1], [0], [0], [1], [0, 0, 1, 1], [], []>} : vector<128x128xbf16>, vector<128x128xbf16>, vector<128x128xf32> -> vector<128x128xf32>
    %c5 = arith.constant 5 : index
    %c0_30 = arith.constant 0 : index
    %55 = vector.load %arg16[%c5, %c0_30] : memref<24x128xf32, #tpu.memory_space<vmem>>, vector<1x128xf32>
    %56 = vector.broadcast %55 : vector<1x128xf32> to vector<128x128xf32>
    %57 = arith.addf %54, %56 : vector<128x128xf32>
    %58 = arith.mulf %57, %57 : vector<128x128xf32>
    %59 = arith.mulf %57, %58 : vector<128x128xf32>
    %cst_31 = arith.constant 4.471500e-02 : f32
    %60 = vector.broadcast %cst_31 : f32 to vector<128x128xf32>
    %61 = arith.mulf %60, %59 : vector<128x128xf32>
    %62 = arith.addf %57, %61 : vector<128x128xf32>
    %cst_32 = arith.constant 0.797884583 : f32
    %63 = vector.broadcast %cst_32 : f32 to vector<128x128xf32>
    %64 = arith.mulf %63, %62 : vector<128x128xf32>
    %65 = math.tanh %64 : vector<128x128xf32>
    %cst_33 = arith.constant 1.000000e+00 : f32
    %66 = vector.broadcast %cst_33 : f32 to vector<128x128xf32>
    %67 = arith.addf %66, %65 : vector<128x128xf32>
    %cst_34 = arith.constant 5.000000e-01 : f32
    %68 = vector.broadcast %cst_34 : f32 to vector<128x128xf32>
    %69 = arith.mulf %68, %67 : vector<128x128xf32>
    %70 = arith.mulf %57, %69 : vector<128x128xf32>
    %c0_35 = arith.constant 0 : index
    %c0_36 = arith.constant 0 : index
    %c0_37 = arith.constant 0 : index
    %71 = vector.load %arg12[%c0_35, %c0_36, %c0_37] : memref<2x128x128xbf16, #tpu.memory_space<vmem>>, vector<1x128x128xbf16>
    %72 = vector.shape_cast %71 : vector<1x128x128xbf16> to vector<128x128xbf16>
    %73 = arith.truncf %70 : vector<128x128xf32> to vector<128x128xbf16>
    %cst_38 = arith.constant dense<0.000000e+00> : vector<128x128xf32>
    %74 = tpu.matmul %73, %72, %cst_38 {dimension_numbers = #tpu.dot_dimension_numbers<[1], [0], [0], [1], [0, 0, 1, 1], [], []>} : vector<128x128xbf16>, vector<128x128xbf16>, vector<128x128xf32> -> vector<128x128xf32>
    %c6 = arith.constant 6 : index
    %c0_39 = arith.constant 0 : index
    %75 = vector.load %arg16[%c6, %c0_39] : memref<24x128xf32, #tpu.memory_space<vmem>>, vector<1x128xf32>
    %76 = vector.broadcast %75 : vector<1x128xf32> to vector<128x128xf32>
    %77 = arith.addf %74, %76 : vector<128x128xf32>
    %78 = arith.addf %21, %77 : vector<128x128xf32>
    %c1_40 = arith.constant 1 : index
    %c0_41 = arith.constant 0 : index
    %c0_42 = arith.constant 0 : index
    %79 = vector.load %arg10[%c1_40, %c0_41, %c0_42] : memref<3x128x128xbf16, #tpu.memory_space<vmem>>, vector<1x128x128xbf16>
    %80 = vector.shape_cast %79 : vector<1x128x128xbf16> to vector<128x128xbf16>
    %81 = arith.truncf %78 : vector<128x128xf32> to vector<128x128xbf16>
    %cst_43 = arith.constant dense<0.000000e+00> : vector<128x128xf32>
    %82 = tpu.matmul %81, %80, %cst_43 {dimension_numbers = #tpu.dot_dimension_numbers<[1], [0], [0], [1], [0, 0, 1, 1], [], []>} : vector<128x128xbf16>, vector<128x128xbf16>, vector<128x128xf32> -> vector<128x128xf32>
    %c2 = arith.constant 2 : index
    %c0_44 = arith.constant 0 : index
    %83 = vector.load %arg16[%c2, %c0_44] : memref<24x128xf32, #tpu.memory_space<vmem>>, vector<1x128xf32>
    %84 = vector.broadcast %83 : vector<1x128xf32> to vector<128x128xf32>
    %85 = arith.addf %82, %84 : vector<128x128xf32>
    %86 = arith.negf %85 : vector<128x128xf32>
    %87 = math.exp %86 : vector<128x128xf32>
    %cst_45 = arith.constant 1.000000e+00 : f32
    %88 = vector.broadcast %cst_45 : f32 to vector<128x128xf32>
    %89 = arith.addf %88, %87 : vector<128x128xf32>
    %90 = arith.divf %88, %89 : vector<128x128xf32>
    %91 = arith.mulf %90, %0 : vector<128x128xf32>
    %92 = arith.addf %91, %78 : vector<128x128xf32>
    %c1_46 = arith.constant 1 : index
    %c0_47 = arith.constant 0 : index
    %c0_48 = arith.constant 0 : index
    %93 = vector.load %arg13[%c1_46, %c0_47, %c0_48] : memref<7x9x128xf32, #tpu.memory_space<vmem>>, vector<1x9x128xf32>
    %94 = vector.shape_cast %93 : vector<1x9x128xf32> to vector<9x128xf32>
    %95 = vector.extract_strided_slice %92 {offsets = [0, 0], sizes = [64, 128], strides = [1, 1]} : vector<128x128xf32> to vector<64x128xf32>
    %c7 = arith.constant 7 : index
    %c0_49 = arith.constant 0 : index
    %96 = vector.load %arg16[%c7, %c0_49] : memref<24x128xf32, #tpu.memory_space<vmem>>, vector<1x128xf32>
    %97 = vector.shape_cast %95 : vector<64x128xf32> to vector<1x64x128xf32>
    %98 = vector.shape_cast %94 : vector<9x128xf32> to vector<9x1x128xf32>
    %99 = vector.broadcast %97 : vector<1x64x128xf32> to vector<9x64x128xf32>
    %100 = vector.broadcast %98 : vector<9x1x128xf32> to vector<9x64x128xf32>
    %101 = arith.mulf %99, %100 : vector<9x64x128xf32>
    %102 = arith.truncf %101 : vector<9x64x128xf32> to vector<9x64x128xbf16>
    %103 = vector.shape_cast %102 : vector<9x64x128xbf16> to vector<576x128xbf16>
    %c0_50 = arith.constant 0 : index
    %c0_51 = arith.constant 0 : index
    %104 = vector.load %arg3[%c0_50, %c0_51] : memref<64x576xbf16, #tpu.memory_space<vmem>>, vector<64x576xbf16>
    %cst_52 = arith.constant dense<0.000000e+00> : vector<64x128xf32>
    %105 = tpu.matmul %104, %103, %cst_52 {dimension_numbers = #tpu.dot_dimension_numbers<[1], [0], [0], [1], [0, 0, 1, 1], [], []>} : vector<64x576xbf16>, vector<576x128xbf16>, vector<64x128xf32> -> vector<64x128xf32>
    %106 = vector.broadcast %96 : vector<1x128xf32> to vector<64x128xf32>
    %107 = arith.addf %105, %106 : vector<64x128xf32>
    %108 = vector.extract_strided_slice %92 {offsets = [64, 0], sizes = [64, 128], strides = [1, 1]} : vector<128x128xf32> to vector<64x128xf32>
    %c7_53 = arith.constant 7 : index
    %c0_54 = arith.constant 0 : index
    %109 = vector.load %arg16[%c7_53, %c0_54] : memref<24x128xf32, #tpu.memory_space<vmem>>, vector<1x128xf32>
    %110 = vector.shape_cast %108 : vector<64x128xf32> to vector<1x64x128xf32>
    %111 = vector.shape_cast %94 : vector<9x128xf32> to vector<9x1x128xf32>
    %112 = vector.broadcast %110 : vector<1x64x128xf32> to vector<9x64x128xf32>
    %113 = vector.broadcast %111 : vector<9x1x128xf32> to vector<9x64x128xf32>
    %114 = arith.mulf %112, %113 : vector<9x64x128xf32>
    %115 = arith.truncf %114 : vector<9x64x128xf32> to vector<9x64x128xbf16>
    %116 = vector.shape_cast %115 : vector<9x64x128xbf16> to vector<576x128xbf16>
    %c0_55 = arith.constant 0 : index
    %c0_56 = arith.constant 0 : index
    %117 = vector.load %arg3[%c0_55, %c0_56] : memref<64x576xbf16, #tpu.memory_space<vmem>>, vector<64x576xbf16>
    %cst_57 = arith.constant dense<0.000000e+00> : vector<64x128xf32>
    %118 = tpu.matmul %117, %116, %cst_57 {dimension_numbers = #tpu.dot_dimension_numbers<[1], [0], [0], [1], [0, 0, 1, 1], [], []>} : vector<64x576xbf16>, vector<576x128xbf16>, vector<64x128xf32> -> vector<64x128xf32>
    %119 = vector.broadcast %109 : vector<1x128xf32> to vector<64x128xf32>
    %120 = arith.addf %118, %119 : vector<64x128xf32>
    %121 = tpu.concatenate %107, %120 in 0 : vector<64x128xf32>, vector<64x128xf32> -> vector<128x128xf32>
    %c1_58 = arith.constant 1 : index
    %c0_59 = arith.constant 0 : index
    %c0_60 = arith.constant 0 : index
    %122 = vector.load %arg11[%c1_58, %c0_59, %c0_60] : memref<2x128x128xbf16, #tpu.memory_space<vmem>>, vector<1x128x128xbf16>
    %123 = vector.shape_cast %122 : vector<1x128x128xbf16> to vector<128x128xbf16>
    %124 = arith.truncf %121 : vector<128x128xf32> to vector<128x128xbf16>
    %cst_61 = arith.constant dense<0.000000e+00> : vector<128x128xf32>
    %125 = tpu.matmul %124, %123, %cst_61 {dimension_numbers = #tpu.dot_dimension_numbers<[1], [0], [0], [1], [0, 0, 1, 1], [], []>} : vector<128x128xbf16>, vector<128x128xbf16>, vector<128x128xf32> -> vector<128x128xf32>
    %c8 = arith.constant 8 : index
    %c0_62 = arith.constant 0 : index
    %126 = vector.load %arg16[%c8, %c0_62] : memref<24x128xf32, #tpu.memory_space<vmem>>, vector<1x128xf32>
    %127 = vector.broadcast %126 : vector<1x128xf32> to vector<128x128xf32>
    %128 = arith.addf %125, %127 : vector<128x128xf32>
    %129 = arith.mulf %128, %128 : vector<128x128xf32>
    %130 = arith.mulf %128, %129 : vector<128x128xf32>
    %cst_63 = arith.constant 4.471500e-02 : f32
    %131 = vector.broadcast %cst_63 : f32 to vector<128x128xf32>
    %132 = arith.mulf %131, %130 : vector<128x128xf32>
    %133 = arith.addf %128, %132 : vector<128x128xf32>
    %cst_64 = arith.constant 0.797884583 : f32
    %134 = vector.broadcast %cst_64 : f32 to vector<128x128xf32>
    %135 = arith.mulf %134, %133 : vector<128x128xf32>
    %136 = math.tanh %135 : vector<128x128xf32>
    %cst_65 = arith.constant 1.000000e+00 : f32
    %137 = vector.broadcast %cst_65 : f32 to vector<128x128xf32>
    %138 = arith.addf %137, %136 : vector<128x128xf32>
    %cst_66 = arith.constant 5.000000e-01 : f32
    %139 = vector.broadcast %cst_66 : f32 to vector<128x128xf32>
    %140 = arith.mulf %139, %138 : vector<128x128xf32>
    %141 = arith.mulf %128, %140 : vector<128x128xf32>
    %c1_67 = arith.constant 1 : index
    %c0_68 = arith.constant 0 : index
    %c0_69 = arith.constant 0 : index
    %142 = vector.load %arg12[%c1_67, %c0_68, %c0_69] : memref<2x128x128xbf16, #tpu.memory_space<vmem>>, vector<1x128x128xbf16>
    %143 = vector.shape_cast %142 : vector<1x128x128xbf16> to vector<128x128xbf16>
    %144 = arith.truncf %141 : vector<128x128xf32> to vector<128x128xbf16>
    %cst_70 = arith.constant dense<0.000000e+00> : vector<128x128xf32>
    %145 = tpu.matmul %144, %143, %cst_70 {dimension_numbers = #tpu.dot_dimension_numbers<[1], [0], [0], [1], [0, 0, 1, 1], [], []>} : vector<128x128xbf16>, vector<128x128xbf16>, vector<128x128xf32> -> vector<128x128xf32>
    %c9 = arith.constant 9 : index
    %c0_71 = arith.constant 0 : index
    %146 = vector.load %arg16[%c9, %c0_71] : memref<24x128xf32, #tpu.memory_space<vmem>>, vector<1x128xf32>
    %147 = vector.broadcast %146 : vector<1x128xf32> to vector<128x128xf32>
    %148 = arith.addf %145, %147 : vector<128x128xf32>
    %149 = arith.addf %92, %148 : vector<128x128xf32>
    %150 = vector.extract_strided_slice %149 {offsets = [0, 0], sizes = [64, 128], strides = [1, 1]} : vector<128x128xf32> to vector<64x128xf32>
    %c2_72 = arith.constant 2 : index
    %c0_73 = arith.constant 0 : index
    %c0_74 = arith.constant 0 : index
    %151 = vector.load %arg13[%c2_72, %c0_73, %c0_74] : memref<7x9x128xf32, #tpu.memory_space<vmem>>, vector<1x9x128xf32>
    %152 = vector.shape_cast %151 : vector<1x9x128xf32> to vector<9x128xf32>
    %c10 = arith.constant 10 : index
    %c0_75 = arith.constant 0 : index
    %153 = vector.load %arg16[%c10, %c0_75] : memref<24x128xf32, #tpu.memory_space<vmem>>, vector<1x128xf32>
    %154 = vector.shape_cast %150 : vector<64x128xf32> to vector<1x64x128xf32>
    %155 = vector.shape_cast %152 : vector<9x128xf32> to vector<9x1x128xf32>
    %156 = vector.broadcast %154 : vector<1x64x128xf32> to vector<9x64x128xf32>
    %157 = vector.broadcast %155 : vector<9x1x128xf32> to vector<9x64x128xf32>
    %158 = arith.mulf %156, %157 : vector<9x64x128xf32>
    %159 = arith.truncf %158 : vector<9x64x128xf32> to vector<9x64x128xbf16>
    %160 = vector.shape_cast %159 : vector<9x64x128xbf16> to vector<576x128xbf16>
    %c0_76 = arith.constant 0 : index
    %c0_77 = arith.constant 0 : index
    %161 = vector.load %arg4[%c0_76, %c0_77] : memref<16x576xbf16, #tpu.memory_space<vmem>>, vector<16x576xbf16>
    %cst_78 = arith.constant dense<0.000000e+00> : vector<16x128xf32>
    %162 = tpu.matmul %161, %160, %cst_78 {dimension_numbers = #tpu.dot_dimension_numbers<[1], [0], [0], [1], [0, 0, 1, 1], [], []>} : vector<16x576xbf16>, vector<576x128xbf16>, vector<16x128xf32> -> vector<16x128xf32>
    %163 = vector.broadcast %153 : vector<1x128xf32> to vector<16x128xf32>
    %164 = arith.addf %162, %163 : vector<16x128xf32>
    %c3 = arith.constant 3 : index
    %c0_79 = arith.constant 0 : index
    %c0_80 = arith.constant 0 : index
    %165 = vector.load %arg13[%c3, %c0_79, %c0_80] : memref<7x9x128xf32, #tpu.memory_space<vmem>>, vector<1x9x128xf32>
    %166 = vector.shape_cast %165 : vector<1x9x128xf32> to vector<9x128xf32>
    %c11 = arith.constant 11 : index
    %c0_81 = arith.constant 0 : index
    %167 = vector.load %arg16[%c11, %c0_81] : memref<24x128xf32, #tpu.memory_space<vmem>>, vector<1x128xf32>
    %168 = vector.shape_cast %164 : vector<16x128xf32> to vector<1x16x128xf32>
    %169 = vector.shape_cast %166 : vector<9x128xf32> to vector<9x1x128xf32>
    %170 = vector.broadcast %168 : vector<1x16x128xf32> to vector<9x16x128xf32>
    %171 = vector.broadcast %169 : vector<9x1x128xf32> to vector<9x16x128xf32>
    %172 = arith.mulf %170, %171 : vector<9x16x128xf32>
    %173 = arith.truncf %172 : vector<9x16x128xf32> to vector<9x16x128xbf16>
    %174 = vector.shape_cast %173 : vector<9x16x128xbf16> to vector<144x128xbf16>
    %c0_82 = arith.constant 0 : index
    %c0_83 = arith.constant 0 : index
    %175 = vector.load %arg6[%c0_82, %c0_83] : memref<8x144xbf16, #tpu.memory_space<vmem>>, vector<8x144xbf16>
    %cst_84 = arith.constant dense<0.000000e+00> : vector<8x128xf32>
    %176 = tpu.matmul %175, %174, %cst_84 {dimension_numbers = #tpu.dot_dimension_numbers<[1], [0], [0], [1], [0, 0, 1, 1], [], []>} : vector<8x144xbf16>, vector<144x128xbf16>, vector<8x128xf32> -> vector<8x128xf32>
    %177 = vector.broadcast %167 : vector<1x128xf32> to vector<8x128xf32>
    %178 = arith.addf %176, %177 : vector<8x128xf32>
    %c0_85 = arith.constant 0 : index
    %c0_86 = arith.constant 0 : index
    %179 = vector.load %arg7[%c0_85, %c0_86] : memref<16x8xbf16, #tpu.memory_space<vmem>>, vector<16x8xbf16>
    %180 = arith.truncf %178 : vector<8x128xf32> to vector<8x128xbf16>
    %cst_87 = arith.constant dense<0.000000e+00> : vector<16x128xf32>
    %181 = tpu.matmul %179, %180, %cst_87 {dimension_numbers = #tpu.dot_dimension_numbers<[1], [0], [0], [1], [0, 0, 1, 1], [], []>} : vector<16x8xbf16>, vector<8x128xbf16>, vector<16x128xf32> -> vector<16x128xf32>
    %182 = arith.addf %164, %181 : vector<16x128xf32>
    %c4_88 = arith.constant 4 : index
    %c0_89 = arith.constant 0 : index
    %c0_90 = arith.constant 0 : index
    %183 = vector.load %arg13[%c4_88, %c0_89, %c0_90] : memref<7x9x128xf32, #tpu.memory_space<vmem>>, vector<1x9x128xf32>
    %184 = vector.shape_cast %183 : vector<1x9x128xf32> to vector<9x128xf32>
    %c12 = arith.constant 12 : index
    %c0_91 = arith.constant 0 : index
    %185 = vector.load %arg16[%c12, %c0_91] : memref<24x128xf32, #tpu.memory_space<vmem>>, vector<1x128xf32>
    %186 = vector.shape_cast %182 : vector<16x128xf32> to vector<1x16x128xf32>
    %187 = vector.shape_cast %184 : vector<9x128xf32> to vector<9x1x128xf32>
    %188 = vector.broadcast %186 : vector<1x16x128xf32> to vector<9x16x128xf32>
    %189 = vector.broadcast %187 : vector<9x1x128xf32> to vector<9x16x128xf32>
    %190 = arith.mulf %188, %189 : vector<9x16x128xf32>
    %191 = arith.truncf %190 : vector<9x16x128xf32> to vector<9x16x128xbf16>
    %192 = vector.shape_cast %191 : vector<9x16x128xbf16> to vector<144x128xbf16>
    %c0_92 = arith.constant 0 : index
    %c0_93 = arith.constant 0 : index
    %193 = vector.load %arg5[%c0_92, %c0_93] : memref<16x144xbf16, #tpu.memory_space<vmem>>, vector<16x144xbf16>
    %cst_94 = arith.constant dense<0.000000e+00> : vector<16x128xf32>
    %194 = tpu.matmul %193, %192, %cst_94 {dimension_numbers = #tpu.dot_dimension_numbers<[1], [0], [0], [1], [0, 0, 1, 1], [], []>} : vector<16x144xbf16>, vector<144x128xbf16>, vector<16x128xf32> -> vector<16x128xf32>
    %195 = vector.broadcast %185 : vector<1x128xf32> to vector<16x128xf32>
    %196 = arith.addf %194, %195 : vector<16x128xf32>
    %c0_95 = arith.constant 0 : index
    %c0_96 = arith.constant 0 : index
    %197 = vector.load %arg8[%c0_95, %c0_96] : memref<64x16xbf16, #tpu.memory_space<vmem>>, vector<64x16xbf16>
    %198 = arith.truncf %196 : vector<16x128xf32> to vector<16x128xbf16>
    %cst_97 = arith.constant dense<0.000000e+00> : vector<64x128xf32>
    %199 = tpu.matmul %197, %198, %cst_97 {dimension_numbers = #tpu.dot_dimension_numbers<[1], [0], [0], [1], [0, 0, 1, 1], [], []>} : vector<64x16xbf16>, vector<16x128xbf16>, vector<64x128xf32> -> vector<64x128xf32>
    %200 = arith.addf %150, %199 : vector<64x128xf32>
    %c5_98 = arith.constant 5 : index
    %c0_99 = arith.constant 0 : index
    %c0_100 = arith.constant 0 : index
    %201 = vector.load %arg13[%c5_98, %c0_99, %c0_100] : memref<7x9x128xf32, #tpu.memory_space<vmem>>, vector<1x9x128xf32>
    %202 = vector.shape_cast %201 : vector<1x9x128xf32> to vector<9x128xf32>
    %c13 = arith.constant 13 : index
    %c0_101 = arith.constant 0 : index
    %203 = vector.load %arg16[%c13, %c0_101] : memref<24x128xf32, #tpu.memory_space<vmem>>, vector<1x128xf32>
    %204 = vector.shape_cast %200 : vector<64x128xf32> to vector<1x64x128xf32>
    %205 = vector.shape_cast %202 : vector<9x128xf32> to vector<9x1x128xf32>
    %206 = vector.broadcast %204 : vector<1x64x128xf32> to vector<9x64x128xf32>
    %207 = vector.broadcast %205 : vector<9x1x128xf32> to vector<9x64x128xf32>
    %208 = arith.mulf %206, %207 : vector<9x64x128xf32>
    %209 = arith.truncf %208 : vector<9x64x128xf32> to vector<9x64x128xbf16>
    %210 = vector.shape_cast %209 : vector<9x64x128xbf16> to vector<576x128xbf16>
    %c0_102 = arith.constant 0 : index
    %c0_103 = arith.constant 0 : index
    %211 = vector.load %arg3[%c0_102, %c0_103] : memref<64x576xbf16, #tpu.memory_space<vmem>>, vector<64x576xbf16>
    %cst_104 = arith.constant dense<0.000000e+00> : vector<64x128xf32>
    %212 = tpu.matmul %211, %210, %cst_104 {dimension_numbers = #tpu.dot_dimension_numbers<[1], [0], [0], [1], [0, 0, 1, 1], [], []>} : vector<64x576xbf16>, vector<576x128xbf16>, vector<64x128xf32> -> vector<64x128xf32>
    %213 = vector.broadcast %203 : vector<1x128xf32> to vector<64x128xf32>
    %214 = arith.addf %212, %213 : vector<64x128xf32>
    %c6_105 = arith.constant 6 : index
    %c0_106 = arith.constant 0 : index
    %c0_107 = arith.constant 0 : index
    %215 = vector.load %arg13[%c6_105, %c0_106, %c0_107] : memref<7x9x128xf32, #tpu.memory_space<vmem>>, vector<1x9x128xf32>
    %216 = vector.shape_cast %215 : vector<1x9x128xf32> to vector<9x128xf32>
    %c14 = arith.constant 14 : index
    %c0_108 = arith.constant 0 : index
    %217 = vector.load %arg16[%c14, %c0_108] : memref<24x128xf32, #tpu.memory_space<vmem>>, vector<1x128xf32>
    %218 = vector.shape_cast %214 : vector<64x128xf32> to vector<1x64x128xf32>
    %219 = vector.shape_cast %216 : vector<9x128xf32> to vector<9x1x128xf32>
    %220 = vector.broadcast %218 : vector<1x64x128xf32> to vector<9x64x128xf32>
    %221 = vector.broadcast %219 : vector<9x1x128xf32> to vector<9x64x128xf32>
    %222 = arith.mulf %220, %221 : vector<9x64x128xf32>
    %223 = arith.truncf %222 : vector<9x64x128xf32> to vector<9x64x128xbf16>
    %224 = vector.shape_cast %223 : vector<9x64x128xbf16> to vector<576x128xbf16>
    %c0_109 = arith.constant 0 : index
    %c0_110 = arith.constant 0 : index
    %225 = vector.load %arg3[%c0_109, %c0_110] : memref<64x576xbf16, #tpu.memory_space<vmem>>, vector<64x576xbf16>
    %cst_111 = arith.constant dense<0.000000e+00> : vector<64x128xf32>
    %226 = tpu.matmul %225, %224, %cst_111 {dimension_numbers = #tpu.dot_dimension_numbers<[1], [0], [0], [1], [0, 0, 1, 1], [], []>} : vector<64x576xbf16>, vector<576x128xbf16>, vector<64x128xf32> -> vector<64x128xf32>
    %227 = vector.broadcast %217 : vector<1x128xf32> to vector<64x128xf32>
    %228 = arith.addf %226, %227 : vector<64x128xf32>
    %229 = arith.addf %228, %214 : vector<64x128xf32>
    %230 = vector.extract_strided_slice %149 {offsets = [64, 0], sizes = [64, 128], strides = [1, 1]} : vector<128x128xf32> to vector<64x128xf32>
    %c2_112 = arith.constant 2 : index
    %c0_113 = arith.constant 0 : index
    %c0_114 = arith.constant 0 : index
    %231 = vector.load %arg13[%c2_112, %c0_113, %c0_114] : memref<7x9x128xf32, #tpu.memory_space<vmem>>, vector<1x9x128xf32>
    %232 = vector.shape_cast %231 : vector<1x9x128xf32> to vector<9x128xf32>
    %c10_115 = arith.constant 10 : index
    %c0_116 = arith.constant 0 : index
    %233 = vector.load %arg16[%c10_115, %c0_116] : memref<24x128xf32, #tpu.memory_space<vmem>>, vector<1x128xf32>
    %234 = vector.shape_cast %230 : vector<64x128xf32> to vector<1x64x128xf32>
    %235 = vector.shape_cast %232 : vector<9x128xf32> to vector<9x1x128xf32>
    %236 = vector.broadcast %234 : vector<1x64x128xf32> to vector<9x64x128xf32>
    %237 = vector.broadcast %235 : vector<9x1x128xf32> to vector<9x64x128xf32>
    %238 = arith.mulf %236, %237 : vector<9x64x128xf32>
    %239 = arith.truncf %238 : vector<9x64x128xf32> to vector<9x64x128xbf16>
    %240 = vector.shape_cast %239 : vector<9x64x128xbf16> to vector<576x128xbf16>
    %c0_117 = arith.constant 0 : index
    %c0_118 = arith.constant 0 : index
    %241 = vector.load %arg4[%c0_117, %c0_118] : memref<16x576xbf16, #tpu.memory_space<vmem>>, vector<16x576xbf16>
    %cst_119 = arith.constant dense<0.000000e+00> : vector<16x128xf32>
    %242 = tpu.matmul %241, %240, %cst_119 {dimension_numbers = #tpu.dot_dimension_numbers<[1], [0], [0], [1], [0, 0, 1, 1], [], []>} : vector<16x576xbf16>, vector<576x128xbf16>, vector<16x128xf32> -> vector<16x128xf32>
    %243 = vector.broadcast %233 : vector<1x128xf32> to vector<16x128xf32>
    %244 = arith.addf %242, %243 : vector<16x128xf32>
    %c3_120 = arith.constant 3 : index
    %c0_121 = arith.constant 0 : index
    %c0_122 = arith.constant 0 : index
    %245 = vector.load %arg13[%c3_120, %c0_121, %c0_122] : memref<7x9x128xf32, #tpu.memory_space<vmem>>, vector<1x9x128xf32>
    %246 = vector.shape_cast %245 : vector<1x9x128xf32> to vector<9x128xf32>
    %c11_123 = arith.constant 11 : index
    %c0_124 = arith.constant 0 : index
    %247 = vector.load %arg16[%c11_123, %c0_124] : memref<24x128xf32, #tpu.memory_space<vmem>>, vector<1x128xf32>
    %248 = vector.shape_cast %244 : vector<16x128xf32> to vector<1x16x128xf32>
    %249 = vector.shape_cast %246 : vector<9x128xf32> to vector<9x1x128xf32>
    %250 = vector.broadcast %248 : vector<1x16x128xf32> to vector<9x16x128xf32>
    %251 = vector.broadcast %249 : vector<9x1x128xf32> to vector<9x16x128xf32>
    %252 = arith.mulf %250, %251 : vector<9x16x128xf32>
    %253 = arith.truncf %252 : vector<9x16x128xf32> to vector<9x16x128xbf16>
    %254 = vector.shape_cast %253 : vector<9x16x128xbf16> to vector<144x128xbf16>
    %c0_125 = arith.constant 0 : index
    %c0_126 = arith.constant 0 : index
    %255 = vector.load %arg6[%c0_125, %c0_126] : memref<8x144xbf16, #tpu.memory_space<vmem>>, vector<8x144xbf16>
    %cst_127 = arith.constant dense<0.000000e+00> : vector<8x128xf32>
    %256 = tpu.matmul %255, %254, %cst_127 {dimension_numbers = #tpu.dot_dimension_numbers<[1], [0], [0], [1], [0, 0, 1, 1], [], []>} : vector<8x144xbf16>, vector<144x128xbf16>, vector<8x128xf32> -> vector<8x128xf32>
    %257 = vector.broadcast %247 : vector<1x128xf32> to vector<8x128xf32>
    %258 = arith.addf %256, %257 : vector<8x128xf32>
    %c0_128 = arith.constant 0 : index
    %c0_129 = arith.constant 0 : index
    %259 = vector.load %arg7[%c0_128, %c0_129] : memref<16x8xbf16, #tpu.memory_space<vmem>>, vector<16x8xbf16>
    %260 = arith.truncf %258 : vector<8x128xf32> to vector<8x128xbf16>
    %cst_130 = arith.constant dense<0.000000e+00> : vector<16x128xf32>
    %261 = tpu.matmul %259, %260, %cst_130 {dimension_numbers = #tpu.dot_dimension_numbers<[1], [0], [0], [1], [0, 0, 1, 1], [], []>} : vector<16x8xbf16>, vector<8x128xbf16>, vector<16x128xf32> -> vector<16x128xf32>
    %262 = arith.addf %244, %261 : vector<16x128xf32>
    %c4_131 = arith.constant 4 : index
    %c0_132 = arith.constant 0 : index
    %c0_133 = arith.constant 0 : index
    %263 = vector.load %arg13[%c4_131, %c0_132, %c0_133] : memref<7x9x128xf32, #tpu.memory_space<vmem>>, vector<1x9x128xf32>
    %264 = vector.shape_cast %263 : vector<1x9x128xf32> to vector<9x128xf32>
    %c12_134 = arith.constant 12 : index
    %c0_135 = arith.constant 0 : index
    %265 = vector.load %arg16[%c12_134, %c0_135] : memref<24x128xf32, #tpu.memory_space<vmem>>, vector<1x128xf32>
    %266 = vector.shape_cast %262 : vector<16x128xf32> to vector<1x16x128xf32>
    %267 = vector.shape_cast %264 : vector<9x128xf32> to vector<9x1x128xf32>
    %268 = vector.broadcast %266 : vector<1x16x128xf32> to vector<9x16x128xf32>
    %269 = vector.broadcast %267 : vector<9x1x128xf32> to vector<9x16x128xf32>
    %270 = arith.mulf %268, %269 : vector<9x16x128xf32>
    %271 = arith.truncf %270 : vector<9x16x128xf32> to vector<9x16x128xbf16>
    %272 = vector.shape_cast %271 : vector<9x16x128xbf16> to vector<144x128xbf16>
    %c0_136 = arith.constant 0 : index
    %c0_137 = arith.constant 0 : index
    %273 = vector.load %arg5[%c0_136, %c0_137] : memref<16x144xbf16, #tpu.memory_space<vmem>>, vector<16x144xbf16>
    %cst_138 = arith.constant dense<0.000000e+00> : vector<16x128xf32>
    %274 = tpu.matmul %273, %272, %cst_138 {dimension_numbers = #tpu.dot_dimension_numbers<[1], [0], [0], [1], [0, 0, 1, 1], [], []>} : vector<16x144xbf16>, vector<144x128xbf16>, vector<16x128xf32> -> vector<16x128xf32>
    %275 = vector.broadcast %265 : vector<1x128xf32> to vector<16x128xf32>
    %276 = arith.addf %274, %275 : vector<16x128xf32>
    %c0_139 = arith.constant 0 : index
    %c0_140 = arith.constant 0 : index
    %277 = vector.load %arg8[%c0_139, %c0_140] : memref<64x16xbf16, #tpu.memory_space<vmem>>, vector<64x16xbf16>
    %278 = arith.truncf %276 : vector<16x128xf32> to vector<16x128xbf16>
    %cst_141 = arith.constant dense<0.000000e+00> : vector<64x128xf32>
    %279 = tpu.matmul %277, %278, %cst_141 {dimension_numbers = #tpu.dot_dimension_numbers<[1], [0], [0], [1], [0, 0, 1, 1], [], []>} : vector<64x16xbf16>, vector<16x128xbf16>, vector<64x128xf32> -> vector<64x128xf32>
    %280 = arith.addf %230, %279 : vector<64x128xf32>
    %c5_142 = arith.constant 5 : index
    %c0_143 = arith.constant 0 : index
    %c0_144 = arith.constant 0 : index
    %281 = vector.load %arg13[%c5_142, %c0_143, %c0_144] : memref<7x9x128xf32, #tpu.memory_space<vmem>>, vector<1x9x128xf32>
    %282 = vector.shape_cast %281 : vector<1x9x128xf32> to vector<9x128xf32>
    %c13_145 = arith.constant 13 : index
    %c0_146 = arith.constant 0 : index
    %283 = vector.load %arg16[%c13_145, %c0_146] : memref<24x128xf32, #tpu.memory_space<vmem>>, vector<1x128xf32>
    %284 = vector.shape_cast %280 : vector<64x128xf32> to vector<1x64x128xf32>
    %285 = vector.shape_cast %282 : vector<9x128xf32> to vector<9x1x128xf32>
    %286 = vector.broadcast %284 : vector<1x64x128xf32> to vector<9x64x128xf32>
    %287 = vector.broadcast %285 : vector<9x1x128xf32> to vector<9x64x128xf32>
    %288 = arith.mulf %286, %287 : vector<9x64x128xf32>
    %289 = arith.truncf %288 : vector<9x64x128xf32> to vector<9x64x128xbf16>
    %290 = vector.shape_cast %289 : vector<9x64x128xbf16> to vector<576x128xbf16>
    %c0_147 = arith.constant 0 : index
    %c0_148 = arith.constant 0 : index
    %291 = vector.load %arg3[%c0_147, %c0_148] : memref<64x576xbf16, #tpu.memory_space<vmem>>, vector<64x576xbf16>
    %cst_149 = arith.constant dense<0.000000e+00> : vector<64x128xf32>
    %292 = tpu.matmul %291, %290, %cst_149 {dimension_numbers = #tpu.dot_dimension_numbers<[1], [0], [0], [1], [0, 0, 1, 1], [], []>} : vector<64x576xbf16>, vector<576x128xbf16>, vector<64x128xf32> -> vector<64x128xf32>
    %293 = vector.broadcast %283 : vector<1x128xf32> to vector<64x128xf32>
    %294 = arith.addf %292, %293 : vector<64x128xf32>
    %c6_150 = arith.constant 6 : index
    %c0_151 = arith.constant 0 : index
    %c0_152 = arith.constant 0 : index
    %295 = vector.load %arg13[%c6_150, %c0_151, %c0_152] : memref<7x9x128xf32, #tpu.memory_space<vmem>>, vector<1x9x128xf32>
    %296 = vector.shape_cast %295 : vector<1x9x128xf32> to vector<9x128xf32>
    %c14_153 = arith.constant 14 : index
    %c0_154 = arith.constant 0 : index
    %297 = vector.load %arg16[%c14_153, %c0_154] : memref<24x128xf32, #tpu.memory_space<vmem>>, vector<1x128xf32>
    %298 = vector.shape_cast %294 : vector<64x128xf32> to vector<1x64x128xf32>
    %299 = vector.shape_cast %296 : vector<9x128xf32> to vector<9x1x128xf32>
    %300 = vector.broadcast %298 : vector<1x64x128xf32> to vector<9x64x128xf32>
    %301 = vector.broadcast %299 : vector<9x1x128xf32> to vector<9x64x128xf32>
    %302 = arith.mulf %300, %301 : vector<9x64x128xf32>
    %303 = arith.truncf %302 : vector<9x64x128xf32> to vector<9x64x128xbf16>
    %304 = vector.shape_cast %303 : vector<9x64x128xbf16> to vector<576x128xbf16>
    %c0_155 = arith.constant 0 : index
    %c0_156 = arith.constant 0 : index
    %305 = vector.load %arg3[%c0_155, %c0_156] : memref<64x576xbf16, #tpu.memory_space<vmem>>, vector<64x576xbf16>
    %cst_157 = arith.constant dense<0.000000e+00> : vector<64x128xf32>
    %306 = tpu.matmul %305, %304, %cst_157 {dimension_numbers = #tpu.dot_dimension_numbers<[1], [0], [0], [1], [0, 0, 1, 1], [], []>} : vector<64x576xbf16>, vector<576x128xbf16>, vector<64x128xf32> -> vector<64x128xf32>
    %307 = vector.broadcast %297 : vector<1x128xf32> to vector<64x128xf32>
    %308 = arith.addf %306, %307 : vector<64x128xf32>
    %309 = arith.addf %308, %294 : vector<64x128xf32>
    %310 = tpu.concatenate %229, %309 in 0 : vector<64x128xf32>, vector<64x128xf32> -> vector<128x128xf32>
    %c2_158 = arith.constant 2 : index
    %c0_159 = arith.constant 0 : index
    %c0_160 = arith.constant 0 : index
    %311 = vector.load %arg10[%c2_158, %c0_159, %c0_160] : memref<3x128x128xbf16, #tpu.memory_space<vmem>>, vector<1x128x128xbf16>
    %312 = vector.shape_cast %311 : vector<1x128x128xbf16> to vector<128x128xbf16>
    %313 = arith.truncf %310 : vector<128x128xf32> to vector<128x128xbf16>
    %cst_161 = arith.constant dense<0.000000e+00> : vector<128x128xf32>
    %314 = tpu.matmul %313, %312, %cst_161 {dimension_numbers = #tpu.dot_dimension_numbers<[1], [0], [0], [1], [0, 0, 1, 1], [], []>} : vector<128x128xbf16>, vector<128x128xbf16>, vector<128x128xf32> -> vector<128x128xf32>
    %c3_162 = arith.constant 3 : index
    %c0_163 = arith.constant 0 : index
    %315 = vector.load %arg16[%c3_162, %c0_163] : memref<24x128xf32, #tpu.memory_space<vmem>>, vector<1x128xf32>
    %316 = vector.broadcast %315 : vector<1x128xf32> to vector<128x128xf32>
    %317 = arith.addf %314, %316 : vector<128x128xf32>
    %318 = arith.negf %317 : vector<128x128xf32>
    %319 = math.exp %318 : vector<128x128xf32>
    %cst_164 = arith.constant 1.000000e+00 : f32
    %320 = vector.broadcast %cst_164 : f32 to vector<128x128xf32>
    %321 = arith.addf %320, %319 : vector<128x128xf32>
    %322 = arith.divf %320, %321 : vector<128x128xf32>
    %323 = arith.mulf %322, %0 : vector<128x128xf32>
    %324 = arith.addf %323, %310 : vector<128x128xf32>
    %325 = vector.shape_cast %324 : vector<128x128xf32> to vector<2x64x128xf32>
    %cst_165 = arith.constant dense<0.000000e+00> : vector<2x128xf32>
    %326 = vector.multi_reduction <add>, %325, %cst_165 [1] : vector<2x64x128xf32> to vector<2x128xf32>
    %cst_166 = arith.constant 6.400000e+01 : f32
    %327 = vector.broadcast %cst_166 : f32 to vector<2x128xf32>
    %328 = arith.divf %326, %327 : vector<2x128xf32>
    %c0_167 = arith.constant 0 : index
    %c0_168 = arith.constant 0 : index
    %329 = vector.load %arg14[%c0_167, %c0_168] : memref<128x32xbf16, #tpu.memory_space<vmem>>, vector<128x32xbf16>
    %330 = arith.truncf %328 : vector<2x128xf32> to vector<2x128xbf16>
    %cst_169 = arith.constant dense<0.000000e+00> : vector<2x32xf32>
    %331 = tpu.matmul %330, %329, %cst_169 {dimension_numbers = #tpu.dot_dimension_numbers<[1], [0], [0], [1], [0, 0, 1, 1], [], []>} : vector<2x128xbf16>, vector<128x32xbf16>, vector<2x32xf32> -> vector<2x32xf32>
    %c15 = arith.constant 15 : index
    %c0_170 = arith.constant 0 : index
    %332 = vector.load %arg16[%c15, %c0_170] : memref<24x128xf32, #tpu.memory_space<vmem>>, vector<1x128xf32>
    %333 = vector.extract_strided_slice %332 {offsets = [0, 0], sizes = [1, 32], strides = [1, 1]} : vector<1x128xf32> to vector<1x32xf32>
    %334 = vector.broadcast %333 : vector<1x32xf32> to vector<2x32xf32>
    %335 = arith.addf %331, %334 : vector<2x32xf32>
    %336 = arith.mulf %335, %335 : vector<2x32xf32>
    %337 = arith.mulf %335, %336 : vector<2x32xf32>
    %cst_171 = arith.constant 4.471500e-02 : f32
    %338 = vector.broadcast %cst_171 : f32 to vector<2x32xf32>
    %339 = arith.mulf %338, %337 : vector<2x32xf32>
    %340 = arith.addf %335, %339 : vector<2x32xf32>
    %cst_172 = arith.constant 0.797884583 : f32
    %341 = vector.broadcast %cst_172 : f32 to vector<2x32xf32>
    %342 = arith.mulf %341, %340 : vector<2x32xf32>
    %343 = math.tanh %342 : vector<2x32xf32>
    %cst_173 = arith.constant 1.000000e+00 : f32
    %344 = vector.broadcast %cst_173 : f32 to vector<2x32xf32>
    %345 = arith.addf %344, %343 : vector<2x32xf32>
    %cst_174 = arith.constant 5.000000e-01 : f32
    %346 = vector.broadcast %cst_174 : f32 to vector<2x32xf32>
    %347 = arith.mulf %346, %345 : vector<2x32xf32>
    %348 = arith.mulf %335, %347 : vector<2x32xf32>
    %c0_175 = arith.constant 0 : index
    %c0_176 = arith.constant 0 : index
    %349 = vector.load %arg15[%c0_175, %c0_176] : memref<32x128xbf16, #tpu.memory_space<vmem>>, vector<32x128xbf16>
    %350 = arith.truncf %348 : vector<2x32xf32> to vector<2x32xbf16>
    %cst_177 = arith.constant dense<0.000000e+00> : vector<2x128xf32>
    %351 = tpu.matmul %350, %349, %cst_177 {dimension_numbers = #tpu.dot_dimension_numbers<[1], [0], [0], [1], [0, 0, 1, 1], [], []>} : vector<2x32xbf16>, vector<32x128xbf16>, vector<2x128xf32> -> vector<2x128xf32>
    %c16 = arith.constant 16 : index
    %c0_178 = arith.constant 0 : index
    %352 = vector.load %arg16[%c16, %c0_178] : memref<24x128xf32, #tpu.memory_space<vmem>>, vector<1x128xf32>
    %353 = vector.broadcast %352 : vector<1x128xf32> to vector<2x128xf32>
    %354 = arith.addf %351, %353 : vector<2x128xf32>
    %355 = arith.negf %354 : vector<2x128xf32>
    %356 = math.exp %355 : vector<2x128xf32>
    %cst_179 = arith.constant 1.000000e+00 : f32
    %357 = vector.broadcast %cst_179 : f32 to vector<2x128xf32>
    %358 = arith.addf %357, %356 : vector<2x128xf32>
    %359 = arith.divf %357, %358 : vector<2x128xf32>
    %360 = vector.shape_cast %359 : vector<2x128xf32> to vector<2x1x128xf32>
    %361 = vector.broadcast %360 : vector<2x1x128xf32> to vector<2x64x128xf32>
    %362 = arith.mulf %325, %361 : vector<2x64x128xf32>
    %c0_180 = arith.constant 0 : index
    %c0_181 = arith.constant 0 : index
    %c0_182 = arith.constant 0 : index
    %363 = vector.load %arg17[%c0_180, %c0_181, %c0_182] : memref<2x64x128xf32, #tpu.memory_space<vmem>>, vector<2x64x128xf32>
    tpu.vector_store %arg17[%c0_180, %c0_181, %c0_182], %362 {strides = array<i32>} : memref<2x64x128xf32, #tpu.memory_space<vmem>>, vector<2x64x128xf32>,
    return
  }
  func.func @transform_0(%arg0: i32) -> (i32, i32, i32) {
    %c0_i32 = arith.constant 0 : i32
    %c0_i32_0 = arith.constant 0 : i32
    %c0_i32_1 = arith.constant 0 : i32
    return %arg0, %c0_i32, %c0_i32_0 : i32, i32, i32
  }
  func.func @transform_1(%arg0: i32) -> (i32, i32) {
    %c0_i32 = arith.constant 0 : i32
    %c0_i32_0 = arith.constant 0 : i32
    %c0_i32_1 = arith.constant 0 : i32
    return %c0_i32, %c0_i32_0 : i32, i32
  }
  func.func @transform_2(%arg0: i32) -> (i32, i32) {
    %c0_i32 = arith.constant 0 : i32
    %c0_i32_0 = arith.constant 0 : i32
    %c0_i32_1 = arith.constant 0 : i32
    return %c0_i32, %c0_i32_0 : i32, i32
  }
  func.func @transform_3(%arg0: i32) -> (i32, i32) {
    %c0_i32 = arith.constant 0 : i32
    %c0_i32_0 = arith.constant 0 : i32
    %c0_i32_1 = arith.constant 0 : i32
    return %c0_i32, %c0_i32_0 : i32, i32
  }
  func.func @transform_4(%arg0: i32) -> (i32, i32) {
    %c0_i32 = arith.constant 0 : i32
    %c0_i32_0 = arith.constant 0 : i32
    %c0_i32_1 = arith.constant 0 : i32
    return %c0_i32, %c0_i32_0 : i32, i32
  }
  func.func @transform_5(%arg0: i32) -> (i32, i32) {
    %c0_i32 = arith.constant 0 : i32
    %c0_i32_0 = arith.constant 0 : i32
    %c0_i32_1 = arith.constant 0 : i32
    return %c0_i32, %c0_i32_0 : i32, i32
  }
  func.func @transform_6(%arg0: i32) -> (i32, i32) {
    %c0_i32 = arith.constant 0 : i32
    %c0_i32_0 = arith.constant 0 : i32
    %c0_i32_1 = arith.constant 0 : i32
    return %c0_i32, %c0_i32_0 : i32, i32
  }
  func.func @transform_7(%arg0: i32) -> (i32, i32) {
    %c0_i32 = arith.constant 0 : i32
    %c0_i32_0 = arith.constant 0 : i32
    %c0_i32_1 = arith.constant 0 : i32
    return %c0_i32, %c0_i32_0 : i32, i32
  }
  func.func @transform_8(%arg0: i32) -> (i32, i32) {
    %c0_i32 = arith.constant 0 : i32
    %c0_i32_0 = arith.constant 0 : i32
    %c0_i32_1 = arith.constant 0 : i32
    return %c0_i32, %c0_i32_0 : i32, i32
  }
  func.func @transform_9(%arg0: i32) -> (i32, i32, i32) {
    %c0_i32 = arith.constant 0 : i32
    %c0_i32_0 = arith.constant 0 : i32
    %c0_i32_1 = arith.constant 0 : i32
    %c0_i32_2 = arith.constant 0 : i32
    return %c0_i32, %c0_i32_0, %c0_i32_1 : i32, i32, i32
  }
  func.func @transform_10(%arg0: i32) -> (i32, i32, i32) {
    %c0_i32 = arith.constant 0 : i32
    %c0_i32_0 = arith.constant 0 : i32
    %c0_i32_1 = arith.constant 0 : i32
    %c0_i32_2 = arith.constant 0 : i32
    return %c0_i32, %c0_i32_0, %c0_i32_1 : i32, i32, i32
  }
  func.func @transform_11(%arg0: i32) -> (i32, i32, i32) {
    %c0_i32 = arith.constant 0 : i32
    %c0_i32_0 = arith.constant 0 : i32
    %c0_i32_1 = arith.constant 0 : i32
    %c0_i32_2 = arith.constant 0 : i32
    return %c0_i32, %c0_i32_0, %c0_i32_1 : i32, i32, i32
  }
  func.func @transform_12(%arg0: i32) -> (i32, i32, i32) {
    %c0_i32 = arith.constant 0 : i32
    %c0_i32_0 = arith.constant 0 : i32
    %c0_i32_1 = arith.constant 0 : i32
    %c0_i32_2 = arith.constant 0 : i32
    return %c0_i32, %c0_i32_0, %c0_i32_1 : i32, i32, i32
  }
  func.func @transform_13(%arg0: i32) -> (i32, i32) {
    %c0_i32 = arith.constant 0 : i32
    %c0_i32_0 = arith.constant 0 : i32
    %c0_i32_1 = arith.constant 0 : i32
    return %c0_i32, %c0_i32_0 : i32, i32
  }
  func.func @transform_14(%arg0: i32) -> (i32, i32) {
    %c0_i32 = arith.constant 0 : i32
    %c0_i32_0 = arith.constant 0 : i32
    %c0_i32_1 = arith.constant 0 : i32
    return %c0_i32, %c0_i32_0 : i32, i32
  }
  func.func @transform_15(%arg0: i32) -> (i32, i32) {
    %c0_i32 = arith.constant 0 : i32
    %c0_i32_0 = arith.constant 0 : i32
    %c0_i32_1 = arith.constant 0 : i32
    return %c0_i32, %c0_i32_0 : i32, i32
  }
  func.func @transform_16(%arg0: i32) -> (i32, i32, i32) {
    %c0_i32 = arith.constant 0 : i32
    %c0_i32_0 = arith.constant 0 : i32
    %c0_i32_1 = arith.constant 0 : i32
    return %arg0, %c0_i32, %c0_i32_0 : i32, i32, i32
  }
}

</mosaic_0001>

<llo_original>
// kernel: feature_extraction_forward.1
$region0: #{feature_extraction_forward.1}
  #allocation0 [shape = 'u32[]', space=smem, size = 0x4, offset = 0x4, fixed_abs, tag = 'smem constant byte address 0x4 - core index']
  #allocation1 [shape = 'u32[72,128]{1,0:T(1,128)}', space=vmem, size = 0x9000, scoped, tag = 'internal scratch']
  %s0 = inlined_call_operand.vmem [shape: bf16[4,64,64], index: 0, kind: input, shape index: {}]
  %s1 = inlined_call_operand.vmem [shape: f32[128,128], index: 1, kind: input, shape index: {}]
  %s2 = inlined_call_operand.vmem [shape: bf16[64,576], index: 2, kind: input, shape index: {}]
  %s3 = inlined_call_operand.vmem [shape: bf16[16,576], index: 3, kind: input, shape index: {}]
  %s4 = inlined_call_operand.vmem [shape: bf16[16,144], index: 4, kind: input, shape index: {}]
  %s5 = inlined_call_operand.vmem [shape: bf16[8,144], index: 5, kind: input, shape index: {}]
  %s6 = inlined_call_operand.vmem [shape: bf16[16,8], index: 6, kind: input, shape index: {}]
  %s7 = inlined_call_operand.vmem [shape: bf16[64,16], index: 7, kind: input, shape index: {}]
  %s8 = inlined_call_operand.vmem [shape: bf16[64,128], index: 8, kind: input, shape index: {}]
  %s9 = inlined_call_operand.vmem [shape: bf16[3,128,128], index: 9, kind: input, shape index: {}]
  %s10 = inlined_call_operand.vmem [shape: bf16[2,128,128], index: 10, kind: input, shape index: {}]
  %s11 = inlined_call_operand.vmem [shape: bf16[2,128,128], index: 11, kind: input, shape index: {}]
  %s12 = inlined_call_operand.vmem [shape: f32[7,9,128], index: 12, kind: input, shape index: {}]
  %s13 = inlined_call_operand.vmem [shape: bf16[128,32], index: 13, kind: input, shape index: {}]
  %s14 = inlined_call_operand.vmem [shape: bf16[32,128], index: 14, kind: input, shape index: {}]
  %s15 = inlined_call_operand.vmem [shape: f32[24,128], index: 15, kind: input, shape index: {}]
  %s16 = inlined_call_operand.hbm [shape: f32[4,64,128], index: 16, kind: output, shape index: {}]
  %s17 = sld [smem:[#allocation0]]
  $region97: #{feature_extraction_forward.1} parent=0
    _
  %s19 = ssub.s32 1, %s17
  %s20 = scalar_select 0, %s19, %s17
  $region1: #{feature_extraction_forward.1} parent=0
    #allocation2 [shape = 'u8[131072]{0}', space=vmem, size = 0x20000, scoped, tag = 'output window, operand 0']
    #allocation3 [shape = 's32[2]{0}', space=sflag, size = 0x8, scoped, tag = 'scoped memory for feature_extraction_forward.1']
    %21 = vsyncpa [#allocation3], 0
    %s22 = scalar_lea.sflag [#allocation3], 1
    %23 = vsyncpa %s22, 0
    loop: start=0, step=1, limit=4
    $region2: #{feature_extraction_forward.1} parent=1 // loop_pre_header
      _
    $region3: #{feature_extraction_forward.1} parent=1 // loop_header
      %s25 = sphi 0, %s29
      %p26 = scmp.ge.s32.totalorder %s25, 4
      %s35 = sphi 0, %s37
      %s38 = sphi 0, %s35
      %s39 = sphi 0, %s38
      %s55 = sphi 0, %s39
      %s59 = sphi 0, %s59
      %s61 = sphi 0, %s59
      %s62 = sphi 0, %s61
      %s76 = sphi 0, %s62
      %s80 = sphi 0, %s80
      %s82 = sphi 0, %s80
      %s83 = sphi 0, %s82
      %s97 = sphi 0, %s83
      %s101 = sphi 0, %s101
      %s103 = sphi 0, %s101
      %s104 = sphi 0, %s103
      %s118 = sphi 0, %s104
      %s122 = sphi 0, %s122
      %s124 = sphi 0, %s122
      %s125 = sphi 0, %s124
      %s139 = sphi 0, %s125
      %s143 = sphi 0, %s143
      %s145 = sphi 0, %s143
      %s146 = sphi 0, %s145
      %s160 = sphi 0, %s146
      %s164 = sphi 0, %s164
      %s166 = sphi 0, %s164
      %s167 = sphi 0, %s166
      %s181 = sphi 0, %s167
      %s185 = sphi 0, %s185
      %s187 = sphi 0, %s185
      %s188 = sphi 0, %s187
      %s202 = sphi 0, %s188
      %s206 = sphi 0, %s206
      %s208 = sphi 0, %s206
      %s209 = sphi 0, %s208
      %s223 = sphi 0, %s209
      %s227 = sphi 0, %s227
      %s229 = sphi 0, %s227
      %s230 = sphi 0, %s229
      %s244 = sphi 0, %s230
      %s248 = sphi 0, %s248
      %s250 = sphi 0, %s248
      %s251 = sphi 0, %s250
      %s265 = sphi 0, %s251
      %s269 = sphi 0, %s269
      %s271 = sphi 0, %s269
      %s272 = sphi 0, %s271
      %s286 = sphi 0, %s272
      %s290 = sphi 0, %s290
      %s292 = sphi 0, %s290
      %s293 = sphi 0, %s292
      %s307 = sphi 0, %s293
      %s311 = sphi 0, %s311
      %s313 = sphi 0, %s311
      %s314 = sphi 0, %s313
      %s328 = sphi 0, %s314
      %s332 = sphi 0, %s332
      %s334 = sphi 0, %s332
      %s335 = sphi 0, %s334
      %s349 = sphi 0, %s335
      %s353 = sphi 0, %s353
      %s355 = sphi 0, %s353
      %s356 = sphi 0, %s355
      %s370 = sphi 0, %s356
      %s376 = sphi 0, %s378
      %s379 = sphi 0, %s376
      %s380 = sphi 0, %s379
      %s396 = sphi 0, %s380
    $region4: #{feature_extraction_forward.1} parent=1 // loop_header_branch
      %28 = sbr.rel (%p26) target = $region8
    $region5: #{feature_extraction_forward.1} parent=1 // loop_body
      %s30 = ssub.s32 %s25, 1
      %s31 = ssub.s32 %s25, 2
      %s32 = sadd.s32 %s25, 1
      %s33 = ssub.s32 %s25, %s32
      %p34 = scmp.eq.s32.totalorder %s33, 0
      %s36 = sadd.s32 %s35, 1
      %s37 = scalar_select %p34, %s35, %s36
      %p40 = pneg %p34
      %p41 = scmp.eq.s32.totalorder %s25, 1
      %p42 = por %p40, %p41
      %p43 = scmp.ne.s32.totalorder %s35, %s38
      %p44 = scmp.eq.s32.totalorder %s25, 0
      %p45 = por %p43, %p44
      %p46 = scmp.ne.s32.totalorder %s35, %s38
      %p47 = scmp.eq.s32.totalorder %s30, 1
      %p48 = por %p46, %p47
      %p49 = scmp.ne.s32.totalorder %s38, %s39
      %p50 = scmp.eq.s32.totalorder %s30, 0
      %p51 = por %p49, %p50
      %p52 = scmp.ne.s32.totalorder %s38, %s39
      %p53 = scmp.eq.s32.totalorder %s31, 1
      %p54 = por %p52, %p53
      %p56 = scmp.ne.s32.totalorder %s39, %s55
      %p57 = scmp.eq.s32.totalorder %s31, 0
      %p58 = por %p56, %p57
      %s60 = sadd.s32 %s59, 1
      %p63 = scmp.eq.s32.totalorder %s25, 1
      %p64 = scmp.ne.s32.totalorder %s59, %s61
      %p65 = scmp.eq.s32.totalorder %s25, 0
      %p66 = por %p64, %p65
      %p67 = scmp.ne.s32.totalorder %s59, %s61
      %p68 = scmp.eq.s32.totalorder %s30, 1
      %p69 = por %p67, %p68
      %p70 = scmp.ne.s32.totalorder %s61, %s62
      %p71 = scmp.eq.s32.totalorder %s30, 0
      %p72 = por %p70, %p71
      %p73 = scmp.ne.s32.totalorder %s61, %s62
      %p74 = scmp.eq.s32.totalorder %s31, 1
      %p75 = por %p73, %p74
      %p77 = scmp.ne.s32.totalorder %s62, %s76
      %p78 = scmp.eq.s32.totalorder %s31, 0
      %p79 = por %p77, %p78
      %s81 = sadd.s32 %s80, 1
      %p84 = scmp.eq.s32.totalorder %s25, 1
      %p85 = scmp.ne.s32.totalorder %s80, %s82
      %p86 = scmp.eq.s32.totalorder %s25, 0
      %p87 = por %p85, %p86
      %p88 = scmp.ne.s32.totalorder %s80, %s82
      %p89 = scmp.eq.s32.totalorder %s30, 1
      %p90 = por %p88, %p89
      %p91 = scmp.ne.s32.totalorder %s82, %s83
      %p92 = scmp.eq.s32.totalorder %s30, 0
      %p93 = por %p91, %p92
      %p94 = scmp.ne.s32.totalorder %s82, %s83
      %p95 = scmp.eq.s32.totalorder %s31, 1
      %p96 = por %p94, %p95
      %p98 = scmp.ne.s32.totalorder %s83, %s97
      %p99 = scmp.eq.s32.totalorder %s31, 0
      %p100 = por %p98, %p99
      %s102 = sadd.s32 %s101, 1
      %p105 = scmp.eq.s32.totalorder %s25, 1
      %p106 = scmp.ne.s32.totalorder %s101, %s103
      %p107 = scmp.eq.s32.totalorder %s25, 0
      %p108 = por %p106, %p107
      %p109 = scmp.ne.s32.totalorder %s101, %s103
      %p110 = scmp.eq.s32.totalorder %s30, 1
      %p111 = por %p109, %p110
      %p112 = scmp.ne.s32.totalorder %s103, %s104
      %p113 = scmp.eq.s32.totalorder %s30, 0
      %p114 = por %p112, %p113
      %p115 = scmp.ne.s32.totalorder %s103, %s104
      %p116 = scmp.eq.s32.totalorder %s31, 1
      %p117 = por %p115, %p116
      %p119 = scmp.ne.s32.totalorder %s104, %s118
      %p120 = scmp.eq.s32.totalorder %s31, 0
      %p121 = por %p119, %p120
      %s123 = sadd.s32 %s122, 1
      %p126 = scmp.eq.s32.totalorder %s25, 1
      %p127 = scmp.ne.s32.totalorder %s122, %s124
      %p128 = scmp.eq.s32.totalorder %s25, 0
      %p129 = por %p127, %p128
      %p130 = scmp.ne.s32.totalorder %s122, %s124
      %p131 = scmp.eq.s32.totalorder %s30, 1
      %p132 = por %p130, %p131
      %p133 = scmp.ne.s32.totalorder %s124, %s125
      %p134 = scmp.eq.s32.totalorder %s30, 0
      %p135 = por %p133, %p134
      %p136 = scmp.ne.s32.totalorder %s124, %s125
      %p137 = scmp.eq.s32.totalorder %s31, 1
      %p138 = por %p136, %p137
      %p140 = scmp.ne.s32.totalorder %s125, %s139
      %p141 = scmp.eq.s32.totalorder %s31, 0
      %p142 = por %p140, %p141
      %s144 = sadd.s32 %s143, 1
      %p147 = scmp.eq.s32.totalorder %s25, 1
      %p148 = scmp.ne.s32.totalorder %s143, %s145
      %p149 = scmp.eq.s32.totalorder %s25, 0
      %p150 = por %p148, %p149
      %p151 = scmp.ne.s32.totalorder %s143, %s145
      %p152 = scmp.eq.s32.totalorder %s30, 1
      %p153 = por %p151, %p152
      %p154 = scmp.ne.s32.totalorder %s145, %s146
      %p155 = scmp.eq.s32.totalorder %s30, 0
      %p156 = por %p154, %p155
      %p157 = scmp.ne.s32.totalorder %s145, %s146
      %p158 = scmp.eq.s32.totalorder %s31, 1
      %p159 = por %p157, %p158
      %p161 = scmp.ne.s32.totalorder %s146, %s160
      %p162 = scmp.eq.s32.totalorder %s31, 0
      %p163 = por %p161, %p162
      %s165 = sadd.s32 %s164, 1
      %p168 = scmp.eq.s32.totalorder %s25, 1
      %p169 = scmp.ne.s32.totalorder %s164, %s166
      %p170 = scmp.eq.s32.totalorder %s25, 0
      %p171 = por %p169, %p170
      %p172 = scmp.ne.s32.totalorder %s164, %s166
      %p173 = scmp.eq.s32.totalorder %s30, 1
      %p174 = por %p172, %p173
      %p175 = scmp.ne.s32.totalorder %s166, %s167
      %p176 = scmp.eq.s32.totalorder %s30, 0
      %p177 = por %p175, %p176
      %p178 = scmp.ne.s32.totalorder %s166, %s167
      %p179 = scmp.eq.s32.totalorder %s31, 1
      %p180 = por %p178, %p179
      %p182 = scmp.ne.s32.totalorder %s167, %s181
      %p183 = scmp.eq.s32.totalorder %s31, 0
      %p184 = por %p182, %p183
      %s186 = sadd.s32 %s185, 1
      %p189 = scmp.eq.s32.totalorder %s25, 1
      %p190 = scmp.ne.s32.totalorder %s185, %s187
      %p191 = scmp.eq.s32.totalorder %s25, 0
      %p192 = por %p190, %p191
      %p193 = scmp.ne.s32.totalorder %s185, %s187
      %p194 = scmp.eq.s32.totalorder %s30, 1
      %p195 = por %p193, %p194
      %p196 = scmp.ne.s32.totalorder %s187, %s188
      %p197 = scmp.eq.s32.totalorder %s30, 0
      %p198 = por %p196, %p197
      %p199 = scmp.ne.s32.totalorder %s187, %s188
      %p200 = scmp.eq.s32.totalorder %s31, 1
      %p201 = por %p199, %p200
      %p203 = scmp.ne.s32.totalorder %s188, %s202
      %p204 = scmp.eq.s32.totalorder %s31, 0
      %p205 = por %p203, %p204
      %s207 = sadd.s32 %s206, 1
      %p210 = scmp.eq.s32.totalorder %s25, 1
      %p211 = scmp.ne.s32.totalorder %s206, %s208
      %p212 = scmp.eq.s32.totalorder %s25, 0
      %p213 = por %p211, %p212
      %p214 = scmp.ne.s32.totalorder %s206, %s208
      %p215 = scmp.eq.s32.totalorder %s30, 1
      %p216 = por %p214, %p215
      %p217 = scmp.ne.s32.totalorder %s208, %s209
      %p218 = scmp.eq.s32.totalorder %s30, 0
      %p219 = por %p217, %p218
      %p220 = scmp.ne.s32.totalorder %s208, %s209
      %p221 = scmp.eq.s32.totalorder %s31, 1
      %p222 = por %p220, %p221
      %p224 = scmp.ne.s32.totalorder %s209, %s223
      %p225 = scmp.eq.s32.totalorder %s31, 0
      %p226 = por %p224, %p225
      %s228 = sadd.s32 %s227, 1
      %p231 = scmp.eq.s32.totalorder %s25, 1
      %p232 = scmp.ne.s32.totalorder %s227, %s229
      %p233 = scmp.eq.s32.totalorder %s25, 0
      %p234 = por %p232, %p233
      %p235 = scmp.ne.s32.totalorder %s227, %s229
      %p236 = scmp.eq.s32.totalorder %s30, 1
      %p237 = por %p235, %p236
      %p238 = scmp.ne.s32.totalorder %s229, %s230
      %p239 = scmp.eq.s32.totalorder %s30, 0
      %p240 = por %p238, %p239
      %p241 = scmp.ne.s32.totalorder %s229, %s230
      %p242 = scmp.eq.s32.totalorder %s31, 1
      %p243 = por %p241, %p242
      %p245 = scmp.ne.s32.totalorder %s230, %s244
      %p246 = scmp.eq.s32.totalorder %s31, 0
      %p247 = por %p245, %p246
      %s249 = sadd.s32 %s248, 1
      %p252 = scmp.eq.s32.totalorder %s25, 1
      %p253 = scmp.ne.s32.totalorder %s248, %s250
      %p254 = scmp.eq.s32.totalorder %s25, 0
      %p255 = por %p253, %p254
      %p256 = scmp.ne.s32.totalorder %s248, %s250
      %p257 = scmp.eq.s32.totalorder %s30, 1
      %p258 = por %p256, %p257
      %p259 = scmp.ne.s32.totalorder %s250, %s251
      %p260 = scmp.eq.s32.totalorder %s30, 0
      %p261 = por %p259, %p260
      %p262 = scmp.ne.s32.totalorder %s250, %s251
      %p263 = scmp.eq.s32.totalorder %s31, 1
      %p264 = por %p262, %p263
      %p266 = scmp.ne.s32.totalorder %s251, %s265
      %p267 = scmp.eq.s32.totalorder %s31, 0
      %p268 = por %p266, %p267
      %s270 = sadd.s32 %s269, 1
      %p273 = scmp.eq.s32.totalorder %s25, 1
      %p274 = scmp.ne.s32.totalorder %s269, %s271
      %p275 = scmp.eq.s32.totalorder %s25, 0
      %p276 = por %p274, %p275
      %p277 = scmp.ne.s32.totalorder %s269, %s271
      %p278 = scmp.eq.s32.totalorder %s30, 1
      %p279 = por %p277, %p278
      %p280 = scmp.ne.s32.totalorder %s271, %s272
      %p281 = scmp.eq.s32.totalorder %s30, 0
      %p282 = por %p280, %p281
      %p283 = scmp.ne.s32.totalorder %s271, %s272
      %p284 = scmp.eq.s32.totalorder %s31, 1
      %p285 = por %p283, %p284
      %p287 = scmp.ne.s32.totalorder %s272, %s286
      %p288 = scmp.eq.s32.totalorder %s31, 0
      %p289 = por %p287, %p288
      %s291 = sadd.s32 %s290, 1
      %p294 = scmp.eq.s32.totalorder %s25, 1
      %p295 = scmp.ne.s32.totalorder %s290, %s292
      %p296 = scmp.eq.s32.totalorder %s25, 0
      %p297 = por %p295, %p296
      %p298 = scmp.ne.s32.totalorder %s290, %s292
      %p299 = scmp.eq.s32.totalorder %s30, 1
      %p300 = por %p298, %p299
      %p301 = scmp.ne.s32.totalorder %s292, %s293
      %p302 = scmp.eq.s32.totalorder %s30, 0
      %p303 = por %p301, %p302
      %p304 = scmp.ne.s32.totalorder %s292, %s293
      %p305 = scmp.eq.s32.totalorder %s31, 1
      %p306 = por %p304, %p305
      %p308 = scmp.ne.s32.totalorder %s293, %s307
      %p309 = scmp.eq.s32.totalorder %s31, 0
      %p310 = por %p308, %p309
      %s312 = sadd.s32 %s311, 1
      %p315 = scmp.eq.s32.totalorder %s25, 1
      %p316 = scmp.ne.s32.totalorder %s311, %s313
      %p317 = scmp.eq.s32.totalorder %s25, 0
      %p318 = por %p316, %p317
      %p319 = scmp.ne.s32.totalorder %s311, %s313
      %p320 = scmp.eq.s32.totalorder %s30, 1
      %p321 = por %p319, %p320
      %p322 = scmp.ne.s32.totalorder %s313, %s314
      %p323 = scmp.eq.s32.totalorder %s30, 0
      %p324 = por %p322, %p323
      %p325 = scmp.ne.s32.totalorder %s313, %s314
      %p326 = scmp.eq.s32.totalorder %s31, 1
      %p327 = por %p325, %p326
      %p329 = scmp.ne.s32.totalorder %s314, %s328
      %p330 = scmp.eq.s32.totalorder %s31, 0
      %p331 = por %p329, %p330
      %s333 = sadd.s32 %s332, 1
      %p336 = scmp.eq.s32.totalorder %s25, 1
      %p337 = scmp.ne.s32.totalorder %s332, %s334
      %p338 = scmp.eq.s32.totalorder %s25, 0
      %p339 = por %p337, %p338
      %p340 = scmp.ne.s32.totalorder %s332, %s334
      %p341 = scmp.eq.s32.totalorder %s30, 1
      %p342 = por %p340, %p341
      %p343 = scmp.ne.s32.totalorder %s334, %s335
      %p344 = scmp.eq.s32.totalorder %s30, 0
      %p345 = por %p343, %p344
      %p346 = scmp.ne.s32.totalorder %s334, %s335
      %p347 = scmp.eq.s32.totalorder %s31, 1
      %p348 = por %p346, %p347
      %p350 = scmp.ne.s32.totalorder %s335, %s349
      %p351 = scmp.eq.s32.totalorder %s31, 0
      %p352 = por %p350, %p351
      %s354 = sadd.s32 %s353, 1
      %p357 = scmp.eq.s32.totalorder %s25, 1
      %p358 = scmp.ne.s32.totalorder %s353, %s355
      %p359 = scmp.eq.s32.totalorder %s25, 0
      %p360 = por %p358, %p359
      %p361 = scmp.ne.s32.totalorder %s353, %s355
      %p362 = scmp.eq.s32.totalorder %s30, 1
      %p363 = por %p361, %p362
      %p364 = scmp.ne.s32.totalorder %s355, %s356
      %p365 = scmp.eq.s32.totalorder %s30, 0
      %p366 = por %p364, %p365
      %p367 = scmp.ne.s32.totalorder %s355, %s356
      %p368 = scmp.eq.s32.totalorder %s31, 1
      %p369 = por %p367, %p368
      %p371 = scmp.ne.s32.totalorder %s356, %s370
      %p372 = scmp.eq.s32.totalorder %s31, 0
      %p373 = por %p371, %p372
      %s374 = ssub.s32 %s25, %s32
      %p375 = scmp.eq.s32.totalorder %s374, 0
      %s377 = sadd.s32 %s376, 1
      %s378 = scalar_select %p375, %s376, %s377
      %p381 = pneg %p375
      %p382 = scmp.eq.s32.totalorder %s25, 1
      %p383 = por %p381, %p382
      %p384 = scmp.ne.s32.totalorder %s376, %s379
      %p385 = scmp.eq.s32.totalorder %s25, 0
      %p386 = por %p384, %p385
      %p387 = scmp.ne.s32.totalorder %s376, %s379
      %p388 = scmp.eq.s32.totalorder %s30, 1
      %p389 = por %p387, %p388
      %p390 = scmp.ne.s32.totalorder %s379, %s380
      %p391 = scmp.eq.s32.totalorder %s30, 0
      %p392 = por %p390, %p391
      %p393 = scmp.ne.s32.totalorder %s379, %s380
      %p394 = scmp.eq.s32.totalorder %s31, 1
      %p395 = por %p393, %p394
      %p397 = scmp.ne.s32.totalorder %s380, %s396
      %p398 = scmp.eq.s32.totalorder %s31, 0
      %p399 = por %p397, %p398
      %p400 = scmp.le.s32.totalorder 1, %s25
      %p401 = scmp.lt.s32.totalorder %s25, 3
      %p402 = pnand %p400, %p401
      %p403 = pneg %p402
      // Predicated region
      $region9: #{feature_extraction_forward.1} parent=5 // pred_check
        _
      $region10: #{feature_extraction_forward.1} parent=5 // pred_check_branch
        %405 = sbr.rel (%p402) target = $region12
      $region11: #{feature_extraction_forward.1} parent=5 // pred_region
        %s406 = ssub.s32 %s25, 1
        // Predicated region
        $region13: #{feature_extraction_forward.1} parent=11 // pred_check
          %p407 = pneg %p72
        $region14: #{feature_extraction_forward.1} parent=11 // pred_check_branch
          %409 = sbr.rel (%p407) target = $region16
        $region15: #{feature_extraction_forward.1} parent=11 // pred_region
          _
        $region16: #{feature_extraction_forward.1} parent=11 // pred_fallthru
          _
        // Predicated region
        $region17: #{feature_extraction_forward.1} parent=11 // pred_check
          %p410 = pneg %p93
        $region18: #{feature_extraction_forward.1} parent=11 // pred_check_branch
          %412 = sbr.rel (%p410) target = $region20
        $region19: #{feature_extraction_forward.1} parent=11 // pred_region
          _
        $region20: #{feature_extraction_forward.1} parent=11 // pred_fallthru
          _
        // Predicated region
        $region21: #{feature_extraction_forward.1} parent=11 // pred_check
          %p413 = pneg %p114
        $region22: #{feature_extraction_forward.1} parent=11 // pred_check_branch
          %415 = sbr.rel (%p413) target = $region24
        $region23: #{feature_extraction_forward.1} parent=11 // pred_region
          _
        $region24: #{feature_extraction_forward.1} parent=11 // pred_fallthru
          _
        // Predicated region
        $region25: #{feature_extraction_forward.1} parent=11 // pred_check
          %p416 = pneg %p135
        $region26: #{feature_extraction_forward.1} parent=11 // pred_check_branch
          %418 = sbr.rel (%p416) target = $region28
        $region27: #{feature_extraction_forward.1} parent=11 // pred_region
          _
        $region28: #{feature_extraction_forward.1} parent=11 // pred_fallthru
          _
        // Predicated region
        $region29: #{feature_extraction_forward.1} parent=11 // pred_check
          %p419 = pneg %p156
        $region30: #{feature_extraction_forward.1} parent=11 // pred_check_branch
          %421 = sbr.rel (%p419) target = $region32
        $region31: #{feature_extraction_forward.1} parent=11 // pred_region
          _
        $region32: #{feature_extraction_forward.1} parent=11 // pred_fallthru
          _
        // Predicated region
        $region33: #{feature_extraction_forward.1} parent=11 // pred_check
          %p422 = pneg %p177
        $region34: #{feature_extraction_forward.1} parent=11 // pred_check_branch
          %424 = sbr.rel (%p422) target = $region36
        $region35: #{feature_extraction_forward.1} parent=11 // pred_region
          _
        $region36: #{feature_extraction_forward.1} parent=11 // pred_fallthru
          _
        // Predicated region
        $region37: #{feature_extraction_forward.1} parent=11 // pred_check
          %p425 = pneg %p198
        $region38: #{feature_extraction_forward.1} parent=11 // pred_check_branch
          %427 = sbr.rel (%p425) target = $region40
        $region39: #{feature_extraction_forward.1} parent=11 // pred_region
          _
        $region40: #{feature_extraction_forward.1} parent=11 // pred_fallthru
          _
        // Predicated region
        $region41: #{feature_extraction_forward.1} parent=11 // pred_check
          %p428 = pneg %p219
        $region42: #{feature_extraction_forward.1} parent=11 // pred_check_branch
          %430 = sbr.rel (%p428) target = $region44
        $region43: #{feature_extraction_forward.1} parent=11 // pred_region
          _
        $region44: #{feature_extraction_forward.1} parent=11 // pred_fallthru
          _
        // Predicated region
        $region45: #{feature_extraction_forward.1} parent=11 // pred_check
          %p431 = pneg %p240
        $region46: #{feature_extraction_forward.1} parent=11 // pred_check_branch
          %433 = sbr.rel (%p431) target = $region48
        $region47: #{feature_extraction_forward.1} parent=11 // pred_region
          _
        $region48: #{feature_extraction_forward.1} parent=11 // pred_fallthru
          _
        // Predicated region
        $region49: #{feature_extraction_forward.1} parent=11 // pred_check
          %p434 = pneg %p261
        $region50: #{feature_extraction_forward.1} parent=11 // pred_check_branch
          %436 = sbr.rel (%p434) target = $region52
        $region51: #{feature_extraction_forward.1} parent=11 // pred_region
          _
        $region52: #{feature_extraction_forward.1} parent=11 // pred_fallthru
          _
        // Predicated region
        $region53: #{feature_extraction_forward.1} parent=11 // pred_check
          %p437 = pneg %p282
        $region54: #{feature_extraction_forward.1} parent=11 // pred_check_branch
          %439 = sbr.rel (%p437) target = $region56
        $region55: #{feature_extraction_forward.1} parent=11 // pred_region
          _
        $region56: #{feature_extraction_forward.1} parent=11 // pred_fallthru
          _
        // Predicated region
        $region57: #{feature_extraction_forward.1} parent=11 // pred_check
          %p440 = pneg %p303
        $region58: #{feature_extraction_forward.1} parent=11 // pred_check_branch
          %442 = sbr.rel (%p440) target = $region60
        $region59: #{feature_extraction_forward.1} parent=11 // pred_region
          _
        $region60: #{feature_extraction_forward.1} parent=11 // pred_fallthru
          _
        // Predicated region
        $region61: #{feature_extraction_forward.1} parent=11 // pred_check
          %p443 = pneg %p324
        $region62: #{feature_extraction_forward.1} parent=11 // pred_check_branch
          %445 = sbr.rel (%p443) target = $region64
        $region63: #{feature_extraction_forward.1} parent=11 // pred_region
          _
        $region64: #{feature_extraction_forward.1} parent=11 // pred_fallthru
          _
        // Predicated region
        $region65: #{feature_extraction_forward.1} parent=11 // pred_check
          %p446 = pneg %p345
        $region66: #{feature_extraction_forward.1} parent=11 // pred_check_branch
          %448 = sbr.rel (%p446) target = $region68
        $region67: #{feature_extraction_forward.1} parent=11 // pred_region
          _
        $region68: #{feature_extraction_forward.1} parent=11 // pred_fallthru
          _
        // Predicated region
        $region69: #{feature_extraction_forward.1} parent=11 // pred_check
          %p449 = pneg %p366
        $region70: #{feature_extraction_forward.1} parent=11 // pred_check_branch
          %451 = sbr.rel (%p449) target = $region72
        $region71: #{feature_extraction_forward.1} parent=11 // pred_region
          _
        $region72: #{feature_extraction_forward.1} parent=11 // pred_fallthru
          _
      $region12: #{feature_extraction_forward.1} parent=5 // pred_fallthru
        _
      %p452 = scmp.lt.s32.totalorder %s25, 2
      // Predicated region
      $region73: #{feature_extraction_forward.1} parent=5 // pred_check
        %p453 = pneg %p452
      $region74: #{feature_extraction_forward.1} parent=5 // pred_check_branch
        %455 = sbr.rel (%p453) target = $region76
      $region75: #{feature_extraction_forward.1} parent=5 // pred_region
        // Predicated region
        $region77: #{feature_extraction_forward.1} parent=75 // pred_check
          %p456 = pneg %p45
        $region78: #{feature_extraction_forward.1} parent=75 // pred_check_branch
          %458 = sbr.rel (%p456) target = $region80
        $region79: #{feature_extraction_forward.1} parent=75 // pred_region
          %s459 = smul.u32 2, %s25
          %p460 = scmp.lt.s32.totalorder %s459, 3
          %s461 = scalar_select %p460, %s459, 3
          %s462 = smul.addr %s461, 8
          %s463 = smul.addr %s462, 4
          %s464 = scalar_lea.vmem %s0, %s463
          %s465 = smul.u32 2, %s25
        $region80: #{feature_extraction_forward.1} parent=75 // pred_fallthru
          _
      $region76: #{feature_extraction_forward.1} parent=5 // pred_fallthru
        _
      %p466 = scmp.le.s32.totalorder 1, %s25
      %p467 = scmp.lt.s32.totalorder %s25, 3
      %p468 = pnand %p466, %p467
      %p469 = pneg %p468
      // Predicated region
      $region81: #{feature_extraction_forward.1} parent=5 // pred_check
        _
      $region82: #{feature_extraction_forward.1} parent=5 // pred_check_branch
        %471 = sbr.rel (%p468) target = $region84
      $region83: #{feature_extraction_forward.1} parent=5 // pred_region
        %s472 = ssub.s32 %s25, 1
        %s473 = smul.u32 2, %s30
        %p474 = scmp.lt.s32.totalorder %s473, 3
        %s475 = scalar_select %p474, %s473, 3
        %s476 = smul.addr %s475, 8
        %s477 = smul.addr %s476, 4
        %s478 = scalar_lea.vmem %s0, %s477
        %p479 = pneg %p51
        %p480 = pneg %p48
        %p481 = pneg %p72
        %p482 = pneg %p69
        %p483 = pneg %p93
        %p484 = pneg %p90
        %p485 = pneg %p114
        %p486 = pneg %p111
        %p487 = pneg %p135
        %p488 = pneg %p132
        %p489 = pneg %p156
        %p490 = pneg %p153
        %p491 = pneg %p177
        %p492 = pneg %p174
        %p493 = pneg %p198
        %p494 = pneg %p195
        %p495 = pneg %p219
        %p496 = pneg %p216
        %p497 = pneg %p240
        %p498 = pneg %p237
        %p499 = pneg %p261
        %p500 = pneg %p258
        %p501 = pneg %p282
        %p502 = pneg %p279
        %p503 = pneg %p303
        %p504 = pneg %p300
        %p505 = pneg %p324
        %p506 = pneg %p321
        %p507 = pneg %p345
        %p508 = pneg %p342
        %p509 = pneg %p366
        %p510 = pneg %p363
        %p511 = pneg %p392
        %p512 = pneg %p389
        %s513 = sand.u32 %s379, 1
        %s514 = scalar_lea.sflag [#allocation3], %s513
        %s515 = sand.u32 %s379, 1
        %s516 = smul.addr %s515, 128
        %s517 = scalar_lea.vmem [#allocation2], %s516
        %s518 = smul.u32 2, %s30
        %p519 = scmp.lt.s32.totalorder %s518, 3
        %s520 = scalar_select %p519, %s518, 3
        %s521 = smul.addr %s520, 8
        %s522 = smul.addr %s521, 4
        %s523 = scalar_lea.vmem %s0, %s522
        %s524 = smul.u32 2, %s30
        %s525 = smul.u32 2, %s30
        %v527 = vld [vmem:[%s1] sm:$0xff]
        %v528 = vld [vmem:[%s1 + $0x8] sm:$0xff]
        %v529 = vld [vmem:[%s1 + $0x10] sm:$0xff]
        %v530 = vld [vmem:[%s1 + $0x18] sm:$0xff]
        %v531 = vld [vmem:[%s1 + $0x20] sm:$0xff]
        %v532 = vld [vmem:[%s1 + $0x28] sm:$0xff]
        %v533 = vld [vmem:[%s1 + $0x30] sm:$0xff]
        %v534 = vld [vmem:[%s1 + $0x38] sm:$0xff]
        %v535 = vld [vmem:[%s1 + $0x40] sm:$0xff]
        %v536 = vld [vmem:[%s1 + $0x48] sm:$0xff]
        %v537 = vld [vmem:[%s1 + $0x50] sm:$0xff]
        %v538 = vld [vmem:[%s1 + $0x58] sm:$0xff]
        %v539 = vld [vmem:[%s1 + $0x60] sm:$0xff]
        %v540 = vld [vmem:[%s1 + $0x68] sm:$0xff]
        %v541 = vld [vmem:[%s1 + $0x70] sm:$0xff]
        %v542 = vld [vmem:[%s1 + $0x78] sm:$0xff]
        %v543 = vld [vmem:[%s523] sm:$0xf]
        %v544 = vld [vmem:[%s523 + $0x4] sm:$0xf]
        %v545 = vld [vmem:[%s523 + $0x8] sm:$0xf]
        %v546 = vld [vmem:[%s523 + $0xc] sm:$0xf]
        %v547 = vld [vmem:[%s523 + $0x10] sm:$0xf]
        %v548 = vld [vmem:[%s523 + $0x14] sm:$0xf]
        %v549 = vld [vmem:[%s523 + $0x18] sm:$0xf]
        %v550 = vld [vmem:[%s523 + $0x1c] sm:$0xf]
        %v551 = vld [vmem:[%s523 + $0x20] sm:$0xf]
        %v552 = vld [vmem:[%s523 + $0x24] sm:$0xf]
        %v553 = vld [vmem:[%s523 + $0x28] sm:$0xf]
        %v554 = vld [vmem:[%s523 + $0x2c] sm:$0xf]
        %v555 = vld [vmem:[%s523 + $0x30] sm:$0xf]
        %v556 = vld [vmem:[%s523 + $0x34] sm:$0xf]
        %v557 = vld [vmem:[%s523 + $0x38] sm:$0xf]
        %v558 = vld [vmem:[%s523 + $0x3c] sm:$0xf]
        %v559 = vld [vmem:[%s8] sm:$0xf]
        %v560 = vld [vmem:[%s8 + $0x4] sm:$0xf]
        %v561 = vld [vmem:[%s8 + $0x8] sm:$0xf]
        %v562 = vld [vmem:[%s8 + $0xc] sm:$0xf]
        %v563 = vld [vmem:[%s8 + $0x10] sm:$0xf]
        %v564 = vld [vmem:[%s8 + $0x14] sm:$0xf]
        %v565 = vld [vmem:[%s8 + $0x18] sm:$0xf]
        %v566 = vld [vmem:[%s8 + $0x1c] sm:$0xf]
        %v567 = vld [vmem:[%s15] sm:$0x1]
        %v568 = vperm.slane %v567, 0
        %v585 = vunpack.c.l.b16 %v543
        %v586 = vunpack.c.l.b16 %v544
        %v587 = vunpack.c.l.b16 %v545
        %v588 = vunpack.c.l.b16 %v546
        %v589 = vunpack.c.l.b16 %v547
        %v590 = vunpack.c.l.b16 %v548
        %v591 = vunpack.c.l.b16 %v549
        %v592 = vunpack.c.l.b16 %v550
        %v593 = vunpack.c.l.b16 %v551
        %v594 = vunpack.c.l.b16 %v552
        %v595 = vunpack.c.l.b16 %v553
        %v596 = vunpack.c.l.b16 %v554
        %v597 = vunpack.c.l.b16 %v555
        %v598 = vunpack.c.l.b16 %v556
        %v599 = vunpack.c.l.b16 %v557
        %v600 = vunpack.c.l.b16 %v558
        %v601 = vpack.c.b16 %v586, %v585
        %v602 = vpack.c.b16 %v588, %v587
        %v603 = vpack.c.b16 %v590, %v589
        %v604 = vpack.c.b16 %v592, %v591
        %v605 = vpack.c.b16 %v594, %v593
        %v606 = vpack.c.b16 %v596, %v595
        %v607 = vpack.c.b16 %v598, %v597
        %v608 = vpack.c.b16 %v600, %v599
        %v617 = vunpack.c.l.b16 %v559
        %v618 = vunpack.c.l.b16 %v560
        %v619 = vunpack.c.l.b16 %v561
        %v620 = vunpack.c.l.b16 %v562
        %v621 = vunpack.c.l.b16 %v563
        %v622 = vunpack.c.l.b16 %v564
        %v623 = vunpack.c.l.b16 %v565
        %v624 = vunpack.c.l.b16 %v566
        %v625 = vpack.c.b16 %v618, %v617
        %v626 = vpack.c.b16 %v620, %v619
        %v627 = vpack.c.b16 %v622, %v621
        %v628 = vpack.c.b16 %v624, %v623
        %vm633 = vcmask 523264
        %v635 = vsel %vm633, %v601, 0
        %v638 = vsel %vm633, %v602, 0
        %v641 = vsel %vm633, %v603, 0
        %v644 = vsel %vm633, %v604, 0
        %v647 = vsel %vm633, %v605, 0
        %v650 = vsel %vm633, %v606, 0
        %v653 = vsel %vm633, %v607, 0
        %v656 = vsel %vm633, %v608, 0
        %658 = vmatpush.bf16.msra.mxu0 0
        %659 = vmatpush.bf16.msra.mxu0 0
        %660 = vmatpush.bf16.msra.mxu0 0
        %661 = vmatpush.bf16.msra.mxu0 0
        %662 = vmatpush.bf16.msra.mxu0 %v628
        %663 = vmatpush.bf16.msra.mxu0 %v627
        %664 = vmatpush.bf16.msra.mxu0 %v626
        %665 = vmatpush.bf16.msra.mxu0 %v625
        %666 = vmatmul.bf16.gmra.mxu0 %v635
        %v667 = vpop.f32.mrf.mxu0
        %v668 = vadd.f32 %v568, %v667
        %v669 = vpop.f32.mrf.mxu0
        %v670 = vadd.f32 %v568, %v669
        %671 = vmatmul.bf16.gmra.mxu0 %v638
        %v672 = vpop.f32.mrf.mxu0
        %v673 = vadd.f32 %v568, %v672
        %v674 = vpop.f32.mrf.mxu0
        %v675 = vadd.f32 %v568, %v674
        %676 = vmatmul.bf16.gmra.mxu0 %v641
        %v677 = vpop.f32.mrf.mxu0
        %v678 = vadd.f32 %v568, %v677
        %v679 = vpop.f32.mrf.mxu0
        %v680 = vadd.f32 %v568, %v679
        %681 = vmatmul.bf16.gmra.mxu0 %v644
        %v682 = vpop.f32.mrf.mxu0
        %v683 = vadd.f32 %v568, %v682
        %v684 = vpop.f32.mrf.mxu0
        %v685 = vadd.f32 %v568, %v684
        %686 = vmatmul.bf16.gmra.mxu0 %v647
        %v687 = vpop.f32.mrf.mxu0
        %v688 = vadd.f32 %v568, %v687
        %v689 = vpop.f32.mrf.mxu0
        %v690 = vadd.f32 %v568, %v689
        %691 = vmatmul.bf16.gmra.mxu0 %v650
        %v692 = vpop.f32.mrf.mxu0
        %v693 = vadd.f32 %v568, %v692
        %v694 = vpop.f32.mrf.mxu0
        %v695 = vadd.f32 %v568, %v694
        %696 = vmatmul.bf16.gmra.mxu0 %v653
        %v697 = vpop.f32.mrf.mxu0
        %v698 = vadd.f32 %v568, %v697
        %v699 = vpop.f32.mrf.mxu0
        %v700 = vadd.f32 %v568, %v699
        %701 = vmatmul.bf16.gmra.mxu0 %v656
        %v702 = vpop.f32.mrf.mxu0
        %v703 = vadd.f32 %v568, %v702
        %v704 = vpop.f32.mrf.mxu0
        %v705 = vadd.f32 %v568, %v704
        %706 = vdwg.mxu0
        %v707 = vld [vmem:[%s9] sm:$0xf]
        %v708 = vld [vmem:[%s9 + $0x4] sm:$0xf]
        %v709 = vld [vmem:[%s9 + $0x8] sm:$0xf]
        %v710 = vld [vmem:[%s9 + $0xc] sm:$0xf]
        %v711 = vld [vmem:[%s9 + $0x10] sm:$0xf]
        %v712 = vld [vmem:[%s9 + $0x14] sm:$0xf]
        %v713 = vld [vmem:[%s9 + $0x18] sm:$0xf]
        %v714 = vld [vmem:[%s9 + $0x1c] sm:$0xf]
        %v715 = vld [vmem:[%s9 + $0x20] sm:$0xf]
        %v716 = vld [vmem:[%s9 + $0x24] sm:$0xf]
        %v717 = vld [vmem:[%s9 + $0x28] sm:$0xf]
        %v718 = vld [vmem:[%s9 + $0x2c] sm:$0xf]
        %v719 = vld [vmem:[%s9 + $0x30] sm:$0xf]
        %v720 = vld [vmem:[%s9 + $0x34] sm:$0xf]
        %v721 = vld [vmem:[%s9 + $0x38] sm:$0xf]
        %v722 = vld [vmem:[%s9 + $0x3c] sm:$0xf]
        %v723 = vpack.c.bf16 %v670, %v668
        %v724 = vpack.c.bf16 %v675, %v673
        %v725 = vpack.c.bf16 %v680, %v678
        %v726 = vpack.c.bf16 %v685, %v683
        %v727 = vpack.c.bf16 %v690, %v688
        %v728 = vpack.c.bf16 %v695, %v693
        %v729 = vpack.c.bf16 %v700, %v698
        %v730 = vpack.c.bf16 %v705, %v703
        %v731 = vld [vmem:[%s15 + $0x1] sm:$0x1]
        %v732 = vperm.slane %v731, 0
        %v749 = vunpack.c.l.b16 %v707
        %v750 = vunpack.c.l.b16 %v708
        %v751 = vunpack.c.l.b16 %v709
        %v752 = vunpack.c.l.b16 %v710
        %v753 = vunpack.c.l.b16 %v711
        %v754 = vunpack.c.l.b16 %v712
        %v755 = vunpack.c.l.b16 %v713
        %v756 = vunpack.c.l.b16 %v714
        %v757 = vunpack.c.l.b16 %v715
        %v758 = vunpack.c.l.b16 %v716
        %v759 = vunpack.c.l.b16 %v717
        %v760 = vunpack.c.l.b16 %v718
        %v761 = vunpack.c.l.b16 %v719
        %v762 = vunpack.c.l.b16 %v720
        %v763 = vunpack.c.l.b16 %v721
        %v764 = vunpack.c.l.b16 %v722
        %v765 = vpack.c.b16 %v750, %v749
        %v766 = vpack.c.b16 %v752, %v751
        %v767 = vpack.c.b16 %v754, %v753
        %v768 = vpack.c.b16 %v756, %v755
        %v769 = vpack.c.b16 %v758, %v757
        %v770 = vpack.c.b16 %v760, %v759
        %v771 = vpack.c.b16 %v762, %v761
        %v772 = vpack.c.b16 %v764, %v763
        %781 = vmatpush.bf16.msra.mxu0 %v772
        %782 = vmatpush.bf16.msra.mxu0 %v771
        %783 = vmatpush.bf16.msra.mxu0 %v770
        %784 = vmatpush.bf16.msra.mxu0 %v769
        %785 = vmatpush.bf16.msra.mxu0 %v768
        %786 = vmatpush.bf16.msra.mxu0 %v767
        %787 = vmatpush.bf16.msra.mxu0 %v766
        %788 = vmatpush.bf16.msra.mxu0 %v765
        %789 = vmatmul.bf16.gmra.mxu0 %v723
        %v790 = vpop.f32.mrf.mxu0
        %v791 = vadd.f32 %v732, %v790
        %v792 = vpop.f32.mrf.mxu0
        %v793 = vadd.f32 %v732, %v792
        %794 = vmatmul.bf16.gmra.mxu0 %v724
        %v795 = vpop.f32.mrf.mxu0
        %v796 = vadd.f32 %v732, %v795
        %v797 = vpop.f32.mrf.mxu0
        %v798 = vadd.f32 %v732, %v797
        %799 = vmatmul.bf16.gmra.mxu0 %v725
        %v800 = vpop.f32.mrf.mxu0
        %v801 = vadd.f32 %v732, %v800
        %v802 = vpop.f32.mrf.mxu0
        %v803 = vadd.f32 %v732, %v802
        %804 = vmatmul.bf16.gmra.mxu0 %v726
        %v805 = vpop.f32.mrf.mxu0
        %v806 = vadd.f32 %v732, %v805
        %v807 = vpop.f32.mrf.mxu0
        %v808 = vadd.f32 %v732, %v807
        %809 = vmatmul.bf16.gmra.mxu0 %v727
        %v810 = vpop.f32.mrf.mxu0
        %v811 = vadd.f32 %v732, %v810
        %v812 = vpop.f32.mrf.mxu0
        %v813 = vadd.f32 %v732, %v812
        %814 = vmatmul.bf16.gmra.mxu0 %v728
        %v815 = vpop.f32.mrf.mxu0
        %v816 = vadd.f32 %v732, %v815
        %v817 = vpop.f32.mrf.mxu0
        %v818 = vadd.f32 %v732, %v817
        %819 = vmatmul.bf16.gmra.mxu0 %v729
        %v820 = vpop.f32.mrf.mxu0
        %v821 = vadd.f32 %v732, %v820
        %v822 = vpop.f32.mrf.mxu0
        %v823 = vadd.f32 %v732, %v822
        %824 = vmatmul.bf16.gmra.mxu0 %v730
        %v825 = vpop.f32.mrf.mxu0
        %v826 = vadd.f32 %v732, %v825
        %v827 = vpop.f32.mrf.mxu0
        %v828 = vadd.f32 %v732, %v827
        %829 = vdwg.mxu0
        %v830 = vxor.u32 %v791, 2147483648
        %v831 = vxor.u32 %v793, 2147483648
        %v832 = vxor.u32 %v796, 2147483648
        %v833 = vxor.u32 %v798, 2147483648
        %v834 = vxor.u32 %v801, 2147483648
        %v835 = vxor.u32 %v803, 2147483648
        %v836 = vxor.u32 %v806, 2147483648
        %v837 = vxor.u32 %v808, 2147483648
        %v838 = vxor.u32 %v811, 2147483648
        %v839 = vxor.u32 %v813, 2147483648
        %v840 = vxor.u32 %v816, 2147483648
        %v841 = vxor.u32 %v818, 2147483648
        %v842 = vxor.u32 %v821, 2147483648
        %v843 = vxor.u32 %v823, 2147483648
        %v844 = vxor.u32 %v826, 2147483648
        %v845 = vxor.u32 %v828, 2147483648
        %v846 = vmul.f32 %v830, 1.442695
        %v847 = vpow.pop %v846
        %v848 = vmul.f32 %v831, 1.442695
        %v849 = vpow.pop %v848
        %v850 = vmul.f32 %v832, 1.442695
        %v851 = vpow.pop %v850
        %v852 = vmul.f32 %v833, 1.442695
        %v853 = vpow.pop %v852
        %v854 = vmul.f32 %v834, 1.442695
        %v855 = vpow.pop %v854
        %v856 = vmul.f32 %v835, 1.442695
        %v857 = vpow.pop %v856
        %v858 = vmul.f32 %v836, 1.442695
        %v859 = vpow.pop %v858
        %v860 = vmul.f32 %v837, 1.442695
        %v861 = vpow.pop %v860
        %v862 = vmul.f32 %v838, 1.442695
        %v863 = vpow.pop %v862
        %v864 = vmul.f32 %v839, 1.442695
        %v865 = vpow.pop %v864
        %v866 = vmul.f32 %v840, 1.442695
        %v867 = vpow.pop %v866
        %v868 = vmul.f32 %v841, 1.442695
        %v869 = vpow.pop %v868
        %v870 = vmul.f32 %v842, 1.442695
        %v871 = vpow.pop %v870
        %v872 = vmul.f32 %v843, 1.442695
        %v873 = vpow.pop %v872
        %v874 = vmul.f32 %v844, 1.442695
        %v875 = vpow.pop %v874
        %v876 = vmul.f32 %v845, 1.442695
        %v877 = vpow.pop %v876
        %v878 = vadd.f32 %v847, 1.0
        %v879 = vadd.f32 %v849, 1.0
        %v880 = vadd.f32 %v851, 1.0
        %v881 = vadd.f32 %v853, 1.0
        %v882 = vadd.f32 %v855, 1.0
        %v883 = vadd.f32 %v857, 1.0
        %v884 = vadd.f32 %v859, 1.0
        %v885 = vadd.f32 %v861, 1.0
        %v886 = vadd.f32 %v863, 1.0
        %v887 = vadd.f32 %v865, 1.0
        %v888 = vadd.f32 %v867, 1.0
        %v889 = vadd.f32 %v869, 1.0
        %v890 = vadd.f32 %v871, 1.0
        %v891 = vadd.f32 %v873, 1.0
        %v892 = vadd.f32 %v875, 1.0
        %v893 = vadd.f32 %v877, 1.0
        %v894 = vrcp.pop %v878
        %v895 = vmul.f32 %v878, %v894
        %v896 = vsub.f32 1.0, %v895
        %v897 = vmul.f32 %v894, %v896
        %v898 = vadd.f32 %v894, %v897
        %vm899 = vweird.f32 %v878
        %vm900 = vweird.f32 %v894
        %vm901 = vmor %vm899, %vm900
        %v902 = vsel %vm901, %v894, %v898
        %v903 = vand.u32 2147483647, %v878
        %vm904 = vcmp.eq.f32.partialorder %v903, 8.507059e+37
        %v905 = vand.u32 %v878, 2147483648
        %v906 = vor.u32 1.1754944e-38, %v905
        %v907 = vsel %vm904, %v906, %v902
        %v908 = vmul.f32 1.0, %v907
        %v909 = vrcp.pop %v879
        %v910 = vmul.f32 %v879, %v909
        %v911 = vsub.f32 1.0, %v910
        %v912 = vmul.f32 %v909, %v911
        %v913 = vadd.f32 %v909, %v912
        %vm914 = vweird.f32 %v879
        %vm915 = vweird.f32 %v909
        %vm916 = vmor %vm914, %vm915
        %v917 = vsel %vm916, %v909, %v913
        %v918 = vand.u32 2147483647, %v879
        %vm919 = vcmp.eq.f32.partialorder %v918, 8.507059e+37
        %v920 = vand.u32 %v879, 2147483648
        %v921 = vor.u32 1.1754944e-38, %v920
        %v922 = vsel %vm919, %v921, %v917
        %v923 = vmul.f32 1.0, %v922
        %v924 = vrcp.pop %v880
        %v925 = vmul.f32 %v880, %v924
        %v926 = vsub.f32 1.0, %v925
        %v927 = vmul.f32 %v924, %v926
        %v928 = vadd.f32 %v924, %v927
        %vm929 = vweird.f32 %v880
        %vm930 = vweird.f32 %v924
        %vm931 = vmor %vm929, %vm930
        %v932 = vsel %vm931, %v924, %v928
        %v933 = vand.u32 2147483647, %v880
        %vm934 = vcmp.eq.f32.partialorder %v933, 8.507059e+37
        %v935 = vand.u32 %v880, 2147483648
        %v936 = vor.u32 1.1754944e-38, %v935
        %v937 = vsel %vm934, %v936, %v932
        %v938 = vmul.f32 1.0, %v937
        %v939 = vrcp.pop %v881
        %v940 = vmul.f32 %v881, %v939
        %v941 = vsub.f32 1.0, %v940
        %v942 = vmul.f32 %v939, %v941
        %v943 = vadd.f32 %v939, %v942
        %vm944 = vweird.f32 %v881
        %vm945 = vweird.f32 %v939
        %vm946 = vmor %vm944, %vm945
        %v947 = vsel %vm946, %v939, %v943
        %v948 = vand.u32 2147483647, %v881
        %vm949 = vcmp.eq.f32.partialorder %v948, 8.507059e+37
        %v950 = vand.u32 %v881, 2147483648
        %v951 = vor.u32 1.1754944e-38, %v950
        %v952 = vsel %vm949, %v951, %v947
        %v953 = vmul.f32 1.0, %v952
        %v954 = vrcp.pop %v882
        %v955 = vmul.f32 %v882, %v954
        %v956 = vsub.f32 1.0, %v955
        %v957 = vmul.f32 %v954, %v956
        %v958 = vadd.f32 %v954, %v957
        %vm959 = vweird.f32 %v882
        %vm960 = vweird.f32 %v954
        %vm961 = vmor %vm959, %vm960
        %v962 = vsel %vm961, %v954, %v958
        %v963 = vand.u32 2147483647, %v882
        %vm964 = vcmp.eq.f32.partialorder %v963, 8.507059e+37
        %v965 = vand.u32 %v882, 2147483648
        %v966 = vor.u32 1.1754944e-38, %v965
        %v967 = vsel %vm964, %v966, %v962
        %v968 = vmul.f32 1.0, %v967
        %v969 = vrcp.pop %v883
        %v970 = vmul.f32 %v883, %v969
        %v971 = vsub.f32 1.0, %v970
        %v972 = vmul.f32 %v969, %v971
        %v973 = vadd.f32 %v969, %v972
        %vm974 = vweird.f32 %v883
        %vm975 = vweird.f32 %v969
        %vm976 = vmor %vm974, %vm975
        %v977 = vsel %vm976, %v969, %v973
        %v978 = vand.u32 2147483647, %v883
        %vm979 = vcmp.eq.f32.partialorder %v978, 8.507059e+37
        %v980 = vand.u32 %v883, 2147483648
        %v981 = vor.u32 1.1754944e-38, %v980
        %v982 = vsel %vm979, %v981, %v977
        %v983 = vmul.f32 1.0, %v982
        %v984 = vrcp.pop %v884
        %v985 = vmul.f32 %v884, %v984
        %v986 = vsub.f32 1.0, %v985
        %v987 = vmul.f32 %v984, %v986
        %v988 = vadd.f32 %v984, %v987
        %vm989 = vweird.f32 %v884
        %vm990 = vweird.f32 %v984
        %vm991 = vmor %vm989, %vm990
        %v992 = vsel %vm991, %v984, %v988
        %v993 = vand.u32 2147483647, %v884
        %vm994 = vcmp.eq.f32.partialorder %v993, 8.507059e+37
        %v995 = vand.u32 %v884, 2147483648
        %v996 = vor.u32 1.1754944e-38, %v995
        %v997 = vsel %vm994, %v996, %v992
        %v998 = vmul.f32 1.0, %v997
        %v999 = vrcp.pop %v885
        %v1000 = vmul.f32 %v885, %v999
        %v1001 = vsub.f32 1.0, %v1000
        %v1002 = vmul.f32 %v999, %v1001
        %v1003 = vadd.f32 %v999, %v1002
        %vm1004 = vweird.f32 %v885
        %vm1005 = vweird.f32 %v999
        %vm1006 = vmor %vm1004, %vm1005
        %v1007 = vsel %vm1006, %v999, %v1003
        %v1008 = vand.u32 2147483647, %v885
        %vm1009 = vcmp.eq.f32.partialorder %v1008, 8.507059e+37
        %v1010 = vand.u32 %v885, 2147483648
        %v1011 = vor.u32 1.1754944e-38, %v1010
        %v1012 = vsel %vm1009, %v1011, %v1007
        %v1013 = vmul.f32 1.0, %v1012
        %v1014 = vrcp.pop %v886
        %v1015 = vmul.f32 %v886, %v1014
        %v1016 = vsub.f32 1.0, %v1015
        %v1017 = vmul.f32 %v1014, %v1016
        %v1018 = vadd.f32 %v1014, %v1017
        %vm1019 = vweird.f32 %v886
        %vm1020 = vweird.f32 %v1014
        %vm1021 = vmor %vm1019, %vm1020
        %v1022 = vsel %vm1021, %v1014, %v1018
        %v1023 = vand.u32 2147483647, %v886
        %vm1024 = vcmp.eq.f32.partialorder %v1023, 8.507059e+37
        %v1025 = vand.u32 %v886, 2147483648
        %v1026 = vor.u32 1.1754944e-38, %v1025
        %v1027 = vsel %vm1024, %v1026, %v1022
        %v1028 = vmul.f32 1.0, %v1027
        %v1029 = vrcp.pop %v887
        %v1030 = vmul.f32 %v887, %v1029
        %v1031 = vsub.f32 1.0, %v1030
        %v1032 = vmul.f32 %v1029, %v1031
        %v1033 = vadd.f32 %v1029, %v1032
        %vm1034 = vweird.f32 %v887
        %vm1035 = vweird.f32 %v1029
        %vm1036 = vmor %vm1034, %vm1035
        %v1037 = vsel %vm1036, %v1029, %v1033
        %v1038 = vand.u32 2147483647, %v887
        %vm1039 = vcmp.eq.f32.partialorder %v1038, 8.507059e+37
        %v1040 = vand.u32 %v887, 2147483648
        %v1041 = vor.u32 1.1754944e-38, %v1040
        %v1042 = vsel %vm1039, %v1041, %v1037
        %v1043 = vmul.f32 1.0, %v1042
        %v1044 = vrcp.pop %v888
        %v1045 = vmul.f32 %v888, %v1044
        %v1046 = vsub.f32 1.0, %v1045
        %v1047 = vmul.f32 %v1044, %v1046
        %v1048 = vadd.f32 %v1044, %v1047
        %vm1049 = vweird.f32 %v888
        %vm1050 = vweird.f32 %v1044
        %vm1051 = vmor %vm1049, %vm1050
        %v1052 = vsel %vm1051, %v1044, %v1048
        %v1053 = vand.u32 2147483647, %v888
        %vm1054 = vcmp.eq.f32.partialorder %v1053, 8.507059e+37
        %v1055 = vand.u32 %v888, 2147483648
        %v1056 = vor.u32 1.1754944e-38, %v1055
        %v1057 = vsel %vm1054, %v1056, %v1052
        %v1058 = vmul.f32 1.0, %v1057
        %v1059 = vrcp.pop %v889
        %v1060 = vmul.f32 %v889, %v1059
        %v1061 = vsub.f32 1.0, %v1060
        %v1062 = vmul.f32 %v1059, %v1061
        %v1063 = vadd.f32 %v1059, %v1062
        %vm1064 = vweird.f32 %v889
        %vm1065 = vweird.f32 %v1059
        %vm1066 = vmor %vm1064, %vm1065
        %v1067 = vsel %vm1066, %v1059, %v1063
        %v1068 = vand.u32 2147483647, %v889
        %vm1069 = vcmp.eq.f32.partialorder %v1068, 8.507059e+37
        %v1070 = vand.u32 %v889, 2147483648
        %v1071 = vor.u32 1.1754944e-38, %v1070
        %v1072 = vsel %vm1069, %v1071, %v1067
        %v1073 = vmul.f32 1.0, %v1072
        %v1074 = vrcp.pop %v890
        %v1075 = vmul.f32 %v890, %v1074
        %v1076 = vsub.f32 1.0, %v1075
        %v1077 = vmul.f32 %v1074, %v1076
        %v1078 = vadd.f32 %v1074, %v1077
        %vm1079 = vweird.f32 %v890
        %vm1080 = vweird.f32 %v1074
        %vm1081 = vmor %vm1079, %vm1080
        %v1082 = vsel %vm1081, %v1074, %v1078
        %v1083 = vand.u32 2147483647, %v890
        %vm1084 = vcmp.eq.f32.partialorder %v1083, 8.507059e+37
        %v1085 = vand.u32 %v890, 2147483648
        %v1086 = vor.u32 1.1754944e-38, %v1085
        %v1087 = vsel %vm1084, %v1086, %v1082
        %v1088 = vmul.f32 1.0, %v1087
        %v1089 = vrcp.pop %v891
        %v1090 = vmul.f32 %v891, %v1089
        %v1091 = vsub.f32 1.0, %v1090
        %v1092 = vmul.f32 %v1089, %v1091
        %v1093 = vadd.f32 %v1089, %v1092
        %vm1094 = vweird.f32 %v891
        %vm1095 = vweird.f32 %v1089
        %vm1096 = vmor %vm1094, %vm1095
        %v1097 = vsel %vm1096, %v1089, %v1093
        %v1098 = vand.u32 2147483647, %v891
        %vm1099 = vcmp.eq.f32.partialorder %v1098, 8.507059e+37
        %v1100 = vand.u32 %v891, 2147483648
        %v1101 = vor.u32 1.1754944e-38, %v1100
        %v1102 = vsel %vm1099, %v1101, %v1097
        %v1103 = vmul.f32 1.0, %v1102
        %v1104 = vrcp.pop %v892
        %v1105 = vmul.f32 %v892, %v1104
        %v1106 = vsub.f32 1.0, %v1105
        %v1107 = vmul.f32 %v1104, %v1106
        %v1108 = vadd.f32 %v1104, %v1107
        %vm1109 = vweird.f32 %v892
        %vm1110 = vweird.f32 %v1104
        %vm1111 = vmor %vm1109, %vm1110
        %v1112 = vsel %vm1111, %v1104, %v1108
        %v1113 = vand.u32 2147483647, %v892
        %vm1114 = vcmp.eq.f32.partialorder %v1113, 8.507059e+37
        %v1115 = vand.u32 %v892, 2147483648
        %v1116 = vor.u32 1.1754944e-38, %v1115
        %v1117 = vsel %vm1114, %v1116, %v1112
        %v1118 = vmul.f32 1.0, %v1117
        %v1119 = vrcp.pop %v893
        %v1120 = vmul.f32 %v893, %v1119
        %v1121 = vsub.f32 1.0, %v1120
        %v1122 = vmul.f32 %v1119, %v1121
        %v1123 = vadd.f32 %v1119, %v1122
        %vm1124 = vweird.f32 %v893
        %vm1125 = vweird.f32 %v1119
        %vm1126 = vmor %vm1124, %vm1125
        %v1127 = vsel %vm1126, %v1119, %v1123
        %v1128 = vand.u32 2147483647, %v893
        %vm1129 = vcmp.eq.f32.partialorder %v1128, 8.507059e+37
        %v1130 = vand.u32 %v893, 2147483648
        %v1131 = vor.u32 1.1754944e-38, %v1130
        %v1132 = vsel %vm1129, %v1131, %v1127
        %v1133 = vmul.f32 1.0, %v1132
        %v1134 = vmul.f32 %v908, %v527
        %v1135 = vmul.f32 %v923, %v528
        %v1136 = vmul.f32 %v938, %v529
        %v1137 = vmul.f32 %v953, %v530
        %v1138 = vmul.f32 %v968, %v531
        %v1139 = vmul.f32 %v983, %v532
        %v1140 = vmul.f32 %v998, %v533
        %v1141 = vmul.f32 %v1013, %v534
        %v1142 = vmul.f32 %v1028, %v535
        %v1143 = vmul.f32 %v1043, %v536
        %v1144 = vmul.f32 %v1058, %v537
        %v1145 = vmul.f32 %v1073, %v538
        %v1146 = vmul.f32 %v1088, %v539
        %v1147 = vmul.f32 %v1103, %v540
        %v1148 = vmul.f32 %v1118, %v541
        %v1149 = vmul.f32 %v1133, %v542
        %v1150 = vadd.f32 %v1134, %v668
        %v1151 = vadd.f32 %v1135, %v670
        %v1152 = vadd.f32 %v1136, %v673
        %v1153 = vadd.f32 %v1137, %v675
        %v1154 = vadd.f32 %v1138, %v678
        %v1155 = vadd.f32 %v1139, %v680
        %v1156 = vadd.f32 %v1140, %v683
        %v1157 = vadd.f32 %v1141, %v685
        %v1158 = vadd.f32 %v1142, %v688
        %v1159 = vadd.f32 %v1143, %v690
        %v1160 = vadd.f32 %v1144, %v693
        %v1161 = vadd.f32 %v1145, %v695
        %v1162 = vadd.f32 %v1146, %v698
        %v1163 = vadd.f32 %v1147, %v700
        %v1164 = vadd.f32 %v1148, %v703
        %v1165 = vadd.f32 %v1149, %v705
        %v1166 = vld [vmem:[%s12] sm:$0xff]
        %v1167 = vld [vmem:[%s12 + $0x8] sm:$0x1]
        %v1168 = vld [vmem:[%s15 + $0x4] sm:$0x1]
        %v1171 = vrot.slane %v1166, 1
        %v1172 = vrot.slane %v1166, 2
        %v1173 = vrot.slane %v1166, 3
        %v1174 = vrot.slane %v1166, 4
        %v1175 = vrot.slane %v1166, 5
        %v1176 = vrot.slane %v1166, 6
        %v1177 = vrot.slane %v1166, 7
        %v1178 = vperm.slane %v1166, 0
        %v1179 = vperm.slane %v1171, 0
        %v1180 = vperm.slane %v1172, 0
        %v1181 = vperm.slane %v1173, 0
        %v1182 = vperm.slane %v1174, 0
        %v1183 = vperm.slane %v1175, 0
        %v1184 = vperm.slane %v1176, 0
        %v1185 = vperm.slane %v1177, 0
        %v1186 = vperm.slane %v1167, 0
        %v1196 = vmul.f32 %v1150, %v1178
        %v1197 = vmul.f32 %v1151, %v1178
        %v1198 = vmul.f32 %v1152, %v1178
        %v1199 = vmul.f32 %v1153, %v1178
        %v1200 = vmul.f32 %v1154, %v1178
        %v1201 = vmul.f32 %v1155, %v1178
        %v1202 = vmul.f32 %v1156, %v1178
        %v1203 = vmul.f32 %v1157, %v1178
        %v1204 = vmul.f32 %v1150, %v1179
        %v1205 = vmul.f32 %v1151, %v1179
        %v1206 = vmul.f32 %v1152, %v1179
        %v1207 = vmul.f32 %v1153, %v1179
        %v1208 = vmul.f32 %v1154, %v1179
        %v1209 = vmul.f32 %v1155, %v1179
        %v1210 = vmul.f32 %v1156, %v1179
        %v1211 = vmul.f32 %v1157, %v1179
        %v1212 = vmul.f32 %v1150, %v1180
        %v1213 = vmul.f32 %v1151, %v1180
        %v1214 = vmul.f32 %v1152, %v1180
        %v1215 = vmul.f32 %v1153, %v1180
        %v1216 = vmul.f32 %v1154, %v1180
        %v1217 = vmul.f32 %v1155, %v1180
        %v1218 = vmul.f32 %v1156, %v1180
        %v1219 = vmul.f32 %v1157, %v1180
        %v1220 = vmul.f32 %v1150, %v1181
        %v1221 = vmul.f32 %v1151, %v1181
        %v1222 = vmul.f32 %v1152, %v1181
        %v1223 = vmul.f32 %v1153, %v1181
        %v1224 = vmul.f32 %v1154, %v1181
        %v1225 = vmul.f32 %v1155, %v1181
        %v1226 = vmul.f32 %v1156, %v1181
        %v1227 = vmul.f32 %v1157, %v1181
        %v1228 = vmul.f32 %v1150, %v1182
        %v1229 = vmul.f32 %v1151, %v1182
        %v1230 = vmul.f32 %v1152, %v1182
        %v1231 = vmul.f32 %v1153, %v1182
        %v1232 = vmul.f32 %v1154, %v1182
        %v1233 = vmul.f32 %v1155, %v1182
        %v1234 = vmul.f32 %v1156, %v1182
        %v1235 = vmul.f32 %v1157, %v1182
        %v1236 = vmul.f32 %v1150, %v1183
        %v1237 = vmul.f32 %v1151, %v1183
        %v1238 = vmul.f32 %v1152, %v1183
        %v1239 = vmul.f32 %v1153, %v1183
        %v1240 = vmul.f32 %v1154, %v1183
        %v1241 = vmul.f32 %v1155, %v1183
        %v1242 = vmul.f32 %v1156, %v1183
        %v1243 = vmul.f32 %v1157, %v1183
        %v1244 = vmul.f32 %v1150, %v1184
        %v1245 = vmul.f32 %v1151, %v1184
        %v1246 = vmul.f32 %v1152, %v1184
        %v1247 = vmul.f32 %v1153, %v1184
        %v1248 = vmul.f32 %v1154, %v1184
        %v1249 = vmul.f32 %v1155, %v1184
        %v1250 = vmul.f32 %v1156, %v1184
        %v1251 = vmul.f32 %v1157, %v1184
        %v1252 = vmul.f32 %v1150, %v1185
        %v1253 = vmul.f32 %v1151, %v1185
        %v1254 = vmul.f32 %v1152, %v1185
        %v1255 = vmul.f32 %v1153, %v1185
        %v1256 = vmul.f32 %v1154, %v1185
        %v1257 = vmul.f32 %v1155, %v1185
        %v1258 = vmul.f32 %v1156, %v1185
        %v1259 = vmul.f32 %v1157, %v1185
        %v1260 = vmul.f32 %v1150, %v1186
        %v1261 = vmul.f32 %v1151, %v1186
        %v1262 = vmul.f32 %v1152, %v1186
        %v1263 = vmul.f32 %v1153, %v1186
        %v1264 = vmul.f32 %v1154, %v1186
        %v1265 = vmul.f32 %v1155, %v1186
        %v1266 = vmul.f32 %v1156, %v1186
        %v1267 = vmul.f32 %v1157, %v1186
        %v1268 = vpack.c.bf16 %v1196, %v1196
        %v1269 = vpack.c.bf16 %v1197, %v1197
        %v1270 = vpack.c.bf16 %v1198, %v1198
        %v1271 = vpack.c.bf16 %v1199, %v1199
        %v1272 = vpack.c.bf16 %v1200, %v1200
        %v1273 = vpack.c.bf16 %v1201, %v1201
        %v1274 = vpack.c.bf16 %v1202, %v1202
        %v1275 = vpack.c.bf16 %v1203, %v1203
        %v1276 = vpack.c.bf16 %v1204, %v1204
        %v1277 = vpack.c.bf16 %v1205, %v1205
        %v1278 = vpack.c.bf16 %v1206, %v1206
        %v1279 = vpack.c.bf16 %v1207, %v1207
        %v1280 = vpack.c.bf16 %v1208, %v1208
        %v1281 = vpack.c.bf16 %v1209, %v1209
        %v1282 = vpack.c.bf16 %v1210, %v1210
        %v1283 = vpack.c.bf16 %v1211, %v1211
        %v1284 = vpack.c.bf16 %v1212, %v1212
        %v1285 = vpack.c.bf16 %v1213, %v1213
        %v1286 = vpack.c.bf16 %v1214, %v1214
        %v1287 = vpack.c.bf16 %v1215, %v1215
        %v1288 = vpack.c.bf16 %v1216, %v1216
        %v1289 = vpack.c.bf16 %v1217, %v1217
        %v1290 = vpack.c.bf16 %v1218, %v1218
        %v1291 = vpack.c.bf16 %v1219, %v1219
        %v1292 = vpack.c.bf16 %v1220, %v1220
        %v1293 = vpack.c.bf16 %v1221, %v1221
        %v1294 = vpack.c.bf16 %v1222, %v1222
        %v1295 = vpack.c.bf16 %v1223, %v1223
        %v1296 = vpack.c.bf16 %v1224, %v1224
        %v1297 = vpack.c.bf16 %v1225, %v1225
        %v1298 = vpack.c.bf16 %v1226, %v1226
        %v1299 = vpack.c.bf16 %v1227, %v1227
        %v1300 = vpack.c.bf16 %v1228, %v1228
        %v1301 = vpack.c.bf16 %v1229, %v1229
        %v1302 = vpack.c.bf16 %v1230, %v1230
        %v1303 = vpack.c.bf16 %v1231, %v1231
        %v1304 = vpack.c.bf16 %v1232, %v1232
        %v1305 = vpack.c.bf16 %v1233, %v1233
        %v1306 = vpack.c.bf16 %v1234, %v1234
        %v1307 = vpack.c.bf16 %v1235, %v1235
        %v1308 = vpack.c.bf16 %v1236, %v1236
        %v1309 = vpack.c.bf16 %v1237, %v1237
        %v1310 = vpack.c.bf16 %v1238, %v1238
        %v1311 = vpack.c.bf16 %v1239, %v1239
        %v1312 = vpack.c.bf16 %v1240, %v1240
        %v1313 = vpack.c.bf16 %v1241, %v1241
        %v1314 = vpack.c.bf16 %v1242, %v1242
        %v1315 = vpack.c.bf16 %v1243, %v1243
        %v1316 = vpack.c.bf16 %v1244, %v1244
        %v1317 = vpack.c.bf16 %v1245, %v1245
        %v1318 = vpack.c.bf16 %v1246, %v1246
        %v1319 = vpack.c.bf16 %v1247, %v1247
        %v1320 = vpack.c.bf16 %v1248, %v1248
        %v1321 = vpack.c.bf16 %v1249, %v1249
        %v1322 = vpack.c.bf16 %v1250, %v1250
        %v1323 = vpack.c.bf16 %v1251, %v1251
        %v1324 = vpack.c.bf16 %v1252, %v1252
        %v1325 = vpack.c.bf16 %v1253, %v1253
        %v1326 = vpack.c.bf16 %v1254, %v1254
        %v1327 = vpack.c.bf16 %v1255, %v1255
        %v1328 = vpack.c.bf16 %v1256, %v1256
        %v1329 = vpack.c.bf16 %v1257, %v1257
        %v1330 = vpack.c.bf16 %v1258, %v1258
        %v1331 = vpack.c.bf16 %v1259, %v1259
        %v1332 = vpack.c.bf16 %v1260, %v1260
        %v1333 = vpack.c.bf16 %v1261, %v1261
        %v1334 = vpack.c.bf16 %v1262, %v1262
        %v1335 = vpack.c.bf16 %v1263, %v1263
        %v1336 = vpack.c.bf16 %v1264, %v1264
        %v1337 = vpack.c.bf16 %v1265, %v1265
        %v1338 = vpack.c.bf16 %v1266, %v1266
        %v1339 = vpack.c.bf16 %v1267, %v1267
        %v1340 = vld [vmem:[%s2] sm:$0xff]
        %v1341 = vld [vmem:[%s2 + $0x8] sm:$0xff]
        %v1342 = vld [vmem:[%s2 + $0x10] sm:$0xf]
        %v1343 = vld [vmem:[%s2 + $0x14] sm:$0xff]
        %v1344 = vld [vmem:[%s2 + $0x1c] sm:$0xff]
        %v1345 = vld [vmem:[%s2 + $0x24] sm:$0xf]
        %v1346 = vld [vmem:[%s2 + $0x28] sm:$0xff]
        %v1347 = vld [vmem:[%s2 + $0x30] sm:$0xff]
        %v1348 = vld [vmem:[%s2 + $0x38] sm:$0xf]
        %v1349 = vld [vmem:[%s2 + $0x3c] sm:$0xff]
        %v1350 = vld [vmem:[%s2 + $0x44] sm:$0xff]
        %v1351 = vld [vmem:[%s2 + $0x4c] sm:$0xf]
        %v1352 = vld [vmem:[%s2 + $0x50] sm:$0xff]
        %v1353 = vld [vmem:[%s2 + $0x58] sm:$0xff]
        %v1354 = vld [vmem:[%s2 + $0x60] sm:$0xf]
        %v1355 = vld [vmem:[%s2 + $0x64] sm:$0xff]
        %v1356 = vld [vmem:[%s2 + $0x6c] sm:$0xff]
        %v1357 = vld [vmem:[%s2 + $0x74] sm:$0xf]
        %v1358 = vld [vmem:[%s2 + $0x78] sm:$0xff]
        %v1359 = vld [vmem:[%s2 + $0x80] sm:$0xff]
        %v1360 = vld [vmem:[%s2 + $0x88] sm:$0xf]
        %v1361 = vld [vmem:[%s2 + $0x8c] sm:$0xff]
        %v1362 = vld [vmem:[%s2 + $0x94] sm:$0xff]
        %v1363 = vld [vmem:[%s2 + $0x9c] sm:$0xf]
        %v1364 = vperm.slane %v1168, 0
        %v1389 = vunpack.c.l.b16 %v1340
        %v1390 = vunpack.c.h.b16 %v1340
        %v1391 = vunpack.c.l.b16 %v1341
        %v1392 = vunpack.c.h.b16 %v1341
        %v1393 = vunpack.c.l.b16 %v1342
        %v1394 = vunpack.c.l.b16 %v1343
        %v1395 = vunpack.c.h.b16 %v1343
        %v1396 = vunpack.c.l.b16 %v1344
        %v1397 = vunpack.c.h.b16 %v1344
        %v1398 = vunpack.c.l.b16 %v1345
        %v1399 = vunpack.c.l.b16 %v1346
        %v1400 = vunpack.c.h.b16 %v1346
        %v1401 = vunpack.c.l.b16 %v1347
        %v1402 = vunpack.c.h.b16 %v1347
        %v1403 = vunpack.c.l.b16 %v1348
        %v1404 = vunpack.c.l.b16 %v1349
        %v1405 = vunpack.c.h.b16 %v1349
        %v1406 = vunpack.c.l.b16 %v1350
        %v1407 = vunpack.c.h.b16 %v1350
        %v1408 = vunpack.c.l.b16 %v1351
        %v1409 = vunpack.c.l.b16 %v1352
        %v1410 = vunpack.c.h.b16 %v1352
        %v1411 = vunpack.c.l.b16 %v1353
        %v1412 = vunpack.c.h.b16 %v1353
        %v1413 = vunpack.c.l.b16 %v1354
        %v1414 = vunpack.c.l.b16 %v1355
        %v1415 = vunpack.c.h.b16 %v1355
        %v1416 = vunpack.c.l.b16 %v1356
        %v1417 = vunpack.c.h.b16 %v1356
        %v1418 = vunpack.c.l.b16 %v1357
        %v1419 = vunpack.c.l.b16 %v1358
        %v1420 = vunpack.c.h.b16 %v1358
        %v1421 = vunpack.c.l.b16 %v1359
        %v1422 = vunpack.c.h.b16 %v1359
        %v1423 = vunpack.c.l.b16 %v1360
        %v1424 = vunpack.c.l.b16 %v1361
        %v1425 = vunpack.c.h.b16 %v1361
        %v1426 = vunpack.c.l.b16 %v1362
        %v1427 = vunpack.c.h.b16 %v1362
        %v1428 = vunpack.c.l.b16 %v1363
        %v1429 = vpack.c.b16 %v1394, %v1389
        %v1430 = vpack.c.b16 %v1395, %v1390
        %v1431 = vpack.c.b16 %v1396, %v1391
        %v1432 = vpack.c.b16 %v1397, %v1392
        %v1433 = vpack.c.b16 %v1398, %v1393
        %v1434 = vpack.c.b16 %v1404, %v1399
        %v1435 = vpack.c.b16 %v1405, %v1400
        %v1436 = vpack.c.b16 %v1406, %v1401
        %v1437 = vpack.c.b16 %v1407, %v1402
        %v1438 = vpack.c.b16 %v1408, %v1403
        %v1439 = vpack.c.b16 %v1414, %v1409
        %v1440 = vpack.c.b16 %v1415, %v1410
        %v1441 = vpack.c.b16 %v1416, %v1411
        %v1442 = vpack.c.b16 %v1417, %v1412
        %v1443 = vpack.c.b16 %v1418, %v1413
        %v1444 = vpack.c.b16 %v1424, %v1419
        %v1445 = vpack.c.b16 %v1425, %v1420
        %v1446 = vpack.c.b16 %v1426, %v1421
        %v1447 = vpack.c.b16 %v1427, %v1422
        %v1448 = vpack.c.b16 %v1428, %v1423
        %v1537 = vunpack.c.l.b16 %v1268
        %v1538 = vunpack.c.l.b16 %v1269
        %v1539 = vunpack.c.l.b16 %v1270
        %v1540 = vunpack.c.l.b16 %v1271
        %v1541 = vunpack.c.l.b16 %v1272
        %v1542 = vunpack.c.l.b16 %v1273
        %v1543 = vunpack.c.l.b16 %v1274
        %v1544 = vunpack.c.l.b16 %v1275
        %v1545 = vunpack.c.l.b16 %v1276
        %v1546 = vunpack.c.l.b16 %v1277
        %v1547 = vunpack.c.l.b16 %v1278
        %v1548 = vunpack.c.l.b16 %v1279
        %v1549 = vunpack.c.l.b16 %v1280
        %v1550 = vunpack.c.l.b16 %v1281
        %v1551 = vunpack.c.l.b16 %v1282
        %v1552 = vunpack.c.l.b16 %v1283
        %v1553 = vunpack.c.l.b16 %v1284
        %v1554 = vunpack.c.l.b16 %v1285
        %v1555 = vunpack.c.l.b16 %v1286
        %v1556 = vunpack.c.l.b16 %v1287
        %v1557 = vunpack.c.l.b16 %v1288
        %v1558 = vunpack.c.l.b16 %v1289
        %v1559 = vunpack.c.l.b16 %v1290
        %v1560 = vunpack.c.l.b16 %v1291
        %v1561 = vunpack.c.l.b16 %v1292
        %v1562 = vunpack.c.l.b16 %v1293
        %v1563 = vunpack.c.l.b16 %v1294
        %v1564 = vunpack.c.l.b16 %v1295
        %v1565 = vunpack.c.l.b16 %v1296
        %v1566 = vunpack.c.l.b16 %v1297
        %v1567 = vunpack.c.l.b16 %v1298
        %v1568 = vunpack.c.l.b16 %v1299
        %v1569 = vunpack.c.l.b16 %v1300
        %v1570 = vunpack.c.l.b16 %v1301
        %v1571 = vunpack.c.l.b16 %v1302
        %v1572 = vunpack.c.l.b16 %v1303
        %v1573 = vunpack.c.l.b16 %v1304
        %v1574 = vunpack.c.l.b16 %v1305
        %v1575 = vunpack.c.l.b16 %v1306
        %v1576 = vunpack.c.l.b16 %v1307
        %v1577 = vunpack.c.l.b16 %v1308
        %v1578 = vunpack.c.l.b16 %v1309
        %v1579 = vunpack.c.l.b16 %v1310
        %v1580 = vunpack.c.l.b16 %v1311
        %v1581 = vunpack.c.l.b16 %v1312
        %v1582 = vunpack.c.l.b16 %v1313
        %v1583 = vunpack.c.l.b16 %v1314
        %v1584 = vunpack.c.l.b16 %v1315
        %v1585 = vunpack.c.l.b16 %v1316
        %v1586 = vunpack.c.l.b16 %v1317
        %v1587 = vunpack.c.l.b16 %v1318
        %v1588 = vunpack.c.l.b16 %v1319
        %v1589 = vunpack.c.l.b16 %v1320
        %v1590 = vunpack.c.l.b16 %v1321
        %v1591 = vunpack.c.l.b16 %v1322
        %v1592 = vunpack.c.l.b16 %v1323
        %v1593 = vunpack.c.l.b16 %v1324
        %v1594 = vunpack.c.l.b16 %v1325
        %v1595 = vunpack.c.l.b16 %v1326
        %v1596 = vunpack.c.l.b16 %v1327
        %v1597 = vunpack.c.l.b16 %v1328
        %v1598 = vunpack.c.l.b16 %v1329
        %v1599 = vunpack.c.l.b16 %v1330
        %v1600 = vunpack.c.l.b16 %v1331
        %v1601 = vunpack.c.l.b16 %v1332
        %v1602 = vunpack.c.l.b16 %v1333
        %v1603 = vunpack.c.l.b16 %v1334
        %v1604 = vunpack.c.l.b16 %v1335
        %v1605 = vunpack.c.l.b16 %v1336
        %v1606 = vunpack.c.l.b16 %v1337
        %v1607 = vunpack.c.l.b16 %v1338
        %v1608 = vunpack.c.l.b16 %v1339
        %v1609 = vpack.c.b16 %v1538, %v1537
        %v1610 = vpack.c.b16 %v1540, %v1539
        %v1611 = vpack.c.b16 %v1542, %v1541
        %v1612 = vpack.c.b16 %v1544, %v1543
        %v1613 = vpack.c.b16 %v1546, %v1545
        %v1614 = vpack.c.b16 %v1548, %v1547
        %v1615 = vpack.c.b16 %v1550, %v1549
        %v1616 = vpack.c.b16 %v1552, %v1551
        %v1617 = vpack.c.b16 %v1554, %v1553
        %v1618 = vpack.c.b16 %v1556, %v1555
        %v1619 = vpack.c.b16 %v1558, %v1557
        %v1620 = vpack.c.b16 %v1560, %v1559
        %v1621 = vpack.c.b16 %v1562, %v1561
        %v1622 = vpack.c.b16 %v1564, %v1563
        %v1623 = vpack.c.b16 %v1566, %v1565
        %v1624 = vpack.c.b16 %v1568, %v1567
        %v1625 = vpack.c.b16 %v1570, %v1569
        %v1626 = vpack.c.b16 %v1572, %v1571
        %v1627 = vpack.c.b16 %v1574, %v1573
        %v1628 = vpack.c.b16 %v1576, %v1575
        %v1629 = vpack.c.b16 %v1578, %v1577
        %v1630 = vpack.c.b16 %v1580, %v1579
        %v1631 = vpack.c.b16 %v1582, %v1581
        %v1632 = vpack.c.b16 %v1584, %v1583
        %v1633 = vpack.c.b16 %v1586, %v1585
        %v1634 = vpack.c.b16 %v1588, %v1587
        %v1635 = vpack.c.b16 %v1590, %v1589
        %v1636 = vpack.c.b16 %v1592, %v1591
        %v1637 = vpack.c.b16 %v1594, %v1593
        %v1638 = vpack.c.b16 %v1596, %v1595
        %v1639 = vpack.c.b16 %v1598, %v1597
        %v1640 = vpack.c.b16 %v1600, %v1599
        %v1641 = vpack.c.b16 %v1602, %v1601
        %v1642 = vpack.c.b16 %v1604, %v1603
        %v1643 = vpack.c.b16 %v1606, %v1605
        %v1644 = vpack.c.b16 %v1608, %v1607
        %v1682 = vsel %vm633, %v1433, 0
        %v1685 = vsel %vm633, %v1438, 0
        %v1688 = vsel %vm633, %v1443, 0
        %v1691 = vsel %vm633, %v1448, 0
        %1693 = vmatpush.bf16.msra.mxu0 %v1616
        %1694 = vmatpush.bf16.msra.mxu0 %v1615
        %1695 = vmatpush.bf16.msra.mxu0 %v1614
        %1696 = vmatpush.bf16.msra.mxu0 %v1613
        %1697 = vmatpush.bf16.msra.mxu0 %v1612
        %1698 = vmatpush.bf16.msra.mxu0 %v1611
        %1699 = vmatpush.bf16.msra.mxu0 %v1610
        %1700 = vmatpush.bf16.msra.mxu0 %v1609
        %1701 = vmatmul.bf16.gmra.mxu0 %v1429
        %v1702 = vpop.f32.mrf.mxu0
        %v1703 = vadd.f32 %v1364, %v1702
        %v1704 = vpop.f32.mrf.mxu0
        %v1705 = vadd.f32 %v1364, %v1704
        %1706 = vmatmul.bf16.gmra.mxu0 %v1434
        %v1707 = vpop.f32.mrf.mxu0
        %v1708 = vadd.f32 %v1364, %v1707
        %v1709 = vpop.f32.mrf.mxu0
        %v1710 = vadd.f32 %v1364, %v1709
        %1711 = vmatmul.bf16.gmra.mxu0 %v1439
        %v1712 = vpop.f32.mrf.mxu0
        %v1713 = vadd.f32 %v1364, %v1712
        %v1714 = vpop.f32.mrf.mxu0
        %v1715 = vadd.f32 %v1364, %v1714
        %1716 = vmatmul.bf16.gmra.mxu0 %v1444
        %v1717 = vpop.f32.mrf.mxu0
        %v1718 = vadd.f32 %v1364, %v1717
        %v1719 = vpop.f32.mrf.mxu0
        %v1720 = vadd.f32 %v1364, %v1719
        %1721 = vdwg.mxu0
        %1722 = vmatpush.bf16.msra.mxu0 %v1624
        %1723 = vmatpush.bf16.msra.mxu0 %v1623
        %1724 = vmatpush.bf16.msra.mxu0 %v1622
        %1725 = vmatpush.bf16.msra.mxu0 %v1621
        %1726 = vmatpush.bf16.msra.mxu0 %v1620
        %1727 = vmatpush.bf16.msra.mxu0 %v1619
        %1728 = vmatpush.bf16.msra.mxu0 %v1618
        %1729 = vmatpush.bf16.msra.mxu0 %v1617
        %1730 = vmatmul.bf16.gmra.mxu0 %v1430
        %v1731 = vpop.f32.mrf.mxu0
        %v1732 = vadd.f32 %v1703, %v1731
        %v1733 = vpop.f32.mrf.mxu0
        %v1734 = vadd.f32 %v1705, %v1733
        %1735 = vmatmul.bf16.gmra.mxu0 %v1435
        %v1736 = vpop.f32.mrf.mxu0
        %v1737 = vadd.f32 %v1708, %v1736
        %v1738 = vpop.f32.mrf.mxu0
        %v1739 = vadd.f32 %v1710, %v1738
        %1740 = vmatmul.bf16.gmra.mxu0 %v1440
        %v1741 = vpop.f32.mrf.mxu0
        %v1742 = vadd.f32 %v1713, %v1741
        %v1743 = vpop.f32.mrf.mxu0
        %v1744 = vadd.f32 %v1715, %v1743
        %1745 = vmatmul.bf16.gmra.mxu0 %v1445
        %v1746 = vpop.f32.mrf.mxu0
        %v1747 = vadd.f32 %v1718, %v1746
        %v1748 = vpop.f32.mrf.mxu0
        %v1749 = vadd.f32 %v1720, %v1748
        %1750 = vdwg.mxu0
        %1751 = vmatpush.bf16.msra.mxu0 %v1632
        %1752 = vmatpush.bf16.msra.mxu0 %v1631
        %1753 = vmatpush.bf16.msra.mxu0 %v1630
        %1754 = vmatpush.bf16.msra.mxu0 %v1629
        %1755 = vmatpush.bf16.msra.mxu0 %v1628
        %1756 = vmatpush.bf16.msra.mxu0 %v1627
        %1757 = vmatpush.bf16.msra.mxu0 %v1626
        %1758 = vmatpush.bf16.msra.mxu0 %v1625
        %1759 = vmatmul.bf16.gmra.mxu0 %v1431
        %v1760 = vpop.f32.mrf.mxu0
        %v1761 = vadd.f32 %v1732, %v1760
        %v1762 = vpop.f32.mrf.mxu0
        %v1763 = vadd.f32 %v1734, %v1762
        %1764 = vmatmul.bf16.gmra.mxu0 %v1436
        %v1765 = vpop.f32.mrf.mxu0
        %v1766 = vadd.f32 %v1737, %v1765
        %v1767 = vpop.f32.mrf.mxu0
        %v1768 = vadd.f32 %v1739, %v1767
        %1769 = vmatmul.bf16.gmra.mxu0 %v1441
        %v1770 = vpop.f32.mrf.mxu0
        %v1771 = vadd.f32 %v1742, %v1770
        %v1772 = vpop.f32.mrf.mxu0
        %v1773 = vadd.f32 %v1744, %v1772
        %1774 = vmatmul.bf16.gmra.mxu0 %v1446
        %v1775 = vpop.f32.mrf.mxu0
        %v1776 = vadd.f32 %v1747, %v1775
        %v1777 = vpop.f32.mrf.mxu0
        %v1778 = vadd.f32 %v1749, %v1777
        %1779 = vdwg.mxu0
        %1780 = vmatpush.bf16.msra.mxu0 %v1640
        %1781 = vmatpush.bf16.msra.mxu0 %v1639
        %1782 = vmatpush.bf16.msra.mxu0 %v1638
        %1783 = vmatpush.bf16.msra.mxu0 %v1637
        %1784 = vmatpush.bf16.msra.mxu0 %v1636
        %1785 = vmatpush.bf16.msra.mxu0 %v1635
        %1786 = vmatpush.bf16.msra.mxu0 %v1634
        %1787 = vmatpush.bf16.msra.mxu0 %v1633
        %1788 = vmatmul.bf16.gmra.mxu0 %v1432
        %v1789 = vpop.f32.mrf.mxu0
        %v1790 = vadd.f32 %v1761, %v1789
        %v1791 = vpop.f32.mrf.mxu0
        %v1792 = vadd.f32 %v1763, %v1791
        %1793 = vmatmul.bf16.gmra.mxu0 %v1437
        %v1794 = vpop.f32.mrf.mxu0
        %v1795 = vadd.f32 %v1766, %v1794
        %v1796 = vpop.f32.mrf.mxu0
        %v1797 = vadd.f32 %v1768, %v1796
        %1798 = vmatmul.bf16.gmra.mxu0 %v1442
        %v1799 = vpop.f32.mrf.mxu0
        %v1800 = vadd.f32 %v1771, %v1799
        %v1801 = vpop.f32.mrf.mxu0
        %v1802 = vadd.f32 %v1773, %v1801
        %1803 = vmatmul.bf16.gmra.mxu0 %v1447
        %v1804 = vpop.f32.mrf.mxu0
        %v1805 = vadd.f32 %v1776, %v1804
        %v1806 = vpop.f32.mrf.mxu0
        %v1807 = vadd.f32 %v1778, %v1806
        %1808 = vdwg.mxu0
        %1809 = vmatpush.bf16.msra.mxu0 0
        %1810 = vmatpush.bf16.msra.mxu0 0
        %1811 = vmatpush.bf16.msra.mxu0 0
        %1812 = vmatpush.bf16.msra.mxu0 0
        %1813 = vmatpush.bf16.msra.mxu0 %v1644
        %1814 = vmatpush.bf16.msra.mxu0 %v1643
        %1815 = vmatpush.bf16.msra.mxu0 %v1642
        %1816 = vmatpush.bf16.msra.mxu0 %v1641
        %1817 = vmatmul.bf16.gmra.mxu0 %v1682
        %v1818 = vpop.f32.mrf.mxu0
        %v1819 = vadd.f32 %v1790, %v1818
        %v1820 = vpop.f32.mrf.mxu0
        %v1821 = vadd.f32 %v1792, %v1820
        %1822 = vmatmul.bf16.gmra.mxu0 %v1685
        %v1823 = vpop.f32.mrf.mxu0
        %v1824 = vadd.f32 %v1795, %v1823
        %v1825 = vpop.f32.mrf.mxu0
        %v1826 = vadd.f32 %v1797, %v1825
        %1827 = vmatmul.bf16.gmra.mxu0 %v1688
        %v1828 = vpop.f32.mrf.mxu0
        %v1829 = vadd.f32 %v1800, %v1828
        %v1830 = vpop.f32.mrf.mxu0
        %v1831 = vadd.f32 %v1802, %v1830
        %1832 = vmatmul.bf16.gmra.mxu0 %v1691
        %v1833 = vpop.f32.mrf.mxu0
        %v1834 = vadd.f32 %v1805, %v1833
        %v1835 = vpop.f32.mrf.mxu0
        %v1836 = vadd.f32 %v1807, %v1835
        %1837 = vdwg.mxu0
        %v1838 = vmul.f32 %v1158, %v1178
        %v1839 = vmul.f32 %v1159, %v1178
        %v1840 = vmul.f32 %v1160, %v1178
        %v1841 = vmul.f32 %v1161, %v1178
        %v1842 = vmul.f32 %v1162, %v1178
        %v1843 = vmul.f32 %v1163, %v1178
        %v1844 = vmul.f32 %v1164, %v1178
        %v1845 = vmul.f32 %v1165, %v1178
        %v1846 = vmul.f32 %v1158, %v1179
        %v1847 = vmul.f32 %v1159, %v1179
        %v1848 = vmul.f32 %v1160, %v1179
        %v1849 = vmul.f32 %v1161, %v1179
        %v1850 = vmul.f32 %v1162, %v1179
        %v1851 = vmul.f32 %v1163, %v1179
        %v1852 = vmul.f32 %v1164, %v1179
        %v1853 = vmul.f32 %v1165, %v1179
        %v1854 = vmul.f32 %v1158, %v1180
        %v1855 = vmul.f32 %v1159, %v1180
        %v1856 = vmul.f32 %v1160, %v1180
        %v1857 = vmul.f32 %v1161, %v1180
        %v1858 = vmul.f32 %v1162, %v1180
        %v1859 = vmul.f32 %v1163, %v1180
        %v1860 = vmul.f32 %v1164, %v1180
        %v1861 = vmul.f32 %v1165, %v1180
        %v1862 = vmul.f32 %v1158, %v1181
        %v1863 = vmul.f32 %v1159, %v1181
        %v1864 = vmul.f32 %v1160, %v1181
        %v1865 = vmul.f32 %v1161, %v1181
        %v1866 = vmul.f32 %v1162, %v1181
        %v1867 = vmul.f32 %v1163, %v1181
        %v1868 = vmul.f32 %v1164, %v1181
        %v1869 = vmul.f32 %v1165, %v1181
        %v1870 = vmul.f32 %v1158, %v1182
        %v1871 = vmul.f32 %v1159, %v1182
        %v1872 = vmul.f32 %v1160, %v1182
        %v1873 = vmul.f32 %v1161, %v1182
        %v1874 = vmul.f32 %v1162, %v1182
        %v1875 = vmul.f32 %v1163, %v1182
        %v1876 = vmul.f32 %v1164, %v1182
        %v1877 = vmul.f32 %v1165, %v1182
        %v1878 = vmul.f32 %v1158, %v1183
        %v1879 = vmul.f32 %v1159, %v1183
        %v1880 = vmul.f32 %v1160, %v1183
        %v1881 = vmul.f32 %v1161, %v1183
        %v1882 = vmul.f32 %v1162, %v1183
        %v1883 = vmul.f32 %v1163, %v1183
        %v1884 = vmul.f32 %v1164, %v1183
        %v1885 = vmul.f32 %v1165, %v1183
        %v1886 = vmul.f32 %v1158, %v1184
        %v1887 = vmul.f32 %v1159, %v1184
        %v1888 = vmul.f32 %v1160, %v1184
        %v1889 = vmul.f32 %v1161, %v1184
        %v1890 = vmul.f32 %v1162, %v1184
        %v1891 = vmul.f32 %v1163, %v1184
        %v1892 = vmul.f32 %v1164, %v1184
        %v1893 = vmul.f32 %v1165, %v1184
        %v1894 = vmul.f32 %v1158, %v1185
        %v1895 = vmul.f32 %v1159, %v1185
        %v1896 = vmul.f32 %v1160, %v1185
        %v1897 = vmul.f32 %v1161, %v1185
        %v1898 = vmul.f32 %v1162, %v1185
        %v1899 = vmul.f32 %v1163, %v1185
        %v1900 = vmul.f32 %v1164, %v1185
        %v1901 = vmul.f32 %v1165, %v1185
        %v1902 = vmul.f32 %v1158, %v1186
        %v1903 = vmul.f32 %v1159, %v1186
        %v1904 = vmul.f32 %v1160, %v1186
        %v1905 = vmul.f32 %v1161, %v1186
        %v1906 = vmul.f32 %v1162, %v1186
        %v1907 = vmul.f32 %v1163, %v1186
        %v1908 = vmul.f32 %v1164, %v1186
        %v1909 = vmul.f32 %v1165, %v1186
        %v1910 = vpack.c.bf16 %v1838, %v1838
        %v1911 = vpack.c.bf16 %v1839, %v1839
        %v1912 = vpack.c.bf16 %v1840, %v1840
        %v1913 = vpack.c.bf16 %v1841, %v1841
        %v1914 = vpack.c.bf16 %v1842, %v1842
        %v1915 = vpack.c.bf16 %v1843, %v1843
        %v1916 = vpack.c.bf16 %v1844, %v1844
        %v1917 = vpack.c.bf16 %v1845, %v1845
        %v1918 = vpack.c.bf16 %v1846, %v1846
        %v1919 = vpack.c.bf16 %v1847, %v1847
        %v1920 = vpack.c.bf16 %v1848, %v1848
        %v1921 = vpack.c.bf16 %v1849, %v1849
        %v1922 = vpack.c.bf16 %v1850, %v1850
        %v1923 = vpack.c.bf16 %v1851, %v1851
        %v1924 = vpack.c.bf16 %v1852, %v1852
        %v1925 = vpack.c.bf16 %v1853, %v1853
        %v1926 = vpack.c.bf16 %v1854, %v1854
        %v1927 = vpack.c.bf16 %v1855, %v1855
        %v1928 = vpack.c.bf16 %v1856, %v1856
        %v1929 = vpack.c.bf16 %v1857, %v1857
        %v1930 = vpack.c.bf16 %v1858, %v1858
        %v1931 = vpack.c.bf16 %v1859, %v1859
        %v1932 = vpack.c.bf16 %v1860, %v1860
        %v1933 = vpack.c.bf16 %v1861, %v1861
        %v1934 = vpack.c.bf16 %v1862, %v1862
        %v1935 = vpack.c.bf16 %v1863, %v1863
        %v1936 = vpack.c.bf16 %v1864, %v1864
        %v1937 = vpack.c.bf16 %v1865, %v1865
        %v1938 = vpack.c.bf16 %v1866, %v1866
        %v1939 = vpack.c.bf16 %v1867, %v1867
        %v1940 = vpack.c.bf16 %v1868, %v1868
        %v1941 = vpack.c.bf16 %v1869, %v1869
        %v1942 = vpack.c.bf16 %v1870, %v1870
        %v1943 = vpack.c.bf16 %v1871, %v1871
        %v1944 = vpack.c.bf16 %v1872, %v1872
        %v1945 = vpack.c.bf16 %v1873, %v1873
        %v1946 = vpack.c.bf16 %v1874, %v1874
        %v1947 = vpack.c.bf16 %v1875, %v1875
        %v1948 = vpack.c.bf16 %v1876, %v1876
        %v1949 = vpack.c.bf16 %v1877, %v1877
        %v1950 = vpack.c.bf16 %v1878, %v1878
        %v1951 = vpack.c.bf16 %v1879, %v1879
        %v1952 = vpack.c.bf16 %v1880, %v1880
        %v1953 = vpack.c.bf16 %v1881, %v1881
        %v1954 = vpack.c.bf16 %v1882, %v1882
        %v1955 = vpack.c.bf16 %v1883, %v1883
        %v1956 = vpack.c.bf16 %v1884, %v1884
        %v1957 = vpack.c.bf16 %v1885, %v1885
        %v1958 = vpack.c.bf16 %v1886, %v1886
        %v1959 = vpack.c.bf16 %v1887, %v1887
        %v1960 = vpack.c.bf16 %v1888, %v1888
        %v1961 = vpack.c.bf16 %v1889, %v1889
        %v1962 = vpack.c.bf16 %v1890, %v1890
        %v1963 = vpack.c.bf16 %v1891, %v1891
        %v1964 = vpack.c.bf16 %v1892, %v1892
        %v1965 = vpack.c.bf16 %v1893, %v1893
        %v1966 = vpack.c.bf16 %v1894, %v1894
        %v1967 = vpack.c.bf16 %v1895, %v1895
        %v1968 = vpack.c.bf16 %v1896, %v1896
        %v1969 = vpack.c.bf16 %v1897, %v1897
        %v1970 = vpack.c.bf16 %v1898, %v1898
        %v1971 = vpack.c.bf16 %v1899, %v1899
        %v1972 = vpack.c.bf16 %v1900, %v1900
        %v1973 = vpack.c.bf16 %v1901, %v1901
        %v1974 = vpack.c.bf16 %v1902, %v1902
        %v1975 = vpack.c.bf16 %v1903, %v1903
        %v1976 = vpack.c.bf16 %v1904, %v1904
        %v1977 = vpack.c.bf16 %v1905, %v1905
        %v1978 = vpack.c.bf16 %v1906, %v1906
        %v1979 = vpack.c.bf16 %v1907, %v1907
        %v1980 = vpack.c.bf16 %v1908, %v1908
        %v1981 = vpack.c.bf16 %v1909, %v1909
        %v2054 = vunpack.c.l.b16 %v1910
        %v2055 = vunpack.c.l.b16 %v1911
        %v2056 = vunpack.c.l.b16 %v1912
        %v2057 = vunpack.c.l.b16 %v1913
        %v2058 = vunpack.c.l.b16 %v1914
        %v2059 = vunpack.c.l.b16 %v1915
        %v2060 = vunpack.c.l.b16 %v1916
        %v2061 = vunpack.c.l.b16 %v1917
        %v2062 = vunpack.c.l.b16 %v1918
        %v2063 = vunpack.c.l.b16 %v1919
        %v2064 = vunpack.c.l.b16 %v1920
        %v2065 = vunpack.c.l.b16 %v1921
        %v2066 = vunpack.c.l.b16 %v1922
        %v2067 = vunpack.c.l.b16 %v1923
        %v2068 = vunpack.c.l.b16 %v1924
        %v2069 = vunpack.c.l.b16 %v1925
        %v2070 = vunpack.c.l.b16 %v1926
        %v2071 = vunpack.c.l.b16 %v1927
        %v2072 = vunpack.c.l.b16 %v1928
        %v2073 = vunpack.c.l.b16 %v1929
        %v2074 = vunpack.c.l.b16 %v1930
        %v2075 = vunpack.c.l.b16 %v1931
        %v2076 = vunpack.c.l.b16 %v1932
        %v2077 = vunpack.c.l.b16 %v1933
        %v2078 = vunpack.c.l.b16 %v1934
        %v2079 = vunpack.c.l.b16 %v1935
        %v2080 = vunpack.c.l.b16 %v1936
        %v2081 = vunpack.c.l.b16 %v1937
        %v2082 = vunpack.c.l.b16 %v1938
        %v2083 = vunpack.c.l.b16 %v1939
        %v2084 = vunpack.c.l.b16 %v1940
        %v2085 = vunpack.c.l.b16 %v1941
        %v2086 = vunpack.c.l.b16 %v1942
        %v2087 = vunpack.c.l.b16 %v1943
        %v2088 = vunpack.c.l.b16 %v1944
        %v2089 = vunpack.c.l.b16 %v1945
        %v2090 = vunpack.c.l.b16 %v1946
        %v2091 = vunpack.c.l.b16 %v1947
        %v2092 = vunpack.c.l.b16 %v1948
        %v2093 = vunpack.c.l.b16 %v1949
        %v2094 = vunpack.c.l.b16 %v1950
        %v2095 = vunpack.c.l.b16 %v1951
        %v2096 = vunpack.c.l.b16 %v1952
        %v2097 = vunpack.c.l.b16 %v1953
        %v2098 = vunpack.c.l.b16 %v1954
        %v2099 = vunpack.c.l.b16 %v1955
        %v2100 = vunpack.c.l.b16 %v1956
        %v2101 = vunpack.c.l.b16 %v1957
        %v2102 = vunpack.c.l.b16 %v1958
        %v2103 = vunpack.c.l.b16 %v1959
        %v2104 = vunpack.c.l.b16 %v1960
        %v2105 = vunpack.c.l.b16 %v1961
        %v2106 = vunpack.c.l.b16 %v1962
        %v2107 = vunpack.c.l.b16 %v1963
        %v2108 = vunpack.c.l.b16 %v1964
        %v2109 = vunpack.c.l.b16 %v1965
        %v2110 = vunpack.c.l.b16 %v1966
        %v2111 = vunpack.c.l.b16 %v1967
        %v2112 = vunpack.c.l.b16 %v1968
        %v2113 = vunpack.c.l.b16 %v1969
        %v2114 = vunpack.c.l.b16 %v1970
        %v2115 = vunpack.c.l.b16 %v1971
        %v2116 = vunpack.c.l.b16 %v1972
        %v2117 = vunpack.c.l.b16 %v1973
        %v2118 = vunpack.c.l.b16 %v1974
        %v2119 = vunpack.c.l.b16 %v1975
        %v2120 = vunpack.c.l.b16 %v1976
        %v2121 = vunpack.c.l.b16 %v1977
        %v2122 = vunpack.c.l.b16 %v1978
        %v2123 = vunpack.c.l.b16 %v1979
        %v2124 = vunpack.c.l.b16 %v1980
        %v2125 = vunpack.c.l.b16 %v1981
        %v2126 = vpack.c.b16 %v2055, %v2054
        %v2127 = vpack.c.b16 %v2057, %v2056
        %v2128 = vpack.c.b16 %v2059, %v2058
        %v2129 = vpack.c.b16 %v2061, %v2060
        %v2130 = vpack.c.b16 %v2063, %v2062
        %v2131 = vpack.c.b16 %v2065, %v2064
        %v2132 = vpack.c.b16 %v2067, %v2066
        %v2133 = vpack.c.b16 %v2069, %v2068
        %v2134 = vpack.c.b16 %v2071, %v2070
        %v2135 = vpack.c.b16 %v2073, %v2072
        %v2136 = vpack.c.b16 %v2075, %v2074
        %v2137 = vpack.c.b16 %v2077, %v2076
        %v2138 = vpack.c.b16 %v2079, %v2078
        %v2139 = vpack.c.b16 %v2081, %v2080
        %v2140 = vpack.c.b16 %v2083, %v2082
        %v2141 = vpack.c.b16 %v2085, %v2084
        %v2142 = vpack.c.b16 %v2087, %v2086
        %v2143 = vpack.c.b16 %v2089, %v2088
        %v2144 = vpack.c.b16 %v2091, %v2090
        %v2145 = vpack.c.b16 %v2093, %v2092
        %v2146 = vpack.c.b16 %v2095, %v2094
        %v2147 = vpack.c.b16 %v2097, %v2096
        %v2148 = vpack.c.b16 %v2099, %v2098
        %v2149 = vpack.c.b16 %v2101, %v2100
        %v2150 = vpack.c.b16 %v2103, %v2102
        %v2151 = vpack.c.b16 %v2105, %v2104
        %v2152 = vpack.c.b16 %v2107, %v2106
        %v2153 = vpack.c.b16 %v2109, %v2108
        %v2154 = vpack.c.b16 %v2111, %v2110
        %v2155 = vpack.c.b16 %v2113, %v2112
        %v2156 = vpack.c.b16 %v2115, %v2114
        %v2157 = vpack.c.b16 %v2117, %v2116
        %v2158 = vpack.c.b16 %v2119, %v2118
        %v2159 = vpack.c.b16 %v2121, %v2120
        %v2160 = vpack.c.b16 %v2123, %v2122
        %v2161 = vpack.c.b16 %v2125, %v2124
        %2198 = vmatpush.bf16.msra.mxu0 %v2133
        %2199 = vmatpush.bf16.msra.mxu0 %v2132
        %2200 = vmatpush.bf16.msra.mxu0 %v2131
        %2201 = vmatpush.bf16.msra.mxu0 %v2130
        %2202 = vmatpush.bf16.msra.mxu0 %v2129
        %2203 = vmatpush.bf16.msra.mxu0 %v2128
        %2204 = vmatpush.bf16.msra.mxu0 %v2127
        %2205 = vmatpush.bf16.msra.mxu0 %v2126
        %2206 = vmatmul.bf16.gmra.mxu0 %v1429
        %v2207 = vpop.f32.mrf.mxu0
        %v2208 = vadd.f32 %v1364, %v2207
        %v2209 = vpop.f32.mrf.mxu0
        %v2210 = vadd.f32 %v1364, %v2209
        %2211 = vmatmul.bf16.gmra.mxu0 %v1434
        %v2212 = vpop.f32.mrf.mxu0
        %v2213 = vadd.f32 %v1364, %v2212
        %v2214 = vpop.f32.mrf.mxu0
        %v2215 = vadd.f32 %v1364, %v2214
        %2216 = vmatmul.bf16.gmra.mxu0 %v1439
        %v2217 = vpop.f32.mrf.mxu0
        %v2218 = vadd.f32 %v1364, %v2217
        %v2219 = vpop.f32.mrf.mxu0
        %v2220 = vadd.f32 %v1364, %v2219
        %2221 = vmatmul.bf16.gmra.mxu0 %v1444
        %v2222 = vpop.f32.mrf.mxu0
        %v2223 = vadd.f32 %v1364, %v2222
        %v2224 = vpop.f32.mrf.mxu0
        %v2225 = vadd.f32 %v1364, %v2224
        %2226 = vdwg.mxu0
        %2227 = vmatpush.bf16.msra.mxu0 %v2141
        %2228 = vmatpush.bf16.msra.mxu0 %v2140
        %2229 = vmatpush.bf16.msra.mxu0 %v2139
        %2230 = vmatpush.bf16.msra.mxu0 %v2138
        %2231 = vmatpush.bf16.msra.mxu0 %v2137
        %2232 = vmatpush.bf16.msra.mxu0 %v2136
        %2233 = vmatpush.bf16.msra.mxu0 %v2135
        %2234 = vmatpush.bf16.msra.mxu0 %v2134
        %2235 = vmatmul.bf16.gmra.mxu0 %v1430
        %v2236 = vpop.f32.mrf.mxu0
        %v2237 = vadd.f32 %v2208, %v2236
        %v2238 = vpop.f32.mrf.mxu0
        %v2239 = vadd.f32 %v2210, %v2238
        %2240 = vmatmul.bf16.gmra.mxu0 %v1435
        %v2241 = vpop.f32.mrf.mxu0
        %v2242 = vadd.f32 %v2213, %v2241
        %v2243 = vpop.f32.mrf.mxu0
        %v2244 = vadd.f32 %v2215, %v2243
        %2245 = vmatmul.bf16.gmra.mxu0 %v1440
        %v2246 = vpop.f32.mrf.mxu0
        %v2247 = vadd.f32 %v2218, %v2246
        %v2248 = vpop.f32.mrf.mxu0
        %v2249 = vadd.f32 %v2220, %v2248
        %2250 = vmatmul.bf16.gmra.mxu0 %v1445
        %v2251 = vpop.f32.mrf.mxu0
        %v2252 = vadd.f32 %v2223, %v2251
        %v2253 = vpop.f32.mrf.mxu0
        %v2254 = vadd.f32 %v2225, %v2253
        %2255 = vdwg.mxu0
        %2256 = vmatpush.bf16.msra.mxu0 %v2149
        %2257 = vmatpush.bf16.msra.mxu0 %v2148
        %2258 = vmatpush.bf16.msra.mxu0 %v2147
        %2259 = vmatpush.bf16.msra.mxu0 %v2146
        %2260 = vmatpush.bf16.msra.mxu0 %v2145
        %2261 = vmatpush.bf16.msra.mxu0 %v2144
        %2262 = vmatpush.bf16.msra.mxu0 %v2143
        %2263 = vmatpush.bf16.msra.mxu0 %v2142
        %2264 = vmatmul.bf16.gmra.mxu0 %v1431
        %v2265 = vpop.f32.mrf.mxu0
        %v2266 = vadd.f32 %v2237, %v2265
        %v2267 = vpop.f32.mrf.mxu0
        %v2268 = vadd.f32 %v2239, %v2267
        %2269 = vmatmul.bf16.gmra.mxu0 %v1436
        %v2270 = vpop.f32.mrf.mxu0
        %v2271 = vadd.f32 %v2242, %v2270
        %v2272 = vpop.f32.mrf.mxu0
        %v2273 = vadd.f32 %v2244, %v2272
        %2274 = vmatmul.bf16.gmra.mxu0 %v1441
        %v2275 = vpop.f32.mrf.mxu0
        %v2276 = vadd.f32 %v2247, %v2275
        %v2277 = vpop.f32.mrf.mxu0
        %v2278 = vadd.f32 %v2249, %v2277
        %2279 = vmatmul.bf16.gmra.mxu0 %v1446
        %v2280 = vpop.f32.mrf.mxu0
        %v2281 = vadd.f32 %v2252, %v2280
        %v2282 = vpop.f32.mrf.mxu0
        %v2283 = vadd.f32 %v2254, %v2282
        %2284 = vdwg.mxu0
        %2285 = vmatpush.bf16.msra.mxu0 %v2157
        %2286 = vmatpush.bf16.msra.mxu0 %v2156
        %2287 = vmatpush.bf16.msra.mxu0 %v2155
        %2288 = vmatpush.bf16.msra.mxu0 %v2154
        %2289 = vmatpush.bf16.msra.mxu0 %v2153
        %2290 = vmatpush.bf16.msra.mxu0 %v2152
        %2291 = vmatpush.bf16.msra.mxu0 %v2151
        %2292 = vmatpush.bf16.msra.mxu0 %v2150
        %2293 = vmatmul.bf16.gmra.mxu0 %v1432
        %v2294 = vpop.f32.mrf.mxu0
        %v2295 = vadd.f32 %v2266, %v2294
        %v2296 = vpop.f32.mrf.mxu0
        %v2297 = vadd.f32 %v2268, %v2296
        %2298 = vmatmul.bf16.gmra.mxu0 %v1437
        %v2299 = vpop.f32.mrf.mxu0
        %v2300 = vadd.f32 %v2271, %v2299
        %v2301 = vpop.f32.mrf.mxu0
        %v2302 = vadd.f32 %v2273, %v2301
        %2303 = vmatmul.bf16.gmra.mxu0 %v1442
        %v2304 = vpop.f32.mrf.mxu0
        %v2305 = vadd.f32 %v2276, %v2304
        %v2306 = vpop.f32.mrf.mxu0
        %v2307 = vadd.f32 %v2278, %v2306
        %2308 = vmatmul.bf16.gmra.mxu0 %v1447
        %v2309 = vpop.f32.mrf.mxu0
        %v2310 = vadd.f32 %v2281, %v2309
        %v2311 = vpop.f32.mrf.mxu0
        %v2312 = vadd.f32 %v2283, %v2311
        %2313 = vdwg.mxu0
        %2314 = vmatpush.bf16.msra.mxu0 0
        %2315 = vmatpush.bf16.msra.mxu0 0
        %2316 = vmatpush.bf16.msra.mxu0 0
        %2317 = vmatpush.bf16.msra.mxu0 0
        %2318 = vmatpush.bf16.msra.mxu0 %v2161
        %2319 = vmatpush.bf16.msra.mxu0 %v2160
        %2320 = vmatpush.bf16.msra.mxu0 %v2159
        %2321 = vmatpush.bf16.msra.mxu0 %v2158
        %2322 = vmatmul.bf16.gmra.mxu0 %v1682
        %v2323 = vpop.f32.mrf.mxu0
        %v2324 = vadd.f32 %v2295, %v2323
        %v2325 = vpop.f32.mrf.mxu0
        %v2326 = vadd.f32 %v2297, %v2325
        %2327 = vmatmul.bf16.gmra.mxu0 %v1685
        %v2328 = vpop.f32.mrf.mxu0
        %v2329 = vadd.f32 %v2300, %v2328
        %v2330 = vpop.f32.mrf.mxu0
        %v2331 = vadd.f32 %v2302, %v2330
        %2332 = vmatmul.bf16.gmra.mxu0 %v1688
        %v2333 = vpop.f32.mrf.mxu0
        %v2334 = vadd.f32 %v2305, %v2333
        %v2335 = vpop.f32.mrf.mxu0
        %v2336 = vadd.f32 %v2307, %v2335
        %2337 = vmatmul.bf16.gmra.mxu0 %v1691
        %v2338 = vpop.f32.mrf.mxu0
        %v2339 = vadd.f32 %v2310, %v2338
        %v2340 = vpop.f32.mrf.mxu0
        %v2341 = vadd.f32 %v2312, %v2340
        %2342 = vdwg.mxu0
        %v2343 = vld [vmem:[%s10] sm:$0xf]
        %v2344 = vld [vmem:[%s10 + $0x4] sm:$0xf]
        %v2345 = vld [vmem:[%s10 + $0x8] sm:$0xf]
        %v2346 = vld [vmem:[%s10 + $0xc] sm:$0xf]
        %v2347 = vld [vmem:[%s10 + $0x10] sm:$0xf]
        %v2348 = vld [vmem:[%s10 + $0x14] sm:$0xf]
        %v2349 = vld [vmem:[%s10 + $0x18] sm:$0xf]
        %v2350 = vld [vmem:[%s10 + $0x1c] sm:$0xf]
        %v2351 = vld [vmem:[%s10 + $0x20] sm:$0xf]
        %v2352 = vld [vmem:[%s10 + $0x24] sm:$0xf]
        %v2353 = vld [vmem:[%s10 + $0x28] sm:$0xf]
        %v2354 = vld [vmem:[%s10 + $0x2c] sm:$0xf]
        %v2355 = vld [vmem:[%s10 + $0x30] sm:$0xf]
        %v2356 = vld [vmem:[%s10 + $0x34] sm:$0xf]
        %v2357 = vld [vmem:[%s10 + $0x38] sm:$0xf]
        %v2358 = vld [vmem:[%s10 + $0x3c] sm:$0xf]
        %v2359 = vpack.c.bf16 %v1821, %v1819
        %v2360 = vpack.c.bf16 %v1826, %v1824
        %v2361 = vpack.c.bf16 %v1831, %v1829
        %v2362 = vpack.c.bf16 %v1836, %v1834
        %v2363 = vpack.c.bf16 %v2326, %v2324
        %v2364 = vpack.c.bf16 %v2331, %v2329
        %v2365 = vpack.c.bf16 %v2336, %v2334
        %v2366 = vpack.c.bf16 %v2341, %v2339
        %v2367 = vld [vmem:[%s15 + $0x5] sm:$0x1]
        %v2368 = vperm.slane %v2367, 0
        %v2385 = vunpack.c.l.b16 %v2343
        %v2386 = vunpack.c.l.b16 %v2344
        %v2387 = vunpack.c.l.b16 %v2345
        %v2388 = vunpack.c.l.b16 %v2346
        %v2389 = vunpack.c.l.b16 %v2347
        %v2390 = vunpack.c.l.b16 %v2348
        %v2391 = vunpack.c.l.b16 %v2349
        %v2392 = vunpack.c.l.b16 %v2350
        %v2393 = vunpack.c.l.b16 %v2351
        %v2394 = vunpack.c.l.b16 %v2352
        %v2395 = vunpack.c.l.b16 %v2353
        %v2396 = vunpack.c.l.b16 %v2354
        %v2397 = vunpack.c.l.b16 %v2355
        %v2398 = vunpack.c.l.b16 %v2356
        %v2399 = vunpack.c.l.b16 %v2357
        %v2400 = vunpack.c.l.b16 %v2358
        %v2401 = vpack.c.b16 %v2386, %v2385
        %v2402 = vpack.c.b16 %v2388, %v2387
        %v2403 = vpack.c.b16 %v2390, %v2389
        %v2404 = vpack.c.b16 %v2392, %v2391
        %v2405 = vpack.c.b16 %v2394, %v2393
        %v2406 = vpack.c.b16 %v2396, %v2395
        %v2407 = vpack.c.b16 %v2398, %v2397
        %v2408 = vpack.c.b16 %v2400, %v2399
        %2417 = vmatpush.bf16.msra.mxu0 %v2408
        %2418 = vmatpush.bf16.msra.mxu0 %v2407
        %2419 = vmatpush.bf16.msra.mxu0 %v2406
        %2420 = vmatpush.bf16.msra.mxu0 %v2405
        %2421 = vmatpush.bf16.msra.mxu0 %v2404
        %2422 = vmatpush.bf16.msra.mxu0 %v2403
        %2423 = vmatpush.bf16.msra.mxu0 %v2402
        %2424 = vmatpush.bf16.msra.mxu0 %v2401
        %2425 = vmatmul.bf16.gmra.mxu0 %v2359
        %v2426 = vpop.f32.mrf.mxu0
        %v2427 = vadd.f32 %v2368, %v2426
        %v2428 = vpop.f32.mrf.mxu0
        %v2429 = vadd.f32 %v2368, %v2428
        %2430 = vmatmul.bf16.gmra.mxu0 %v2360
        %v2431 = vpop.f32.mrf.mxu0
        %v2432 = vadd.f32 %v2368, %v2431
        %v2433 = vpop.f32.mrf.mxu0
        %v2434 = vadd.f32 %v2368, %v2433
        %2435 = vmatmul.bf16.gmra.mxu0 %v2361
        %v2436 = vpop.f32.mrf.mxu0
        %v2437 = vadd.f32 %v2368, %v2436
        %v2438 = vpop.f32.mrf.mxu0
        %v2439 = vadd.f32 %v2368, %v2438
        %2440 = vmatmul.bf16.gmra.mxu0 %v2362
        %v2441 = vpop.f32.mrf.mxu0
        %v2442 = vadd.f32 %v2368, %v2441
        %v2443 = vpop.f32.mrf.mxu0
        %v2444 = vadd.f32 %v2368, %v2443
        %2445 = vmatmul.bf16.gmra.mxu0 %v2363
        %v2446 = vpop.f32.mrf.mxu0
        %v2447 = vadd.f32 %v2368, %v2446
        %v2448 = vpop.f32.mrf.mxu0
        %v2449 = vadd.f32 %v2368, %v2448
        %2450 = vmatmul.bf16.gmra.mxu0 %v2364
        %v2451 = vpop.f32.mrf.mxu0
        %v2452 = vadd.f32 %v2368, %v2451
        %v2453 = vpop.f32.mrf.mxu0
        %v2454 = vadd.f32 %v2368, %v2453
        %2455 = vmatmul.bf16.gmra.mxu0 %v2365
        %v2456 = vpop.f32.mrf.mxu0
        %v2457 = vadd.f32 %v2368, %v2456
        %v2458 = vpop.f32.mrf.mxu0
        %v2459 = vadd.f32 %v2368, %v2458
        %2460 = vmatmul.bf16.gmra.mxu0 %v2366
        %v2461 = vpop.f32.mrf.mxu0
        %v2462 = vadd.f32 %v2368, %v2461
        %v2463 = vpop.f32.mrf.mxu0
        %v2464 = vadd.f32 %v2368, %v2463
        %2465 = vdwg.mxu0
        %v2466 = vmul.f32 %v2427, %v2427
        %v2467 = vmul.f32 %v2429, %v2429
        %v2468 = vmul.f32 %v2432, %v2432
        %v2469 = vmul.f32 %v2434, %v2434
        %v2470 = vmul.f32 %v2437, %v2437
        %v2471 = vmul.f32 %v2439, %v2439
        %v2472 = vmul.f32 %v2442, %v2442
        %v2473 = vmul.f32 %v2444, %v2444
        %v2474 = vmul.f32 %v2447, %v2447
        %v2475 = vmul.f32 %v2449, %v2449
        %v2476 = vmul.f32 %v2452, %v2452
        %v2477 = vmul.f32 %v2454, %v2454
        %v2478 = vmul.f32 %v2457, %v2457
        %v2479 = vmul.f32 %v2459, %v2459
        %v2480 = vmul.f32 %v2462, %v2462
        %v2481 = vmul.f32 %v2464, %v2464
        %v2482 = vmul.f32 %v2427, %v2466
        %v2483 = vmul.f32 %v2429, %v2467
        %v2484 = vmul.f32 %v2432, %v2468
        %v2485 = vmul.f32 %v2434, %v2469
        %v2486 = vmul.f32 %v2437, %v2470
        %v2487 = vmul.f32 %v2439, %v2471
        %v2488 = vmul.f32 %v2442, %v2472
        %v2489 = vmul.f32 %v2444, %v2473
        %v2490 = vmul.f32 %v2447, %v2474
        %v2491 = vmul.f32 %v2449, %v2475
        %v2492 = vmul.f32 %v2452, %v2476
        %v2493 = vmul.f32 %v2454, %v2477
        %v2494 = vmul.f32 %v2457, %v2478
        %v2495 = vmul.f32 %v2459, %v2479
        %v2496 = vmul.f32 %v2462, %v2480
        %v2497 = vmul.f32 %v2464, %v2481
        %v2498 = vmul.f32 %v2482, 0.044715
        %v2499 = vmul.f32 %v2483, 0.044715
        %v2500 = vmul.f32 %v2484, 0.044715
        %v2501 = vmul.f32 %v2485, 0.044715
        %v2502 = vmul.f32 %v2486, 0.044715
        %v2503 = vmul.f32 %v2487, 0.044715
        %v2504 = vmul.f32 %v2488, 0.044715
        %v2505 = vmul.f32 %v2489, 0.044715
        %v2506 = vmul.f32 %v2490, 0.044715
        %v2507 = vmul.f32 %v2491, 0.044715
        %v2508 = vmul.f32 %v2492, 0.044715
        %v2509 = vmul.f32 %v2493, 0.044715
        %v2510 = vmul.f32 %v2494, 0.044715
        %v2511 = vmul.f32 %v2495, 0.044715
        %v2512 = vmul.f32 %v2496, 0.044715
        %v2513 = vmul.f32 %v2497, 0.044715
        %v2514 = vadd.f32 %v2427, %v2498
        %v2515 = vadd.f32 %v2429, %v2499
        %v2516 = vadd.f32 %v2432, %v2500
        %v2517 = vadd.f32 %v2434, %v2501
        %v2518 = vadd.f32 %v2437, %v2502
        %v2519 = vadd.f32 %v2439, %v2503
        %v2520 = vadd.f32 %v2442, %v2504
        %v2521 = vadd.f32 %v2444, %v2505
        %v2522 = vadd.f32 %v2447, %v2506
        %v2523 = vadd.f32 %v2449, %v2507
        %v2524 = vadd.f32 %v2452, %v2508
        %v2525 = vadd.f32 %v2454, %v2509
        %v2526 = vadd.f32 %v2457, %v2510
        %v2527 = vadd.f32 %v2459, %v2511
        %v2528 = vadd.f32 %v2462, %v2512
        %v2529 = vadd.f32 %v2464, %v2513
        %v2530 = vmul.f32 %v2514, 0.7978846
        %v2531 = vmul.f32 %v2515, 0.7978846
        %v2532 = vmul.f32 %v2516, 0.7978846
        %v2533 = vmul.f32 %v2517, 0.7978846
        %v2534 = vmul.f32 %v2518, 0.7978846
        %v2535 = vmul.f32 %v2519, 0.7978846
        %v2536 = vmul.f32 %v2520, 0.7978846
        %v2537 = vmul.f32 %v2521, 0.7978846
        %v2538 = vmul.f32 %v2522, 0.7978846
        %v2539 = vmul.f32 %v2523, 0.7978846
        %v2540 = vmul.f32 %v2524, 0.7978846
        %v2541 = vmul.f32 %v2525, 0.7978846
        %v2542 = vmul.f32 %v2526, 0.7978846
        %v2543 = vmul.f32 %v2527, 0.7978846
        %v2544 = vmul.f32 %v2528, 0.7978846
        %v2545 = vmul.f32 %v2529, 0.7978846
        %v2546 = vtanh.pop %v2530
        %v2547 = vtanh.pop %v2531
        %v2548 = vtanh.pop %v2532
        %v2549 = vtanh.pop %v2533
        %v2550 = vtanh.pop %v2534
        %v2551 = vtanh.pop %v2535
        %v2552 = vtanh.pop %v2536
        %v2553 = vtanh.pop %v2537
        %v2554 = vtanh.pop %v2538
        %v2555 = vtanh.pop %v2539
        %v2556 = vtanh.pop %v2540
        %v2557 = vtanh.pop %v2541
        %v2558 = vtanh.pop %v2542
        %v2559 = vtanh.pop %v2543
        %v2560 = vtanh.pop %v2544
        %v2561 = vtanh.pop %v2545
        %v2562 = vadd.f32 %v2546, 1.0
        %v2563 = vadd.f32 %v2547, 1.0
        %v2564 = vadd.f32 %v2548, 1.0
        %v2565 = vadd.f32 %v2549, 1.0
        %v2566 = vadd.f32 %v2550, 1.0
        %v2567 = vadd.f32 %v2551, 1.0
        %v2568 = vadd.f32 %v2552, 1.0
        %v2569 = vadd.f32 %v2553, 1.0
        %v2570 = vadd.f32 %v2554, 1.0
        %v2571 = vadd.f32 %v2555, 1.0
        %v2572 = vadd.f32 %v2556, 1.0
        %v2573 = vadd.f32 %v2557, 1.0
        %v2574 = vadd.f32 %v2558, 1.0
        %v2575 = vadd.f32 %v2559, 1.0
        %v2576 = vadd.f32 %v2560, 1.0
        %v2577 = vadd.f32 %v2561, 1.0
        %v2578 = vmul.f32 %v2562, 0.5
        %v2579 = vmul.f32 %v2563, 0.5
        %v2580 = vmul.f32 %v2564, 0.5
        %v2581 = vmul.f32 %v2565, 0.5
        %v2582 = vmul.f32 %v2566, 0.5
        %v2583 = vmul.f32 %v2567, 0.5
        %v2584 = vmul.f32 %v2568, 0.5
        %v2585 = vmul.f32 %v2569, 0.5
        %v2586 = vmul.f32 %v2570, 0.5
        %v2587 = vmul.f32 %v2571, 0.5
        %v2588 = vmul.f32 %v2572, 0.5
        %v2589 = vmul.f32 %v2573, 0.5
        %v2590 = vmul.f32 %v2574, 0.5
        %v2591 = vmul.f32 %v2575, 0.5
        %v2592 = vmul.f32 %v2576, 0.5
        %v2593 = vmul.f32 %v2577, 0.5
        %v2594 = vmul.f32 %v2427, %v2578
        %v2595 = vmul.f32 %v2429, %v2579
        %v2596 = vmul.f32 %v2432, %v2580
        %v2597 = vmul.f32 %v2434, %v2581
        %v2598 = vmul.f32 %v2437, %v2582
        %v2599 = vmul.f32 %v2439, %v2583
        %v2600 = vmul.f32 %v2442, %v2584
        %v2601 = vmul.f32 %v2444, %v2585
        %v2602 = vmul.f32 %v2447, %v2586
        %v2603 = vmul.f32 %v2449, %v2587
        %v2604 = vmul.f32 %v2452, %v2588
        %v2605 = vmul.f32 %v2454, %v2589
        %v2606 = vmul.f32 %v2457, %v2590
        %v2607 = vmul.f32 %v2459, %v2591
        %v2608 = vmul.f32 %v2462, %v2592
        %v2609 = vmul.f32 %v2464, %v2593
        %v2610 = vld [vmem:[%s11] sm:$0xf]
        %v2611 = vld [vmem:[%s11 + $0x4] sm:$0xf]
        %v2612 = vld [vmem:[%s11 + $0x8] sm:$0xf]
        %v2613 = vld [vmem:[%s11 + $0xc] sm:$0xf]
        %v2614 = vld [vmem:[%s11 + $0x10] sm:$0xf]
        %v2615 = vld [vmem:[%s11 + $0x14] sm:$0xf]
        %v2616 = vld [vmem:[%s11 + $0x18] sm:$0xf]
        %v2617 = vld [vmem:[%s11 + $0x1c] sm:$0xf]
        %v2618 = vld [vmem:[%s11 + $0x20] sm:$0xf]
        %v2619 = vld [vmem:[%s11 + $0x24] sm:$0xf]
        %v2620 = vld [vmem:[%s11 + $0x28] sm:$0xf]
        %v2621 = vld [vmem:[%s11 + $0x2c] sm:$0xf]
        %v2622 = vld [vmem:[%s11 + $0x30] sm:$0xf]
        %v2623 = vld [vmem:[%s11 + $0x34] sm:$0xf]
        %v2624 = vld [vmem:[%s11 + $0x38] sm:$0xf]
        %v2625 = vld [vmem:[%s11 + $0x3c] sm:$0xf]
        %v2626 = vpack.c.bf16 %v2595, %v2594
        %v2627 = vpack.c.bf16 %v2597, %v2596
        %v2628 = vpack.c.bf16 %v2599, %v2598
        %v2629 = vpack.c.bf16 %v2601, %v2600
        %v2630 = vpack.c.bf16 %v2603, %v2602
        %v2631 = vpack.c.bf16 %v2605, %v2604
        %v2632 = vpack.c.bf16 %v2607, %v2606
        %v2633 = vpack.c.bf16 %v2609, %v2608
        %v2634 = vld [vmem:[%s15 + $0x6] sm:$0x1]
        %v2635 = vperm.slane %v2634, 0
        %v2652 = vunpack.c.l.b16 %v2610
        %v2653 = vunpack.c.l.b16 %v2611
        %v2654 = vunpack.c.l.b16 %v2612
        %v2655 = vunpack.c.l.b16 %v2613
        %v2656 = vunpack.c.l.b16 %v2614
        %v2657 = vunpack.c.l.b16 %v2615
        %v2658 = vunpack.c.l.b16 %v2616
        %v2659 = vunpack.c.l.b16 %v2617
        %v2660 = vunpack.c.l.b16 %v2618
        %v2661 = vunpack.c.l.b16 %v2619
        %v2662 = vunpack.c.l.b16 %v2620
        %v2663 = vunpack.c.l.b16 %v2621
        %v2664 = vunpack.c.l.b16 %v2622
        %v2665 = vunpack.c.l.b16 %v2623
        %v2666 = vunpack.c.l.b16 %v2624
        %v2667 = vunpack.c.l.b16 %v2625
        %v2668 = vpack.c.b16 %v2653, %v2652
        %v2669 = vpack.c.b16 %v2655, %v2654
        %v2670 = vpack.c.b16 %v2657, %v2656
        %v2671 = vpack.c.b16 %v2659, %v2658
        %v2672 = vpack.c.b16 %v2661, %v2660
        %v2673 = vpack.c.b16 %v2663, %v2662
        %v2674 = vpack.c.b16 %v2665, %v2664
        %v2675 = vpack.c.b16 %v2667, %v2666
        %2684 = vmatpush.bf16.msra.mxu0 %v2675
        %2685 = vmatpush.bf16.msra.mxu0 %v2674
        %2686 = vmatpush.bf16.msra.mxu0 %v2673
        %2687 = vmatpush.bf16.msra.mxu0 %v2672
        %2688 = vmatpush.bf16.msra.mxu0 %v2671
        %2689 = vmatpush.bf16.msra.mxu0 %v2670
        %2690 = vmatpush.bf16.msra.mxu0 %v2669
        %2691 = vmatpush.bf16.msra.mxu0 %v2668
        %2692 = vmatmul.bf16.gmra.mxu0 %v2626
        %v2693 = vpop.f32.mrf.mxu0
        %v2694 = vadd.f32 %v2635, %v2693
        %v2695 = vpop.f32.mrf.mxu0
        %v2696 = vadd.f32 %v2635, %v2695
        %2697 = vmatmul.bf16.gmra.mxu0 %v2627
        %v2698 = vpop.f32.mrf.mxu0
        %v2699 = vadd.f32 %v2635, %v2698
        %v2700 = vpop.f32.mrf.mxu0
        %v2701 = vadd.f32 %v2635, %v2700
        %2702 = vmatmul.bf16.gmra.mxu0 %v2628
        %v2703 = vpop.f32.mrf.mxu0
        %v2704 = vadd.f32 %v2635, %v2703
        %v2705 = vpop.f32.mrf.mxu0
        %v2706 = vadd.f32 %v2635, %v2705
        %2707 = vmatmul.bf16.gmra.mxu0 %v2629
        %v2708 = vpop.f32.mrf.mxu0
        %v2709 = vadd.f32 %v2635, %v2708
        %v2710 = vpop.f32.mrf.mxu0
        %v2711 = vadd.f32 %v2635, %v2710
        %2712 = vmatmul.bf16.gmra.mxu0 %v2630
        %v2713 = vpop.f32.mrf.mxu0
        %v2714 = vadd.f32 %v2635, %v2713
        %v2715 = vpop.f32.mrf.mxu0
        %v2716 = vadd.f32 %v2635, %v2715
        %2717 = vmatmul.bf16.gmra.mxu0 %v2631
        %v2718 = vpop.f32.mrf.mxu0
        %v2719 = vadd.f32 %v2635, %v2718
        %v2720 = vpop.f32.mrf.mxu0
        %v2721 = vadd.f32 %v2635, %v2720
        %2722 = vmatmul.bf16.gmra.mxu0 %v2632
        %v2723 = vpop.f32.mrf.mxu0
        %v2724 = vadd.f32 %v2635, %v2723
        %v2725 = vpop.f32.mrf.mxu0
        %v2726 = vadd.f32 %v2635, %v2725
        %2727 = vmatmul.bf16.gmra.mxu0 %v2633
        %v2728 = vpop.f32.mrf.mxu0
        %v2729 = vadd.f32 %v2635, %v2728
        %v2730 = vpop.f32.mrf.mxu0
        %v2731 = vadd.f32 %v2635, %v2730
        %2732 = vdwg.mxu0
        %v2733 = vadd.f32 %v1150, %v2694
        %v2734 = vadd.f32 %v1151, %v2696
        %v2735 = vadd.f32 %v1152, %v2699
        %v2736 = vadd.f32 %v1153, %v2701
        %v2737 = vadd.f32 %v1154, %v2704
        %v2738 = vadd.f32 %v1155, %v2706
        %v2739 = vadd.f32 %v1156, %v2709
        %v2740 = vadd.f32 %v1157, %v2711
        %v2741 = vadd.f32 %v1158, %v2714
        %v2742 = vadd.f32 %v1159, %v2716
        %v2743 = vadd.f32 %v1160, %v2719
        %v2744 = vadd.f32 %v1161, %v2721
        %v2745 = vadd.f32 %v1162, %v2724
        %v2746 = vadd.f32 %v1163, %v2726
        %v2747 = vadd.f32 %v1164, %v2729
        %v2748 = vadd.f32 %v1165, %v2731
        %s2749 = scalar_lea.vmem %s9, 64
        %v2750 = vld [vmem:[%s2749] sm:$0xf]
        %v2751 = vld [vmem:[%s2749 + $0x4] sm:$0xf]
        %v2752 = vld [vmem:[%s2749 + $0x8] sm:$0xf]
        %v2753 = vld [vmem:[%s2749 + $0xc] sm:$0xf]
        %v2754 = vld [vmem:[%s2749 + $0x10] sm:$0xf]
        %v2755 = vld [vmem:[%s2749 + $0x14] sm:$0xf]
        %v2756 = vld [vmem:[%s2749 + $0x18] sm:$0xf]
        %v2757 = vld [vmem:[%s2749 + $0x1c] sm:$0xf]
        %v2758 = vld [vmem:[%s2749 + $0x20] sm:$0xf]
        %v2759 = vld [vmem:[%s2749 + $0x24] sm:$0xf]
        %v2760 = vld [vmem:[%s2749 + $0x28] sm:$0xf]
        %v2761 = vld [vmem:[%s2749 + $0x2c] sm:$0xf]
        %v2762 = vld [vmem:[%s2749 + $0x30] sm:$0xf]
        %v2763 = vld [vmem:[%s2749 + $0x34] sm:$0xf]
        %v2764 = vld [vmem:[%s2749 + $0x38] sm:$0xf]
        %v2765 = vld [vmem:[%s2749 + $0x3c] sm:$0xf]
        %v2766 = vpack.c.bf16 %v2734, %v2733
        %v2767 = vpack.c.bf16 %v2736, %v2735
        %v2768 = vpack.c.bf16 %v2738, %v2737
        %v2769 = vpack.c.bf16 %v2740, %v2739
        %v2770 = vpack.c.bf16 %v2742, %v2741
        %v2771 = vpack.c.bf16 %v2744, %v2743
        %v2772 = vpack.c.bf16 %v2746, %v2745
        %v2773 = vpack.c.bf16 %v2748, %v2747
        %v2774 = vld [vmem:[%s15 + $0x2] sm:$0x1]
        %v2775 = vperm.slane %v2774, 0
        %v2792 = vunpack.c.l.b16 %v2750
        %v2793 = vunpack.c.l.b16 %v2751
        %v2794 = vunpack.c.l.b16 %v2752
        %v2795 = vunpack.c.l.b16 %v2753
        %v2796 = vunpack.c.l.b16 %v2754
        %v2797 = vunpack.c.l.b16 %v2755
        %v2798 = vunpack.c.l.b16 %v2756
        %v2799 = vunpack.c.l.b16 %v2757
        %v2800 = vunpack.c.l.b16 %v2758
        %v2801 = vunpack.c.l.b16 %v2759
        %v2802 = vunpack.c.l.b16 %v2760
        %v2803 = vunpack.c.l.b16 %v2761
        %v2804 = vunpack.c.l.b16 %v2762
        %v2805 = vunpack.c.l.b16 %v2763
        %v2806 = vunpack.c.l.b16 %v2764
        %v2807 = vunpack.c.l.b16 %v2765
        %v2808 = vpack.c.b16 %v2793, %v2792
        %v2809 = vpack.c.b16 %v2795, %v2794
        %v2810 = vpack.c.b16 %v2797, %v2796
        %v2811 = vpack.c.b16 %v2799, %v2798
        %v2812 = vpack.c.b16 %v2801, %v2800
        %v2813 = vpack.c.b16 %v2803, %v2802
        %v2814 = vpack.c.b16 %v2805, %v2804
        %v2815 = vpack.c.b16 %v2807, %v2806
        %2824 = vmatpush.bf16.msra.mxu0 %v2815
        %2825 = vmatpush.bf16.msra.mxu0 %v2814
        %2826 = vmatpush.bf16.msra.mxu0 %v2813
        %2827 = vmatpush.bf16.msra.mxu0 %v2812
        %2828 = vmatpush.bf16.msra.mxu0 %v2811
        %2829 = vmatpush.bf16.msra.mxu0 %v2810
        %2830 = vmatpush.bf16.msra.mxu0 %v2809
        %2831 = vmatpush.bf16.msra.mxu0 %v2808
        %2832 = vmatmul.bf16.gmra.mxu0 %v2766
        %v2833 = vpop.f32.mrf.mxu0
        %v2834 = vadd.f32 %v2775, %v2833
        %v2835 = vpop.f32.mrf.mxu0
        %v2836 = vadd.f32 %v2775, %v2835
        %2837 = vmatmul.bf16.gmra.mxu0 %v2767
        %v2838 = vpop.f32.mrf.mxu0
        %v2839 = vadd.f32 %v2775, %v2838
        %v2840 = vpop.f32.mrf.mxu0
        %v2841 = vadd.f32 %v2775, %v2840
        %2842 = vmatmul.bf16.gmra.mxu0 %v2768
        %v2843 = vpop.f32.mrf.mxu0
        %v2844 = vadd.f32 %v2775, %v2843
        %v2845 = vpop.f32.mrf.mxu0
        %v2846 = vadd.f32 %v2775, %v2845
        %2847 = vmatmul.bf16.gmra.mxu0 %v2769
        %v2848 = vpop.f32.mrf.mxu0
        %v2849 = vadd.f32 %v2775, %v2848
        %v2850 = vpop.f32.mrf.mxu0
        %v2851 = vadd.f32 %v2775, %v2850
        %2852 = vmatmul.bf16.gmra.mxu0 %v2770
        %v2853 = vpop.f32.mrf.mxu0
        %v2854 = vadd.f32 %v2775, %v2853
        %v2855 = vpop.f32.mrf.mxu0
        %v2856 = vadd.f32 %v2775, %v2855
        %2857 = vmatmul.bf16.gmra.mxu0 %v2771
        %v2858 = vpop.f32.mrf.mxu0
        %v2859 = vadd.f32 %v2775, %v2858
        %v2860 = vpop.f32.mrf.mxu0
        %v2861 = vadd.f32 %v2775, %v2860
        %2862 = vmatmul.bf16.gmra.mxu0 %v2772
        %v2863 = vpop.f32.mrf.mxu0
        %v2864 = vadd.f32 %v2775, %v2863
        %v2865 = vpop.f32.mrf.mxu0
        %v2866 = vadd.f32 %v2775, %v2865
        %2867 = vmatmul.bf16.gmra.mxu0 %v2773
        %v2868 = vpop.f32.mrf.mxu0
        %v2869 = vadd.f32 %v2775, %v2868
        %v2870 = vpop.f32.mrf.mxu0
        %v2871 = vadd.f32 %v2775, %v2870
        %2872 = vdwg.mxu0
        %v2873 = vxor.u32 %v2834, 2147483648
        %v2874 = vxor.u32 %v2836, 2147483648
        %v2875 = vxor.u32 %v2839, 2147483648
        %v2876 = vxor.u32 %v2841, 2147483648
        %v2877 = vxor.u32 %v2844, 2147483648
        %v2878 = vxor.u32 %v2846, 2147483648
        %v2879 = vxor.u32 %v2849, 2147483648
        %v2880 = vxor.u32 %v2851, 2147483648
        %v2881 = vxor.u32 %v2854, 2147483648
        %v2882 = vxor.u32 %v2856, 2147483648
        %v2883 = vxor.u32 %v2859, 2147483648
        %v2884 = vxor.u32 %v2861, 2147483648
        %v2885 = vxor.u32 %v2864, 2147483648
        %v2886 = vxor.u32 %v2866, 2147483648
        %v2887 = vxor.u32 %v2869, 2147483648
        %v2888 = vxor.u32 %v2871, 2147483648
        %v2889 = vmul.f32 %v2873, 1.442695
        %v2890 = vpow.pop %v2889
        %v2891 = vmul.f32 %v2874, 1.442695
        %v2892 = vpow.pop %v2891
        %v2893 = vmul.f32 %v2875, 1.442695
        %v2894 = vpow.pop %v2893
        %v2895 = vmul.f32 %v2876, 1.442695
        %v2896 = vpow.pop %v2895
        %v2897 = vmul.f32 %v2877, 1.442695
        %v2898 = vpow.pop %v2897
        %v2899 = vmul.f32 %v2878, 1.442695
        %v2900 = vpow.pop %v2899
        %v2901 = vmul.f32 %v2879, 1.442695
        %v2902 = vpow.pop %v2901
        %v2903 = vmul.f32 %v2880, 1.442695
        %v2904 = vpow.pop %v2903
        %v2905 = vmul.f32 %v2881, 1.442695
        %v2906 = vpow.pop %v2905
        %v2907 = vmul.f32 %v2882, 1.442695
        %v2908 = vpow.pop %v2907
        %v2909 = vmul.f32 %v2883, 1.442695
        %v2910 = vpow.pop %v2909
        %v2911 = vmul.f32 %v2884, 1.442695
        %v2912 = vpow.pop %v2911
        %v2913 = vmul.f32 %v2885, 1.442695
        %v2914 = vpow.pop %v2913
        %v2915 = vmul.f32 %v2886, 1.442695
        %v2916 = vpow.pop %v2915
        %v2917 = vmul.f32 %v2887, 1.442695
        %v2918 = vpow.pop %v2917
        %v2919 = vmul.f32 %v2888, 1.442695
        %v2920 = vpow.pop %v2919
        %v2921 = vadd.f32 %v2890, 1.0
        %v2922 = vadd.f32 %v2892, 1.0
        %v2923 = vadd.f32 %v2894, 1.0
        %v2924 = vadd.f32 %v2896, 1.0
        %v2925 = vadd.f32 %v2898, 1.0
        %v2926 = vadd.f32 %v2900, 1.0
        %v2927 = vadd.f32 %v2902, 1.0
        %v2928 = vadd.f32 %v2904, 1.0
        %v2929 = vadd.f32 %v2906, 1.0
        %v2930 = vadd.f32 %v2908, 1.0
        %v2931 = vadd.f32 %v2910, 1.0
        %v2932 = vadd.f32 %v2912, 1.0
        %v2933 = vadd.f32 %v2914, 1.0
        %v2934 = vadd.f32 %v2916, 1.0
        %v2935 = vadd.f32 %v2918, 1.0
        %v2936 = vadd.f32 %v2920, 1.0
        %v2937 = vrcp.pop %v2921
        %v2938 = vmul.f32 %v2921, %v2937
        %v2939 = vsub.f32 1.0, %v2938
        %v2940 = vmul.f32 %v2937, %v2939
        %v2941 = vadd.f32 %v2937, %v2940
        %vm2942 = vweird.f32 %v2921
        %vm2943 = vweird.f32 %v2937
        %vm2944 = vmor %vm2942, %vm2943
        %v2945 = vsel %vm2944, %v2937, %v2941
        %v2946 = vand.u32 2147483647, %v2921
        %vm2947 = vcmp.eq.f32.partialorder %v2946, 8.507059e+37
        %v2948 = vand.u32 %v2921, 2147483648
        %v2949 = vor.u32 1.1754944e-38, %v2948
        %v2950 = vsel %vm2947, %v2949, %v2945
        %v2951 = vmul.f32 1.0, %v2950
        %v2952 = vrcp.pop %v2922
        %v2953 = vmul.f32 %v2922, %v2952
        %v2954 = vsub.f32 1.0, %v2953
        %v2955 = vmul.f32 %v2952, %v2954
        %v2956 = vadd.f32 %v2952, %v2955
        %vm2957 = vweird.f32 %v2922
        %vm2958 = vweird.f32 %v2952
        %vm2959 = vmor %vm2957, %vm2958
        %v2960 = vsel %vm2959, %v2952, %v2956
        %v2961 = vand.u32 2147483647, %v2922
        %vm2962 = vcmp.eq.f32.partialorder %v2961, 8.507059e+37
        %v2963 = vand.u32 %v2922, 2147483648
        %v2964 = vor.u32 1.1754944e-38, %v2963
        %v2965 = vsel %vm2962, %v2964, %v2960
        %v2966 = vmul.f32 1.0, %v2965
        %v2967 = vrcp.pop %v2923
        %v2968 = vmul.f32 %v2923, %v2967
        %v2969 = vsub.f32 1.0, %v2968
        %v2970 = vmul.f32 %v2967, %v2969
        %v2971 = vadd.f32 %v2967, %v2970
        %vm2972 = vweird.f32 %v2923
        %vm2973 = vweird.f32 %v2967
        %vm2974 = vmor %vm2972, %vm2973
        %v2975 = vsel %vm2974, %v2967, %v2971
        %v2976 = vand.u32 2147483647, %v2923
        %vm2977 = vcmp.eq.f32.partialorder %v2976, 8.507059e+37
        %v2978 = vand.u32 %v2923, 2147483648
        %v2979 = vor.u32 1.1754944e-38, %v2978
        %v2980 = vsel %vm2977, %v2979, %v2975
        %v2981 = vmul.f32 1.0, %v2980
        %v2982 = vrcp.pop %v2924
        %v2983 = vmul.f32 %v2924, %v2982
        %v2984 = vsub.f32 1.0, %v2983
        %v2985 = vmul.f32 %v2982, %v2984
        %v2986 = vadd.f32 %v2982, %v2985
        %vm2987 = vweird.f32 %v2924
        %vm2988 = vweird.f32 %v2982
        %vm2989 = vmor %vm2987, %vm2988
        %v2990 = vsel %vm2989, %v2982, %v2986
        %v2991 = vand.u32 2147483647, %v2924
        %vm2992 = vcmp.eq.f32.partialorder %v2991, 8.507059e+37
        %v2993 = vand.u32 %v2924, 2147483648
        %v2994 = vor.u32 1.1754944e-38, %v2993
        %v2995 = vsel %vm2992, %v2994, %v2990
        %v2996 = vmul.f32 1.0, %v2995
        %v2997 = vrcp.pop %v2925
        %v2998 = vmul.f32 %v2925, %v2997
        %v2999 = vsub.f32 1.0, %v2998
        %v3000 = vmul.f32 %v2997, %v2999
        %v3001 = vadd.f32 %v2997, %v3000
        %vm3002 = vweird.f32 %v2925
        %vm3003 = vweird.f32 %v2997
        %vm3004 = vmor %vm3002, %vm3003
        %v3005 = vsel %vm3004, %v2997, %v3001
        %v3006 = vand.u32 2147483647, %v2925
        %vm3007 = vcmp.eq.f32.partialorder %v3006, 8.507059e+37
        %v3008 = vand.u32 %v2925, 2147483648
        %v3009 = vor.u32 1.1754944e-38, %v3008
        %v3010 = vsel %vm3007, %v3009, %v3005
        %v3011 = vmul.f32 1.0, %v3010
        %v3012 = vrcp.pop %v2926
        %v3013 = vmul.f32 %v2926, %v3012
        %v3014 = vsub.f32 1.0, %v3013
        %v3015 = vmul.f32 %v3012, %v3014
        %v3016 = vadd.f32 %v3012, %v3015
        %vm3017 = vweird.f32 %v2926
        %vm3018 = vweird.f32 %v3012
        %vm3019 = vmor %vm3017, %vm3018
        %v3020 = vsel %vm3019, %v3012, %v3016
        %v3021 = vand.u32 2147483647, %v2926
        %vm3022 = vcmp.eq.f32.partialorder %v3021, 8.507059e+37
        %v3023 = vand.u32 %v2926, 2147483648
        %v3024 = vor.u32 1.1754944e-38, %v3023
        %v3025 = vsel %vm3022, %v3024, %v3020
        %v3026 = vmul.f32 1.0, %v3025
        %v3027 = vrcp.pop %v2927
        %v3028 = vmul.f32 %v2927, %v3027
        %v3029 = vsub.f32 1.0, %v3028
        %v3030 = vmul.f32 %v3027, %v3029
        %v3031 = vadd.f32 %v3027, %v3030
        %vm3032 = vweird.f32 %v2927
        %vm3033 = vweird.f32 %v3027
        %vm3034 = vmor %vm3032, %vm3033
        %v3035 = vsel %vm3034, %v3027, %v3031
        %v3036 = vand.u32 2147483647, %v2927
        %vm3037 = vcmp.eq.f32.partialorder %v3036, 8.507059e+37
        %v3038 = vand.u32 %v2927, 2147483648
        %v3039 = vor.u32 1.1754944e-38, %v3038
        %v3040 = vsel %vm3037, %v3039, %v3035
        %v3041 = vmul.f32 1.0, %v3040
        %v3042 = vrcp.pop %v2928
        %v3043 = vmul.f32 %v2928, %v3042
        %v3044 = vsub.f32 1.0, %v3043
        %v3045 = vmul.f32 %v3042, %v3044
        %v3046 = vadd.f32 %v3042, %v3045
        %vm3047 = vweird.f32 %v2928
        %vm3048 = vweird.f32 %v3042
        %vm3049 = vmor %vm3047, %vm3048
        %v3050 = vsel %vm3049, %v3042, %v3046
        %v3051 = vand.u32 2147483647, %v2928
        %vm3052 = vcmp.eq.f32.partialorder %v3051, 8.507059e+37
        %v3053 = vand.u32 %v2928, 2147483648
        %v3054 = vor.u32 1.1754944e-38, %v3053
        %v3055 = vsel %vm3052, %v3054, %v3050
        %v3056 = vmul.f32 1.0, %v3055
        %v3057 = vrcp.pop %v2929
        %v3058 = vmul.f32 %v2929, %v3057
        %v3059 = vsub.f32 1.0, %v3058
        %v3060 = vmul.f32 %v3057, %v3059
        %v3061 = vadd.f32 %v3057, %v3060
        %vm3062 = vweird.f32 %v2929
        %vm3063 = vweird.f32 %v3057
        %vm3064 = vmor %vm3062, %vm3063
        %v3065 = vsel %vm3064, %v3057, %v3061
        %v3066 = vand.u32 2147483647, %v2929
        %vm3067 = vcmp.eq.f32.partialorder %v3066, 8.507059e+37
        %v3068 = vand.u32 %v2929, 2147483648
        %v3069 = vor.u32 1.1754944e-38, %v3068
        %v3070 = vsel %vm3067, %v3069, %v3065
        %v3071 = vmul.f32 1.0, %v3070
        %v3072 = vrcp.pop %v2930
        %v3073 = vmul.f32 %v2930, %v3072
        %v3074 = vsub.f32 1.0, %v3073
        %v3075 = vmul.f32 %v3072, %v3074
        %v3076 = vadd.f32 %v3072, %v3075
        %vm3077 = vweird.f32 %v2930
        %vm3078 = vweird.f32 %v3072
        %vm3079 = vmor %vm3077, %vm3078
        %v3080 = vsel %vm3079, %v3072, %v3076
        %v3081 = vand.u32 2147483647, %v2930
        %vm3082 = vcmp.eq.f32.partialorder %v3081, 8.507059e+37
        %v3083 = vand.u32 %v2930, 2147483648
        %v3084 = vor.u32 1.1754944e-38, %v3083
        %v3085 = vsel %vm3082, %v3084, %v3080
        %v3086 = vmul.f32 1.0, %v3085
        %v3087 = vrcp.pop %v2931
        %v3088 = vmul.f32 %v2931, %v3087
        %v3089 = vsub.f32 1.0, %v3088
        %v3090 = vmul.f32 %v3087, %v3089
        %v3091 = vadd.f32 %v3087, %v3090
        %vm3092 = vweird.f32 %v2931
        %vm3093 = vweird.f32 %v3087
        %vm3094 = vmor %vm3092, %vm3093
        %v3095 = vsel %vm3094, %v3087, %v3091
        %v3096 = vand.u32 2147483647, %v2931
        %vm3097 = vcmp.eq.f32.partialorder %v3096, 8.507059e+37
        %v3098 = vand.u32 %v2931, 2147483648
        %v3099 = vor.u32 1.1754944e-38, %v3098
        %v3100 = vsel %vm3097, %v3099, %v3095
        %v3101 = vmul.f32 1.0, %v3100
        %v3102 = vrcp.pop %v2932
        %v3103 = vmul.f32 %v2932, %v3102
        %v3104 = vsub.f32 1.0, %v3103
        %v3105 = vmul.f32 %v3102, %v3104
        %v3106 = vadd.f32 %v3102, %v3105
        %vm3107 = vweird.f32 %v2932
        %vm3108 = vweird.f32 %v3102
        %vm3109 = vmor %vm3107, %vm3108
        %v3110 = vsel %vm3109, %v3102, %v3106
        %v3111 = vand.u32 2147483647, %v2932
        %vm3112 = vcmp.eq.f32.partialorder %v3111, 8.507059e+37
        %v3113 = vand.u32 %v2932, 2147483648
        %v3114 = vor.u32 1.1754944e-38, %v3113
        %v3115 = vsel %vm3112, %v3114, %v3110
        %v3116 = vmul.f32 1.0, %v3115
        %v3117 = vrcp.pop %v2933
        %v3118 = vmul.f32 %v2933, %v3117
        %v3119 = vsub.f32 1.0, %v3118
        %v3120 = vmul.f32 %v3117, %v3119
        %v3121 = vadd.f32 %v3117, %v3120
        %vm3122 = vweird.f32 %v2933
        %vm3123 = vweird.f32 %v3117
        %vm3124 = vmor %vm3122, %vm3123
        %v3125 = vsel %vm3124, %v3117, %v3121
        %v3126 = vand.u32 2147483647, %v2933
        %vm3127 = vcmp.eq.f32.partialorder %v3126, 8.507059e+37
        %v3128 = vand.u32 %v2933, 2147483648
        %v3129 = vor.u32 1.1754944e-38, %v3128
        %v3130 = vsel %vm3127, %v3129, %v3125
        %v3131 = vmul.f32 1.0, %v3130
        %v3132 = vrcp.pop %v2934
        %v3133 = vmul.f32 %v2934, %v3132
        %v3134 = vsub.f32 1.0, %v3133
        %v3135 = vmul.f32 %v3132, %v3134
        %v3136 = vadd.f32 %v3132, %v3135
        %vm3137 = vweird.f32 %v2934
        %vm3138 = vweird.f32 %v3132
        %vm3139 = vmor %vm3137, %vm3138
        %v3140 = vsel %vm3139, %v3132, %v3136
        %v3141 = vand.u32 2147483647, %v2934
        %vm3142 = vcmp.eq.f32.partialorder %v3141, 8.507059e+37
        %v3143 = vand.u32 %v2934, 2147483648
        %v3144 = vor.u32 1.1754944e-38, %v3143
        %v3145 = vsel %vm3142, %v3144, %v3140
        %v3146 = vmul.f32 1.0, %v3145
        %v3147 = vrcp.pop %v2935
        %v3148 = vmul.f32 %v2935, %v3147
        %v3149 = vsub.f32 1.0, %v3148
        %v3150 = vmul.f32 %v3147, %v3149
        %v3151 = vadd.f32 %v3147, %v3150
        %vm3152 = vweird.f32 %v2935
        %vm3153 = vweird.f32 %v3147
        %vm3154 = vmor %vm3152, %vm3153
        %v3155 = vsel %vm3154, %v3147, %v3151
        %v3156 = vand.u32 2147483647, %v2935
        %vm3157 = vcmp.eq.f32.partialorder %v3156, 8.507059e+37
        %v3158 = vand.u32 %v2935, 2147483648
        %v3159 = vor.u32 1.1754944e-38, %v3158
        %v3160 = vsel %vm3157, %v3159, %v3155
        %v3161 = vmul.f32 1.0, %v3160
        %v3162 = vrcp.pop %v2936
        %v3163 = vmul.f32 %v2936, %v3162
        %v3164 = vsub.f32 1.0, %v3163
        %v3165 = vmul.f32 %v3162, %v3164
        %v3166 = vadd.f32 %v3162, %v3165
        %vm3167 = vweird.f32 %v2936
        %vm3168 = vweird.f32 %v3162
        %vm3169 = vmor %vm3167, %vm3168
        %v3170 = vsel %vm3169, %v3162, %v3166
        %v3171 = vand.u32 2147483647, %v2936
        %vm3172 = vcmp.eq.f32.partialorder %v3171, 8.507059e+37
        %v3173 = vand.u32 %v2936, 2147483648
        %v3174 = vor.u32 1.1754944e-38, %v3173
        %v3175 = vsel %vm3172, %v3174, %v3170
        %v3176 = vmul.f32 1.0, %v3175
        %v3177 = vmul.f32 %v2951, %v527
        %v3178 = vmul.f32 %v2966, %v528
        %v3179 = vmul.f32 %v2981, %v529
        %v3180 = vmul.f32 %v2996, %v530
        %v3181 = vmul.f32 %v3011, %v531
        %v3182 = vmul.f32 %v3026, %v532
        %v3183 = vmul.f32 %v3041, %v533
        %v3184 = vmul.f32 %v3056, %v534
        %v3185 = vmul.f32 %v3071, %v535
        %v3186 = vmul.f32 %v3086, %v536
        %v3187 = vmul.f32 %v3101, %v537
        %v3188 = vmul.f32 %v3116, %v538
        %v3189 = vmul.f32 %v3131, %v539
        %v3190 = vmul.f32 %v3146, %v540
        %v3191 = vmul.f32 %v3161, %v541
        %v3192 = vmul.f32 %v3176, %v542
        %v3193 = vadd.f32 %v3177, %v2733
        %v3194 = vadd.f32 %v3178, %v2734
        %v3195 = vadd.f32 %v3179, %v2735
        %v3196 = vadd.f32 %v3180, %v2736
        %v3197 = vadd.f32 %v3181, %v2737
        %v3198 = vadd.f32 %v3182, %v2738
        %v3199 = vadd.f32 %v3183, %v2739
        %v3200 = vadd.f32 %v3184, %v2740
        %v3201 = vadd.f32 %v3185, %v2741
        %v3202 = vadd.f32 %v3186, %v2742
        %v3203 = vadd.f32 %v3187, %v2743
        %v3204 = vadd.f32 %v3188, %v2744
        %v3205 = vadd.f32 %v3189, %v2745
        %v3206 = vadd.f32 %v3190, %v2746
        %v3207 = vadd.f32 %v3191, %v2747
        %v3208 = vadd.f32 %v3192, %v2748
        %s3209 = scalar_lea.vmem %s12, 16
        %v3210 = vld [vmem:[%s3209] sm:$0xff]
        %v3211 = vld [vmem:[%s3209 + $0x8] sm:$0x1]
        %v3212 = vld [vmem:[%s15 + $0x7] sm:$0x1]
        %v3215 = vrot.slane %v3210, 1
        %v3216 = vrot.slane %v3210, 2
        %v3217 = vrot.slane %v3210, 3
        %v3218 = vrot.slane %v3210, 4
        %v3219 = vrot.slane %v3210, 5
        %v3220 = vrot.slane %v3210, 6
        %v3221 = vrot.slane %v3210, 7
        %v3222 = vperm.slane %v3210, 0
        %v3223 = vperm.slane %v3215, 0
        %v3224 = vperm.slane %v3216, 0
        %v3225 = vperm.slane %v3217, 0
        %v3226 = vperm.slane %v3218, 0
        %v3227 = vperm.slane %v3219, 0
        %v3228 = vperm.slane %v3220, 0
        %v3229 = vperm.slane %v3221, 0
        %v3230 = vperm.slane %v3211, 0
        %v3240 = vmul.f32 %v3193, %v3222
        %v3241 = vmul.f32 %v3194, %v3222
        %v3242 = vmul.f32 %v3195, %v3222
        %v3243 = vmul.f32 %v3196, %v3222
        %v3244 = vmul.f32 %v3197, %v3222
        %v3245 = vmul.f32 %v3198, %v3222
        %v3246 = vmul.f32 %v3199, %v3222
        %v3247 = vmul.f32 %v3200, %v3222
        %v3248 = vmul.f32 %v3193, %v3223
        %v3249 = vmul.f32 %v3194, %v3223
        %v3250 = vmul.f32 %v3195, %v3223
        %v3251 = vmul.f32 %v3196, %v3223
        %v3252 = vmul.f32 %v3197, %v3223
        %v3253 = vmul.f32 %v3198, %v3223
        %v3254 = vmul.f32 %v3199, %v3223
        %v3255 = vmul.f32 %v3200, %v3223
        %v3256 = vmul.f32 %v3193, %v3224
        %v3257 = vmul.f32 %v3194, %v3224
        %v3258 = vmul.f32 %v3195, %v3224
        %v3259 = vmul.f32 %v3196, %v3224
        %v3260 = vmul.f32 %v3197, %v3224
        %v3261 = vmul.f32 %v3198, %v3224
        %v3262 = vmul.f32 %v3199, %v3224
        %v3263 = vmul.f32 %v3200, %v3224
        %v3264 = vmul.f32 %v3193, %v3225
        %v3265 = vmul.f32 %v3194, %v3225
        %v3266 = vmul.f32 %v3195, %v3225
        %v3267 = vmul.f32 %v3196, %v3225
        %v3268 = vmul.f32 %v3197, %v3225
        %v3269 = vmul.f32 %v3198, %v3225
        %v3270 = vmul.f32 %v3199, %v3225
        %v3271 = vmul.f32 %v3200, %v3225
        %v3272 = vmul.f32 %v3193, %v3226
        %v3273 = vmul.f32 %v3194, %v3226
        %v3274 = vmul.f32 %v3195, %v3226
        %v3275 = vmul.f32 %v3196, %v3226
        %v3276 = vmul.f32 %v3197, %v3226
        %v3277 = vmul.f32 %v3198, %v3226
        %v3278 = vmul.f32 %v3199, %v3226
        %v3279 = vmul.f32 %v3200, %v3226
        %v3280 = vmul.f32 %v3193, %v3227
        %v3281 = vmul.f32 %v3194, %v3227
        %v3282 = vmul.f32 %v3195, %v3227
        %v3283 = vmul.f32 %v3196, %v3227
        %v3284 = vmul.f32 %v3197, %v3227
        %v3285 = vmul.f32 %v3198, %v3227
        %v3286 = vmul.f32 %v3199, %v3227
        %v3287 = vmul.f32 %v3200, %v3227
        %v3288 = vmul.f32 %v3193, %v3228
        %v3289 = vmul.f32 %v3194, %v3228
        %v3290 = vmul.f32 %v3195, %v3228
        %v3291 = vmul.f32 %v3196, %v3228
        %v3292 = vmul.f32 %v3197, %v3228
        %v3293 = vmul.f32 %v3198, %v3228
        %v3294 = vmul.f32 %v3199, %v3228
        %v3295 = vmul.f32 %v3200, %v3228
        %v3296 = vmul.f32 %v3193, %v3229
        %v3297 = vmul.f32 %v3194, %v3229
        %v3298 = vmul.f32 %v3195, %v3229
        %v3299 = vmul.f32 %v3196, %v3229
        %v3300 = vmul.f32 %v3197, %v3229
        %v3301 = vmul.f32 %v3198, %v3229
        %v3302 = vmul.f32 %v3199, %v3229
        %v3303 = vmul.f32 %v3200, %v3229
        %v3304 = vmul.f32 %v3193, %v3230
        %v3305 = vmul.f32 %v3194, %v3230
        %v3306 = vmul.f32 %v3195, %v3230
        %v3307 = vmul.f32 %v3196, %v3230
        %v3308 = vmul.f32 %v3197, %v3230
        %v3309 = vmul.f32 %v3198, %v3230
        %v3310 = vmul.f32 %v3199, %v3230
        %v3311 = vmul.f32 %v3200, %v3230
        %v3312 = vpack.c.bf16 %v3240, %v3240
        %v3313 = vpack.c.bf16 %v3241, %v3241
        %v3314 = vpack.c.bf16 %v3242, %v3242
        %v3315 = vpack.c.bf16 %v3243, %v3243
        %v3316 = vpack.c.bf16 %v3244, %v3244
        %v3317 = vpack.c.bf16 %v3245, %v3245
        %v3318 = vpack.c.bf16 %v3246, %v3246
        %v3319 = vpack.c.bf16 %v3247, %v3247
        %v3320 = vpack.c.bf16 %v3248, %v3248
        %v3321 = vpack.c.bf16 %v3249, %v3249
        %v3322 = vpack.c.bf16 %v3250, %v3250
        %v3323 = vpack.c.bf16 %v3251, %v3251
        %v3324 = vpack.c.bf16 %v3252, %v3252
        %v3325 = vpack.c.bf16 %v3253, %v3253
        %v3326 = vpack.c.bf16 %v3254, %v3254
        %v3327 = vpack.c.bf16 %v3255, %v3255
        %v3328 = vpack.c.bf16 %v3256, %v3256
        %v3329 = vpack.c.bf16 %v3257, %v3257
        %v3330 = vpack.c.bf16 %v3258, %v3258
        %v3331 = vpack.c.bf16 %v3259, %v3259
        %v3332 = vpack.c.bf16 %v3260, %v3260
        %v3333 = vpack.c.bf16 %v3261, %v3261
        %v3334 = vpack.c.bf16 %v3262, %v3262
        %v3335 = vpack.c.bf16 %v3263, %v3263
        %v3336 = vpack.c.bf16 %v3264, %v3264
        %v3337 = vpack.c.bf16 %v3265, %v3265
        %v3338 = vpack.c.bf16 %v3266, %v3266
        %v3339 = vpack.c.bf16 %v3267, %v3267
        %v3340 = vpack.c.bf16 %v3268, %v3268
        %v3341 = vpack.c.bf16 %v3269, %v3269
        %v3342 = vpack.c.bf16 %v3270, %v3270
        %v3343 = vpack.c.bf16 %v3271, %v3271
        %v3344 = vpack.c.bf16 %v3272, %v3272
        %v3345 = vpack.c.bf16 %v3273, %v3273
        %v3346 = vpack.c.bf16 %v3274, %v3274
        %v3347 = vpack.c.bf16 %v3275, %v3275
        %v3348 = vpack.c.bf16 %v3276, %v3276
        %v3349 = vpack.c.bf16 %v3277, %v3277
        %v3350 = vpack.c.bf16 %v3278, %v3278
        %v3351 = vpack.c.bf16 %v3279, %v3279
        %v3352 = vpack.c.bf16 %v3280, %v3280
        %v3353 = vpack.c.bf16 %v3281, %v3281
        %v3354 = vpack.c.bf16 %v3282, %v3282
        %v3355 = vpack.c.bf16 %v3283, %v3283
        %v3356 = vpack.c.bf16 %v3284, %v3284
        %v3357 = vpack.c.bf16 %v3285, %v3285
        %v3358 = vpack.c.bf16 %v3286, %v3286
        %v3359 = vpack.c.bf16 %v3287, %v3287
        %v3360 = vpack.c.bf16 %v3288, %v3288
        %v3361 = vpack.c.bf16 %v3289, %v3289
        %v3362 = vpack.c.bf16 %v3290, %v3290
        %v3363 = vpack.c.bf16 %v3291, %v3291
        %v3364 = vpack.c.bf16 %v3292, %v3292
        %v3365 = vpack.c.bf16 %v3293, %v3293
        %v3366 = vpack.c.bf16 %v3294, %v3294
        %v3367 = vpack.c.bf16 %v3295, %v3295
        %v3368 = vpack.c.bf16 %v3296, %v3296
        %v3369 = vpack.c.bf16 %v3297, %v3297
        %v3370 = vpack.c.bf16 %v3298, %v3298
        %v3371 = vpack.c.bf16 %v3299, %v3299
        %v3372 = vpack.c.bf16 %v3300, %v3300
        %v3373 = vpack.c.bf16 %v3301, %v3301
        %v3374 = vpack.c.bf16 %v3302, %v3302
        %v3375 = vpack.c.bf16 %v3303, %v3303
        %v3376 = vpack.c.bf16 %v3304, %v3304
        %v3377 = vpack.c.bf16 %v3305, %v3305
        %v3378 = vpack.c.bf16 %v3306, %v3306
        %v3379 = vpack.c.bf16 %v3307, %v3307
        %v3380 = vpack.c.bf16 %v3308, %v3308
        %v3381 = vpack.c.bf16 %v3309, %v3309
        %v3382 = vpack.c.bf16 %v3310, %v3310
        %v3383 = vpack.c.bf16 %v3311, %v3311
        %v3384 = vperm.slane %v3212, 0
        %v3457 = vunpack.c.l.b16 %v3312
        %v3458 = vunpack.c.l.b16 %v3313
        %v3459 = vunpack.c.l.b16 %v3314
        %v3460 = vunpack.c.l.b16 %v3315
        %v3461 = vunpack.c.l.b16 %v3316
        %v3462 = vunpack.c.l.b16 %v3317
        %v3463 = vunpack.c.l.b16 %v3318
        %v3464 = vunpack.c.l.b16 %v3319
        %v3465 = vunpack.c.l.b16 %v3320
        %v3466 = vunpack.c.l.b16 %v3321
        %v3467 = vunpack.c.l.b16 %v3322
        %v3468 = vunpack.c.l.b16 %v3323
        %v3469 = vunpack.c.l.b16 %v3324
        %v3470 = vunpack.c.l.b16 %v3325
        %v3471 = vunpack.c.l.b16 %v3326
        %v3472 = vunpack.c.l.b16 %v3327
        %v3473 = vunpack.c.l.b16 %v3328
        %v3474 = vunpack.c.l.b16 %v3329
        %v3475 = vunpack.c.l.b16 %v3330
        %v3476 = vunpack.c.l.b16 %v3331
        %v3477 = vunpack.c.l.b16 %v3332
        %v3478 = vunpack.c.l.b16 %v3333
        %v3479 = vunpack.c.l.b16 %v3334
        %v3480 = vunpack.c.l.b16 %v3335
        %v3481 = vunpack.c.l.b16 %v3336
        %v3482 = vunpack.c.l.b16 %v3337
        %v3483 = vunpack.c.l.b16 %v3338
        %v3484 = vunpack.c.l.b16 %v3339
        %v3485 = vunpack.c.l.b16 %v3340
        %v3486 = vunpack.c.l.b16 %v3341
        %v3487 = vunpack.c.l.b16 %v3342
        %v3488 = vunpack.c.l.b16 %v3343
        %v3489 = vunpack.c.l.b16 %v3344
        %v3490 = vunpack.c.l.b16 %v3345
        %v3491 = vunpack.c.l.b16 %v3346
        %v3492 = vunpack.c.l.b16 %v3347
        %v3493 = vunpack.c.l.b16 %v3348
        %v3494 = vunpack.c.l.b16 %v3349
        %v3495 = vunpack.c.l.b16 %v3350
        %v3496 = vunpack.c.l.b16 %v3351
        %v3497 = vunpack.c.l.b16 %v3352
        %v3498 = vunpack.c.l.b16 %v3353
        %v3499 = vunpack.c.l.b16 %v3354
        %v3500 = vunpack.c.l.b16 %v3355
        %v3501 = vunpack.c.l.b16 %v3356
        %v3502 = vunpack.c.l.b16 %v3357
        %v3503 = vunpack.c.l.b16 %v3358
        %v3504 = vunpack.c.l.b16 %v3359
        %v3505 = vunpack.c.l.b16 %v3360
        %v3506 = vunpack.c.l.b16 %v3361
        %v3507 = vunpack.c.l.b16 %v3362
        %v3508 = vunpack.c.l.b16 %v3363
        %v3509 = vunpack.c.l.b16 %v3364
        %v3510 = vunpack.c.l.b16 %v3365
        %v3511 = vunpack.c.l.b16 %v3366
        %v3512 = vunpack.c.l.b16 %v3367
        %v3513 = vunpack.c.l.b16 %v3368
        %v3514 = vunpack.c.l.b16 %v3369
        %v3515 = vunpack.c.l.b16 %v3370
        %v3516 = vunpack.c.l.b16 %v3371
        %v3517 = vunpack.c.l.b16 %v3372
        %v3518 = vunpack.c.l.b16 %v3373
        %v3519 = vunpack.c.l.b16 %v3374
        %v3520 = vunpack.c.l.b16 %v3375
        %v3521 = vunpack.c.l.b16 %v3376
        %v3522 = vunpack.c.l.b16 %v3377
        %v3523 = vunpack.c.l.b16 %v3378
        %v3524 = vunpack.c.l.b16 %v3379
        %v3525 = vunpack.c.l.b16 %v3380
        %v3526 = vunpack.c.l.b16 %v3381
        %v3527 = vunpack.c.l.b16 %v3382
        %v3528 = vunpack.c.l.b16 %v3383
        %v3529 = vpack.c.b16 %v3458, %v3457
        %v3530 = vpack.c.b16 %v3460, %v3459
        %v3531 = vpack.c.b16 %v3462, %v3461
        %v3532 = vpack.c.b16 %v3464, %v3463
        %v3533 = vpack.c.b16 %v3466, %v3465
        %v3534 = vpack.c.b16 %v3468, %v3467
        %v3535 = vpack.c.b16 %v3470, %v3469
        %v3536 = vpack.c.b16 %v3472, %v3471
        %v3537 = vpack.c.b16 %v3474, %v3473
        %v3538 = vpack.c.b16 %v3476, %v3475
        %v3539 = vpack.c.b16 %v3478, %v3477
        %v3540 = vpack.c.b16 %v3480, %v3479
        %v3541 = vpack.c.b16 %v3482, %v3481
        %v3542 = vpack.c.b16 %v3484, %v3483
        %v3543 = vpack.c.b16 %v3486, %v3485
        %v3544 = vpack.c.b16 %v3488, %v3487
        %v3545 = vpack.c.b16 %v3490, %v3489
        %v3546 = vpack.c.b16 %v3492, %v3491
        %v3547 = vpack.c.b16 %v3494, %v3493
        %v3548 = vpack.c.b16 %v3496, %v3495
        %v3549 = vpack.c.b16 %v3498, %v3497
        %v3550 = vpack.c.b16 %v3500, %v3499
        %v3551 = vpack.c.b16 %v3502, %v3501
        %v3552 = vpack.c.b16 %v3504, %v3503
        %v3553 = vpack.c.b16 %v3506, %v3505
        %v3554 = vpack.c.b16 %v3508, %v3507
        %v3555 = vpack.c.b16 %v3510, %v3509
        %v3556 = vpack.c.b16 %v3512, %v3511
        %v3557 = vpack.c.b16 %v3514, %v3513
        %v3558 = vpack.c.b16 %v3516, %v3515
        %v3559 = vpack.c.b16 %v3518, %v3517
        %v3560 = vpack.c.b16 %v3520, %v3519
        %v3561 = vpack.c.b16 %v3522, %v3521
        %v3562 = vpack.c.b16 %v3524, %v3523
        %v3563 = vpack.c.b16 %v3526, %v3525
        %v3564 = vpack.c.b16 %v3528, %v3527
        %3601 = vmatpush.bf16.msra.mxu0 %v3536
        %3602 = vmatpush.bf16.msra.mxu0 %v3535
        %3603 = vmatpush.bf16.msra.mxu0 %v3534
        %3604 = vmatpush.bf16.msra.mxu0 %v3533
        %3605 = vmatpush.bf16.msra.mxu0 %v3532
        %3606 = vmatpush.bf16.msra.mxu0 %v3531
        %3607 = vmatpush.bf16.msra.mxu0 %v3530
        %3608 = vmatpush.bf16.msra.mxu0 %v3529
        %3609 = vmatmul.bf16.gmra.mxu0 %v1429
        %v3610 = vpop.f32.mrf.mxu0
        %v3611 = vadd.f32 %v3384, %v3610
        %v3612 = vpop.f32.mrf.mxu0
        %v3613 = vadd.f32 %v3384, %v3612
        %3614 = vmatmul.bf16.gmra.mxu0 %v1434
        %v3615 = vpop.f32.mrf.mxu0
        %v3616 = vadd.f32 %v3384, %v3615
        %v3617 = vpop.f32.mrf.mxu0
        %v3618 = vadd.f32 %v3384, %v3617
        %3619 = vmatmul.bf16.gmra.mxu0 %v1439
        %v3620 = vpop.f32.mrf.mxu0
        %v3621 = vadd.f32 %v3384, %v3620
        %v3622 = vpop.f32.mrf.mxu0
        %v3623 = vadd.f32 %v3384, %v3622
        %3624 = vmatmul.bf16.gmra.mxu0 %v1444
        %v3625 = vpop.f32.mrf.mxu0
        %v3626 = vadd.f32 %v3384, %v3625
        %v3627 = vpop.f32.mrf.mxu0
        %v3628 = vadd.f32 %v3384, %v3627
        %3629 = vdwg.mxu0
        %3630 = vmatpush.bf16.msra.mxu0 %v3544
        %3631 = vmatpush.bf16.msra.mxu0 %v3543
        %3632 = vmatpush.bf16.msra.mxu0 %v3542
        %3633 = vmatpush.bf16.msra.mxu0 %v3541
        %3634 = vmatpush.bf16.msra.mxu0 %v3540
        %3635 = vmatpush.bf16.msra.mxu0 %v3539
        %3636 = vmatpush.bf16.msra.mxu0 %v3538
        %3637 = vmatpush.bf16.msra.mxu0 %v3537
        %3638 = vmatmul.bf16.gmra.mxu0 %v1430
        %v3639 = vpop.f32.mrf.mxu0
        %v3640 = vadd.f32 %v3611, %v3639
        %v3641 = vpop.f32.mrf.mxu0
        %v3642 = vadd.f32 %v3613, %v3641
        %3643 = vmatmul.bf16.gmra.mxu0 %v1435
        %v3644 = vpop.f32.mrf.mxu0
        %v3645 = vadd.f32 %v3616, %v3644
        %v3646 = vpop.f32.mrf.mxu0
        %v3647 = vadd.f32 %v3618, %v3646
        %3648 = vmatmul.bf16.gmra.mxu0 %v1440
        %v3649 = vpop.f32.mrf.mxu0
        %v3650 = vadd.f32 %v3621, %v3649
        %v3651 = vpop.f32.mrf.mxu0
        %v3652 = vadd.f32 %v3623, %v3651
        %3653 = vmatmul.bf16.gmra.mxu0 %v1445
        %v3654 = vpop.f32.mrf.mxu0
        %v3655 = vadd.f32 %v3626, %v3654
        %v3656 = vpop.f32.mrf.mxu0
        %v3657 = vadd.f32 %v3628, %v3656
        %3658 = vdwg.mxu0
        %3659 = vmatpush.bf16.msra.mxu0 %v3552
        %3660 = vmatpush.bf16.msra.mxu0 %v3551
        %3661 = vmatpush.bf16.msra.mxu0 %v3550
        %3662 = vmatpush.bf16.msra.mxu0 %v3549
        %3663 = vmatpush.bf16.msra.mxu0 %v3548
        %3664 = vmatpush.bf16.msra.mxu0 %v3547
        %3665 = vmatpush.bf16.msra.mxu0 %v3546
        %3666 = vmatpush.bf16.msra.mxu0 %v3545
        %3667 = vmatmul.bf16.gmra.mxu0 %v1431
        %v3668 = vpop.f32.mrf.mxu0
        %v3669 = vadd.f32 %v3640, %v3668
        %v3670 = vpop.f32.mrf.mxu0
        %v3671 = vadd.f32 %v3642, %v3670
        %3672 = vmatmul.bf16.gmra.mxu0 %v1436
        %v3673 = vpop.f32.mrf.mxu0
        %v3674 = vadd.f32 %v3645, %v3673
        %v3675 = vpop.f32.mrf.mxu0
        %v3676 = vadd.f32 %v3647, %v3675
        %3677 = vmatmul.bf16.gmra.mxu0 %v1441
        %v3678 = vpop.f32.mrf.mxu0
        %v3679 = vadd.f32 %v3650, %v3678
        %v3680 = vpop.f32.mrf.mxu0
        %v3681 = vadd.f32 %v3652, %v3680
        %3682 = vmatmul.bf16.gmra.mxu0 %v1446
        %v3683 = vpop.f32.mrf.mxu0
        %v3684 = vadd.f32 %v3655, %v3683
        %v3685 = vpop.f32.mrf.mxu0
        %v3686 = vadd.f32 %v3657, %v3685
        %3687 = vdwg.mxu0
        %3688 = vmatpush.bf16.msra.mxu0 %v3560
        %3689 = vmatpush.bf16.msra.mxu0 %v3559
        %3690 = vmatpush.bf16.msra.mxu0 %v3558
        %3691 = vmatpush.bf16.msra.mxu0 %v3557
        %3692 = vmatpush.bf16.msra.mxu0 %v3556
        %3693 = vmatpush.bf16.msra.mxu0 %v3555
        %3694 = vmatpush.bf16.msra.mxu0 %v3554
        %3695 = vmatpush.bf16.msra.mxu0 %v3553
        %3696 = vmatmul.bf16.gmra.mxu0 %v1432
        %v3697 = vpop.f32.mrf.mxu0
        %v3698 = vadd.f32 %v3669, %v3697
        %v3699 = vpop.f32.mrf.mxu0
        %v3700 = vadd.f32 %v3671, %v3699
        %3701 = vmatmul.bf16.gmra.mxu0 %v1437
        %v3702 = vpop.f32.mrf.mxu0
        %v3703 = vadd.f32 %v3674, %v3702
        %v3704 = vpop.f32.mrf.mxu0
        %v3705 = vadd.f32 %v3676, %v3704
        %3706 = vmatmul.bf16.gmra.mxu0 %v1442
        %v3707 = vpop.f32.mrf.mxu0
        %v3708 = vadd.f32 %v3679, %v3707
        %v3709 = vpop.f32.mrf.mxu0
        %v3710 = vadd.f32 %v3681, %v3709
        %3711 = vmatmul.bf16.gmra.mxu0 %v1447
        %v3712 = vpop.f32.mrf.mxu0
        %v3713 = vadd.f32 %v3684, %v3712
        %v3714 = vpop.f32.mrf.mxu0
        %v3715 = vadd.f32 %v3686, %v3714
        %3716 = vdwg.mxu0
        %3717 = vmatpush.bf16.msra.mxu0 0
        %3718 = vmatpush.bf16.msra.mxu0 0
        %3719 = vmatpush.bf16.msra.mxu0 0
        %3720 = vmatpush.bf16.msra.mxu0 0
        %3721 = vmatpush.bf16.msra.mxu0 %v3564
        %3722 = vmatpush.bf16.msra.mxu0 %v3563
        %3723 = vmatpush.bf16.msra.mxu0 %v3562
        %3724 = vmatpush.bf16.msra.mxu0 %v3561
        %3725 = vmatmul.bf16.gmra.mxu0 %v1682
        %v3726 = vpop.f32.mrf.mxu0
        %v3727 = vadd.f32 %v3698, %v3726
        %v3728 = vpop.f32.mrf.mxu0
        %v3729 = vadd.f32 %v3700, %v3728
        %3730 = vmatmul.bf16.gmra.mxu0 %v1685
        %v3731 = vpop.f32.mrf.mxu0
        %v3732 = vadd.f32 %v3703, %v3731
        %v3733 = vpop.f32.mrf.mxu0
        %v3734 = vadd.f32 %v3705, %v3733
        %3735 = vmatmul.bf16.gmra.mxu0 %v1688
        %v3736 = vpop.f32.mrf.mxu0
        %v3737 = vadd.f32 %v3708, %v3736
        %v3738 = vpop.f32.mrf.mxu0
        %v3739 = vadd.f32 %v3710, %v3738
        %3740 = vmatmul.bf16.gmra.mxu0 %v1691
        %v3741 = vpop.f32.mrf.mxu0
        %v3742 = vadd.f32 %v3713, %v3741
        %v3743 = vpop.f32.mrf.mxu0
        %v3744 = vadd.f32 %v3715, %v3743
        %3745 = vdwg.mxu0
        %v3746 = vmul.f32 %v3201, %v3222
        %v3747 = vmul.f32 %v3202, %v3222
        %v3748 = vmul.f32 %v3203, %v3222
        %v3749 = vmul.f32 %v3204, %v3222
        %v3750 = vmul.f32 %v3205, %v3222
        %v3751 = vmul.f32 %v3206, %v3222
        %v3752 = vmul.f32 %v3207, %v3222
        %v3753 = vmul.f32 %v3208, %v3222
        %v3754 = vmul.f32 %v3201, %v3223
        %v3755 = vmul.f32 %v3202, %v3223
        %v3756 = vmul.f32 %v3203, %v3223
        %v3757 = vmul.f32 %v3204, %v3223
        %v3758 = vmul.f32 %v3205, %v3223
        %v3759 = vmul.f32 %v3206, %v3223
        %v3760 = vmul.f32 %v3207, %v3223
        %v3761 = vmul.f32 %v3208, %v3223
        %v3762 = vmul.f32 %v3201, %v3224
        %v3763 = vmul.f32 %v3202, %v3224
        %v3764 = vmul.f32 %v3203, %v3224
        %v3765 = vmul.f32 %v3204, %v3224
        %v3766 = vmul.f32 %v3205, %v3224
        %v3767 = vmul.f32 %v3206, %v3224
        %v3768 = vmul.f32 %v3207, %v3224
        %v3769 = vmul.f32 %v3208, %v3224
        %v3770 = vmul.f32 %v3201, %v3225
        %v3771 = vmul.f32 %v3202, %v3225
        %v3772 = vmul.f32 %v3203, %v3225
        %v3773 = vmul.f32 %v3204, %v3225
        %v3774 = vmul.f32 %v3205, %v3225
        %v3775 = vmul.f32 %v3206, %v3225
        %v3776 = vmul.f32 %v3207, %v3225
        %v3777 = vmul.f32 %v3208, %v3225
        %v3778 = vmul.f32 %v3201, %v3226
        %v3779 = vmul.f32 %v3202, %v3226
        %v3780 = vmul.f32 %v3203, %v3226
        %v3781 = vmul.f32 %v3204, %v3226
        %v3782 = vmul.f32 %v3205, %v3226
        %v3783 = vmul.f32 %v3206, %v3226
        %v3784 = vmul.f32 %v3207, %v3226
        %v3785 = vmul.f32 %v3208, %v3226
        %v3786 = vmul.f32 %v3201, %v3227
        %v3787 = vmul.f32 %v3202, %v3227
        %v3788 = vmul.f32 %v3203, %v3227
        %v3789 = vmul.f32 %v3204, %v3227
        %v3790 = vmul.f32 %v3205, %v3227
        %v3791 = vmul.f32 %v3206, %v3227
        %v3792 = vmul.f32 %v3207, %v3227
        %v3793 = vmul.f32 %v3208, %v3227
        %v3794 = vmul.f32 %v3201, %v3228
        %v3795 = vmul.f32 %v3202, %v3228
        %v3796 = vmul.f32 %v3203, %v3228
        %v3797 = vmul.f32 %v3204, %v3228
        %v3798 = vmul.f32 %v3205, %v3228
        %v3799 = vmul.f32 %v3206, %v3228
        %v3800 = vmul.f32 %v3207, %v3228
        %v3801 = vmul.f32 %v3208, %v3228
        %v3802 = vmul.f32 %v3201, %v3229
        %v3803 = vmul.f32 %v3202, %v3229
        %v3804 = vmul.f32 %v3203, %v3229
        %v3805 = vmul.f32 %v3204, %v3229
        %v3806 = vmul.f32 %v3205, %v3229
        %v3807 = vmul.f32 %v3206, %v3229
        %v3808 = vmul.f32 %v3207, %v3229
        %v3809 = vmul.f32 %v3208, %v3229
        %v3810 = vmul.f32 %v3201, %v3230
        %v3811 = vmul.f32 %v3202, %v3230
        %v3812 = vmul.f32 %v3203, %v3230
        %v3813 = vmul.f32 %v3204, %v3230
        %v3814 = vmul.f32 %v3205, %v3230
        %v3815 = vmul.f32 %v3206, %v3230
        %v3816 = vmul.f32 %v3207, %v3230
        %v3817 = vmul.f32 %v3208, %v3230
        %v3818 = vpack.c.bf16 %v3746, %v3746
        %v3819 = vpack.c.bf16 %v3747, %v3747
        %v3820 = vpack.c.bf16 %v3748, %v3748
        %v3821 = vpack.c.bf16 %v3749, %v3749
        %v3822 = vpack.c.bf16 %v3750, %v3750
        %v3823 = vpack.c.bf16 %v3751, %v3751
        %v3824 = vpack.c.bf16 %v3752, %v3752
        %v3825 = vpack.c.bf16 %v3753, %v3753
        %v3826 = vpack.c.bf16 %v3754, %v3754
        %v3827 = vpack.c.bf16 %v3755, %v3755
        %v3828 = vpack.c.bf16 %v3756, %v3756
        %v3829 = vpack.c.bf16 %v3757, %v3757
        %v3830 = vpack.c.bf16 %v3758, %v3758
        %v3831 = vpack.c.bf16 %v3759, %v3759
        %v3832 = vpack.c.bf16 %v3760, %v3760
        %v3833 = vpack.c.bf16 %v3761, %v3761
        %v3834 = vpack.c.bf16 %v3762, %v3762
        %v3835 = vpack.c.bf16 %v3763, %v3763
        %v3836 = vpack.c.bf16 %v3764, %v3764
        %v3837 = vpack.c.bf16 %v3765, %v3765
        %v3838 = vpack.c.bf16 %v3766, %v3766
        %v3839 = vpack.c.bf16 %v3767, %v3767
        %v3840 = vpack.c.bf16 %v3768, %v3768
        %v3841 = vpack.c.bf16 %v3769, %v3769
        %v3842 = vpack.c.bf16 %v3770, %v3770
        %v3843 = vpack.c.bf16 %v3771, %v3771
        %v3844 = vpack.c.bf16 %v3772, %v3772
        %v3845 = vpack.c.bf16 %v3773, %v3773
        %v3846 = vpack.c.bf16 %v3774, %v3774
        %v3847 = vpack.c.bf16 %v3775, %v3775
        %v3848 = vpack.c.bf16 %v3776, %v3776
        %v3849 = vpack.c.bf16 %v3777, %v3777
        %v3850 = vpack.c.bf16 %v3778, %v3778
        %v3851 = vpack.c.bf16 %v3779, %v3779
        %v3852 = vpack.c.bf16 %v3780, %v3780
        %v3853 = vpack.c.bf16 %v3781, %v3781
        %v3854 = vpack.c.bf16 %v3782, %v3782
        %v3855 = vpack.c.bf16 %v3783, %v3783
        %v3856 = vpack.c.bf16 %v3784, %v3784
        %v3857 = vpack.c.bf16 %v3785, %v3785
        %v3858 = vpack.c.bf16 %v3786, %v3786
        %v3859 = vpack.c.bf16 %v3787, %v3787
        %v3860 = vpack.c.bf16 %v3788, %v3788
        %v3861 = vpack.c.bf16 %v3789, %v3789
        %v3862 = vpack.c.bf16 %v3790, %v3790
        %v3863 = vpack.c.bf16 %v3791, %v3791
        %v3864 = vpack.c.bf16 %v3792, %v3792
        %v3865 = vpack.c.bf16 %v3793, %v3793
        %v3866 = vpack.c.bf16 %v3794, %v3794
        %v3867 = vpack.c.bf16 %v3795, %v3795
        %v3868 = vpack.c.bf16 %v3796, %v3796
        %v3869 = vpack.c.bf16 %v3797, %v3797
        %v3870 = vpack.c.bf16 %v3798, %v3798
        %v3871 = vpack.c.bf16 %v3799, %v3799
        %v3872 = vpack.c.bf16 %v3800, %v3800
        %v3873 = vpack.c.bf16 %v3801, %v3801
        %v3874 = vpack.c.bf16 %v3802, %v3802
        %v3875 = vpack.c.bf16 %v3803, %v3803
        %v3876 = vpack.c.bf16 %v3804, %v3804
        %v3877 = vpack.c.bf16 %v3805, %v3805
        %v3878 = vpack.c.bf16 %v3806, %v3806
        %v3879 = vpack.c.bf16 %v3807, %v3807
        %v3880 = vpack.c.bf16 %v3808, %v3808
        %v3881 = vpack.c.bf16 %v3809, %v3809
        %v3882 = vpack.c.bf16 %v3810, %v3810
        %v3883 = vpack.c.bf16 %v3811, %v3811
        %v3884 = vpack.c.bf16 %v3812, %v3812
        %v3885 = vpack.c.bf16 %v3813, %v3813
        %v3886 = vpack.c.bf16 %v3814, %v3814
        %v3887 = vpack.c.bf16 %v3815, %v3815
        %v3888 = vpack.c.bf16 %v3816, %v3816
        %v3889 = vpack.c.bf16 %v3817, %v3817
        %v3962 = vunpack.c.l.b16 %v3818
        %v3963 = vunpack.c.l.b16 %v3819
        %v3964 = vunpack.c.l.b16 %v3820
        %v3965 = vunpack.c.l.b16 %v3821
        %v3966 = vunpack.c.l.b16 %v3822
        %v3967 = vunpack.c.l.b16 %v3823
        %v3968 = vunpack.c.l.b16 %v3824
        %v3969 = vunpack.c.l.b16 %v3825
        %v3970 = vunpack.c.l.b16 %v3826
        %v3971 = vunpack.c.l.b16 %v3827
        %v3972 = vunpack.c.l.b16 %v3828
        %v3973 = vunpack.c.l.b16 %v3829
        %v3974 = vunpack.c.l.b16 %v3830
        %v3975 = vunpack.c.l.b16 %v3831
        %v3976 = vunpack.c.l.b16 %v3832
        %v3977 = vunpack.c.l.b16 %v3833
        %v3978 = vunpack.c.l.b16 %v3834
        %v3979 = vunpack.c.l.b16 %v3835
        %v3980 = vunpack.c.l.b16 %v3836
        %v3981 = vunpack.c.l.b16 %v3837
        %v3982 = vunpack.c.l.b16 %v3838
        %v3983 = vunpack.c.l.b16 %v3839
        %v3984 = vunpack.c.l.b16 %v3840
        %v3985 = vunpack.c.l.b16 %v3841
        %v3986 = vunpack.c.l.b16 %v3842
        %v3987 = vunpack.c.l.b16 %v3843
        %v3988 = vunpack.c.l.b16 %v3844
        %v3989 = vunpack.c.l.b16 %v3845
        %v3990 = vunpack.c.l.b16 %v3846
        %v3991 = vunpack.c.l.b16 %v3847
        %v3992 = vunpack.c.l.b16 %v3848
        %v3993 = vunpack.c.l.b16 %v3849
        %v3994 = vunpack.c.l.b16 %v3850
        %v3995 = vunpack.c.l.b16 %v3851
        %v3996 = vunpack.c.l.b16 %v3852
        %v3997 = vunpack.c.l.b16 %v3853
        %v3998 = vunpack.c.l.b16 %v3854
        %v3999 = vunpack.c.l.b16 %v3855
        %v4000 = vunpack.c.l.b16 %v3856
        %v4001 = vunpack.c.l.b16 %v3857
        %v4002 = vunpack.c.l.b16 %v3858
        %v4003 = vunpack.c.l.b16 %v3859
        %v4004 = vunpack.c.l.b16 %v3860
        %v4005 = vunpack.c.l.b16 %v3861
        %v4006 = vunpack.c.l.b16 %v3862
        %v4007 = vunpack.c.l.b16 %v3863
        %v4008 = vunpack.c.l.b16 %v3864
        %v4009 = vunpack.c.l.b16 %v3865
        %v4010 = vunpack.c.l.b16 %v3866
        %v4011 = vunpack.c.l.b16 %v3867
        %v4012 = vunpack.c.l.b16 %v3868
        %v4013 = vunpack.c.l.b16 %v3869
        %v4014 = vunpack.c.l.b16 %v3870
        %v4015 = vunpack.c.l.b16 %v3871
        %v4016 = vunpack.c.l.b16 %v3872
        %v4017 = vunpack.c.l.b16 %v3873
        %v4018 = vunpack.c.l.b16 %v3874
        %v4019 = vunpack.c.l.b16 %v3875
        %v4020 = vunpack.c.l.b16 %v3876
        %v4021 = vunpack.c.l.b16 %v3877
        %v4022 = vunpack.c.l.b16 %v3878
        %v4023 = vunpack.c.l.b16 %v3879
        %v4024 = vunpack.c.l.b16 %v3880
        %v4025 = vunpack.c.l.b16 %v3881
        %v4026 = vunpack.c.l.b16 %v3882
        %v4027 = vunpack.c.l.b16 %v3883
        %v4028 = vunpack.c.l.b16 %v3884
        %v4029 = vunpack.c.l.b16 %v3885
        %v4030 = vunpack.c.l.b16 %v3886
        %v4031 = vunpack.c.l.b16 %v3887
        %v4032 = vunpack.c.l.b16 %v3888
        %v4033 = vunpack.c.l.b16 %v3889
        %v4034 = vpack.c.b16 %v3963, %v3962
        %v4035 = vpack.c.b16 %v3965, %v3964
        %v4036 = vpack.c.b16 %v3967, %v3966
        %v4037 = vpack.c.b16 %v3969, %v3968
        %v4038 = vpack.c.b16 %v3971, %v3970
        %v4039 = vpack.c.b16 %v3973, %v3972
        %v4040 = vpack.c.b16 %v3975, %v3974
        %v4041 = vpack.c.b16 %v3977, %v3976
        %v4042 = vpack.c.b16 %v3979, %v3978
        %v4043 = vpack.c.b16 %v3981, %v3980
        %v4044 = vpack.c.b16 %v3983, %v3982
        %v4045 = vpack.c.b16 %v3985, %v3984
        %v4046 = vpack.c.b16 %v3987, %v3986
        %v4047 = vpack.c.b16 %v3989, %v3988
        %v4048 = vpack.c.b16 %v3991, %v3990
        %v4049 = vpack.c.b16 %v3993, %v3992
        %v4050 = vpack.c.b16 %v3995, %v3994
        %v4051 = vpack.c.b16 %v3997, %v3996
        %v4052 = vpack.c.b16 %v3999, %v3998
        %v4053 = vpack.c.b16 %v4001, %v4000
        %v4054 = vpack.c.b16 %v4003, %v4002
        %v4055 = vpack.c.b16 %v4005, %v4004
        %v4056 = vpack.c.b16 %v4007, %v4006
        %v4057 = vpack.c.b16 %v4009, %v4008
        %v4058 = vpack.c.b16 %v4011, %v4010
        %v4059 = vpack.c.b16 %v4013, %v4012
        %v4060 = vpack.c.b16 %v4015, %v4014
        %v4061 = vpack.c.b16 %v4017, %v4016
        %v4062 = vpack.c.b16 %v4019, %v4018
        %v4063 = vpack.c.b16 %v4021, %v4020
        %v4064 = vpack.c.b16 %v4023, %v4022
        %v4065 = vpack.c.b16 %v4025, %v4024
        %v4066 = vpack.c.b16 %v4027, %v4026
        %v4067 = vpack.c.b16 %v4029, %v4028
        %v4068 = vpack.c.b16 %v4031, %v4030
        %v4069 = vpack.c.b16 %v4033, %v4032
        %4106 = vmatpush.bf16.msra.mxu0 %v4041
        %4107 = vmatpush.bf16.msra.mxu0 %v4040
        %4108 = vmatpush.bf16.msra.mxu0 %v4039
        %4109 = vmatpush.bf16.msra.mxu0 %v4038
        %4110 = vmatpush.bf16.msra.mxu0 %v4037
        %4111 = vmatpush.bf16.msra.mxu0 %v4036
        %4112 = vmatpush.bf16.msra.mxu0 %v4035
        %4113 = vmatpush.bf16.msra.mxu0 %v4034
        %4114 = vmatmul.bf16.gmra.mxu0 %v1429
        %v4115 = vpop.f32.mrf.mxu0
        %v4116 = vadd.f32 %v3384, %v4115
        %v4117 = vpop.f32.mrf.mxu0
        %v4118 = vadd.f32 %v3384, %v4117
        %4119 = vmatmul.bf16.gmra.mxu0 %v1434
        %v4120 = vpop.f32.mrf.mxu0
        %v4121 = vadd.f32 %v3384, %v4120
        %v4122 = vpop.f32.mrf.mxu0
        %v4123 = vadd.f32 %v3384, %v4122
        %4124 = vmatmul.bf16.gmra.mxu0 %v1439
        %v4125 = vpop.f32.mrf.mxu0
        %v4126 = vadd.f32 %v3384, %v4125
        %v4127 = vpop.f32.mrf.mxu0
        %v4128 = vadd.f32 %v3384, %v4127
        %4129 = vmatmul.bf16.gmra.mxu0 %v1444
        %v4130 = vpop.f32.mrf.mxu0
        %v4131 = vadd.f32 %v3384, %v4130
        %v4132 = vpop.f32.mrf.mxu0
        %v4133 = vadd.f32 %v3384, %v4132
        %4134 = vdwg.mxu0
        %4135 = vmatpush.bf16.msra.mxu0 %v4049
        %4136 = vmatpush.bf16.msra.mxu0 %v4048
        %4137 = vmatpush.bf16.msra.mxu0 %v4047
        %4138 = vmatpush.bf16.msra.mxu0 %v4046
        %4139 = vmatpush.bf16.msra.mxu0 %v4045
        %4140 = vmatpush.bf16.msra.mxu0 %v4044
        %4141 = vmatpush.bf16.msra.mxu0 %v4043
        %4142 = vmatpush.bf16.msra.mxu0 %v4042
        %4143 = vmatmul.bf16.gmra.mxu0 %v1430
        %v4144 = vpop.f32.mrf.mxu0
        %v4145 = vadd.f32 %v4116, %v4144
        %v4146 = vpop.f32.mrf.mxu0
        %v4147 = vadd.f32 %v4118, %v4146
        %4148 = vmatmul.bf16.gmra.mxu0 %v1435
        %v4149 = vpop.f32.mrf.mxu0
        %v4150 = vadd.f32 %v4121, %v4149
        %v4151 = vpop.f32.mrf.mxu0
        %v4152 = vadd.f32 %v4123, %v4151
        %4153 = vmatmul.bf16.gmra.mxu0 %v1440
        %v4154 = vpop.f32.mrf.mxu0
        %v4155 = vadd.f32 %v4126, %v4154
        %v4156 = vpop.f32.mrf.mxu0
        %v4157 = vadd.f32 %v4128, %v4156
        %4158 = vmatmul.bf16.gmra.mxu0 %v1445
        %v4159 = vpop.f32.mrf.mxu0
        %v4160 = vadd.f32 %v4131, %v4159
        %v4161 = vpop.f32.mrf.mxu0
        %v4162 = vadd.f32 %v4133, %v4161
        %4163 = vdwg.mxu0
        %4164 = vmatpush.bf16.msra.mxu0 %v4057
        %4165 = vmatpush.bf16.msra.mxu0 %v4056
        %4166 = vmatpush.bf16.msra.mxu0 %v4055
        %4167 = vmatpush.bf16.msra.mxu0 %v4054
        %4168 = vmatpush.bf16.msra.mxu0 %v4053
        %4169 = vmatpush.bf16.msra.mxu0 %v4052
        %4170 = vmatpush.bf16.msra.mxu0 %v4051
        %4171 = vmatpush.bf16.msra.mxu0 %v4050
        %4172 = vmatmul.bf16.gmra.mxu0 %v1431
        %v4173 = vpop.f32.mrf.mxu0
        %v4174 = vadd.f32 %v4145, %v4173
        %v4175 = vpop.f32.mrf.mxu0
        %v4176 = vadd.f32 %v4147, %v4175
        %4177 = vmatmul.bf16.gmra.mxu0 %v1436
        %v4178 = vpop.f32.mrf.mxu0
        %v4179 = vadd.f32 %v4150, %v4178
        %v4180 = vpop.f32.mrf.mxu0
        %v4181 = vadd.f32 %v4152, %v4180
        %4182 = vmatmul.bf16.gmra.mxu0 %v1441
        %v4183 = vpop.f32.mrf.mxu0
        %v4184 = vadd.f32 %v4155, %v4183
        %v4185 = vpop.f32.mrf.mxu0
        %v4186 = vadd.f32 %v4157, %v4185
        %4187 = vmatmul.bf16.gmra.mxu0 %v1446
        %v4188 = vpop.f32.mrf.mxu0
        %v4189 = vadd.f32 %v4160, %v4188
        %v4190 = vpop.f32.mrf.mxu0
        %v4191 = vadd.f32 %v4162, %v4190
        %4192 = vdwg.mxu0
        %4193 = vmatpush.bf16.msra.mxu0 %v4065
        %4194 = vmatpush.bf16.msra.mxu0 %v4064
        %4195 = vmatpush.bf16.msra.mxu0 %v4063
        %4196 = vmatpush.bf16.msra.mxu0 %v4062
        %4197 = vmatpush.bf16.msra.mxu0 %v4061
        %4198 = vmatpush.bf16.msra.mxu0 %v4060
        %4199 = vmatpush.bf16.msra.mxu0 %v4059
        %4200 = vmatpush.bf16.msra.mxu0 %v4058
        %4201 = vmatmul.bf16.gmra.mxu0 %v1432
        %v4202 = vpop.f32.mrf.mxu0
        %v4203 = vadd.f32 %v4174, %v4202
        %v4204 = vpop.f32.mrf.mxu0
        %v4205 = vadd.f32 %v4176, %v4204
        %4206 = vmatmul.bf16.gmra.mxu0 %v1437
        %v4207 = vpop.f32.mrf.mxu0
        %v4208 = vadd.f32 %v4179, %v4207
        %v4209 = vpop.f32.mrf.mxu0
        %v4210 = vadd.f32 %v4181, %v4209
        %4211 = vmatmul.bf16.gmra.mxu0 %v1442
        %v4212 = vpop.f32.mrf.mxu0
        %v4213 = vadd.f32 %v4184, %v4212
        %v4214 = vpop.f32.mrf.mxu0
        %v4215 = vadd.f32 %v4186, %v4214
        %4216 = vmatmul.bf16.gmra.mxu0 %v1447
        %v4217 = vpop.f32.mrf.mxu0
        %v4218 = vadd.f32 %v4189, %v4217
        %v4219 = vpop.f32.mrf.mxu0
        %v4220 = vadd.f32 %v4191, %v4219
        %4221 = vdwg.mxu0
        %4222 = vmatpush.bf16.msra.mxu0 0
        %4223 = vmatpush.bf16.msra.mxu0 0
        %4224 = vmatpush.bf16.msra.mxu0 0
        %4225 = vmatpush.bf16.msra.mxu0 0
        %4226 = vmatpush.bf16.msra.mxu0 %v4069
        %4227 = vmatpush.bf16.msra.mxu0 %v4068
        %4228 = vmatpush.bf16.msra.mxu0 %v4067
        %4229 = vmatpush.bf16.msra.mxu0 %v4066
        %4230 = vmatmul.bf16.gmra.mxu0 %v1682
        %v4231 = vpop.f32.mrf.mxu0
        %v4232 = vadd.f32 %v4203, %v4231
        %v4233 = vpop.f32.mrf.mxu0
        %v4234 = vadd.f32 %v4205, %v4233
        %4235 = vmatmul.bf16.gmra.mxu0 %v1685
        %v4236 = vpop.f32.mrf.mxu0
        %v4237 = vadd.f32 %v4208, %v4236
        %v4238 = vpop.f32.mrf.mxu0
        %v4239 = vadd.f32 %v4210, %v4238
        %4240 = vmatmul.bf16.gmra.mxu0 %v1688
        %v4241 = vpop.f32.mrf.mxu0
        %v4242 = vadd.f32 %v4213, %v4241
        %v4243 = vpop.f32.mrf.mxu0
        %v4244 = vadd.f32 %v4215, %v4243
        %4245 = vmatmul.bf16.gmra.mxu0 %v1691
        %v4246 = vpop.f32.mrf.mxu0
        %v4247 = vadd.f32 %v4218, %v4246
        %v4248 = vpop.f32.mrf.mxu0
        %v4249 = vadd.f32 %v4220, %v4248
        %4250 = vdwg.mxu0
        %s4251 = scalar_lea.vmem %s10, 64
        %v4252 = vld [vmem:[%s4251] sm:$0xf]
        %v4253 = vld [vmem:[%s4251 + $0x4] sm:$0xf]
        %v4254 = vld [vmem:[%s4251 + $0x8] sm:$0xf]
        %v4255 = vld [vmem:[%s4251 + $0xc] sm:$0xf]
        %v4256 = vld [vmem:[%s4251 + $0x10] sm:$0xf]
        %v4257 = vld [vmem:[%s4251 + $0x14] sm:$0xf]
        %v4258 = vld [vmem:[%s4251 + $0x18] sm:$0xf]
        %v4259 = vld [vmem:[%s4251 + $0x1c] sm:$0xf]
        %v4260 = vld [vmem:[%s4251 + $0x20] sm:$0xf]
        %v4261 = vld [vmem:[%s4251 + $0x24] sm:$0xf]
        %v4262 = vld [vmem:[%s4251 + $0x28] sm:$0xf]
        %v4263 = vld [vmem:[%s4251 + $0x2c] sm:$0xf]
        %v4264 = vld [vmem:[%s4251 + $0x30] sm:$0xf]
        %v4265 = vld [vmem:[%s4251 + $0x34] sm:$0xf]
        %v4266 = vld [vmem:[%s4251 + $0x38] sm:$0xf]
        %v4267 = vld [vmem:[%s4251 + $0x3c] sm:$0xf]
        %v4268 = vpack.c.bf16 %v3729, %v3727
        %v4269 = vpack.c.bf16 %v3734, %v3732
        %v4270 = vpack.c.bf16 %v3739, %v3737
        %v4271 = vpack.c.bf16 %v3744, %v3742
        %v4272 = vpack.c.bf16 %v4234, %v4232
        %v4273 = vpack.c.bf16 %v4239, %v4237
        %v4274 = vpack.c.bf16 %v4244, %v4242
        %v4275 = vpack.c.bf16 %v4249, %v4247
        %v4276 = vld [vmem:[%s15 + $0x8] sm:$0x1]
        %v4277 = vperm.slane %v4276, 0
        %v4294 = vunpack.c.l.b16 %v4252
        %v4295 = vunpack.c.l.b16 %v4253
        %v4296 = vunpack.c.l.b16 %v4254
        %v4297 = vunpack.c.l.b16 %v4255
        %v4298 = vunpack.c.l.b16 %v4256
        %v4299 = vunpack.c.l.b16 %v4257
        %v4300 = vunpack.c.l.b16 %v4258
        %v4301 = vunpack.c.l.b16 %v4259
        %v4302 = vunpack.c.l.b16 %v4260
        %v4303 = vunpack.c.l.b16 %v4261
        %v4304 = vunpack.c.l.b16 %v4262
        %v4305 = vunpack.c.l.b16 %v4263
        %v4306 = vunpack.c.l.b16 %v4264
        %v4307 = vunpack.c.l.b16 %v4265
        %v4308 = vunpack.c.l.b16 %v4266
        %v4309 = vunpack.c.l.b16 %v4267
        %v4310 = vpack.c.b16 %v4295, %v4294
        %v4311 = vpack.c.b16 %v4297, %v4296
        %v4312 = vpack.c.b16 %v4299, %v4298
        %v4313 = vpack.c.b16 %v4301, %v4300
        %v4314 = vpack.c.b16 %v4303, %v4302
        %v4315 = vpack.c.b16 %v4305, %v4304
        %v4316 = vpack.c.b16 %v4307, %v4306
        %v4317 = vpack.c.b16 %v4309, %v4308
        %4326 = vmatpush.bf16.msra.mxu0 %v4317
        %4327 = vmatpush.bf16.msra.mxu0 %v4316
        %4328 = vmatpush.bf16.msra.mxu0 %v4315
        %4329 = vmatpush.bf16.msra.mxu0 %v4314
        %4330 = vmatpush.bf16.msra.mxu0 %v4313
        %4331 = vmatpush.bf16.msra.mxu0 %v4312
        %4332 = vmatpush.bf16.msra.mxu0 %v4311
        %4333 = vmatpush.bf16.msra.mxu0 %v4310
        %4334 = vmatmul.bf16.gmra.mxu0 %v4268
        %v4335 = vpop.f32.mrf.mxu0
        %v4336 = vadd.f32 %v4277, %v4335
        %v4337 = vpop.f32.mrf.mxu0
        %v4338 = vadd.f32 %v4277, %v4337
        %4339 = vmatmul.bf16.gmra.mxu0 %v4269
        %v4340 = vpop.f32.mrf.mxu0
        %v4341 = vadd.f32 %v4277, %v4340
        %v4342 = vpop.f32.mrf.mxu0
        %v4343 = vadd.f32 %v4277, %v4342
        %4344 = vmatmul.bf16.gmra.mxu0 %v4270
        %v4345 = vpop.f32.mrf.mxu0
        %v4346 = vadd.f32 %v4277, %v4345
        %v4347 = vpop.f32.mrf.mxu0
        %v4348 = vadd.f32 %v4277, %v4347
        %4349 = vmatmul.bf16.gmra.mxu0 %v4271
        %v4350 = vpop.f32.mrf.mxu0
        %v4351 = vadd.f32 %v4277, %v4350
        %v4352 = vpop.f32.mrf.mxu0
        %v4353 = vadd.f32 %v4277, %v4352
        %4354 = vmatmul.bf16.gmra.mxu0 %v4272
        %v4355 = vpop.f32.mrf.mxu0
        %v4356 = vadd.f32 %v4277, %v4355
        %v4357 = vpop.f32.mrf.mxu0
        %v4358 = vadd.f32 %v4277, %v4357
        %4359 = vmatmul.bf16.gmra.mxu0 %v4273
        %v4360 = vpop.f32.mrf.mxu0
        %v4361 = vadd.f32 %v4277, %v4360
        %v4362 = vpop.f32.mrf.mxu0
        %v4363 = vadd.f32 %v4277, %v4362
        %4364 = vmatmul.bf16.gmra.mxu0 %v4274
        %v4365 = vpop.f32.mrf.mxu0
        %v4366 = vadd.f32 %v4277, %v4365
        %v4367 = vpop.f32.mrf.mxu0
        %v4368 = vadd.f32 %v4277, %v4367
        %4369 = vmatmul.bf16.gmra.mxu0 %v4275
        %v4370 = vpop.f32.mrf.mxu0
        %v4371 = vadd.f32 %v4277, %v4370
        %v4372 = vpop.f32.mrf.mxu0
        %v4373 = vadd.f32 %v4277, %v4372
        %4374 = vdwg.mxu0
        %v4375 = vmul.f32 %v4336, %v4336
        %v4376 = vmul.f32 %v4338, %v4338
        %v4377 = vmul.f32 %v4341, %v4341
        %v4378 = vmul.f32 %v4343, %v4343
        %v4379 = vmul.f32 %v4346, %v4346
        %v4380 = vmul.f32 %v4348, %v4348
        %v4381 = vmul.f32 %v4351, %v4351
        %v4382 = vmul.f32 %v4353, %v4353
        %v4383 = vmul.f32 %v4356, %v4356
        %v4384 = vmul.f32 %v4358, %v4358
        %v4385 = vmul.f32 %v4361, %v4361
        %v4386 = vmul.f32 %v4363, %v4363
        %v4387 = vmul.f32 %v4366, %v4366
        %v4388 = vmul.f32 %v4368, %v4368
        %v4389 = vmul.f32 %v4371, %v4371
        %v4390 = vmul.f32 %v4373, %v4373
        %v4391 = vmul.f32 %v4336, %v4375
        %v4392 = vmul.f32 %v4338, %v4376
        %v4393 = vmul.f32 %v4341, %v4377
        %v4394 = vmul.f32 %v4343, %v4378
        %v4395 = vmul.f32 %v4346, %v4379
        %v4396 = vmul.f32 %v4348, %v4380
        %v4397 = vmul.f32 %v4351, %v4381
        %v4398 = vmul.f32 %v4353, %v4382
        %v4399 = vmul.f32 %v4356, %v4383
        %v4400 = vmul.f32 %v4358, %v4384
        %v4401 = vmul.f32 %v4361, %v4385
        %v4402 = vmul.f32 %v4363, %v4386
        %v4403 = vmul.f32 %v4366, %v4387
        %v4404 = vmul.f32 %v4368, %v4388
        %v4405 = vmul.f32 %v4371, %v4389
        %v4406 = vmul.f32 %v4373, %v4390
        %v4407 = vmul.f32 %v4391, 0.044715
        %v4408 = vmul.f32 %v4392, 0.044715
        %v4409 = vmul.f32 %v4393, 0.044715
        %v4410 = vmul.f32 %v4394, 0.044715
        %v4411 = vmul.f32 %v4395, 0.044715
        %v4412 = vmul.f32 %v4396, 0.044715
        %v4413 = vmul.f32 %v4397, 0.044715
        %v4414 = vmul.f32 %v4398, 0.044715
        %v4415 = vmul.f32 %v4399, 0.044715
        %v4416 = vmul.f32 %v4400, 0.044715
        %v4417 = vmul.f32 %v4401, 0.044715
        %v4418 = vmul.f32 %v4402, 0.044715
        %v4419 = vmul.f32 %v4403, 0.044715
        %v4420 = vmul.f32 %v4404, 0.044715
        %v4421 = vmul.f32 %v4405, 0.044715
        %v4422 = vmul.f32 %v4406, 0.044715
        %v4423 = vadd.f32 %v4336, %v4407
        %v4424 = vadd.f32 %v4338, %v4408
        %v4425 = vadd.f32 %v4341, %v4409
        %v4426 = vadd.f32 %v4343, %v4410
        %v4427 = vadd.f32 %v4346, %v4411
        %v4428 = vadd.f32 %v4348, %v4412
        %v4429 = vadd.f32 %v4351, %v4413
        %v4430 = vadd.f32 %v4353, %v4414
        %v4431 = vadd.f32 %v4356, %v4415
        %v4432 = vadd.f32 %v4358, %v4416
        %v4433 = vadd.f32 %v4361, %v4417
        %v4434 = vadd.f32 %v4363, %v4418
        %v4435 = vadd.f32 %v4366, %v4419
        %v4436 = vadd.f32 %v4368, %v4420
        %v4437 = vadd.f32 %v4371, %v4421
        %v4438 = vadd.f32 %v4373, %v4422
        %v4439 = vmul.f32 %v4423, 0.7978846
        %v4440 = vmul.f32 %v4424, 0.7978846
        %v4441 = vmul.f32 %v4425, 0.7978846
        %v4442 = vmul.f32 %v4426, 0.7978846
        %v4443 = vmul.f32 %v4427, 0.7978846
        %v4444 = vmul.f32 %v4428, 0.7978846
        %v4445 = vmul.f32 %v4429, 0.7978846
        %v4446 = vmul.f32 %v4430, 0.7978846
        %v4447 = vmul.f32 %v4431, 0.7978846
        %v4448 = vmul.f32 %v4432, 0.7978846
        %v4449 = vmul.f32 %v4433, 0.7978846
        %v4450 = vmul.f32 %v4434, 0.7978846
        %v4451 = vmul.f32 %v4435, 0.7978846
        %v4452 = vmul.f32 %v4436, 0.7978846
        %v4453 = vmul.f32 %v4437, 0.7978846
        %v4454 = vmul.f32 %v4438, 0.7978846
        %v4455 = vtanh.pop %v4439
        %v4456 = vtanh.pop %v4440
        %v4457 = vtanh.pop %v4441
        %v4458 = vtanh.pop %v4442
        %v4459 = vtanh.pop %v4443
        %v4460 = vtanh.pop %v4444
        %v4461 = vtanh.pop %v4445
        %v4462 = vtanh.pop %v4446
        %v4463 = vtanh.pop %v4447
        %v4464 = vtanh.pop %v4448
        %v4465 = vtanh.pop %v4449
        %v4466 = vtanh.pop %v4450
        %v4467 = vtanh.pop %v4451
        %v4468 = vtanh.pop %v4452
        %v4469 = vtanh.pop %v4453
        %v4470 = vtanh.pop %v4454
        %v4471 = vadd.f32 %v4455, 1.0
        %v4472 = vadd.f32 %v4456, 1.0
        %v4473 = vadd.f32 %v4457, 1.0
        %v4474 = vadd.f32 %v4458, 1.0
        %v4475 = vadd.f32 %v4459, 1.0
        %v4476 = vadd.f32 %v4460, 1.0
        %v4477 = vadd.f32 %v4461, 1.0
        %v4478 = vadd.f32 %v4462, 1.0
        %v4479 = vadd.f32 %v4463, 1.0
        %v4480 = vadd.f32 %v4464, 1.0
        %v4481 = vadd.f32 %v4465, 1.0
        %v4482 = vadd.f32 %v4466, 1.0
        %v4483 = vadd.f32 %v4467, 1.0
        %v4484 = vadd.f32 %v4468, 1.0
        %v4485 = vadd.f32 %v4469, 1.0
        %v4486 = vadd.f32 %v4470, 1.0
        %v4487 = vmul.f32 %v4471, 0.5
        %v4488 = vmul.f32 %v4472, 0.5
        %v4489 = vmul.f32 %v4473, 0.5
        %v4490 = vmul.f32 %v4474, 0.5
        %v4491 = vmul.f32 %v4475, 0.5
        %v4492 = vmul.f32 %v4476, 0.5
        %v4493 = vmul.f32 %v4477, 0.5
        %v4494 = vmul.f32 %v4478, 0.5
        %v4495 = vmul.f32 %v4479, 0.5
        %v4496 = vmul.f32 %v4480, 0.5
        %v4497 = vmul.f32 %v4481, 0.5
        %v4498 = vmul.f32 %v4482, 0.5
        %v4499 = vmul.f32 %v4483, 0.5
        %v4500 = vmul.f32 %v4484, 0.5
        %v4501 = vmul.f32 %v4485, 0.5
        %v4502 = vmul.f32 %v4486, 0.5
        %v4503 = vmul.f32 %v4336, %v4487
        %v4504 = vmul.f32 %v4338, %v4488
        %v4505 = vmul.f32 %v4341, %v4489
        %v4506 = vmul.f32 %v4343, %v4490
        %v4507 = vmul.f32 %v4346, %v4491
        %v4508 = vmul.f32 %v4348, %v4492
        %v4509 = vmul.f32 %v4351, %v4493
        %v4510 = vmul.f32 %v4353, %v4494
        %v4511 = vmul.f32 %v4356, %v4495
        %v4512 = vmul.f32 %v4358, %v4496
        %v4513 = vmul.f32 %v4361, %v4497
        %v4514 = vmul.f32 %v4363, %v4498
        %v4515 = vmul.f32 %v4366, %v4499
        %v4516 = vmul.f32 %v4368, %v4500
        %v4517 = vmul.f32 %v4371, %v4501
        %v4518 = vmul.f32 %v4373, %v4502
        %s4519 = scalar_lea.vmem %s11, 64
        %v4520 = vld [vmem:[%s4519] sm:$0xf]
        %v4521 = vld [vmem:[%s4519 + $0x4] sm:$0xf]
        %v4522 = vld [vmem:[%s4519 + $0x8] sm:$0xf]
        %v4523 = vld [vmem:[%s4519 + $0xc] sm:$0xf]
        %v4524 = vld [vmem:[%s4519 + $0x10] sm:$0xf]
        %v4525 = vld [vmem:[%s4519 + $0x14] sm:$0xf]
        %v4526 = vld [vmem:[%s4519 + $0x18] sm:$0xf]
        %v4527 = vld [vmem:[%s4519 + $0x1c] sm:$0xf]
        %v4528 = vld [vmem:[%s4519 + $0x20] sm:$0xf]
        %v4529 = vld [vmem:[%s4519 + $0x24] sm:$0xf]
        %v4530 = vld [vmem:[%s4519 + $0x28] sm:$0xf]
        %v4531 = vld [vmem:[%s4519 + $0x2c] sm:$0xf]
        %v4532 = vld [vmem:[%s4519 + $0x30] sm:$0xf]
        %v4533 = vld [vmem:[%s4519 + $0x34] sm:$0xf]
        %v4534 = vld [vmem:[%s4519 + $0x38] sm:$0xf]
        %v4535 = vld [vmem:[%s4519 + $0x3c] sm:$0xf]
        %v4536 = vpack.c.bf16 %v4504, %v4503
        %v4537 = vpack.c.bf16 %v4506, %v4505
        %v4538 = vpack.c.bf16 %v4508, %v4507
        %v4539 = vpack.c.bf16 %v4510, %v4509
        %v4540 = vpack.c.bf16 %v4512, %v4511
        %v4541 = vpack.c.bf16 %v4514, %v4513
        %v4542 = vpack.c.bf16 %v4516, %v4515
        %v4543 = vpack.c.bf16 %v4518, %v4517
        %v4544 = vld [vmem:[%s15 + $0x9] sm:$0x1]
        %v4545 = vperm.slane %v4544, 0
        %v4562 = vunpack.c.l.b16 %v4520
        %v4563 = vunpack.c.l.b16 %v4521
        %v4564 = vunpack.c.l.b16 %v4522
        %v4565 = vunpack.c.l.b16 %v4523
        %v4566 = vunpack.c.l.b16 %v4524
        %v4567 = vunpack.c.l.b16 %v4525
        %v4568 = vunpack.c.l.b16 %v4526
        %v4569 = vunpack.c.l.b16 %v4527
        %v4570 = vunpack.c.l.b16 %v4528
        %v4571 = vunpack.c.l.b16 %v4529
        %v4572 = vunpack.c.l.b16 %v4530
        %v4573 = vunpack.c.l.b16 %v4531
        %v4574 = vunpack.c.l.b16 %v4532
        %v4575 = vunpack.c.l.b16 %v4533
        %v4576 = vunpack.c.l.b16 %v4534
        %v4577 = vunpack.c.l.b16 %v4535
        %v4578 = vpack.c.b16 %v4563, %v4562
        %v4579 = vpack.c.b16 %v4565, %v4564
        %v4580 = vpack.c.b16 %v4567, %v4566
        %v4581 = vpack.c.b16 %v4569, %v4568
        %v4582 = vpack.c.b16 %v4571, %v4570
        %v4583 = vpack.c.b16 %v4573, %v4572
        %v4584 = vpack.c.b16 %v4575, %v4574
        %v4585 = vpack.c.b16 %v4577, %v4576
        %4594 = vmatpush.bf16.msra.mxu0 %v4585
        %4595 = vmatpush.bf16.msra.mxu0 %v4584
        %4596 = vmatpush.bf16.msra.mxu0 %v4583
        %4597 = vmatpush.bf16.msra.mxu0 %v4582
        %4598 = vmatpush.bf16.msra.mxu0 %v4581
        %4599 = vmatpush.bf16.msra.mxu0 %v4580
        %4600 = vmatpush.bf16.msra.mxu0 %v4579
        %4601 = vmatpush.bf16.msra.mxu0 %v4578
        %4602 = vmatmul.bf16.gmra.mxu0 %v4536
        %v4603 = vpop.f32.mrf.mxu0
        %v4604 = vadd.f32 %v4545, %v4603
        %v4605 = vpop.f32.mrf.mxu0
        %v4606 = vadd.f32 %v4545, %v4605
        %4607 = vmatmul.bf16.gmra.mxu0 %v4537
        %v4608 = vpop.f32.mrf.mxu0
        %v4609 = vadd.f32 %v4545, %v4608
        %v4610 = vpop.f32.mrf.mxu0
        %v4611 = vadd.f32 %v4545, %v4610
        %4612 = vmatmul.bf16.gmra.mxu0 %v4538
        %v4613 = vpop.f32.mrf.mxu0
        %v4614 = vadd.f32 %v4545, %v4613
        %v4615 = vpop.f32.mrf.mxu0
        %v4616 = vadd.f32 %v4545, %v4615
        %4617 = vmatmul.bf16.gmra.mxu0 %v4539
        %v4618 = vpop.f32.mrf.mxu0
        %v4619 = vadd.f32 %v4545, %v4618
        %v4620 = vpop.f32.mrf.mxu0
        %v4621 = vadd.f32 %v4545, %v4620
        %4622 = vmatmul.bf16.gmra.mxu0 %v4540
        %v4623 = vpop.f32.mrf.mxu0
        %v4624 = vadd.f32 %v4545, %v4623
        %v4625 = vpop.f32.mrf.mxu0
        %v4626 = vadd.f32 %v4545, %v4625
        %4627 = vmatmul.bf16.gmra.mxu0 %v4541
        %v4628 = vpop.f32.mrf.mxu0
        %v4629 = vadd.f32 %v4545, %v4628
        %v4630 = vpop.f32.mrf.mxu0
        %v4631 = vadd.f32 %v4545, %v4630
        %4632 = vmatmul.bf16.gmra.mxu0 %v4542
        %v4633 = vpop.f32.mrf.mxu0
        %v4634 = vadd.f32 %v4545, %v4633
        %v4635 = vpop.f32.mrf.mxu0
        %v4636 = vadd.f32 %v4545, %v4635
        %4637 = vmatmul.bf16.gmra.mxu0 %v4543
        %v4638 = vpop.f32.mrf.mxu0
        %v4639 = vadd.f32 %v4545, %v4638
        %v4640 = vpop.f32.mrf.mxu0
        %v4641 = vadd.f32 %v4545, %v4640
        %4642 = vdwg.mxu0
        %v4643 = vadd.f32 %v3193, %v4604
        %v4644 = vadd.f32 %v3194, %v4606
        %v4645 = vadd.f32 %v3195, %v4609
        %v4646 = vadd.f32 %v3196, %v4611
        %v4647 = vadd.f32 %v3197, %v4614
        %v4648 = vadd.f32 %v3198, %v4616
        %v4649 = vadd.f32 %v3199, %v4619
        %v4650 = vadd.f32 %v3200, %v4621
        %v4651 = vadd.f32 %v3201, %v4624
        %v4652 = vadd.f32 %v3202, %v4626
        %v4653 = vadd.f32 %v3203, %v4629
        %v4654 = vadd.f32 %v3204, %v4631
        %v4655 = vadd.f32 %v3205, %v4634
        %v4656 = vadd.f32 %v3206, %v4636
        %v4657 = vadd.f32 %v3207, %v4639
        %v4658 = vadd.f32 %v3208, %v4641
        %s4659 = scalar_lea.vmem %s12, 32
        %v4660 = vld [vmem:[%s4659] sm:$0xff]
        %v4661 = vld [vmem:[%s4659 + $0x8] sm:$0x1]
        %v4662 = vld [vmem:[%s15 + $0xa] sm:$0x1]
        %v4665 = vrot.slane %v4660, 1
        %v4666 = vrot.slane %v4660, 2
        %v4667 = vrot.slane %v4660, 3
        %v4668 = vrot.slane %v4660, 4
        %v4669 = vrot.slane %v4660, 5
        %v4670 = vrot.slane %v4660, 6
        %v4671 = vrot.slane %v4660, 7
        %v4672 = vperm.slane %v4660, 0
        %v4673 = vperm.slane %v4665, 0
        %v4674 = vperm.slane %v4666, 0
        %v4675 = vperm.slane %v4667, 0
        %v4676 = vperm.slane %v4668, 0
        %v4677 = vperm.slane %v4669, 0
        %v4678 = vperm.slane %v4670, 0
        %v4679 = vperm.slane %v4671, 0
        %v4680 = vperm.slane %v4661, 0
        %v4690 = vmul.f32 %v4643, %v4672
        %v4691 = vmul.f32 %v4644, %v4672
        %v4692 = vmul.f32 %v4645, %v4672
        %v4693 = vmul.f32 %v4646, %v4672
        %v4694 = vmul.f32 %v4647, %v4672
        %v4695 = vmul.f32 %v4648, %v4672
        %v4696 = vmul.f32 %v4649, %v4672
        %v4697 = vmul.f32 %v4650, %v4672
        %v4698 = vmul.f32 %v4643, %v4673
        %v4699 = vmul.f32 %v4644, %v4673
        %v4700 = vmul.f32 %v4645, %v4673
        %v4701 = vmul.f32 %v4646, %v4673
        %v4702 = vmul.f32 %v4647, %v4673
        %v4703 = vmul.f32 %v4648, %v4673
        %v4704 = vmul.f32 %v4649, %v4673
        %v4705 = vmul.f32 %v4650, %v4673
        %v4706 = vmul.f32 %v4643, %v4674
        %v4707 = vmul.f32 %v4644, %v4674
        %v4708 = vmul.f32 %v4645, %v4674
        %v4709 = vmul.f32 %v4646, %v4674
        %v4710 = vmul.f32 %v4647, %v4674
        %v4711 = vmul.f32 %v4648, %v4674
        %v4712 = vmul.f32 %v4649, %v4674
        %v4713 = vmul.f32 %v4650, %v4674
        %v4714 = vmul.f32 %v4643, %v4675
        %v4715 = vmul.f32 %v4644, %v4675
        %v4716 = vmul.f32 %v4645, %v4675
        %v4717 = vmul.f32 %v4646, %v4675
        %v4718 = vmul.f32 %v4647, %v4675
        %v4719 = vmul.f32 %v4648, %v4675
        %v4720 = vmul.f32 %v4649, %v4675
        %v4721 = vmul.f32 %v4650, %v4675
        %v4722 = vmul.f32 %v4643, %v4676
        %v4723 = vmul.f32 %v4644, %v4676
        %v4724 = vmul.f32 %v4645, %v4676
        %v4725 = vmul.f32 %v4646, %v4676
        %v4726 = vmul.f32 %v4647, %v4676
        %v4727 = vmul.f32 %v4648, %v4676
        %v4728 = vmul.f32 %v4649, %v4676
        %v4729 = vmul.f32 %v4650, %v4676
        %v4730 = vmul.f32 %v4643, %v4677
        %v4731 = vmul.f32 %v4644, %v4677
        %v4732 = vmul.f32 %v4645, %v4677
        %v4733 = vmul.f32 %v4646, %v4677
        %v4734 = vmul.f32 %v4647, %v4677
        %v4735 = vmul.f32 %v4648, %v4677
        %v4736 = vmul.f32 %v4649, %v4677
        %v4737 = vmul.f32 %v4650, %v4677
        %v4738 = vmul.f32 %v4643, %v4678
        %v4739 = vmul.f32 %v4644, %v4678
        %v4740 = vmul.f32 %v4645, %v4678
        %v4741 = vmul.f32 %v4646, %v4678
        %v4742 = vmul.f32 %v4647, %v4678
        %v4743 = vmul.f32 %v4648, %v4678
        %v4744 = vmul.f32 %v4649, %v4678
        %v4745 = vmul.f32 %v4650, %v4678
        %v4746 = vmul.f32 %v4643, %v4679
        %v4747 = vmul.f32 %v4644, %v4679
        %v4748 = vmul.f32 %v4645, %v4679
        %v4749 = vmul.f32 %v4646, %v4679
        %v4750 = vmul.f32 %v4647, %v4679
        %v4751 = vmul.f32 %v4648, %v4679
        %v4752 = vmul.f32 %v4649, %v4679
        %v4753 = vmul.f32 %v4650, %v4679
        %v4754 = vmul.f32 %v4643, %v4680
        %v4755 = vmul.f32 %v4644, %v4680
        %v4756 = vmul.f32 %v4645, %v4680
        %v4757 = vmul.f32 %v4646, %v4680
        %v4758 = vmul.f32 %v4647, %v4680
        %v4759 = vmul.f32 %v4648, %v4680
        %v4760 = vmul.f32 %v4649, %v4680
        %v4761 = vmul.f32 %v4650, %v4680
        %v4762 = vpack.c.bf16 %v4690, %v4690
        %v4763 = vpack.c.bf16 %v4691, %v4691
        %v4764 = vpack.c.bf16 %v4692, %v4692
        %v4765 = vpack.c.bf16 %v4693, %v4693
        %v4766 = vpack.c.bf16 %v4694, %v4694
        %v4767 = vpack.c.bf16 %v4695, %v4695
        %v4768 = vpack.c.bf16 %v4696, %v4696
        %v4769 = vpack.c.bf16 %v4697, %v4697
        %v4770 = vpack.c.bf16 %v4698, %v4698
        %v4771 = vpack.c.bf16 %v4699, %v4699
        %v4772 = vpack.c.bf16 %v4700, %v4700
        %v4773 = vpack.c.bf16 %v4701, %v4701
        %v4774 = vpack.c.bf16 %v4702, %v4702
        %v4775 = vpack.c.bf16 %v4703, %v4703
        %v4776 = vpack.c.bf16 %v4704, %v4704
        %v4777 = vpack.c.bf16 %v4705, %v4705
        %v4778 = vpack.c.bf16 %v4706, %v4706
        %v4779 = vpack.c.bf16 %v4707, %v4707
        %v4780 = vpack.c.bf16 %v4708, %v4708
        %v4781 = vpack.c.bf16 %v4709, %v4709
        %v4782 = vpack.c.bf16 %v4710, %v4710
        %v4783 = vpack.c.bf16 %v4711, %v4711
        %v4784 = vpack.c.bf16 %v4712, %v4712
        %v4785 = vpack.c.bf16 %v4713, %v4713
        %v4786 = vpack.c.bf16 %v4714, %v4714
        %v4787 = vpack.c.bf16 %v4715, %v4715
        %v4788 = vpack.c.bf16 %v4716, %v4716
        %v4789 = vpack.c.bf16 %v4717, %v4717
        %v4790 = vpack.c.bf16 %v4718, %v4718
        %v4791 = vpack.c.bf16 %v4719, %v4719
        %v4792 = vpack.c.bf16 %v4720, %v4720
        %v4793 = vpack.c.bf16 %v4721, %v4721
        %v4794 = vpack.c.bf16 %v4722, %v4722
        %v4795 = vpack.c.bf16 %v4723, %v4723
        %v4796 = vpack.c.bf16 %v4724, %v4724
        %v4797 = vpack.c.bf16 %v4725, %v4725
        %v4798 = vpack.c.bf16 %v4726, %v4726
        %v4799 = vpack.c.bf16 %v4727, %v4727
        %v4800 = vpack.c.bf16 %v4728, %v4728
        %v4801 = vpack.c.bf16 %v4729, %v4729
        %v4802 = vpack.c.bf16 %v4730, %v4730
        %v4803 = vpack.c.bf16 %v4731, %v4731
        %v4804 = vpack.c.bf16 %v4732, %v4732
        %v4805 = vpack.c.bf16 %v4733, %v4733
        %v4806 = vpack.c.bf16 %v4734, %v4734
        %v4807 = vpack.c.bf16 %v4735, %v4735
        %v4808 = vpack.c.bf16 %v4736, %v4736
        %v4809 = vpack.c.bf16 %v4737, %v4737
        %v4810 = vpack.c.bf16 %v4738, %v4738
        %v4811 = vpack.c.bf16 %v4739, %v4739
        %v4812 = vpack.c.bf16 %v4740, %v4740
        %v4813 = vpack.c.bf16 %v4741, %v4741
        %v4814 = vpack.c.bf16 %v4742, %v4742
        %v4815 = vpack.c.bf16 %v4743, %v4743
        %v4816 = vpack.c.bf16 %v4744, %v4744
        %v4817 = vpack.c.bf16 %v4745, %v4745
        %v4818 = vpack.c.bf16 %v4746, %v4746
        %v4819 = vpack.c.bf16 %v4747, %v4747
        %v4820 = vpack.c.bf16 %v4748, %v4748
        %v4821 = vpack.c.bf16 %v4749, %v4749
        %v4822 = vpack.c.bf16 %v4750, %v4750
        %v4823 = vpack.c.bf16 %v4751, %v4751
        %v4824 = vpack.c.bf16 %v4752, %v4752
        %v4825 = vpack.c.bf16 %v4753, %v4753
        %v4826 = vpack.c.bf16 %v4754, %v4754
        %v4827 = vpack.c.bf16 %v4755, %v4755
        %v4828 = vpack.c.bf16 %v4756, %v4756
        %v4829 = vpack.c.bf16 %v4757, %v4757
        %v4830 = vpack.c.bf16 %v4758, %v4758
        %v4831 = vpack.c.bf16 %v4759, %v4759
        %v4832 = vpack.c.bf16 %v4760, %v4760
        %v4833 = vpack.c.bf16 %v4761, %v4761
        %v4834 = vld [vmem:[%s3] sm:$0xff]
        %v4835 = vld [vmem:[%s3 + $0x8] sm:$0xff]
        %v4836 = vld [vmem:[%s3 + $0x10] sm:$0xf]
        %v4837 = vld [vmem:[%s3 + $0x14] sm:$0xff]
        %v4838 = vld [vmem:[%s3 + $0x1c] sm:$0xff]
        %v4839 = vld [vmem:[%s3 + $0x24] sm:$0xf]
        %v4840 = vperm.slane %v4662, 0
        %v4847 = vunpack.c.l.b16 %v4834
        %v4848 = vunpack.c.h.b16 %v4834
        %v4849 = vunpack.c.l.b16 %v4835
        %v4850 = vunpack.c.h.b16 %v4835
        %v4851 = vunpack.c.l.b16 %v4836
        %v4852 = vunpack.c.l.b16 %v4837
        %v4853 = vunpack.c.h.b16 %v4837
        %v4854 = vunpack.c.l.b16 %v4838
        %v4855 = vunpack.c.h.b16 %v4838
        %v4856 = vunpack.c.l.b16 %v4839
        %v4857 = vpack.c.b16 %v4852, %v4847
        %v4858 = vpack.c.b16 %v4853, %v4848
        %v4859 = vpack.c.b16 %v4854, %v4849
        %v4860 = vpack.c.b16 %v4855, %v4850
        %v4861 = vpack.c.b16 %v4856, %v4851
        %v4938 = vunpack.c.l.b16 %v4762
        %v4939 = vunpack.c.l.b16 %v4763
        %v4940 = vunpack.c.l.b16 %v4764
        %v4941 = vunpack.c.l.b16 %v4765
        %v4942 = vunpack.c.l.b16 %v4766
        %v4943 = vunpack.c.l.b16 %v4767
        %v4944 = vunpack.c.l.b16 %v4768
        %v4945 = vunpack.c.l.b16 %v4769
        %v4946 = vunpack.c.l.b16 %v4770
        %v4947 = vunpack.c.l.b16 %v4771
        %v4948 = vunpack.c.l.b16 %v4772
        %v4949 = vunpack.c.l.b16 %v4773
        %v4950 = vunpack.c.l.b16 %v4774
        %v4951 = vunpack.c.l.b16 %v4775
        %v4952 = vunpack.c.l.b16 %v4776
        %v4953 = vunpack.c.l.b16 %v4777
        %v4954 = vunpack.c.l.b16 %v4778
        %v4955 = vunpack.c.l.b16 %v4779
        %v4956 = vunpack.c.l.b16 %v4780
        %v4957 = vunpack.c.l.b16 %v4781
        %v4958 = vunpack.c.l.b16 %v4782
        %v4959 = vunpack.c.l.b16 %v4783
        %v4960 = vunpack.c.l.b16 %v4784
        %v4961 = vunpack.c.l.b16 %v4785
        %v4962 = vunpack.c.l.b16 %v4786
        %v4963 = vunpack.c.l.b16 %v4787
        %v4964 = vunpack.c.l.b16 %v4788
        %v4965 = vunpack.c.l.b16 %v4789
        %v4966 = vunpack.c.l.b16 %v4790
        %v4967 = vunpack.c.l.b16 %v4791
        %v4968 = vunpack.c.l.b16 %v4792
        %v4969 = vunpack.c.l.b16 %v4793
        %v4970 = vunpack.c.l.b16 %v4794
        %v4971 = vunpack.c.l.b16 %v4795
        %v4972 = vunpack.c.l.b16 %v4796
        %v4973 = vunpack.c.l.b16 %v4797
        %v4974 = vunpack.c.l.b16 %v4798
        %v4975 = vunpack.c.l.b16 %v4799
        %v4976 = vunpack.c.l.b16 %v4800
        %v4977 = vunpack.c.l.b16 %v4801
        %v4978 = vunpack.c.l.b16 %v4802
        %v4979 = vunpack.c.l.b16 %v4803
        %v4980 = vunpack.c.l.b16 %v4804
        %v4981 = vunpack.c.l.b16 %v4805
        %v4982 = vunpack.c.l.b16 %v4806
        %v4983 = vunpack.c.l.b16 %v4807
        %v4984 = vunpack.c.l.b16 %v4808
        %v4985 = vunpack.c.l.b16 %v4809
        %v4986 = vunpack.c.l.b16 %v4810
        %v4987 = vunpack.c.l.b16 %v4811
        %v4988 = vunpack.c.l.b16 %v4812
        %v4989 = vunpack.c.l.b16 %v4813
        %v4990 = vunpack.c.l.b16 %v4814
        %v4991 = vunpack.c.l.b16 %v4815
        %v4992 = vunpack.c.l.b16 %v4816
        %v4993 = vunpack.c.l.b16 %v4817
        %v4994 = vunpack.c.l.b16 %v4818
        %v4995 = vunpack.c.l.b16 %v4819
        %v4996 = vunpack.c.l.b16 %v4820
        %v4997 = vunpack.c.l.b16 %v4821
        %v4998 = vunpack.c.l.b16 %v4822
        %v4999 = vunpack.c.l.b16 %v4823
        %v5000 = vunpack.c.l.b16 %v4824
        %v5001 = vunpack.c.l.b16 %v4825
        %v5002 = vunpack.c.l.b16 %v4826
        %v5003 = vunpack.c.l.b16 %v4827
        %v5004 = vunpack.c.l.b16 %v4828
        %v5005 = vunpack.c.l.b16 %v4829
        %v5006 = vunpack.c.l.b16 %v4830
        %v5007 = vunpack.c.l.b16 %v4831
        %v5008 = vunpack.c.l.b16 %v4832
        %v5009 = vunpack.c.l.b16 %v4833
        %v5010 = vpack.c.b16 %v4939, %v4938
        %v5011 = vpack.c.b16 %v4941, %v4940
        %v5012 = vpack.c.b16 %v4943, %v4942
        %v5013 = vpack.c.b16 %v4945, %v4944
        %v5014 = vpack.c.b16 %v4947, %v4946
        %v5015 = vpack.c.b16 %v4949, %v4948
        %v5016 = vpack.c.b16 %v4951, %v4950
        %v5017 = vpack.c.b16 %v4953, %v4952
        %v5018 = vpack.c.b16 %v4955, %v4954
        %v5019 = vpack.c.b16 %v4957, %v4956
        %v5020 = vpack.c.b16 %v4959, %v4958
        %v5021 = vpack.c.b16 %v4961, %v4960
        %v5022 = vpack.c.b16 %v4963, %v4962
        %v5023 = vpack.c.b16 %v4965, %v4964
        %v5024 = vpack.c.b16 %v4967, %v4966
        %v5025 = vpack.c.b16 %v4969, %v4968
        %v5026 = vpack.c.b16 %v4971, %v4970
        %v5027 = vpack.c.b16 %v4973, %v4972
        %v5028 = vpack.c.b16 %v4975, %v4974
        %v5029 = vpack.c.b16 %v4977, %v4976
        %v5030 = vpack.c.b16 %v4979, %v4978
        %v5031 = vpack.c.b16 %v4981, %v4980
        %v5032 = vpack.c.b16 %v4983, %v4982
        %v5033 = vpack.c.b16 %v4985, %v4984
        %v5034 = vpack.c.b16 %v4987, %v4986
        %v5035 = vpack.c.b16 %v4989, %v4988
        %v5036 = vpack.c.b16 %v4991, %v4990
        %v5037 = vpack.c.b16 %v4993, %v4992
        %v5038 = vpack.c.b16 %v4995, %v4994
        %v5039 = vpack.c.b16 %v4997, %v4996
        %v5040 = vpack.c.b16 %v4999, %v4998
        %v5041 = vpack.c.b16 %v5001, %v5000
        %v5042 = vpack.c.b16 %v5003, %v5002
        %v5043 = vpack.c.b16 %v5005, %v5004
        %v5044 = vpack.c.b16 %v5007, %v5006
        %v5045 = vpack.c.b16 %v5009, %v5008
        %v5083 = vsel %vm633, %v4861, 0
        %5085 = vmatpush.bf16.msra.mxu0 %v5017
        %5086 = vmatpush.bf16.msra.mxu0 %v5016
        %5087 = vmatpush.bf16.msra.mxu0 %v5015
        %5088 = vmatpush.bf16.msra.mxu0 %v5014
        %5089 = vmatpush.bf16.msra.mxu0 %v5013
        %5090 = vmatpush.bf16.msra.mxu0 %v5012
        %5091 = vmatpush.bf16.msra.mxu0 %v5011
        %5092 = vmatpush.bf16.msra.mxu0 %v5010
        %5093 = vmatmul.bf16.gmra.mxu0 %v4857
        %v5094 = vpop.f32.mrf.mxu0
        %v5095 = vadd.f32 %v4840, %v5094
        %v5096 = vpop.f32.mrf.mxu0
        %v5097 = vadd.f32 %v4840, %v5096
        %5098 = vdwg.mxu0
        %5099 = vmatpush.bf16.msra.mxu0 %v5025
        %5100 = vmatpush.bf16.msra.mxu0 %v5024
        %5101 = vmatpush.bf16.msra.mxu0 %v5023
        %5102 = vmatpush.bf16.msra.mxu0 %v5022
        %5103 = vmatpush.bf16.msra.mxu0 %v5021
        %5104 = vmatpush.bf16.msra.mxu0 %v5020
        %5105 = vmatpush.bf16.msra.mxu0 %v5019
        %5106 = vmatpush.bf16.msra.mxu0 %v5018
        %5107 = vmatmul.bf16.gmra.mxu0 %v4858
        %v5108 = vpop.f32.mrf.mxu0
        %v5109 = vadd.f32 %v5095, %v5108
        %v5110 = vpop.f32.mrf.mxu0
        %v5111 = vadd.f32 %v5097, %v5110
        %5112 = vdwg.mxu0
        %5113 = vmatpush.bf16.msra.mxu0 %v5033
        %5114 = vmatpush.bf16.msra.mxu0 %v5032
        %5115 = vmatpush.bf16.msra.mxu0 %v5031
        %5116 = vmatpush.bf16.msra.mxu0 %v5030
        %5117 = vmatpush.bf16.msra.mxu0 %v5029
        %5118 = vmatpush.bf16.msra.mxu0 %v5028
        %5119 = vmatpush.bf16.msra.mxu0 %v5027
        %5120 = vmatpush.bf16.msra.mxu0 %v5026
        %5121 = vmatmul.bf16.gmra.mxu0 %v4859
        %v5122 = vpop.f32.mrf.mxu0
        %v5123 = vadd.f32 %v5109, %v5122
        %v5124 = vpop.f32.mrf.mxu0
        %v5125 = vadd.f32 %v5111, %v5124
        %5126 = vdwg.mxu0
        %5127 = vmatpush.bf16.msra.mxu0 %v5041
        %5128 = vmatpush.bf16.msra.mxu0 %v5040
        %5129 = vmatpush.bf16.msra.mxu0 %v5039
        %5130 = vmatpush.bf16.msra.mxu0 %v5038
        %5131 = vmatpush.bf16.msra.mxu0 %v5037
        %5132 = vmatpush.bf16.msra.mxu0 %v5036
        %5133 = vmatpush.bf16.msra.mxu0 %v5035
        %5134 = vmatpush.bf16.msra.mxu0 %v5034
        %5135 = vmatmul.bf16.gmra.mxu0 %v4860
        %v5136 = vpop.f32.mrf.mxu0
        %v5137 = vadd.f32 %v5123, %v5136
        %v5138 = vpop.f32.mrf.mxu0
        %v5139 = vadd.f32 %v5125, %v5138
        %5140 = vdwg.mxu0
        %5141 = vmatpush.bf16.msra.mxu0 0
        %5142 = vmatpush.bf16.msra.mxu0 0
        %5143 = vmatpush.bf16.msra.mxu0 0
        %5144 = vmatpush.bf16.msra.mxu0 0
        %5145 = vmatpush.bf16.msra.mxu0 %v5045
        %5146 = vmatpush.bf16.msra.mxu0 %v5044
        %5147 = vmatpush.bf16.msra.mxu0 %v5043
        %5148 = vmatpush.bf16.msra.mxu0 %v5042
        %5149 = vmatmul.bf16.gmra.mxu0 %v5083
        %v5150 = vpop.f32.mrf.mxu0
        %v5151 = vadd.f32 %v5137, %v5150
        %v5152 = vpop.f32.mrf.mxu0
        %v5153 = vadd.f32 %v5139, %v5152
        %5154 = vdwg.mxu0
        %s5155 = scalar_lea.vmem %s12, 48
        %v5156 = vld [vmem:[%s5155] sm:$0xff]
        %v5157 = vld [vmem:[%s5155 + $0x8] sm:$0x1]
        %v5158 = vld [vmem:[%s15 + $0xb] sm:$0x1]
        %v5161 = vrot.slane %v5156, 1
        %v5162 = vrot.slane %v5156, 2
        %v5163 = vrot.slane %v5156, 3
        %v5164 = vrot.slane %v5156, 4
        %v5165 = vrot.slane %v5156, 5
        %v5166 = vrot.slane %v5156, 6
        %v5167 = vrot.slane %v5156, 7
        %v5168 = vperm.slane %v5156, 0
        %v5169 = vperm.slane %v5161, 0
        %v5170 = vperm.slane %v5162, 0
        %v5171 = vperm.slane %v5163, 0
        %v5172 = vperm.slane %v5164, 0
        %v5173 = vperm.slane %v5165, 0
        %v5174 = vperm.slane %v5166, 0
        %v5175 = vperm.slane %v5167, 0
        %v5176 = vperm.slane %v5157, 0
        %v5186 = vmul.f32 %v5151, %v5168
        %v5187 = vmul.f32 %v5153, %v5168
        %v5188 = vmul.f32 %v5151, %v5169
        %v5189 = vmul.f32 %v5153, %v5169
        %v5190 = vmul.f32 %v5151, %v5170
        %v5191 = vmul.f32 %v5153, %v5170
        %v5192 = vmul.f32 %v5151, %v5171
        %v5193 = vmul.f32 %v5153, %v5171
        %v5194 = vmul.f32 %v5151, %v5172
        %v5195 = vmul.f32 %v5153, %v5172
        %v5196 = vmul.f32 %v5151, %v5173
        %v5197 = vmul.f32 %v5153, %v5173
        %v5198 = vmul.f32 %v5151, %v5174
        %v5199 = vmul.f32 %v5153, %v5174
        %v5200 = vmul.f32 %v5151, %v5175
        %v5201 = vmul.f32 %v5153, %v5175
        %v5202 = vmul.f32 %v5151, %v5176
        %v5203 = vmul.f32 %v5153, %v5176
        %v5204 = vpack.c.bf16 %v5186, %v5186
        %v5205 = vpack.c.bf16 %v5187, %v5187
        %v5206 = vpack.c.bf16 %v5188, %v5188
        %v5207 = vpack.c.bf16 %v5189, %v5189
        %v5208 = vpack.c.bf16 %v5190, %v5190
        %v5209 = vpack.c.bf16 %v5191, %v5191
        %v5210 = vpack.c.bf16 %v5192, %v5192
        %v5211 = vpack.c.bf16 %v5193, %v5193
        %v5212 = vpack.c.bf16 %v5194, %v5194
        %v5213 = vpack.c.bf16 %v5195, %v5195
        %v5214 = vpack.c.bf16 %v5196, %v5196
        %v5215 = vpack.c.bf16 %v5197, %v5197
        %v5216 = vpack.c.bf16 %v5198, %v5198
        %v5217 = vpack.c.bf16 %v5199, %v5199
        %v5218 = vpack.c.bf16 %v5200, %v5200
        %v5219 = vpack.c.bf16 %v5201, %v5201
        %v5220 = vpack.c.bf16 %v5202, %v5202
        %v5221 = vpack.c.bf16 %v5203, %v5203
        %v5222 = vld [vmem:[%s5] sm:$0xff]
        %v5223 = vperm.slane %v5158, 0
        %v5225 = vunpack.c.l.b16 %v5222
        %v5226 = vunpack.c.h.b16 %v5222
        %v5227 = vpack.c.b16 %v5225, %v5225
        %v5228 = vpack.c.b16 %v5226, %v5226
        %v5248 = vunpack.c.l.b16 %v5204
        %v5249 = vunpack.c.l.b16 %v5205
        %v5250 = vunpack.c.l.b16 %v5206
        %v5251 = vunpack.c.l.b16 %v5207
        %v5252 = vunpack.c.l.b16 %v5208
        %v5253 = vunpack.c.l.b16 %v5209
        %v5254 = vunpack.c.l.b16 %v5210
        %v5255 = vunpack.c.l.b16 %v5211
        %v5256 = vunpack.c.l.b16 %v5212
        %v5257 = vunpack.c.l.b16 %v5213
        %v5258 = vunpack.c.l.b16 %v5214
        %v5259 = vunpack.c.l.b16 %v5215
        %v5260 = vunpack.c.l.b16 %v5216
        %v5261 = vunpack.c.l.b16 %v5217
        %v5262 = vunpack.c.l.b16 %v5218
        %v5263 = vunpack.c.l.b16 %v5219
        %v5264 = vunpack.c.l.b16 %v5220
        %v5265 = vunpack.c.l.b16 %v5221
        %v5266 = vpack.c.b16 %v5249, %v5248
        %v5267 = vpack.c.b16 %v5251, %v5250
        %v5268 = vpack.c.b16 %v5253, %v5252
        %v5269 = vpack.c.b16 %v5255, %v5254
        %v5270 = vpack.c.b16 %v5257, %v5256
        %v5271 = vpack.c.b16 %v5259, %v5258
        %v5272 = vpack.c.b16 %v5261, %v5260
        %v5273 = vpack.c.b16 %v5263, %v5262
        %v5274 = vpack.c.b16 %v5265, %v5264
        %vm5284 = vcmask 130048
        %v5286 = vsel %vm5284, %v5228, 0
        %5288 = vmatpush.bf16.msra.mxu0 %v5273
        %5289 = vmatpush.bf16.msra.mxu0 %v5272
        %5290 = vmatpush.bf16.msra.mxu0 %v5271
        %5291 = vmatpush.bf16.msra.mxu0 %v5270
        %5292 = vmatpush.bf16.msra.mxu0 %v5269
        %5293 = vmatpush.bf16.msra.mxu0 %v5268
        %5294 = vmatpush.bf16.msra.mxu0 %v5267
        %5295 = vmatpush.bf16.msra.mxu0 %v5266
        %5296 = vmatmul.bf16.gmra.mxu0 %v5227
        %v5297 = vpop.f32.mrf.mxu0
        %v5298 = vadd.f32 %v5223, %v5297
        %v5299 = vpop.f32.mrf.mxu0
        %5300 = vdwg.mxu0
        %5301 = vmatpush.bf16.msra.mxu0 0
        %5302 = vmatpush.bf16.msra.mxu0 0
        %5303 = vmatpush.bf16.msra.mxu0 0
        %5304 = vmatpush.bf16.msra.mxu0 0
        %5305 = vmatpush.bf16.msra.mxu0 0
        %5306 = vmatpush.bf16.msra.mxu0 0
        %5307 = vmatpush.bf16.msra.mxu0 0
        %5308 = vmatpush.bf16.msra.mxu0 %v5274
        %5309 = vmatmul.bf16.gmra.mxu0 %v5286
        %v5310 = vpop.f32.mrf.mxu0
        %v5311 = vadd.f32 %v5298, %v5310
        %v5312 = vpop.f32.mrf.mxu0
        %5313 = vdwg.mxu0
        %v5314 = vld [vmem:[%s6] sm:$0xf]
        %v5315 = vld [vmem:[%s6 + $0x4] sm:$0xf]
        %v5316 = vpack.c.bf16 %v5311, %v5311
        %v5319 = vunpack.c.l.b16 %v5314
        %v5320 = vunpack.c.l.b16 %v5315
        %v5321 = vpack.c.b16 %v5320, %v5319
        %vm5322 = vcmask 64512
        %v5324 = vsel %vm5322, %v5321, 0
        %vm5326 = vcmask 1043456
        %v5328 = vsel %vm5326, %v5316, 0
        %5330 = vmatpush.bf16.msra.mxu0 0
        %5331 = vmatpush.bf16.msra.mxu0 0
        %5332 = vmatpush.bf16.msra.mxu0 0
        %5333 = vmatpush.bf16.msra.mxu0 0
        %5334 = vmatpush.bf16.msra.mxu0 0
        %5335 = vmatpush.bf16.msra.mxu0 0
        %5336 = vmatpush.bf16.msra.mxu0 0
        %5337 = vmatpush.bf16.msra.mxu0 %v5328
        %5338 = vmatmul.bf16.gmra.mxu0 %v5324
        %v5339 = vpop.f32.mrf.mxu0
        %v5340 = vadd.f32 0.0, %v5339
        %v5341 = vpop.f32.mrf.mxu0
        %v5342 = vadd.f32 0.0, %v5341
        %5343 = vdwg.mxu0
        %v5344 = vadd.f32 %v5151, %v5340
        %v5345 = vadd.f32 %v5153, %v5342
        %s5346 = scalar_lea.vmem %s12, 64
        %v5347 = vld [vmem:[%s5346] sm:$0xff]
        %v5348 = vld [vmem:[%s5346 + $0x8] sm:$0x1]
        %v5349 = vld [vmem:[%s15 + $0xc] sm:$0x1]
        %v5352 = vrot.slane %v5347, 1
        %v5353 = vrot.slane %v5347, 2
        %v5354 = vrot.slane %v5347, 3
        %v5355 = vrot.slane %v5347, 4
        %v5356 = vrot.slane %v5347, 5
        %v5357 = vrot.slane %v5347, 6
        %v5358 = vrot.slane %v5347, 7
        %v5359 = vperm.slane %v5347, 0
        %v5360 = vperm.slane %v5352, 0
        %v5361 = vperm.slane %v5353, 0
        %v5362 = vperm.slane %v5354, 0
        %v5363 = vperm.slane %v5355, 0
        %v5364 = vperm.slane %v5356, 0
        %v5365 = vperm.slane %v5357, 0
        %v5366 = vperm.slane %v5358, 0
        %v5367 = vperm.slane %v5348, 0
        %v5377 = vmul.f32 %v5344, %v5359
        %v5378 = vmul.f32 %v5345, %v5359
        %v5379 = vmul.f32 %v5344, %v5360
        %v5380 = vmul.f32 %v5345, %v5360
        %v5381 = vmul.f32 %v5344, %v5361
        %v5382 = vmul.f32 %v5345, %v5361
        %v5383 = vmul.f32 %v5344, %v5362
        %v5384 = vmul.f32 %v5345, %v5362
        %v5385 = vmul.f32 %v5344, %v5363
        %v5386 = vmul.f32 %v5345, %v5363
        %v5387 = vmul.f32 %v5344, %v5364
        %v5388 = vmul.f32 %v5345, %v5364
        %v5389 = vmul.f32 %v5344, %v5365
        %v5390 = vmul.f32 %v5345, %v5365
        %v5391 = vmul.f32 %v5344, %v5366
        %v5392 = vmul.f32 %v5345, %v5366
        %v5393 = vmul.f32 %v5344, %v5367
        %v5394 = vmul.f32 %v5345, %v5367
        %v5395 = vpack.c.bf16 %v5377, %v5377
        %v5396 = vpack.c.bf16 %v5378, %v5378
        %v5397 = vpack.c.bf16 %v5379, %v5379
        %v5398 = vpack.c.bf16 %v5380, %v5380
        %v5399 = vpack.c.bf16 %v5381, %v5381
        %v5400 = vpack.c.bf16 %v5382, %v5382
        %v5401 = vpack.c.bf16 %v5383, %v5383
        %v5402 = vpack.c.bf16 %v5384, %v5384
        %v5403 = vpack.c.bf16 %v5385, %v5385
        %v5404 = vpack.c.bf16 %v5386, %v5386
        %v5405 = vpack.c.bf16 %v5387, %v5387
        %v5406 = vpack.c.bf16 %v5388, %v5388
        %v5407 = vpack.c.bf16 %v5389, %v5389
        %v5408 = vpack.c.bf16 %v5390, %v5390
        %v5409 = vpack.c.bf16 %v5391, %v5391
        %v5410 = vpack.c.bf16 %v5392, %v5392
        %v5411 = vpack.c.bf16 %v5393, %v5393
        %v5412 = vpack.c.bf16 %v5394, %v5394
        %v5413 = vld [vmem:[%s4] sm:$0xff]
        %v5414 = vld [vmem:[%s4 + $0x8] sm:$0xff]
        %v5415 = vperm.slane %v5349, 0
        %v5418 = vunpack.c.l.b16 %v5413
        %v5419 = vunpack.c.h.b16 %v5413
        %v5420 = vunpack.c.l.b16 %v5414
        %v5421 = vunpack.c.h.b16 %v5414
        %v5422 = vpack.c.b16 %v5420, %v5418
        %v5423 = vpack.c.b16 %v5421, %v5419
        %v5443 = vunpack.c.l.b16 %v5395
        %v5444 = vunpack.c.l.b16 %v5396
        %v5445 = vunpack.c.l.b16 %v5397
        %v5446 = vunpack.c.l.b16 %v5398
        %v5447 = vunpack.c.l.b16 %v5399
        %v5448 = vunpack.c.l.b16 %v5400
        %v5449 = vunpack.c.l.b16 %v5401
        %v5450 = vunpack.c.l.b16 %v5402
        %v5451 = vunpack.c.l.b16 %v5403
        %v5452 = vunpack.c.l.b16 %v5404
        %v5453 = vunpack.c.l.b16 %v5405
        %v5454 = vunpack.c.l.b16 %v5406
        %v5455 = vunpack.c.l.b16 %v5407
        %v5456 = vunpack.c.l.b16 %v5408
        %v5457 = vunpack.c.l.b16 %v5409
        %v5458 = vunpack.c.l.b16 %v5410
        %v5459 = vunpack.c.l.b16 %v5411
        %v5460 = vunpack.c.l.b16 %v5412
        %v5461 = vpack.c.b16 %v5444, %v5443
        %v5462 = vpack.c.b16 %v5446, %v5445
        %v5463 = vpack.c.b16 %v5448, %v5447
        %v5464 = vpack.c.b16 %v5450, %v5449
        %v5465 = vpack.c.b16 %v5452, %v5451
        %v5466 = vpack.c.b16 %v5454, %v5453
        %v5467 = vpack.c.b16 %v5456, %v5455
        %v5468 = vpack.c.b16 %v5458, %v5457
        %v5469 = vpack.c.b16 %v5460, %v5459
        %v5480 = vsel %vm5284, %v5423, 0
        %5482 = vmatpush.bf16.msra.mxu0 %v5468
        %5483 = vmatpush.bf16.msra.mxu0 %v5467
        %5484 = vmatpush.bf16.msra.mxu0 %v5466
        %5485 = vmatpush.bf16.msra.mxu0 %v5465
        %5486 = vmatpush.bf16.msra.mxu0 %v5464
        %5487 = vmatpush.bf16.msra.mxu0 %v5463
        %5488 = vmatpush.bf16.msra.mxu0 %v5462
        %5489 = vmatpush.bf16.msra.mxu0 %v5461
        %5490 = vmatmul.bf16.gmra.mxu0 %v5422
        %v5491 = vpop.f32.mrf.mxu0
        %v5492 = vadd.f32 %v5415, %v5491
        %v5493 = vpop.f32.mrf.mxu0
        %v5494 = vadd.f32 %v5415, %v5493
        %5495 = vdwg.mxu0
        %5496 = vmatpush.bf16.msra.mxu0 0
        %5497 = vmatpush.bf16.msra.mxu0 0
        %5498 = vmatpush.bf16.msra.mxu0 0
        %5499 = vmatpush.bf16.msra.mxu0 0
        %5500 = vmatpush.bf16.msra.mxu0 0
        %5501 = vmatpush.bf16.msra.mxu0 0
        %5502 = vmatpush.bf16.msra.mxu0 0
        %5503 = vmatpush.bf16.msra.mxu0 %v5469
        %5504 = vmatmul.bf16.gmra.mxu0 %v5480
        %v5505 = vpop.f32.mrf.mxu0
        %v5506 = vadd.f32 %v5492, %v5505
        %v5507 = vpop.f32.mrf.mxu0
        %v5508 = vadd.f32 %v5494, %v5507
        %5509 = vdwg.mxu0
        %v5510 = vld [vmem:[%s7] sm:$0xf]
        %v5511 = vld [vmem:[%s7 + $0x4] sm:$0xf]
        %v5512 = vld [vmem:[%s7 + $0x8] sm:$0xf]
        %v5513 = vld [vmem:[%s7 + $0xc] sm:$0xf]
        %v5514 = vld [vmem:[%s7 + $0x10] sm:$0xf]
        %v5515 = vld [vmem:[%s7 + $0x14] sm:$0xf]
        %v5516 = vld [vmem:[%s7 + $0x18] sm:$0xf]
        %v5517 = vld [vmem:[%s7 + $0x1c] sm:$0xf]
        %v5518 = vpack.c.bf16 %v5508, %v5506
        %v5527 = vunpack.c.l.b16 %v5510
        %v5528 = vunpack.c.l.b16 %v5511
        %v5529 = vunpack.c.l.b16 %v5512
        %v5530 = vunpack.c.l.b16 %v5513
        %v5531 = vunpack.c.l.b16 %v5514
        %v5532 = vunpack.c.l.b16 %v5515
        %v5533 = vunpack.c.l.b16 %v5516
        %v5534 = vunpack.c.l.b16 %v5517
        %v5535 = vpack.c.b16 %v5528, %v5527
        %v5536 = vpack.c.b16 %v5530, %v5529
        %v5537 = vpack.c.b16 %v5532, %v5531
        %v5538 = vpack.c.b16 %v5534, %v5533
        %v5540 = vsel %vm5284, %v5535, 0
        %v5543 = vsel %vm5284, %v5536, 0
        %v5546 = vsel %vm5284, %v5537, 0
        %v5549 = vsel %vm5284, %v5538, 0
        %5551 = vmatpush.bf16.msra.mxu0 0
        %5552 = vmatpush.bf16.msra.mxu0 0
        %5553 = vmatpush.bf16.msra.mxu0 0
        %5554 = vmatpush.bf16.msra.mxu0 0
        %5555 = vmatpush.bf16.msra.mxu0 0
        %5556 = vmatpush.bf16.msra.mxu0 0
        %5557 = vmatpush.bf16.msra.mxu0 0
        %5558 = vmatpush.bf16.msra.mxu0 %v5518
        %5559 = vmatmul.bf16.gmra.mxu0 %v5540
        %v5560 = vpop.f32.mrf.mxu0
        %v5561 = vadd.f32 0.0, %v5560
        %v5562 = vpop.f32.mrf.mxu0
        %v5563 = vadd.f32 0.0, %v5562
        %5564 = vmatmul.bf16.gmra.mxu0 %v5543
        %v5565 = vpop.f32.mrf.mxu0
        %v5566 = vadd.f32 0.0, %v5565
        %v5567 = vpop.f32.mrf.mxu0
        %v5568 = vadd.f32 0.0, %v5567
        %5569 = vmatmul.bf16.gmra.mxu0 %v5546
        %v5570 = vpop.f32.mrf.mxu0
        %v5571 = vadd.f32 0.0, %v5570
        %v5572 = vpop.f32.mrf.mxu0
        %v5573 = vadd.f32 0.0, %v5572
        %5574 = vmatmul.bf16.gmra.mxu0 %v5549
        %v5575 = vpop.f32.mrf.mxu0
        %v5576 = vadd.f32 0.0, %v5575
        %v5577 = vpop.f32.mrf.mxu0
        %v5578 = vadd.f32 0.0, %v5577
        %5579 = vdwg.mxu0
        %v5580 = vadd.f32 %v4643, %v5561
        %v5581 = vadd.f32 %v4644, %v5563
        %v5582 = vadd.f32 %v4645, %v5566
        %v5583 = vadd.f32 %v4646, %v5568
        %v5584 = vadd.f32 %v4647, %v5571
        %v5585 = vadd.f32 %v4648, %v5573
        %v5586 = vadd.f32 %v4649, %v5576
        %v5587 = vadd.f32 %v4650, %v5578
        %s5588 = scalar_lea.vmem %s12, 80
        %v5589 = vld [vmem:[%s5588] sm:$0xff]
        %v5590 = vld [vmem:[%s5588 + $0x8] sm:$0x1]
        %v5591 = vld [vmem:[%s15 + $0xd] sm:$0x1]
        %v5594 = vrot.slane %v5589, 1
        %v5595 = vrot.slane %v5589, 2
        %v5596 = vrot.slane %v5589, 3
        %v5597 = vrot.slane %v5589, 4
        %v5598 = vrot.slane %v5589, 5
        %v5599 = vrot.slane %v5589, 6
        %v5600 = vrot.slane %v5589, 7
        %v5601 = vperm.slane %v5589, 0
        %v5602 = vperm.slane %v5594, 0
        %v5603 = vperm.slane %v5595, 0
        %v5604 = vperm.slane %v5596, 0
        %v5605 = vperm.slane %v5597, 0
        %v5606 = vperm.slane %v5598, 0
        %v5607 = vperm.slane %v5599, 0
        %v5608 = vperm.slane %v5600, 0
        %v5609 = vperm.slane %v5590, 0
        %v5619 = vmul.f32 %v5580, %v5601
        %v5620 = vmul.f32 %v5581, %v5601
        %v5621 = vmul.f32 %v5582, %v5601
        %v5622 = vmul.f32 %v5583, %v5601
        %v5623 = vmul.f32 %v5584, %v5601
        %v5624 = vmul.f32 %v5585, %v5601
        %v5625 = vmul.f32 %v5586, %v5601
        %v5626 = vmul.f32 %v5587, %v5601
        %v5627 = vmul.f32 %v5580, %v5602
        %v5628 = vmul.f32 %v5581, %v5602
        %v5629 = vmul.f32 %v5582, %v5602
        %v5630 = vmul.f32 %v5583, %v5602
        %v5631 = vmul.f32 %v5584, %v5602
        %v5632 = vmul.f32 %v5585, %v5602
        %v5633 = vmul.f32 %v5586, %v5602
        %v5634 = vmul.f32 %v5587, %v5602
        %v5635 = vmul.f32 %v5580, %v5603
        %v5636 = vmul.f32 %v5581, %v5603
        %v5637 = vmul.f32 %v5582, %v5603
        %v5638 = vmul.f32 %v5583, %v5603
        %v5639 = vmul.f32 %v5584, %v5603
        %v5640 = vmul.f32 %v5585, %v5603
        %v5641 = vmul.f32 %v5586, %v5603
        %v5642 = vmul.f32 %v5587, %v5603
        %v5643 = vmul.f32 %v5580, %v5604
        %v5644 = vmul.f32 %v5581, %v5604
        %v5645 = vmul.f32 %v5582, %v5604
        %v5646 = vmul.f32 %v5583, %v5604
        %v5647 = vmul.f32 %v5584, %v5604
        %v5648 = vmul.f32 %v5585, %v5604
        %v5649 = vmul.f32 %v5586, %v5604
        %v5650 = vmul.f32 %v5587, %v5604
        %v5651 = vmul.f32 %v5580, %v5605
        %v5652 = vmul.f32 %v5581, %v5605
        %v5653 = vmul.f32 %v5582, %v5605
        %v5654 = vmul.f32 %v5583, %v5605
        %v5655 = vmul.f32 %v5584, %v5605
        %v5656 = vmul.f32 %v5585, %v5605
        %v5657 = vmul.f32 %v5586, %v5605
        %v5658 = vmul.f32 %v5587, %v5605
        %v5659 = vmul.f32 %v5580, %v5606
        %v5660 = vmul.f32 %v5581, %v5606
        %v5661 = vmul.f32 %v5582, %v5606
        %v5662 = vmul.f32 %v5583, %v5606
        %v5663 = vmul.f32 %v5584, %v5606
        %v5664 = vmul.f32 %v5585, %v5606
        %v5665 = vmul.f32 %v5586, %v5606
        %v5666 = vmul.f32 %v5587, %v5606
        %v5667 = vmul.f32 %v5580, %v5607
        %v5668 = vmul.f32 %v5581, %v5607
        %v5669 = vmul.f32 %v5582, %v5607
        %v5670 = vmul.f32 %v5583, %v5607
        %v5671 = vmul.f32 %v5584, %v5607
        %v5672 = vmul.f32 %v5585, %v5607
        %v5673 = vmul.f32 %v5586, %v5607
        %v5674 = vmul.f32 %v5587, %v5607
        %v5675 = vmul.f32 %v5580, %v5608
        %v5676 = vmul.f32 %v5581, %v5608
        %v5677 = vmul.f32 %v5582, %v5608
        %v5678 = vmul.f32 %v5583, %v5608
        %v5679 = vmul.f32 %v5584, %v5608
        %v5680 = vmul.f32 %v5585, %v5608
        %v5681 = vmul.f32 %v5586, %v5608
        %v5682 = vmul.f32 %v5587, %v5608
        %v5683 = vmul.f32 %v5580, %v5609
        %v5684 = vmul.f32 %v5581, %v5609
        %v5685 = vmul.f32 %v5582, %v5609
        %v5686 = vmul.f32 %v5583, %v5609
        %v5687 = vmul.f32 %v5584, %v5609
        %v5688 = vmul.f32 %v5585, %v5609
        %v5689 = vmul.f32 %v5586, %v5609
        %v5690 = vmul.f32 %v5587, %v5609
        %v5691 = vpack.c.bf16 %v5619, %v5619
        %v5692 = vpack.c.bf16 %v5620, %v5620
        %v5693 = vpack.c.bf16 %v5621, %v5621
        %v5694 = vpack.c.bf16 %v5622, %v5622
        %v5695 = vpack.c.bf16 %v5623, %v5623
        %v5696 = vpack.c.bf16 %v5624, %v5624
        %v5697 = vpack.c.bf16 %v5625, %v5625
        %v5698 = vpack.c.bf16 %v5626, %v5626
        %v5699 = vpack.c.bf16 %v5627, %v5627
        %v5700 = vpack.c.bf16 %v5628, %v5628
        %v5701 = vpack.c.bf16 %v5629, %v5629
        %v5702 = vpack.c.bf16 %v5630, %v5630
        %v5703 = vpack.c.bf16 %v5631, %v5631
        %v5704 = vpack.c.bf16 %v5632, %v5632
        %v5705 = vpack.c.bf16 %v5633, %v5633
        %v5706 = vpack.c.bf16 %v5634, %v5634
        %v5707 = vpack.c.bf16 %v5635, %v5635
        %v5708 = vpack.c.bf16 %v5636, %v5636
        %v5709 = vpack.c.bf16 %v5637, %v5637
        %v5710 = vpack.c.bf16 %v5638, %v5638
        %v5711 = vpack.c.bf16 %v5639, %v5639
        %v5712 = vpack.c.bf16 %v5640, %v5640
        %v5713 = vpack.c.bf16 %v5641, %v5641
        %v5714 = vpack.c.bf16 %v5642, %v5642
        %v5715 = vpack.c.bf16 %v5643, %v5643
        %v5716 = vpack.c.bf16 %v5644, %v5644
        %v5717 = vpack.c.bf16 %v5645, %v5645
        %v5718 = vpack.c.bf16 %v5646, %v5646
        %v5719 = vpack.c.bf16 %v5647, %v5647
        %v5720 = vpack.c.bf16 %v5648, %v5648
        %v5721 = vpack.c.bf16 %v5649, %v5649
        %v5722 = vpack.c.bf16 %v5650, %v5650
        %v5723 = vpack.c.bf16 %v5651, %v5651
        %v5724 = vpack.c.bf16 %v5652, %v5652
        %v5725 = vpack.c.bf16 %v5653, %v5653
        %v5726 = vpack.c.bf16 %v5654, %v5654
        %v5727 = vpack.c.bf16 %v5655, %v5655
        %v5728 = vpack.c.bf16 %v5656, %v5656
        %v5729 = vpack.c.bf16 %v5657, %v5657
        %v5730 = vpack.c.bf16 %v5658, %v5658
        %v5731 = vpack.c.bf16 %v5659, %v5659
        %v5732 = vpack.c.bf16 %v5660, %v5660
        %v5733 = vpack.c.bf16 %v5661, %v5661
        %v5734 = vpack.c.bf16 %v5662, %v5662
        %v5735 = vpack.c.bf16 %v5663, %v5663
        %v5736 = vpack.c.bf16 %v5664, %v5664
        %v5737 = vpack.c.bf16 %v5665, %v5665
        %v5738 = vpack.c.bf16 %v5666, %v5666
        %v5739 = vpack.c.bf16 %v5667, %v5667
        %v5740 = vpack.c.bf16 %v5668, %v5668
        %v5741 = vpack.c.bf16 %v5669, %v5669
        %v5742 = vpack.c.bf16 %v5670, %v5670
        %v5743 = vpack.c.bf16 %v5671, %v5671
        %v5744 = vpack.c.bf16 %v5672, %v5672
        %v5745 = vpack.c.bf16 %v5673, %v5673
        %v5746 = vpack.c.bf16 %v5674, %v5674
        %v5747 = vpack.c.bf16 %v5675, %v5675
        %v5748 = vpack.c.bf16 %v5676, %v5676
        %v5749 = vpack.c.bf16 %v5677, %v5677
        %v5750 = vpack.c.bf16 %v5678, %v5678
        %v5751 = vpack.c.bf16 %v5679, %v5679
        %v5752 = vpack.c.bf16 %v5680, %v5680
        %v5753 = vpack.c.bf16 %v5681, %v5681
        %v5754 = vpack.c.bf16 %v5682, %v5682
        %v5755 = vpack.c.bf16 %v5683, %v5683
        %v5756 = vpack.c.bf16 %v5684, %v5684
        %v5757 = vpack.c.bf16 %v5685, %v5685
        %v5758 = vpack.c.bf16 %v5686, %v5686
        %v5759 = vpack.c.bf16 %v5687, %v5687
        %v5760 = vpack.c.bf16 %v5688, %v5688
        %v5761 = vpack.c.bf16 %v5689, %v5689
        %v5762 = vpack.c.bf16 %v5690, %v5690
        %v5763 = vperm.slane %v5591, 0
        %v5836 = vunpack.c.l.b16 %v5691
        %v5837 = vunpack.c.l.b16 %v5692
        %v5838 = vunpack.c.l.b16 %v5693
        %v5839 = vunpack.c.l.b16 %v5694
        %v5840 = vunpack.c.l.b16 %v5695
        %v5841 = vunpack.c.l.b16 %v5696
        %v5842 = vunpack.c.l.b16 %v5697
        %v5843 = vunpack.c.l.b16 %v5698
        %v5844 = vunpack.c.l.b16 %v5699
        %v5845 = vunpack.c.l.b16 %v5700
        %v5846 = vunpack.c.l.b16 %v5701
        %v5847 = vunpack.c.l.b16 %v5702
        %v5848 = vunpack.c.l.b16 %v5703
        %v5849 = vunpack.c.l.b16 %v5704
        %v5850 = vunpack.c.l.b16 %v5705
        %v5851 = vunpack.c.l.b16 %v5706
        %v5852 = vunpack.c.l.b16 %v5707
        %v5853 = vunpack.c.l.b16 %v5708
        %v5854 = vunpack.c.l.b16 %v5709
        %v5855 = vunpack.c.l.b16 %v5710
        %v5856 = vunpack.c.l.b16 %v5711
        %v5857 = vunpack.c.l.b16 %v5712
        %v5858 = vunpack.c.l.b16 %v5713
        %v5859 = vunpack.c.l.b16 %v5714
        %v5860 = vunpack.c.l.b16 %v5715
        %v5861 = vunpack.c.l.b16 %v5716
        %v5862 = vunpack.c.l.b16 %v5717
        %v5863 = vunpack.c.l.b16 %v5718
        %v5864 = vunpack.c.l.b16 %v5719
        %v5865 = vunpack.c.l.b16 %v5720
        %v5866 = vunpack.c.l.b16 %v5721
        %v5867 = vunpack.c.l.b16 %v5722
        %v5868 = vunpack.c.l.b16 %v5723
        %v5869 = vunpack.c.l.b16 %v5724
        %v5870 = vunpack.c.l.b16 %v5725
        %v5871 = vunpack.c.l.b16 %v5726
        %v5872 = vunpack.c.l.b16 %v5727
        %v5873 = vunpack.c.l.b16 %v5728
        %v5874 = vunpack.c.l.b16 %v5729
        %v5875 = vunpack.c.l.b16 %v5730
        %v5876 = vunpack.c.l.b16 %v5731
        %v5877 = vunpack.c.l.b16 %v5732
        %v5878 = vunpack.c.l.b16 %v5733
        %v5879 = vunpack.c.l.b16 %v5734
        %v5880 = vunpack.c.l.b16 %v5735
        %v5881 = vunpack.c.l.b16 %v5736
        %v5882 = vunpack.c.l.b16 %v5737
        %v5883 = vunpack.c.l.b16 %v5738
        %v5884 = vunpack.c.l.b16 %v5739
        %v5885 = vunpack.c.l.b16 %v5740
        %v5886 = vunpack.c.l.b16 %v5741
        %v5887 = vunpack.c.l.b16 %v5742
        %v5888 = vunpack.c.l.b16 %v5743
        %v5889 = vunpack.c.l.b16 %v5744
        %v5890 = vunpack.c.l.b16 %v5745
        %v5891 = vunpack.c.l.b16 %v5746
        %v5892 = vunpack.c.l.b16 %v5747
        %v5893 = vunpack.c.l.b16 %v5748
        %v5894 = vunpack.c.l.b16 %v5749
        %v5895 = vunpack.c.l.b16 %v5750
        %v5896 = vunpack.c.l.b16 %v5751
        %v5897 = vunpack.c.l.b16 %v5752
        %v5898 = vunpack.c.l.b16 %v5753
        %v5899 = vunpack.c.l.b16 %v5754
        %v5900 = vunpack.c.l.b16 %v5755
        %v5901 = vunpack.c.l.b16 %v5756
        %v5902 = vunpack.c.l.b16 %v5757
        %v5903 = vunpack.c.l.b16 %v5758
        %v5904 = vunpack.c.l.b16 %v5759
        %v5905 = vunpack.c.l.b16 %v5760
        %v5906 = vunpack.c.l.b16 %v5761
        %v5907 = vunpack.c.l.b16 %v5762
        %v5908 = vpack.c.b16 %v5837, %v5836
        %v5909 = vpack.c.b16 %v5839, %v5838
        %v5910 = vpack.c.b16 %v5841, %v5840
        %v5911 = vpack.c.b16 %v5843, %v5842
        %v5912 = vpack.c.b16 %v5845, %v5844
        %v5913 = vpack.c.b16 %v5847, %v5846
        %v5914 = vpack.c.b16 %v5849, %v5848
        %v5915 = vpack.c.b16 %v5851, %v5850
        %v5916 = vpack.c.b16 %v5853, %v5852
        %v5917 = vpack.c.b16 %v5855, %v5854
        %v5918 = vpack.c.b16 %v5857, %v5856
        %v5919 = vpack.c.b16 %v5859, %v5858
        %v5920 = vpack.c.b16 %v5861, %v5860
        %v5921 = vpack.c.b16 %v5863, %v5862
        %v5922 = vpack.c.b16 %v5865, %v5864
        %v5923 = vpack.c.b16 %v5867, %v5866
        %v5924 = vpack.c.b16 %v5869, %v5868
        %v5925 = vpack.c.b16 %v5871, %v5870
        %v5926 = vpack.c.b16 %v5873, %v5872
        %v5927 = vpack.c.b16 %v5875, %v5874
        %v5928 = vpack.c.b16 %v5877, %v5876
        %v5929 = vpack.c.b16 %v5879, %v5878
        %v5930 = vpack.c.b16 %v5881, %v5880
        %v5931 = vpack.c.b16 %v5883, %v5882
        %v5932 = vpack.c.b16 %v5885, %v5884
        %v5933 = vpack.c.b16 %v5887, %v5886
        %v5934 = vpack.c.b16 %v5889, %v5888
        %v5935 = vpack.c.b16 %v5891, %v5890
        %v5936 = vpack.c.b16 %v5893, %v5892
        %v5937 = vpack.c.b16 %v5895, %v5894
        %v5938 = vpack.c.b16 %v5897, %v5896
        %v5939 = vpack.c.b16 %v5899, %v5898
        %v5940 = vpack.c.b16 %v5901, %v5900
        %v5941 = vpack.c.b16 %v5903, %v5902
        %v5942 = vpack.c.b16 %v5905, %v5904
        %v5943 = vpack.c.b16 %v5907, %v5906
        %5980 = vmatpush.bf16.msra.mxu0 %v5915
        %5981 = vmatpush.bf16.msra.mxu0 %v5914
        %5982 = vmatpush.bf16.msra.mxu0 %v5913
        %5983 = vmatpush.bf16.msra.mxu0 %v5912
        %5984 = vmatpush.bf16.msra.mxu0 %v5911
        %5985 = vmatpush.bf16.msra.mxu0 %v5910
        %5986 = vmatpush.bf16.msra.mxu0 %v5909
        %5987 = vmatpush.bf16.msra.mxu0 %v5908
        %5988 = vmatmul.bf16.gmra.mxu0 %v1429
        %v5989 = vpop.f32.mrf.mxu0
        %v5990 = vadd.f32 %v5763, %v5989
        %v5991 = vpop.f32.mrf.mxu0
        %v5992 = vadd.f32 %v5763, %v5991
        %5993 = vmatmul.bf16.gmra.mxu0 %v1434
        %v5994 = vpop.f32.mrf.mxu0
        %v5995 = vadd.f32 %v5763, %v5994
        %v5996 = vpop.f32.mrf.mxu0
        %v5997 = vadd.f32 %v5763, %v5996
        %5998 = vmatmul.bf16.gmra.mxu0 %v1439
        %v5999 = vpop.f32.mrf.mxu0
        %v6000 = vadd.f32 %v5763, %v5999
        %v6001 = vpop.f32.mrf.mxu0
        %v6002 = vadd.f32 %v5763, %v6001
        %6003 = vmatmul.bf16.gmra.mxu0 %v1444
        %v6004 = vpop.f32.mrf.mxu0
        %v6005 = vadd.f32 %v5763, %v6004
        %v6006 = vpop.f32.mrf.mxu0
        %v6007 = vadd.f32 %v5763, %v6006
        %6008 = vdwg.mxu0
        %6009 = vmatpush.bf16.msra.mxu0 %v5923
        %6010 = vmatpush.bf16.msra.mxu0 %v5922
        %6011 = vmatpush.bf16.msra.mxu0 %v5921
        %6012 = vmatpush.bf16.msra.mxu0 %v5920
        %6013 = vmatpush.bf16.msra.mxu0 %v5919
        %6014 = vmatpush.bf16.msra.mxu0 %v5918
        %6015 = vmatpush.bf16.msra.mxu0 %v5917
        %6016 = vmatpush.bf16.msra.mxu0 %v5916
        %6017 = vmatmul.bf16.gmra.mxu0 %v1430
        %v6018 = vpop.f32.mrf.mxu0
        %v6019 = vadd.f32 %v5990, %v6018
        %v6020 = vpop.f32.mrf.mxu0
        %v6021 = vadd.f32 %v5992, %v6020
        %6022 = vmatmul.bf16.gmra.mxu0 %v1435
        %v6023 = vpop.f32.mrf.mxu0
        %v6024 = vadd.f32 %v5995, %v6023
        %v6025 = vpop.f32.mrf.mxu0
        %v6026 = vadd.f32 %v5997, %v6025
        %6027 = vmatmul.bf16.gmra.mxu0 %v1440
        %v6028 = vpop.f32.mrf.mxu0
        %v6029 = vadd.f32 %v6000, %v6028
        %v6030 = vpop.f32.mrf.mxu0
        %v6031 = vadd.f32 %v6002, %v6030
        %6032 = vmatmul.bf16.gmra.mxu0 %v1445
        %v6033 = vpop.f32.mrf.mxu0
        %v6034 = vadd.f32 %v6005, %v6033
        %v6035 = vpop.f32.mrf.mxu0
        %v6036 = vadd.f32 %v6007, %v6035
        %6037 = vdwg.mxu0
        %6038 = vmatpush.bf16.msra.mxu0 %v5931
        %6039 = vmatpush.bf16.msra.mxu0 %v5930
        %6040 = vmatpush.bf16.msra.mxu0 %v5929
        %6041 = vmatpush.bf16.msra.mxu0 %v5928
        %6042 = vmatpush.bf16.msra.mxu0 %v5927
        %6043 = vmatpush.bf16.msra.mxu0 %v5926
        %6044 = vmatpush.bf16.msra.mxu0 %v5925
        %6045 = vmatpush.bf16.msra.mxu0 %v5924
        %6046 = vmatmul.bf16.gmra.mxu0 %v1431
        %v6047 = vpop.f32.mrf.mxu0
        %v6048 = vadd.f32 %v6019, %v6047
        %v6049 = vpop.f32.mrf.mxu0
        %v6050 = vadd.f32 %v6021, %v6049
        %6051 = vmatmul.bf16.gmra.mxu0 %v1436
        %v6052 = vpop.f32.mrf.mxu0
        %v6053 = vadd.f32 %v6024, %v6052
        %v6054 = vpop.f32.mrf.mxu0
        %v6055 = vadd.f32 %v6026, %v6054
        %6056 = vmatmul.bf16.gmra.mxu0 %v1441
        %v6057 = vpop.f32.mrf.mxu0
        %v6058 = vadd.f32 %v6029, %v6057
        %v6059 = vpop.f32.mrf.mxu0
        %v6060 = vadd.f32 %v6031, %v6059
        %6061 = vmatmul.bf16.gmra.mxu0 %v1446
        %v6062 = vpop.f32.mrf.mxu0
        %v6063 = vadd.f32 %v6034, %v6062
        %v6064 = vpop.f32.mrf.mxu0
        %v6065 = vadd.f32 %v6036, %v6064
        %6066 = vdwg.mxu0
        %6067 = vmatpush.bf16.msra.mxu0 %v5939
        %6068 = vmatpush.bf16.msra.mxu0 %v5938
        %6069 = vmatpush.bf16.msra.mxu0 %v5937
        %6070 = vmatpush.bf16.msra.mxu0 %v5936
        %6071 = vmatpush.bf16.msra.mxu0 %v5935
        %6072 = vmatpush.bf16.msra.mxu0 %v5934
        %6073 = vmatpush.bf16.msra.mxu0 %v5933
        %6074 = vmatpush.bf16.msra.mxu0 %v5932
        %6075 = vmatmul.bf16.gmra.mxu0 %v1432
        %v6076 = vpop.f32.mrf.mxu0
        %v6077 = vadd.f32 %v6048, %v6076
        %v6078 = vpop.f32.mrf.mxu0
        %v6079 = vadd.f32 %v6050, %v6078
        %6080 = vmatmul.bf16.gmra.mxu0 %v1437
        %v6081 = vpop.f32.mrf.mxu0
        %v6082 = vadd.f32 %v6053, %v6081
        %v6083 = vpop.f32.mrf.mxu0
        %v6084 = vadd.f32 %v6055, %v6083
        %6085 = vmatmul.bf16.gmra.mxu0 %v1442
        %v6086 = vpop.f32.mrf.mxu0
        %v6087 = vadd.f32 %v6058, %v6086
        %v6088 = vpop.f32.mrf.mxu0
        %v6089 = vadd.f32 %v6060, %v6088
        %6090 = vmatmul.bf16.gmra.mxu0 %v1447
        %v6091 = vpop.f32.mrf.mxu0
        %v6092 = vadd.f32 %v6063, %v6091
        %v6093 = vpop.f32.mrf.mxu0
        %v6094 = vadd.f32 %v6065, %v6093
        %6095 = vdwg.mxu0
        %6096 = vmatpush.bf16.msra.mxu0 0
        %6097 = vmatpush.bf16.msra.mxu0 0
        %6098 = vmatpush.bf16.msra.mxu0 0
        %6099 = vmatpush.bf16.msra.mxu0 0
        %6100 = vmatpush.bf16.msra.mxu0 %v5943
        %6101 = vmatpush.bf16.msra.mxu0 %v5942
        %6102 = vmatpush.bf16.msra.mxu0 %v5941
        %6103 = vmatpush.bf16.msra.mxu0 %v5940
        %6104 = vmatmul.bf16.gmra.mxu0 %v1682
        %v6105 = vpop.f32.mrf.mxu0
        %v6106 = vadd.f32 %v6077, %v6105
        %v6107 = vpop.f32.mrf.mxu0
        %v6108 = vadd.f32 %v6079, %v6107
        %6109 = vmatmul.bf16.gmra.mxu0 %v1685
        %v6110 = vpop.f32.mrf.mxu0
        %v6111 = vadd.f32 %v6082, %v6110
        %v6112 = vpop.f32.mrf.mxu0
        %v6113 = vadd.f32 %v6084, %v6112
        %6114 = vmatmul.bf16.gmra.mxu0 %v1688
        %v6115 = vpop.f32.mrf.mxu0
        %v6116 = vadd.f32 %v6087, %v6115
        %v6117 = vpop.f32.mrf.mxu0
        %v6118 = vadd.f32 %v6089, %v6117
        %6119 = vmatmul.bf16.gmra.mxu0 %v1691
        %v6120 = vpop.f32.mrf.mxu0
        %v6121 = vadd.f32 %v6092, %v6120
        %v6122 = vpop.f32.mrf.mxu0
        %v6123 = vadd.f32 %v6094, %v6122
        %6124 = vdwg.mxu0
        %s6125 = scalar_lea.vmem %s12, 96
        %v6126 = vld [vmem:[%s6125] sm:$0xff]
        %v6127 = vld [vmem:[%s6125 + $0x8] sm:$0x1]
        %v6128 = vld [vmem:[%s15 + $0xe] sm:$0x1]
        %v6131 = vrot.slane %v6126, 1
        %v6132 = vrot.slane %v6126, 2
        %v6133 = vrot.slane %v6126, 3
        %v6134 = vrot.slane %v6126, 4
        %v6135 = vrot.slane %v6126, 5
        %v6136 = vrot.slane %v6126, 6
        %v6137 = vrot.slane %v6126, 7
        %v6138 = vperm.slane %v6126, 0
        %v6139 = vperm.slane %v6131, 0
        %v6140 = vperm.slane %v6132, 0
        %v6141 = vperm.slane %v6133, 0
        %v6142 = vperm.slane %v6134, 0
        %v6143 = vperm.slane %v6135, 0
        %v6144 = vperm.slane %v6136, 0
        %v6145 = vperm.slane %v6137, 0
        %v6146 = vperm.slane %v6127, 0
        %v6156 = vmul.f32 %v6106, %v6138
        %v6157 = vmul.f32 %v6108, %v6138
        %v6158 = vmul.f32 %v6111, %v6138
        %v6159 = vmul.f32 %v6113, %v6138
        %v6160 = vmul.f32 %v6116, %v6138
        %v6161 = vmul.f32 %v6118, %v6138
        %v6162 = vmul.f32 %v6121, %v6138
        %v6163 = vmul.f32 %v6123, %v6138
        %v6164 = vmul.f32 %v6106, %v6139
        %v6165 = vmul.f32 %v6108, %v6139
        %v6166 = vmul.f32 %v6111, %v6139
        %v6167 = vmul.f32 %v6113, %v6139
        %v6168 = vmul.f32 %v6116, %v6139
        %v6169 = vmul.f32 %v6118, %v6139
        %v6170 = vmul.f32 %v6121, %v6139
        %v6171 = vmul.f32 %v6123, %v6139
        %v6172 = vmul.f32 %v6106, %v6140
        %v6173 = vmul.f32 %v6108, %v6140
        %v6174 = vmul.f32 %v6111, %v6140
        %v6175 = vmul.f32 %v6113, %v6140
        %v6176 = vmul.f32 %v6116, %v6140
        %v6177 = vmul.f32 %v6118, %v6140
        %v6178 = vmul.f32 %v6121, %v6140
        %v6179 = vmul.f32 %v6123, %v6140
        %v6180 = vmul.f32 %v6106, %v6141
        %v6181 = vmul.f32 %v6108, %v6141
        %v6182 = vmul.f32 %v6111, %v6141
        %v6183 = vmul.f32 %v6113, %v6141
        %v6184 = vmul.f32 %v6116, %v6141
        %v6185 = vmul.f32 %v6118, %v6141
        %v6186 = vmul.f32 %v6121, %v6141
        %v6187 = vmul.f32 %v6123, %v6141
        %v6188 = vmul.f32 %v6106, %v6142
        %v6189 = vmul.f32 %v6108, %v6142
        %v6190 = vmul.f32 %v6111, %v6142
        %v6191 = vmul.f32 %v6113, %v6142
        %v6192 = vmul.f32 %v6116, %v6142
        %v6193 = vmul.f32 %v6118, %v6142
        %v6194 = vmul.f32 %v6121, %v6142
        %v6195 = vmul.f32 %v6123, %v6142
        %v6196 = vmul.f32 %v6106, %v6143
        %v6197 = vmul.f32 %v6108, %v6143
        %v6198 = vmul.f32 %v6111, %v6143
        %v6199 = vmul.f32 %v6113, %v6143
        %v6200 = vmul.f32 %v6116, %v6143
        %v6201 = vmul.f32 %v6118, %v6143
        %v6202 = vmul.f32 %v6121, %v6143
        %v6203 = vmul.f32 %v6123, %v6143
        %v6204 = vmul.f32 %v6106, %v6144
        %v6205 = vmul.f32 %v6108, %v6144
        %v6206 = vmul.f32 %v6111, %v6144
        %v6207 = vmul.f32 %v6113, %v6144
        %v6208 = vmul.f32 %v6116, %v6144
        %v6209 = vmul.f32 %v6118, %v6144
        %v6210 = vmul.f32 %v6121, %v6144
        %v6211 = vmul.f32 %v6123, %v6144
        %v6212 = vmul.f32 %v6106, %v6145
        %v6213 = vmul.f32 %v6108, %v6145
        %v6214 = vmul.f32 %v6111, %v6145
        %v6215 = vmul.f32 %v6113, %v6145
        %v6216 = vmul.f32 %v6116, %v6145
        %v6217 = vmul.f32 %v6118, %v6145
        %v6218 = vmul.f32 %v6121, %v6145
        %v6219 = vmul.f32 %v6123, %v6145
        %v6220 = vmul.f32 %v6106, %v6146
        %v6221 = vmul.f32 %v6108, %v6146
        %v6222 = vmul.f32 %v6111, %v6146
        %v6223 = vmul.f32 %v6113, %v6146
        %v6224 = vmul.f32 %v6116, %v6146
        %v6225 = vmul.f32 %v6118, %v6146
        %v6226 = vmul.f32 %v6121, %v6146
        %v6227 = vmul.f32 %v6123, %v6146
        %v6228 = vpack.c.bf16 %v6156, %v6156
        %v6229 = vpack.c.bf16 %v6157, %v6157
        %v6230 = vpack.c.bf16 %v6158, %v6158
        %v6231 = vpack.c.bf16 %v6159, %v6159
        %v6232 = vpack.c.bf16 %v6160, %v6160
        %v6233 = vpack.c.bf16 %v6161, %v6161
        %v6234 = vpack.c.bf16 %v6162, %v6162
        %v6235 = vpack.c.bf16 %v6163, %v6163
        %v6236 = vpack.c.bf16 %v6164, %v6164
        %v6237 = vpack.c.bf16 %v6165, %v6165
        %v6238 = vpack.c.bf16 %v6166, %v6166
        %v6239 = vpack.c.bf16 %v6167, %v6167
        %v6240 = vpack.c.bf16 %v6168, %v6168
        %v6241 = vpack.c.bf16 %v6169, %v6169
        %v6242 = vpack.c.bf16 %v6170, %v6170
        %v6243 = vpack.c.bf16 %v6171, %v6171
        %v6244 = vpack.c.bf16 %v6172, %v6172
        %v6245 = vpack.c.bf16 %v6173, %v6173
        %v6246 = vpack.c.bf16 %v6174, %v6174
        %v6247 = vpack.c.bf16 %v6175, %v6175
        %v6248 = vpack.c.bf16 %v6176, %v6176
        %v6249 = vpack.c.bf16 %v6177, %v6177
        %v6250 = vpack.c.bf16 %v6178, %v6178
        %v6251 = vpack.c.bf16 %v6179, %v6179
        %v6252 = vpack.c.bf16 %v6180, %v6180
        %v6253 = vpack.c.bf16 %v6181, %v6181
        %v6254 = vpack.c.bf16 %v6182, %v6182
        %v6255 = vpack.c.bf16 %v6183, %v6183
        %v6256 = vpack.c.bf16 %v6184, %v6184
        %v6257 = vpack.c.bf16 %v6185, %v6185
        %v6258 = vpack.c.bf16 %v6186, %v6186
        %v6259 = vpack.c.bf16 %v6187, %v6187
        %v6260 = vpack.c.bf16 %v6188, %v6188
        %v6261 = vpack.c.bf16 %v6189, %v6189
        %v6262 = vpack.c.bf16 %v6190, %v6190
        %v6263 = vpack.c.bf16 %v6191, %v6191
        %v6264 = vpack.c.bf16 %v6192, %v6192
        %v6265 = vpack.c.bf16 %v6193, %v6193
        %v6266 = vpack.c.bf16 %v6194, %v6194
        %v6267 = vpack.c.bf16 %v6195, %v6195
        %v6268 = vpack.c.bf16 %v6196, %v6196
        %v6269 = vpack.c.bf16 %v6197, %v6197
        %v6270 = vpack.c.bf16 %v6198, %v6198
        %v6271 = vpack.c.bf16 %v6199, %v6199
        %v6272 = vpack.c.bf16 %v6200, %v6200
        %v6273 = vpack.c.bf16 %v6201, %v6201
        %v6274 = vpack.c.bf16 %v6202, %v6202
        %v6275 = vpack.c.bf16 %v6203, %v6203
        %v6276 = vpack.c.bf16 %v6204, %v6204
        %v6277 = vpack.c.bf16 %v6205, %v6205
        %v6278 = vpack.c.bf16 %v6206, %v6206
        %v6279 = vpack.c.bf16 %v6207, %v6207
        %v6280 = vpack.c.bf16 %v6208, %v6208
        %v6281 = vpack.c.bf16 %v6209, %v6209
        %v6282 = vpack.c.bf16 %v6210, %v6210
        %v6283 = vpack.c.bf16 %v6211, %v6211
        %v6284 = vpack.c.bf16 %v6212, %v6212
        %v6285 = vpack.c.bf16 %v6213, %v6213
        %v6286 = vpack.c.bf16 %v6214, %v6214
        %v6287 = vpack.c.bf16 %v6215, %v6215
        %v6288 = vpack.c.bf16 %v6216, %v6216
        %v6289 = vpack.c.bf16 %v6217, %v6217
        %v6290 = vpack.c.bf16 %v6218, %v6218
        %v6291 = vpack.c.bf16 %v6219, %v6219
        %v6292 = vpack.c.bf16 %v6220, %v6220
        %v6293 = vpack.c.bf16 %v6221, %v6221
        %v6294 = vpack.c.bf16 %v6222, %v6222
        %v6295 = vpack.c.bf16 %v6223, %v6223
        %v6296 = vpack.c.bf16 %v6224, %v6224
        %v6297 = vpack.c.bf16 %v6225, %v6225
        %v6298 = vpack.c.bf16 %v6226, %v6226
        %v6299 = vpack.c.bf16 %v6227, %v6227
        %v6300 = vperm.slane %v6128, 0
        %v6373 = vunpack.c.l.b16 %v6228
        %v6374 = vunpack.c.l.b16 %v6229
        %v6375 = vunpack.c.l.b16 %v6230
        %v6376 = vunpack.c.l.b16 %v6231
        %v6377 = vunpack.c.l.b16 %v6232
        %v6378 = vunpack.c.l.b16 %v6233
        %v6379 = vunpack.c.l.b16 %v6234
        %v6380 = vunpack.c.l.b16 %v6235
        %v6381 = vunpack.c.l.b16 %v6236
        %v6382 = vunpack.c.l.b16 %v6237
        %v6383 = vunpack.c.l.b16 %v6238
        %v6384 = vunpack.c.l.b16 %v6239
        %v6385 = vunpack.c.l.b16 %v6240
        %v6386 = vunpack.c.l.b16 %v6241
        %v6387 = vunpack.c.l.b16 %v6242
        %v6388 = vunpack.c.l.b16 %v6243
        %v6389 = vunpack.c.l.b16 %v6244
        %v6390 = vunpack.c.l.b16 %v6245
        %v6391 = vunpack.c.l.b16 %v6246
        %v6392 = vunpack.c.l.b16 %v6247
        %v6393 = vunpack.c.l.b16 %v6248
        %v6394 = vunpack.c.l.b16 %v6249
        %v6395 = vunpack.c.l.b16 %v6250
        %v6396 = vunpack.c.l.b16 %v6251
        %v6397 = vunpack.c.l.b16 %v6252
        %v6398 = vunpack.c.l.b16 %v6253
        %v6399 = vunpack.c.l.b16 %v6254
        %v6400 = vunpack.c.l.b16 %v6255
        %v6401 = vunpack.c.l.b16 %v6256
        %v6402 = vunpack.c.l.b16 %v6257
        %v6403 = vunpack.c.l.b16 %v6258
        %v6404 = vunpack.c.l.b16 %v6259
        %v6405 = vunpack.c.l.b16 %v6260
        %v6406 = vunpack.c.l.b16 %v6261
        %v6407 = vunpack.c.l.b16 %v6262
        %v6408 = vunpack.c.l.b16 %v6263
        %v6409 = vunpack.c.l.b16 %v6264
        %v6410 = vunpack.c.l.b16 %v6265
        %v6411 = vunpack.c.l.b16 %v6266
        %v6412 = vunpack.c.l.b16 %v6267
        %v6413 = vunpack.c.l.b16 %v6268
        %v6414 = vunpack.c.l.b16 %v6269
        %v6415 = vunpack.c.l.b16 %v6270
        %v6416 = vunpack.c.l.b16 %v6271
        %v6417 = vunpack.c.l.b16 %v6272
        %v6418 = vunpack.c.l.b16 %v6273
        %v6419 = vunpack.c.l.b16 %v6274
        %v6420 = vunpack.c.l.b16 %v6275
        %v6421 = vunpack.c.l.b16 %v6276
        %v6422 = vunpack.c.l.b16 %v6277
        %v6423 = vunpack.c.l.b16 %v6278
        %v6424 = vunpack.c.l.b16 %v6279
        %v6425 = vunpack.c.l.b16 %v6280
        %v6426 = vunpack.c.l.b16 %v6281
        %v6427 = vunpack.c.l.b16 %v6282
        %v6428 = vunpack.c.l.b16 %v6283
        %v6429 = vunpack.c.l.b16 %v6284
        %v6430 = vunpack.c.l.b16 %v6285
        %v6431 = vunpack.c.l.b16 %v6286
        %v6432 = vunpack.c.l.b16 %v6287
        %v6433 = vunpack.c.l.b16 %v6288
        %v6434 = vunpack.c.l.b16 %v6289
        %v6435 = vunpack.c.l.b16 %v6290
        %v6436 = vunpack.c.l.b16 %v6291
        %v6437 = vunpack.c.l.b16 %v6292
        %v6438 = vunpack.c.l.b16 %v6293
        %v6439 = vunpack.c.l.b16 %v6294
        %v6440 = vunpack.c.l.b16 %v6295
        %v6441 = vunpack.c.l.b16 %v6296
        %v6442 = vunpack.c.l.b16 %v6297
        %v6443 = vunpack.c.l.b16 %v6298
        %v6444 = vunpack.c.l.b16 %v6299
        %v6445 = vpack.c.b16 %v6374, %v6373
        %v6446 = vpack.c.b16 %v6376, %v6375
        %v6447 = vpack.c.b16 %v6378, %v6377
        %v6448 = vpack.c.b16 %v6380, %v6379
        %v6449 = vpack.c.b16 %v6382, %v6381
        %v6450 = vpack.c.b16 %v6384, %v6383
        %v6451 = vpack.c.b16 %v6386, %v6385
        %v6452 = vpack.c.b16 %v6388, %v6387
        %v6453 = vpack.c.b16 %v6390, %v6389
        %v6454 = vpack.c.b16 %v6392, %v6391
        %v6455 = vpack.c.b16 %v6394, %v6393
        %v6456 = vpack.c.b16 %v6396, %v6395
        %v6457 = vpack.c.b16 %v6398, %v6397
        %v6458 = vpack.c.b16 %v6400, %v6399
        %v6459 = vpack.c.b16 %v6402, %v6401
        %v6460 = vpack.c.b16 %v6404, %v6403
        %v6461 = vpack.c.b16 %v6406, %v6405
        %v6462 = vpack.c.b16 %v6408, %v6407
        %v6463 = vpack.c.b16 %v6410, %v6409
        %v6464 = vpack.c.b16 %v6412, %v6411
        %v6465 = vpack.c.b16 %v6414, %v6413
        %v6466 = vpack.c.b16 %v6416, %v6415
        %v6467 = vpack.c.b16 %v6418, %v6417
        %v6468 = vpack.c.b16 %v6420, %v6419
        %v6469 = vpack.c.b16 %v6422, %v6421
        %v6470 = vpack.c.b16 %v6424, %v6423
        %v6471 = vpack.c.b16 %v6426, %v6425
        %v6472 = vpack.c.b16 %v6428, %v6427
        %v6473 = vpack.c.b16 %v6430, %v6429
        %v6474 = vpack.c.b16 %v6432, %v6431
        %v6475 = vpack.c.b16 %v6434, %v6433
        %v6476 = vpack.c.b16 %v6436, %v6435
        %v6477 = vpack.c.b16 %v6438, %v6437
        %v6478 = vpack.c.b16 %v6440, %v6439
        %v6479 = vpack.c.b16 %v6442, %v6441
        %v6480 = vpack.c.b16 %v6444, %v6443
        %6517 = vmatpush.bf16.msra.mxu0 %v6452
        %6518 = vmatpush.bf16.msra.mxu0 %v6451
        %6519 = vmatpush.bf16.msra.mxu0 %v6450
        %6520 = vmatpush.bf16.msra.mxu0 %v6449
        %6521 = vmatpush.bf16.msra.mxu0 %v6448
        %6522 = vmatpush.bf16.msra.mxu0 %v6447
        %6523 = vmatpush.bf16.msra.mxu0 %v6446
        %6524 = vmatpush.bf16.msra.mxu0 %v6445
        %6525 = vmatmul.bf16.gmra.mxu0 %v1429
        %v6526 = vpop.f32.mrf.mxu0
        %v6527 = vadd.f32 %v6300, %v6526
        %v6528 = vpop.f32.mrf.mxu0
        %v6529 = vadd.f32 %v6300, %v6528
        %6530 = vmatmul.bf16.gmra.mxu0 %v1434
        %v6531 = vpop.f32.mrf.mxu0
        %v6532 = vadd.f32 %v6300, %v6531
        %v6533 = vpop.f32.mrf.mxu0
        %v6534 = vadd.f32 %v6300, %v6533
        %6535 = vmatmul.bf16.gmra.mxu0 %v1439
        %v6536 = vpop.f32.mrf.mxu0
        %v6537 = vadd.f32 %v6300, %v6536
        %v6538 = vpop.f32.mrf.mxu0
        %v6539 = vadd.f32 %v6300, %v6538
        %6540 = vmatmul.bf16.gmra.mxu0 %v1444
        %v6541 = vpop.f32.mrf.mxu0
        %v6542 = vadd.f32 %v6300, %v6541
        %v6543 = vpop.f32.mrf.mxu0
        %v6544 = vadd.f32 %v6300, %v6543
        %6545 = vdwg.mxu0
        %6546 = vmatpush.bf16.msra.mxu0 %v6460
        %6547 = vmatpush.bf16.msra.mxu0 %v6459
        %6548 = vmatpush.bf16.msra.mxu0 %v6458
        %6549 = vmatpush.bf16.msra.mxu0 %v6457
        %6550 = vmatpush.bf16.msra.mxu0 %v6456
        %6551 = vmatpush.bf16.msra.mxu0 %v6455
        %6552 = vmatpush.bf16.msra.mxu0 %v6454
        %6553 = vmatpush.bf16.msra.mxu0 %v6453
        %6554 = vmatmul.bf16.gmra.mxu0 %v1430
        %v6555 = vpop.f32.mrf.mxu0
        %v6556 = vadd.f32 %v6527, %v6555
        %v6557 = vpop.f32.mrf.mxu0
        %v6558 = vadd.f32 %v6529, %v6557
        %6559 = vmatmul.bf16.gmra.mxu0 %v1435
        %v6560 = vpop.f32.mrf.mxu0
        %v6561 = vadd.f32 %v6532, %v6560
        %v6562 = vpop.f32.mrf.mxu0
        %v6563 = vadd.f32 %v6534, %v6562
        %6564 = vmatmul.bf16.gmra.mxu0 %v1440
        %v6565 = vpop.f32.mrf.mxu0
        %v6566 = vadd.f32 %v6537, %v6565
        %v6567 = vpop.f32.mrf.mxu0
        %v6568 = vadd.f32 %v6539, %v6567
        %6569 = vmatmul.bf16.gmra.mxu0 %v1445
        %v6570 = vpop.f32.mrf.mxu0
        %v6571 = vadd.f32 %v6542, %v6570
        %v6572 = vpop.f32.mrf.mxu0
        %v6573 = vadd.f32 %v6544, %v6572
        %6574 = vdwg.mxu0
        %6575 = vmatpush.bf16.msra.mxu0 %v6468
        %6576 = vmatpush.bf16.msra.mxu0 %v6467
        %6577 = vmatpush.bf16.msra.mxu0 %v6466
        %6578 = vmatpush.bf16.msra.mxu0 %v6465
        %6579 = vmatpush.bf16.msra.mxu0 %v6464
        %6580 = vmatpush.bf16.msra.mxu0 %v6463
        %6581 = vmatpush.bf16.msra.mxu0 %v6462
        %6582 = vmatpush.bf16.msra.mxu0 %v6461
        %6583 = vmatmul.bf16.gmra.mxu0 %v1431
        %v6584 = vpop.f32.mrf.mxu0
        %v6585 = vadd.f32 %v6556, %v6584
        %v6586 = vpop.f32.mrf.mxu0
        %v6587 = vadd.f32 %v6558, %v6586
        %6588 = vmatmul.bf16.gmra.mxu0 %v1436
        %v6589 = vpop.f32.mrf.mxu0
        %v6590 = vadd.f32 %v6561, %v6589
        %v6591 = vpop.f32.mrf.mxu0
        %v6592 = vadd.f32 %v6563, %v6591
        %6593 = vmatmul.bf16.gmra.mxu0 %v1441
        %v6594 = vpop.f32.mrf.mxu0
        %v6595 = vadd.f32 %v6566, %v6594
        %v6596 = vpop.f32.mrf.mxu0
        %v6597 = vadd.f32 %v6568, %v6596
        %6598 = vmatmul.bf16.gmra.mxu0 %v1446
        %v6599 = vpop.f32.mrf.mxu0
        %v6600 = vadd.f32 %v6571, %v6599
        %v6601 = vpop.f32.mrf.mxu0
        %v6602 = vadd.f32 %v6573, %v6601
        %6603 = vdwg.mxu0
        %6604 = vmatpush.bf16.msra.mxu0 %v6476
        %6605 = vmatpush.bf16.msra.mxu0 %v6475
        %6606 = vmatpush.bf16.msra.mxu0 %v6474
        %6607 = vmatpush.bf16.msra.mxu0 %v6473
        %6608 = vmatpush.bf16.msra.mxu0 %v6472
        %6609 = vmatpush.bf16.msra.mxu0 %v6471
        %6610 = vmatpush.bf16.msra.mxu0 %v6470
        %6611 = vmatpush.bf16.msra.mxu0 %v6469
        %6612 = vmatmul.bf16.gmra.mxu0 %v1432
        %v6613 = vpop.f32.mrf.mxu0
        %v6614 = vadd.f32 %v6585, %v6613
        %v6615 = vpop.f32.mrf.mxu0
        %v6616 = vadd.f32 %v6587, %v6615
        %6617 = vmatmul.bf16.gmra.mxu0 %v1437
        %v6618 = vpop.f32.mrf.mxu0
        %v6619 = vadd.f32 %v6590, %v6618
        %v6620 = vpop.f32.mrf.mxu0
        %v6621 = vadd.f32 %v6592, %v6620
        %6622 = vmatmul.bf16.gmra.mxu0 %v1442
        %v6623 = vpop.f32.mrf.mxu0
        %v6624 = vadd.f32 %v6595, %v6623
        %v6625 = vpop.f32.mrf.mxu0
        %v6626 = vadd.f32 %v6597, %v6625
        %6627 = vmatmul.bf16.gmra.mxu0 %v1447
        %v6628 = vpop.f32.mrf.mxu0
        %v6629 = vadd.f32 %v6600, %v6628
        %v6630 = vpop.f32.mrf.mxu0
        %v6631 = vadd.f32 %v6602, %v6630
        %6632 = vdwg.mxu0
        %6633 = vmatpush.bf16.msra.mxu0 0
        %6634 = vmatpush.bf16.msra.mxu0 0
        %6635 = vmatpush.bf16.msra.mxu0 0
        %6636 = vmatpush.bf16.msra.mxu0 0
        %6637 = vmatpush.bf16.msra.mxu0 %v6480
        %6638 = vmatpush.bf16.msra.mxu0 %v6479
        %6639 = vmatpush.bf16.msra.mxu0 %v6478
        %6640 = vmatpush.bf16.msra.mxu0 %v6477
        %6641 = vmatmul.bf16.gmra.mxu0 %v1682
        %v6642 = vpop.f32.mrf.mxu0
        %v6643 = vadd.f32 %v6614, %v6642
        %v6644 = vpop.f32.mrf.mxu0
        %v6645 = vadd.f32 %v6616, %v6644
        %6646 = vmatmul.bf16.gmra.mxu0 %v1685
        %v6647 = vpop.f32.mrf.mxu0
        %v6648 = vadd.f32 %v6619, %v6647
        %v6649 = vpop.f32.mrf.mxu0
        %v6650 = vadd.f32 %v6621, %v6649
        %6651 = vmatmul.bf16.gmra.mxu0 %v1688
        %v6652 = vpop.f32.mrf.mxu0
        %v6653 = vadd.f32 %v6624, %v6652
        %v6654 = vpop.f32.mrf.mxu0
        %v6655 = vadd.f32 %v6626, %v6654
        %6656 = vmatmul.bf16.gmra.mxu0 %v1691
        %v6657 = vpop.f32.mrf.mxu0
        %v6658 = vadd.f32 %v6629, %v6657
        %v6659 = vpop.f32.mrf.mxu0
        %v6660 = vadd.f32 %v6631, %v6659
        %6661 = vdwg.mxu0
        %v6662 = vadd.f32 %v6643, %v6106
        %v6663 = vadd.f32 %v6645, %v6108
        %v6664 = vadd.f32 %v6648, %v6111
        %v6665 = vadd.f32 %v6650, %v6113
        %v6666 = vadd.f32 %v6653, %v6116
        %v6667 = vadd.f32 %v6655, %v6118
        %v6668 = vadd.f32 %v6658, %v6121
        %v6669 = vadd.f32 %v6660, %v6123
        %v6670 = vmul.f32 %v4651, %v4672
        %v6671 = vmul.f32 %v4652, %v4672
        %v6672 = vmul.f32 %v4653, %v4672
        %v6673 = vmul.f32 %v4654, %v4672
        %v6674 = vmul.f32 %v4655, %v4672
        %v6675 = vmul.f32 %v4656, %v4672
        %v6676 = vmul.f32 %v4657, %v4672
        %v6677 = vmul.f32 %v4658, %v4672
        %v6678 = vmul.f32 %v4651, %v4673
        %v6679 = vmul.f32 %v4652, %v4673
        %v6680 = vmul.f32 %v4653, %v4673
        %v6681 = vmul.f32 %v4654, %v4673
        %v6682 = vmul.f32 %v4655, %v4673
        %v6683 = vmul.f32 %v4656, %v4673
        %v6684 = vmul.f32 %v4657, %v4673
        %v6685 = vmul.f32 %v4658, %v4673
        %v6686 = vmul.f32 %v4651, %v4674
        %v6687 = vmul.f32 %v4652, %v4674
        %v6688 = vmul.f32 %v4653, %v4674
        %v6689 = vmul.f32 %v4654, %v4674
        %v6690 = vmul.f32 %v4655, %v4674
        %v6691 = vmul.f32 %v4656, %v4674
        %v6692 = vmul.f32 %v4657, %v4674
        %v6693 = vmul.f32 %v4658, %v4674
        %v6694 = vmul.f32 %v4651, %v4675
        %v6695 = vmul.f32 %v4652, %v4675
        %v6696 = vmul.f32 %v4653, %v4675
        %v6697 = vmul.f32 %v4654, %v4675
        %v6698 = vmul.f32 %v4655, %v4675
        %v6699 = vmul.f32 %v4656, %v4675
        %v6700 = vmul.f32 %v4657, %v4675
        %v6701 = vmul.f32 %v4658, %v4675
        %v6702 = vmul.f32 %v4651, %v4676
        %v6703 = vmul.f32 %v4652, %v4676
        %v6704 = vmul.f32 %v4653, %v4676
        %v6705 = vmul.f32 %v4654, %v4676
        %v6706 = vmul.f32 %v4655, %v4676
        %v6707 = vmul.f32 %v4656, %v4676
        %v6708 = vmul.f32 %v4657, %v4676
        %v6709 = vmul.f32 %v4658, %v4676
        %v6710 = vmul.f32 %v4651, %v4677
        %v6711 = vmul.f32 %v4652, %v4677
        %v6712 = vmul.f32 %v4653, %v4677
        %v6713 = vmul.f32 %v4654, %v4677
        %v6714 = vmul.f32 %v4655, %v4677
        %v6715 = vmul.f32 %v4656, %v4677
        %v6716 = vmul.f32 %v4657, %v4677
        %v6717 = vmul.f32 %v4658, %v4677
        %v6718 = vmul.f32 %v4651, %v4678
        %v6719 = vmul.f32 %v4652, %v4678
        %v6720 = vmul.f32 %v4653, %v4678
        %v6721 = vmul.f32 %v4654, %v4678
        %v6722 = vmul.f32 %v4655, %v4678
        %v6723 = vmul.f32 %v4656, %v4678
        %v6724 = vmul.f32 %v4657, %v4678
        %v6725 = vmul.f32 %v4658, %v4678
        %v6726 = vmul.f32 %v4651, %v4679
        %v6727 = vmul.f32 %v4652, %v4679
        %v6728 = vmul.f32 %v4653, %v4679
        %v6729 = vmul.f32 %v4654, %v4679
        %v6730 = vmul.f32 %v4655, %v4679
        %v6731 = vmul.f32 %v4656, %v4679
        %v6732 = vmul.f32 %v4657, %v4679
        %v6733 = vmul.f32 %v4658, %v4679
        %v6734 = vmul.f32 %v4651, %v4680
        %v6735 = vmul.f32 %v4652, %v4680
        %v6736 = vmul.f32 %v4653, %v4680
        %v6737 = vmul.f32 %v4654, %v4680
        %v6738 = vmul.f32 %v4655, %v4680
        %v6739 = vmul.f32 %v4656, %v4680
        %v6740 = vmul.f32 %v4657, %v4680
        %v6741 = vmul.f32 %v4658, %v4680
        %v6742 = vpack.c.bf16 %v6670, %v6670
        %v6743 = vpack.c.bf16 %v6671, %v6671
        %v6744 = vpack.c.bf16 %v6672, %v6672
        %v6745 = vpack.c.bf16 %v6673, %v6673
        %v6746 = vpack.c.bf16 %v6674, %v6674
        %v6747 = vpack.c.bf16 %v6675, %v6675
        %v6748 = vpack.c.bf16 %v6676, %v6676
        %v6749 = vpack.c.bf16 %v6677, %v6677
        %v6750 = vpack.c.bf16 %v6678, %v6678
        %v6751 = vpack.c.bf16 %v6679, %v6679
        %v6752 = vpack.c.bf16 %v6680, %v6680
        %v6753 = vpack.c.bf16 %v6681, %v6681
        %v6754 = vpack.c.bf16 %v6682, %v6682
        %v6755 = vpack.c.bf16 %v6683, %v6683
        %v6756 = vpack.c.bf16 %v6684, %v6684
        %v6757 = vpack.c.bf16 %v6685, %v6685
        %v6758 = vpack.c.bf16 %v6686, %v6686
        %v6759 = vpack.c.bf16 %v6687, %v6687
        %v6760 = vpack.c.bf16 %v6688, %v6688
        %v6761 = vpack.c.bf16 %v6689, %v6689
        %v6762 = vpack.c.bf16 %v6690, %v6690
        %v6763 = vpack.c.bf16 %v6691, %v6691
        %v6764 = vpack.c.bf16 %v6692, %v6692
        %v6765 = vpack.c.bf16 %v6693, %v6693
        %v6766 = vpack.c.bf16 %v6694, %v6694
        %v6767 = vpack.c.bf16 %v6695, %v6695
        %v6768 = vpack.c.bf16 %v6696, %v6696
        %v6769 = vpack.c.bf16 %v6697, %v6697
        %v6770 = vpack.c.bf16 %v6698, %v6698
        %v6771 = vpack.c.bf16 %v6699, %v6699
        %v6772 = vpack.c.bf16 %v6700, %v6700
        %v6773 = vpack.c.bf16 %v6701, %v6701
        %v6774 = vpack.c.bf16 %v6702, %v6702
        %v6775 = vpack.c.bf16 %v6703, %v6703
        %v6776 = vpack.c.bf16 %v6704, %v6704
        %v6777 = vpack.c.bf16 %v6705, %v6705
        %v6778 = vpack.c.bf16 %v6706, %v6706
        %v6779 = vpack.c.bf16 %v6707, %v6707
        %v6780 = vpack.c.bf16 %v6708, %v6708
        %v6781 = vpack.c.bf16 %v6709, %v6709
        %v6782 = vpack.c.bf16 %v6710, %v6710
        %v6783 = vpack.c.bf16 %v6711, %v6711
        %v6784 = vpack.c.bf16 %v6712, %v6712
        %v6785 = vpack.c.bf16 %v6713, %v6713
        %v6786 = vpack.c.bf16 %v6714, %v6714
        %v6787 = vpack.c.bf16 %v6715, %v6715
        %v6788 = vpack.c.bf16 %v6716, %v6716
        %v6789 = vpack.c.bf16 %v6717, %v6717
        %v6790 = vpack.c.bf16 %v6718, %v6718
        %v6791 = vpack.c.bf16 %v6719, %v6719
        %v6792 = vpack.c.bf16 %v6720, %v6720
        %v6793 = vpack.c.bf16 %v6721, %v6721
        %v6794 = vpack.c.bf16 %v6722, %v6722
        %v6795 = vpack.c.bf16 %v6723, %v6723
        %v6796 = vpack.c.bf16 %v6724, %v6724
        %v6797 = vpack.c.bf16 %v6725, %v6725
        %v6798 = vpack.c.bf16 %v6726, %v6726
        %v6799 = vpack.c.bf16 %v6727, %v6727
        %v6800 = vpack.c.bf16 %v6728, %v6728
        %v6801 = vpack.c.bf16 %v6729, %v6729
        %v6802 = vpack.c.bf16 %v6730, %v6730
        %v6803 = vpack.c.bf16 %v6731, %v6731
        %v6804 = vpack.c.bf16 %v6732, %v6732
        %v6805 = vpack.c.bf16 %v6733, %v6733
        %v6806 = vpack.c.bf16 %v6734, %v6734
        %v6807 = vpack.c.bf16 %v6735, %v6735
        %v6808 = vpack.c.bf16 %v6736, %v6736
        %v6809 = vpack.c.bf16 %v6737, %v6737
        %v6810 = vpack.c.bf16 %v6738, %v6738
        %v6811 = vpack.c.bf16 %v6739, %v6739
        %v6812 = vpack.c.bf16 %v6740, %v6740
        %v6813 = vpack.c.bf16 %v6741, %v6741
        %v6886 = vunpack.c.l.b16 %v6742
        %v6887 = vunpack.c.l.b16 %v6743
        %v6888 = vunpack.c.l.b16 %v6744
        %v6889 = vunpack.c.l.b16 %v6745
        %v6890 = vunpack.c.l.b16 %v6746
        %v6891 = vunpack.c.l.b16 %v6747
        %v6892 = vunpack.c.l.b16 %v6748
        %v6893 = vunpack.c.l.b16 %v6749
        %v6894 = vunpack.c.l.b16 %v6750
        %v6895 = vunpack.c.l.b16 %v6751
        %v6896 = vunpack.c.l.b16 %v6752
        %v6897 = vunpack.c.l.b16 %v6753
        %v6898 = vunpack.c.l.b16 %v6754
        %v6899 = vunpack.c.l.b16 %v6755
        %v6900 = vunpack.c.l.b16 %v6756
        %v6901 = vunpack.c.l.b16 %v6757
        %v6902 = vunpack.c.l.b16 %v6758
        %v6903 = vunpack.c.l.b16 %v6759
        %v6904 = vunpack.c.l.b16 %v6760
        %v6905 = vunpack.c.l.b16 %v6761
        %v6906 = vunpack.c.l.b16 %v6762
        %v6907 = vunpack.c.l.b16 %v6763
        %v6908 = vunpack.c.l.b16 %v6764
        %v6909 = vunpack.c.l.b16 %v6765
        %v6910 = vunpack.c.l.b16 %v6766
        %v6911 = vunpack.c.l.b16 %v6767
        %v6912 = vunpack.c.l.b16 %v6768
        %v6913 = vunpack.c.l.b16 %v6769
        %v6914 = vunpack.c.l.b16 %v6770
        %v6915 = vunpack.c.l.b16 %v6771
        %v6916 = vunpack.c.l.b16 %v6772
        %v6917 = vunpack.c.l.b16 %v6773
        %v6918 = vunpack.c.l.b16 %v6774
        %v6919 = vunpack.c.l.b16 %v6775
        %v6920 = vunpack.c.l.b16 %v6776
        %v6921 = vunpack.c.l.b16 %v6777
        %v6922 = vunpack.c.l.b16 %v6778
        %v6923 = vunpack.c.l.b16 %v6779
        %v6924 = vunpack.c.l.b16 %v6780
        %v6925 = vunpack.c.l.b16 %v6781
        %v6926 = vunpack.c.l.b16 %v6782
        %v6927 = vunpack.c.l.b16 %v6783
        %v6928 = vunpack.c.l.b16 %v6784
        %v6929 = vunpack.c.l.b16 %v6785
        %v6930 = vunpack.c.l.b16 %v6786
        %v6931 = vunpack.c.l.b16 %v6787
        %v6932 = vunpack.c.l.b16 %v6788
        %v6933 = vunpack.c.l.b16 %v6789
        %v6934 = vunpack.c.l.b16 %v6790
        %v6935 = vunpack.c.l.b16 %v6791
        %v6936 = vunpack.c.l.b16 %v6792
        %v6937 = vunpack.c.l.b16 %v6793
        %v6938 = vunpack.c.l.b16 %v6794
        %v6939 = vunpack.c.l.b16 %v6795
        %v6940 = vunpack.c.l.b16 %v6796
        %v6941 = vunpack.c.l.b16 %v6797
        %v6942 = vunpack.c.l.b16 %v6798
        %v6943 = vunpack.c.l.b16 %v6799
        %v6944 = vunpack.c.l.b16 %v6800
        %v6945 = vunpack.c.l.b16 %v6801
        %v6946 = vunpack.c.l.b16 %v6802
        %v6947 = vunpack.c.l.b16 %v6803
        %v6948 = vunpack.c.l.b16 %v6804
        %v6949 = vunpack.c.l.b16 %v6805
        %v6950 = vunpack.c.l.b16 %v6806
        %v6951 = vunpack.c.l.b16 %v6807
        %v6952 = vunpack.c.l.b16 %v6808
        %v6953 = vunpack.c.l.b16 %v6809
        %v6954 = vunpack.c.l.b16 %v6810
        %v6955 = vunpack.c.l.b16 %v6811
        %v6956 = vunpack.c.l.b16 %v6812
        %v6957 = vunpack.c.l.b16 %v6813
        %v6958 = vpack.c.b16 %v6887, %v6886
        %v6959 = vpack.c.b16 %v6889, %v6888
        %v6960 = vpack.c.b16 %v6891, %v6890
        %v6961 = vpack.c.b16 %v6893, %v6892
        %v6962 = vpack.c.b16 %v6895, %v6894
        %v6963 = vpack.c.b16 %v6897, %v6896
        %v6964 = vpack.c.b16 %v6899, %v6898
        %v6965 = vpack.c.b16 %v6901, %v6900
        %v6966 = vpack.c.b16 %v6903, %v6902
        %v6967 = vpack.c.b16 %v6905, %v6904
        %v6968 = vpack.c.b16 %v6907, %v6906
        %v6969 = vpack.c.b16 %v6909, %v6908
        %v6970 = vpack.c.b16 %v6911, %v6910
        %v6971 = vpack.c.b16 %v6913, %v6912
        %v6972 = vpack.c.b16 %v6915, %v6914
        %v6973 = vpack.c.b16 %v6917, %v6916
        %v6974 = vpack.c.b16 %v6919, %v6918
        %v6975 = vpack.c.b16 %v6921, %v6920
        %v6976 = vpack.c.b16 %v6923, %v6922
        %v6977 = vpack.c.b16 %v6925, %v6924
        %v6978 = vpack.c.b16 %v6927, %v6926
        %v6979 = vpack.c.b16 %v6929, %v6928
        %v6980 = vpack.c.b16 %v6931, %v6930
        %v6981 = vpack.c.b16 %v6933, %v6932
        %v6982 = vpack.c.b16 %v6935, %v6934
        %v6983 = vpack.c.b16 %v6937, %v6936
        %v6984 = vpack.c.b16 %v6939, %v6938
        %v6985 = vpack.c.b16 %v6941, %v6940
        %v6986 = vpack.c.b16 %v6943, %v6942
        %v6987 = vpack.c.b16 %v6945, %v6944
        %v6988 = vpack.c.b16 %v6947, %v6946
        %v6989 = vpack.c.b16 %v6949, %v6948
        %v6990 = vpack.c.b16 %v6951, %v6950
        %v6991 = vpack.c.b16 %v6953, %v6952
        %v6992 = vpack.c.b16 %v6955, %v6954
        %v6993 = vpack.c.b16 %v6957, %v6956
        %7030 = vmatpush.bf16.msra.mxu0 %v6965
        %7031 = vmatpush.bf16.msra.mxu0 %v6964
        %7032 = vmatpush.bf16.msra.mxu0 %v6963
        %7033 = vmatpush.bf16.msra.mxu0 %v6962
        %7034 = vmatpush.bf16.msra.mxu0 %v6961
        %7035 = vmatpush.bf16.msra.mxu0 %v6960
        %7036 = vmatpush.bf16.msra.mxu0 %v6959
        %7037 = vmatpush.bf16.msra.mxu0 %v6958
        %7038 = vmatmul.bf16.gmra.mxu0 %v4857
        %v7039 = vpop.f32.mrf.mxu0
        %v7040 = vadd.f32 %v4840, %v7039
        %v7041 = vpop.f32.mrf.mxu0
        %v7042 = vadd.f32 %v4840, %v7041
        %7043 = vdwg.mxu0
        %7044 = vmatpush.bf16.msra.mxu0 %v6973
        %7045 = vmatpush.bf16.msra.mxu0 %v6972
        %7046 = vmatpush.bf16.msra.mxu0 %v6971
        %7047 = vmatpush.bf16.msra.mxu0 %v6970
        %7048 = vmatpush.bf16.msra.mxu0 %v6969
        %7049 = vmatpush.bf16.msra.mxu0 %v6968
        %7050 = vmatpush.bf16.msra.mxu0 %v6967
        %7051 = vmatpush.bf16.msra.mxu0 %v6966
        %7052 = vmatmul.bf16.gmra.mxu0 %v4858
        %v7053 = vpop.f32.mrf.mxu0
        %v7054 = vadd.f32 %v7040, %v7053
        %v7055 = vpop.f32.mrf.mxu0
        %v7056 = vadd.f32 %v7042, %v7055
        %7057 = vdwg.mxu0
        %7058 = vmatpush.bf16.msra.mxu0 %v6981
        %7059 = vmatpush.bf16.msra.mxu0 %v6980
        %7060 = vmatpush.bf16.msra.mxu0 %v6979
        %7061 = vmatpush.bf16.msra.mxu0 %v6978
        %7062 = vmatpush.bf16.msra.mxu0 %v6977
        %7063 = vmatpush.bf16.msra.mxu0 %v6976
        %7064 = vmatpush.bf16.msra.mxu0 %v6975
        %7065 = vmatpush.bf16.msra.mxu0 %v6974
        %7066 = vmatmul.bf16.gmra.mxu0 %v4859
        %v7067 = vpop.f32.mrf.mxu0
        %v7068 = vadd.f32 %v7054, %v7067
        %v7069 = vpop.f32.mrf.mxu0
        %v7070 = vadd.f32 %v7056, %v7069
        %7071 = vdwg.mxu0
        %7072 = vmatpush.bf16.msra.mxu0 %v6989
        %7073 = vmatpush.bf16.msra.mxu0 %v6988
        %7074 = vmatpush.bf16.msra.mxu0 %v6987
        %7075 = vmatpush.bf16.msra.mxu0 %v6986
        %7076 = vmatpush.bf16.msra.mxu0 %v6985
        %7077 = vmatpush.bf16.msra.mxu0 %v6984
        %7078 = vmatpush.bf16.msra.mxu0 %v6983
        %7079 = vmatpush.bf16.msra.mxu0 %v6982
        %7080 = vmatmul.bf16.gmra.mxu0 %v4860
        %v7081 = vpop.f32.mrf.mxu0
        %v7082 = vadd.f32 %v7068, %v7081
        %v7083 = vpop.f32.mrf.mxu0
        %v7084 = vadd.f32 %v7070, %v7083
        %7085 = vdwg.mxu0
        %7086 = vmatpush.bf16.msra.mxu0 0
        %7087 = vmatpush.bf16.msra.mxu0 0
        %7088 = vmatpush.bf16.msra.mxu0 0
        %7089 = vmatpush.bf16.msra.mxu0 0
        %7090 = vmatpush.bf16.msra.mxu0 %v6993
        %7091 = vmatpush.bf16.msra.mxu0 %v6992
        %7092 = vmatpush.bf16.msra.mxu0 %v6991
        %7093 = vmatpush.bf16.msra.mxu0 %v6990
        %7094 = vmatmul.bf16.gmra.mxu0 %v5083
        %v7095 = vpop.f32.mrf.mxu0
        %v7096 = vadd.f32 %v7082, %v7095
        %v7097 = vpop.f32.mrf.mxu0
        %v7098 = vadd.f32 %v7084, %v7097
        %7099 = vdwg.mxu0
        %v7100 = vmul.f32 %v7096, %v5168
        %v7101 = vmul.f32 %v7098, %v5168
        %v7102 = vmul.f32 %v7096, %v5169
        %v7103 = vmul.f32 %v7098, %v5169
        %v7104 = vmul.f32 %v7096, %v5170
        %v7105 = vmul.f32 %v7098, %v5170
        %v7106 = vmul.f32 %v7096, %v5171
        %v7107 = vmul.f32 %v7098, %v5171
        %v7108 = vmul.f32 %v7096, %v5172
        %v7109 = vmul.f32 %v7098, %v5172
        %v7110 = vmul.f32 %v7096, %v5173
        %v7111 = vmul.f32 %v7098, %v5173
        %v7112 = vmul.f32 %v7096, %v5174
        %v7113 = vmul.f32 %v7098, %v5174
        %v7114 = vmul.f32 %v7096, %v5175
        %v7115 = vmul.f32 %v7098, %v5175
        %v7116 = vmul.f32 %v7096, %v5176
        %v7117 = vmul.f32 %v7098, %v5176
        %v7118 = vpack.c.bf16 %v7100, %v7100
        %v7119 = vpack.c.bf16 %v7101, %v7101
        %v7120 = vpack.c.bf16 %v7102, %v7102
        %v7121 = vpack.c.bf16 %v7103, %v7103
        %v7122 = vpack.c.bf16 %v7104, %v7104
        %v7123 = vpack.c.bf16 %v7105, %v7105
        %v7124 = vpack.c.bf16 %v7106, %v7106
        %v7125 = vpack.c.bf16 %v7107, %v7107
        %v7126 = vpack.c.bf16 %v7108, %v7108
        %v7127 = vpack.c.bf16 %v7109, %v7109
        %v7128 = vpack.c.bf16 %v7110, %v7110
        %v7129 = vpack.c.bf16 %v7111, %v7111
        %v7130 = vpack.c.bf16 %v7112, %v7112
        %v7131 = vpack.c.bf16 %v7113, %v7113
        %v7132 = vpack.c.bf16 %v7114, %v7114
        %v7133 = vpack.c.bf16 %v7115, %v7115
        %v7134 = vpack.c.bf16 %v7116, %v7116
        %v7135 = vpack.c.bf16 %v7117, %v7117
        %v7154 = vunpack.c.l.b16 %v7118
        %v7155 = vunpack.c.l.b16 %v7119
        %v7156 = vunpack.c.l.b16 %v7120
        %v7157 = vunpack.c.l.b16 %v7121
        %v7158 = vunpack.c.l.b16 %v7122
        %v7159 = vunpack.c.l.b16 %v7123
        %v7160 = vunpack.c.l.b16 %v7124
        %v7161 = vunpack.c.l.b16 %v7125
        %v7162 = vunpack.c.l.b16 %v7126
        %v7163 = vunpack.c.l.b16 %v7127
        %v7164 = vunpack.c.l.b16 %v7128
        %v7165 = vunpack.c.l.b16 %v7129
        %v7166 = vunpack.c.l.b16 %v7130
        %v7167 = vunpack.c.l.b16 %v7131
        %v7168 = vunpack.c.l.b16 %v7132
        %v7169 = vunpack.c.l.b16 %v7133
        %v7170 = vunpack.c.l.b16 %v7134
        %v7171 = vunpack.c.l.b16 %v7135
        %v7172 = vpack.c.b16 %v7155, %v7154
        %v7173 = vpack.c.b16 %v7157, %v7156
        %v7174 = vpack.c.b16 %v7159, %v7158
        %v7175 = vpack.c.b16 %v7161, %v7160
        %v7176 = vpack.c.b16 %v7163, %v7162
        %v7177 = vpack.c.b16 %v7165, %v7164
        %v7178 = vpack.c.b16 %v7167, %v7166
        %v7179 = vpack.c.b16 %v7169, %v7168
        %v7180 = vpack.c.b16 %v7171, %v7170
        %7190 = vmatpush.bf16.msra.mxu0 %v7179
        %7191 = vmatpush.bf16.msra.mxu0 %v7178
        %7192 = vmatpush.bf16.msra.mxu0 %v7177
        %7193 = vmatpush.bf16.msra.mxu0 %v7176
        %7194 = vmatpush.bf16.msra.mxu0 %v7175
        %7195 = vmatpush.bf16.msra.mxu0 %v7174
        %7196 = vmatpush.bf16.msra.mxu0 %v7173
        %7197 = vmatpush.bf16.msra.mxu0 %v7172
        %7198 = vmatmul.bf16.gmra.mxu0 %v5227
        %v7199 = vpop.f32.mrf.mxu0
        %v7200 = vadd.f32 %v5223, %v7199
        %v7201 = vpop.f32.mrf.mxu0
        %7202 = vdwg.mxu0
        %7203 = vmatpush.bf16.msra.mxu0 0
        %7204 = vmatpush.bf16.msra.mxu0 0
        %7205 = vmatpush.bf16.msra.mxu0 0
        %7206 = vmatpush.bf16.msra.mxu0 0
        %7207 = vmatpush.bf16.msra.mxu0 0
        %7208 = vmatpush.bf16.msra.mxu0 0
        %7209 = vmatpush.bf16.msra.mxu0 0
        %7210 = vmatpush.bf16.msra.mxu0 %v7180
        %7211 = vmatmul.bf16.gmra.mxu0 %v5286
        %v7212 = vpop.f32.mrf.mxu0
        %v7213 = vadd.f32 %v7200, %v7212
        %v7214 = vpop.f32.mrf.mxu0
        %7215 = vdwg.mxu0
        %v7216 = vpack.c.bf16 %v7213, %v7213
        %v7218 = vsel %vm5326, %v7216, 0
        %7220 = vmatpush.bf16.msra.mxu0 0
        %7221 = vmatpush.bf16.msra.mxu0 0
        %7222 = vmatpush.bf16.msra.mxu0 0
        %7223 = vmatpush.bf16.msra.mxu0 0
        %7224 = vmatpush.bf16.msra.mxu0 0
        %7225 = vmatpush.bf16.msra.mxu0 0
        %7226 = vmatpush.bf16.msra.mxu0 0
        %7227 = vmatpush.bf16.msra.mxu0 %v7218
        %7228 = vmatmul.bf16.gmra.mxu0 %v5324
        %v7229 = vpop.f32.mrf.mxu0
        %v7230 = vadd.f32 0.0, %v7229
        %v7231 = vpop.f32.mrf.mxu0
        %v7232 = vadd.f32 0.0, %v7231
        %7233 = vdwg.mxu0
        %v7234 = vadd.f32 %v7096, %v7230
        %v7235 = vadd.f32 %v7098, %v7232
        %v7236 = vmul.f32 %v7234, %v5359
        %v7237 = vmul.f32 %v7235, %v5359
        %v7238 = vmul.f32 %v7234, %v5360
        %v7239 = vmul.f32 %v7235, %v5360
        %v7240 = vmul.f32 %v7234, %v5361
        %v7241 = vmul.f32 %v7235, %v5361
        %v7242 = vmul.f32 %v7234, %v5362
        %v7243 = vmul.f32 %v7235, %v5362
        %v7244 = vmul.f32 %v7234, %v5363
        %v7245 = vmul.f32 %v7235, %v5363
        %v7246 = vmul.f32 %v7234, %v5364
        %v7247 = vmul.f32 %v7235, %v5364
        %v7248 = vmul.f32 %v7234, %v5365
        %v7249 = vmul.f32 %v7235, %v5365
        %v7250 = vmul.f32 %v7234, %v5366
        %v7251 = vmul.f32 %v7235, %v5366
        %v7252 = vmul.f32 %v7234, %v5367
        %v7253 = vmul.f32 %v7235, %v5367
        %v7254 = vpack.c.bf16 %v7236, %v7236
        %v7255 = vpack.c.bf16 %v7237, %v7237
        %v7256 = vpack.c.bf16 %v7238, %v7238
        %v7257 = vpack.c.bf16 %v7239, %v7239
        %v7258 = vpack.c.bf16 %v7240, %v7240
        %v7259 = vpack.c.bf16 %v7241, %v7241
        %v7260 = vpack.c.bf16 %v7242, %v7242
        %v7261 = vpack.c.bf16 %v7243, %v7243
        %v7262 = vpack.c.bf16 %v7244, %v7244
        %v7263 = vpack.c.bf16 %v7245, %v7245
        %v7264 = vpack.c.bf16 %v7246, %v7246
        %v7265 = vpack.c.bf16 %v7247, %v7247
        %v7266 = vpack.c.bf16 %v7248, %v7248
        %v7267 = vpack.c.bf16 %v7249, %v7249
        %v7268 = vpack.c.bf16 %v7250, %v7250
        %v7269 = vpack.c.bf16 %v7251, %v7251
        %v7270 = vpack.c.bf16 %v7252, %v7252
        %v7271 = vpack.c.bf16 %v7253, %v7253
        %v7290 = vunpack.c.l.b16 %v7254
        %v7291 = vunpack.c.l.b16 %v7255
        %v7292 = vunpack.c.l.b16 %v7256
        %v7293 = vunpack.c.l.b16 %v7257
        %v7294 = vunpack.c.l.b16 %v7258
        %v7295 = vunpack.c.l.b16 %v7259
        %v7296 = vunpack.c.l.b16 %v7260
        %v7297 = vunpack.c.l.b16 %v7261
        %v7298 = vunpack.c.l.b16 %v7262
        %v7299 = vunpack.c.l.b16 %v7263
        %v7300 = vunpack.c.l.b16 %v7264
        %v7301 = vunpack.c.l.b16 %v7265
        %v7302 = vunpack.c.l.b16 %v7266
        %v7303 = vunpack.c.l.b16 %v7267
        %v7304 = vunpack.c.l.b16 %v7268
        %v7305 = vunpack.c.l.b16 %v7269
        %v7306 = vunpack.c.l.b16 %v7270
        %v7307 = vunpack.c.l.b16 %v7271
        %v7308 = vpack.c.b16 %v7291, %v7290
        %v7309 = vpack.c.b16 %v7293, %v7292
        %v7310 = vpack.c.b16 %v7295, %v7294
        %v7311 = vpack.c.b16 %v7297, %v7296
        %v7312 = vpack.c.b16 %v7299, %v7298
        %v7313 = vpack.c.b16 %v7301, %v7300
        %v7314 = vpack.c.b16 %v7303, %v7302
        %v7315 = vpack.c.b16 %v7305, %v7304
        %v7316 = vpack.c.b16 %v7307, %v7306
        %7326 = vmatpush.bf16.msra.mxu0 %v7315
        %7327 = vmatpush.bf16.msra.mxu0 %v7314
        %7328 = vmatpush.bf16.msra.mxu0 %v7313
        %7329 = vmatpush.bf16.msra.mxu0 %v7312
        %7330 = vmatpush.bf16.msra.mxu0 %v7311
        %7331 = vmatpush.bf16.msra.mxu0 %v7310
        %7332 = vmatpush.bf16.msra.mxu0 %v7309
        %7333 = vmatpush.bf16.msra.mxu0 %v7308
        %7334 = vmatmul.bf16.gmra.mxu0 %v5422
        %v7335 = vpop.f32.mrf.mxu0
        %v7336 = vadd.f32 %v5415, %v7335
        %v7337 = vpop.f32.mrf.mxu0
        %v7338 = vadd.f32 %v5415, %v7337
        %7339 = vdwg.mxu0
        %7340 = vmatpush.bf16.msra.mxu0 0
        %7341 = vmatpush.bf16.msra.mxu0 0
        %7342 = vmatpush.bf16.msra.mxu0 0
        %7343 = vmatpush.bf16.msra.mxu0 0
        %7344 = vmatpush.bf16.msra.mxu0 0
        %7345 = vmatpush.bf16.msra.mxu0 0
        %7346 = vmatpush.bf16.msra.mxu0 0
        %7347 = vmatpush.bf16.msra.mxu0 %v7316
        %7348 = vmatmul.bf16.gmra.mxu0 %v5480
        %v7349 = vpop.f32.mrf.mxu0
        %v7350 = vadd.f32 %v7336, %v7349
        %v7351 = vpop.f32.mrf.mxu0
        %v7352 = vadd.f32 %v7338, %v7351
        %7353 = vdwg.mxu0
        %v7354 = vpack.c.bf16 %v7352, %v7350
        %7355 = vmatpush.bf16.msra.mxu0 0
        %7356 = vmatpush.bf16.msra.mxu0 0
        %7357 = vmatpush.bf16.msra.mxu0 0
        %7358 = vmatpush.bf16.msra.mxu0 0
        %7359 = vmatpush.bf16.msra.mxu0 0
        %7360 = vmatpush.bf16.msra.mxu0 0
        %7361 = vmatpush.bf16.msra.mxu0 0
        %7362 = vmatpush.bf16.msra.mxu0 %v7354
        %7363 = vmatmul.bf16.gmra.mxu0 %v5540
        %v7364 = vpop.f32.mrf.mxu0
        %v7365 = vadd.f32 0.0, %v7364
        %v7366 = vpop.f32.mrf.mxu0
        %v7367 = vadd.f32 0.0, %v7366
        %7368 = vmatmul.bf16.gmra.mxu0 %v5543
        %v7369 = vpop.f32.mrf.mxu0
        %v7370 = vadd.f32 0.0, %v7369
        %v7371 = vpop.f32.mrf.mxu0
        %v7372 = vadd.f32 0.0, %v7371
        %7373 = vmatmul.bf16.gmra.mxu0 %v5546
        %v7374 = vpop.f32.mrf.mxu0
        %v7375 = vadd.f32 0.0, %v7374
        %v7376 = vpop.f32.mrf.mxu0
        %v7377 = vadd.f32 0.0, %v7376
        %7378 = vmatmul.bf16.gmra.mxu0 %v5549
        %v7379 = vpop.f32.mrf.mxu0
        %v7380 = vadd.f32 0.0, %v7379
        %v7381 = vpop.f32.mrf.mxu0
        %v7382 = vadd.f32 0.0, %v7381
        %7383 = vdwg.mxu0
        %v7384 = vadd.f32 %v4651, %v7365
        %v7385 = vadd.f32 %v4652, %v7367
        %v7386 = vadd.f32 %v4653, %v7370
        %v7387 = vadd.f32 %v4654, %v7372
        %v7388 = vadd.f32 %v4655, %v7375
        %v7389 = vadd.f32 %v4656, %v7377
        %v7390 = vadd.f32 %v4657, %v7380
        %v7391 = vadd.f32 %v4658, %v7382
        %v7392 = vmul.f32 %v7384, %v5601
        %v7393 = vmul.f32 %v7385, %v5601
        %v7394 = vmul.f32 %v7386, %v5601
        %v7395 = vmul.f32 %v7387, %v5601
        %v7396 = vmul.f32 %v7388, %v5601
        %v7397 = vmul.f32 %v7389, %v5601
        %v7398 = vmul.f32 %v7390, %v5601
        %v7399 = vmul.f32 %v7391, %v5601
        %v7400 = vmul.f32 %v7384, %v5602
        %v7401 = vmul.f32 %v7385, %v5602
        %v7402 = vmul.f32 %v7386, %v5602
        %v7403 = vmul.f32 %v7387, %v5602
        %v7404 = vmul.f32 %v7388, %v5602
        %v7405 = vmul.f32 %v7389, %v5602
        %v7406 = vmul.f32 %v7390, %v5602
        %v7407 = vmul.f32 %v7391, %v5602
        %v7408 = vmul.f32 %v7384, %v5603
        %v7409 = vmul.f32 %v7385, %v5603
        %v7410 = vmul.f32 %v7386, %v5603
        %v7411 = vmul.f32 %v7387, %v5603
        %v7412 = vmul.f32 %v7388, %v5603
        %v7413 = vmul.f32 %v7389, %v5603
        %v7414 = vmul.f32 %v7390, %v5603
        %v7415 = vmul.f32 %v7391, %v5603
        %v7416 = vmul.f32 %v7384, %v5604
        %v7417 = vmul.f32 %v7385, %v5604
        %v7418 = vmul.f32 %v7386, %v5604
        %v7419 = vmul.f32 %v7387, %v5604
        %v7420 = vmul.f32 %v7388, %v5604
        %v7421 = vmul.f32 %v7389, %v5604
        %v7422 = vmul.f32 %v7390, %v5604
        %v7423 = vmul.f32 %v7391, %v5604
        %v7424 = vmul.f32 %v7384, %v5605
        %v7425 = vmul.f32 %v7385, %v5605
        %v7426 = vmul.f32 %v7386, %v5605
        %v7427 = vmul.f32 %v7387, %v5605
        %v7428 = vmul.f32 %v7388, %v5605
        %v7429 = vmul.f32 %v7389, %v5605
        %v7430 = vmul.f32 %v7390, %v5605
        %v7431 = vmul.f32 %v7391, %v5605
        %v7432 = vmul.f32 %v7384, %v5606
        %v7433 = vmul.f32 %v7385, %v5606
        %v7434 = vmul.f32 %v7386, %v5606
        %v7435 = vmul.f32 %v7387, %v5606
        %v7436 = vmul.f32 %v7388, %v5606
        %v7437 = vmul.f32 %v7389, %v5606
        %v7438 = vmul.f32 %v7390, %v5606
        %v7439 = vmul.f32 %v7391, %v5606
        %v7440 = vmul.f32 %v7384, %v5607
        %v7441 = vmul.f32 %v7385, %v5607
        %v7442 = vmul.f32 %v7386, %v5607
        %v7443 = vmul.f32 %v7387, %v5607
        %v7444 = vmul.f32 %v7388, %v5607
        %v7445 = vmul.f32 %v7389, %v5607
        %v7446 = vmul.f32 %v7390, %v5607
        %v7447 = vmul.f32 %v7391, %v5607
        %v7448 = vmul.f32 %v7384, %v5608
        %v7449 = vmul.f32 %v7385, %v5608
        %v7450 = vmul.f32 %v7386, %v5608
        %v7451 = vmul.f32 %v7387, %v5608
        %v7452 = vmul.f32 %v7388, %v5608
        %v7453 = vmul.f32 %v7389, %v5608
        %v7454 = vmul.f32 %v7390, %v5608
        %v7455 = vmul.f32 %v7391, %v5608
        %v7456 = vmul.f32 %v7384, %v5609
        %v7457 = vmul.f32 %v7385, %v5609
        %v7458 = vmul.f32 %v7386, %v5609
        %v7459 = vmul.f32 %v7387, %v5609
        %v7460 = vmul.f32 %v7388, %v5609
        %v7461 = vmul.f32 %v7389, %v5609
        %v7462 = vmul.f32 %v7390, %v5609
        %v7463 = vmul.f32 %v7391, %v5609
        %v7464 = vpack.c.bf16 %v7392, %v7392
        %v7465 = vpack.c.bf16 %v7393, %v7393
        %v7466 = vpack.c.bf16 %v7394, %v7394
        %v7467 = vpack.c.bf16 %v7395, %v7395
        %v7468 = vpack.c.bf16 %v7396, %v7396
        %v7469 = vpack.c.bf16 %v7397, %v7397
        %v7470 = vpack.c.bf16 %v7398, %v7398
        %v7471 = vpack.c.bf16 %v7399, %v7399
        %v7472 = vpack.c.bf16 %v7400, %v7400
        %v7473 = vpack.c.bf16 %v7401, %v7401
        %v7474 = vpack.c.bf16 %v7402, %v7402
        %v7475 = vpack.c.bf16 %v7403, %v7403
        %v7476 = vpack.c.bf16 %v7404, %v7404
        %v7477 = vpack.c.bf16 %v7405, %v7405
        %v7478 = vpack.c.bf16 %v7406, %v7406
        %v7479 = vpack.c.bf16 %v7407, %v7407
        %v7480 = vpack.c.bf16 %v7408, %v7408
        %v7481 = vpack.c.bf16 %v7409, %v7409
        %v7482 = vpack.c.bf16 %v7410, %v7410
        %v7483 = vpack.c.bf16 %v7411, %v7411
        %v7484 = vpack.c.bf16 %v7412, %v7412
        %v7485 = vpack.c.bf16 %v7413, %v7413
        %v7486 = vpack.c.bf16 %v7414, %v7414
        %v7487 = vpack.c.bf16 %v7415, %v7415
        %v7488 = vpack.c.bf16 %v7416, %v7416
        %v7489 = vpack.c.bf16 %v7417, %v7417
        %v7490 = vpack.c.bf16 %v7418, %v7418
        %v7491 = vpack.c.bf16 %v7419, %v7419
        %v7492 = vpack.c.bf16 %v7420, %v7420
        %v7493 = vpack.c.bf16 %v7421, %v7421
        %v7494 = vpack.c.bf16 %v7422, %v7422
        %v7495 = vpack.c.bf16 %v7423, %v7423
        %v7496 = vpack.c.bf16 %v7424, %v7424
        %v7497 = vpack.c.bf16 %v7425, %v7425
        %v7498 = vpack.c.bf16 %v7426, %v7426
        %v7499 = vpack.c.bf16 %v7427, %v7427
        %v7500 = vpack.c.bf16 %v7428, %v7428
        %v7501 = vpack.c.bf16 %v7429, %v7429
        %v7502 = vpack.c.bf16 %v7430, %v7430
        %v7503 = vpack.c.bf16 %v7431, %v7431
        %v7504 = vpack.c.bf16 %v7432, %v7432
        %v7505 = vpack.c.bf16 %v7433, %v7433
        %v7506 = vpack.c.bf16 %v7434, %v7434
        %v7507 = vpack.c.bf16 %v7435, %v7435
        %v7508 = vpack.c.bf16 %v7436, %v7436
        %v7509 = vpack.c.bf16 %v7437, %v7437
        %v7510 = vpack.c.bf16 %v7438, %v7438
        %v7511 = vpack.c.bf16 %v7439, %v7439
        %v7512 = vpack.c.bf16 %v7440, %v7440
        %v7513 = vpack.c.bf16 %v7441, %v7441
        %v7514 = vpack.c.bf16 %v7442, %v7442
        %v7515 = vpack.c.bf16 %v7443, %v7443
        %v7516 = vpack.c.bf16 %v7444, %v7444
        %v7517 = vpack.c.bf16 %v7445, %v7445
        %v7518 = vpack.c.bf16 %v7446, %v7446
        %v7519 = vpack.c.bf16 %v7447, %v7447
        %v7520 = vpack.c.bf16 %v7448, %v7448
        %v7521 = vpack.c.bf16 %v7449, %v7449
        %v7522 = vpack.c.bf16 %v7450, %v7450
        %v7523 = vpack.c.bf16 %v7451, %v7451
        %v7524 = vpack.c.bf16 %v7452, %v7452
        %v7525 = vpack.c.bf16 %v7453, %v7453
        %v7526 = vpack.c.bf16 %v7454, %v7454
        %v7527 = vpack.c.bf16 %v7455, %v7455
        %v7528 = vpack.c.bf16 %v7456, %v7456
        %v7529 = vpack.c.bf16 %v7457, %v7457
        %v7530 = vpack.c.bf16 %v7458, %v7458
        %v7531 = vpack.c.bf16 %v7459, %v7459
        %v7532 = vpack.c.bf16 %v7460, %v7460
        %v7533 = vpack.c.bf16 %v7461, %v7461
        %v7534 = vpack.c.bf16 %v7462, %v7462
        %v7535 = vpack.c.bf16 %v7463, %v7463
        %v7608 = vunpack.c.l.b16 %v7464
        %v7609 = vunpack.c.l.b16 %v7465
        %v7610 = vunpack.c.l.b16 %v7466
        %v7611 = vunpack.c.l.b16 %v7467
        %v7612 = vunpack.c.l.b16 %v7468
        %v7613 = vunpack.c.l.b16 %v7469
        %v7614 = vunpack.c.l.b16 %v7470
        %v7615 = vunpack.c.l.b16 %v7471
        %v7616 = vunpack.c.l.b16 %v7472
        %v7617 = vunpack.c.l.b16 %v7473
        %v7618 = vunpack.c.l.b16 %v7474
        %v7619 = vunpack.c.l.b16 %v7475
        %v7620 = vunpack.c.l.b16 %v7476
        %v7621 = vunpack.c.l.b16 %v7477
        %v7622 = vunpack.c.l.b16 %v7478
        %v7623 = vunpack.c.l.b16 %v7479
        %v7624 = vunpack.c.l.b16 %v7480
        %v7625 = vunpack.c.l.b16 %v7481
        %v7626 = vunpack.c.l.b16 %v7482
        %v7627 = vunpack.c.l.b16 %v7483
        %v7628 = vunpack.c.l.b16 %v7484
        %v7629 = vunpack.c.l.b16 %v7485
        %v7630 = vunpack.c.l.b16 %v7486
        %v7631 = vunpack.c.l.b16 %v7487
        %v7632 = vunpack.c.l.b16 %v7488
        %v7633 = vunpack.c.l.b16 %v7489
        %v7634 = vunpack.c.l.b16 %v7490
        %v7635 = vunpack.c.l.b16 %v7491
        %v7636 = vunpack.c.l.b16 %v7492
        %v7637 = vunpack.c.l.b16 %v7493
        %v7638 = vunpack.c.l.b16 %v7494
        %v7639 = vunpack.c.l.b16 %v7495
        %v7640 = vunpack.c.l.b16 %v7496
        %v7641 = vunpack.c.l.b16 %v7497
        %v7642 = vunpack.c.l.b16 %v7498
        %v7643 = vunpack.c.l.b16 %v7499
        %v7644 = vunpack.c.l.b16 %v7500
        %v7645 = vunpack.c.l.b16 %v7501
        %v7646 = vunpack.c.l.b16 %v7502
        %v7647 = vunpack.c.l.b16 %v7503
        %v7648 = vunpack.c.l.b16 %v7504
        %v7649 = vunpack.c.l.b16 %v7505
        %v7650 = vunpack.c.l.b16 %v7506
        %v7651 = vunpack.c.l.b16 %v7507
        %v7652 = vunpack.c.l.b16 %v7508
        %v7653 = vunpack.c.l.b16 %v7509
        %v7654 = vunpack.c.l.b16 %v7510
        %v7655 = vunpack.c.l.b16 %v7511
        %v7656 = vunpack.c.l.b16 %v7512
        %v7657 = vunpack.c.l.b16 %v7513
        %v7658 = vunpack.c.l.b16 %v7514
        %v7659 = vunpack.c.l.b16 %v7515
        %v7660 = vunpack.c.l.b16 %v7516
        %v7661 = vunpack.c.l.b16 %v7517
        %v7662 = vunpack.c.l.b16 %v7518
        %v7663 = vunpack.c.l.b16 %v7519
        %v7664 = vunpack.c.l.b16 %v7520
        %v7665 = vunpack.c.l.b16 %v7521
        %v7666 = vunpack.c.l.b16 %v7522
        %v7667 = vunpack.c.l.b16 %v7523
        %v7668 = vunpack.c.l.b16 %v7524
        %v7669 = vunpack.c.l.b16 %v7525
        %v7670 = vunpack.c.l.b16 %v7526
        %v7671 = vunpack.c.l.b16 %v7527
        %v7672 = vunpack.c.l.b16 %v7528
        %v7673 = vunpack.c.l.b16 %v7529
        %v7674 = vunpack.c.l.b16 %v7530
        %v7675 = vunpack.c.l.b16 %v7531
        %v7676 = vunpack.c.l.b16 %v7532
        %v7677 = vunpack.c.l.b16 %v7533
        %v7678 = vunpack.c.l.b16 %v7534
        %v7679 = vunpack.c.l.b16 %v7535
        %v7680 = vpack.c.b16 %v7609, %v7608
        %v7681 = vpack.c.b16 %v7611, %v7610
        %v7682 = vpack.c.b16 %v7613, %v7612
        %v7683 = vpack.c.b16 %v7615, %v7614
        %v7684 = vpack.c.b16 %v7617, %v7616
        %v7685 = vpack.c.b16 %v7619, %v7618
        %v7686 = vpack.c.b16 %v7621, %v7620
        %v7687 = vpack.c.b16 %v7623, %v7622
        %v7688 = vpack.c.b16 %v7625, %v7624
        %v7689 = vpack.c.b16 %v7627, %v7626
        %v7690 = vpack.c.b16 %v7629, %v7628
        %v7691 = vpack.c.b16 %v7631, %v7630
        %v7692 = vpack.c.b16 %v7633, %v7632
        %v7693 = vpack.c.b16 %v7635, %v7634
        %v7694 = vpack.c.b16 %v7637, %v7636
        %v7695 = vpack.c.b16 %v7639, %v7638
        %v7696 = vpack.c.b16 %v7641, %v7640
        %v7697 = vpack.c.b16 %v7643, %v7642
        %v7698 = vpack.c.b16 %v7645, %v7644
        %v7699 = vpack.c.b16 %v7647, %v7646
        %v7700 = vpack.c.b16 %v7649, %v7648
        %v7701 = vpack.c.b16 %v7651, %v7650
        %v7702 = vpack.c.b16 %v7653, %v7652
        %v7703 = vpack.c.b16 %v7655, %v7654
        %v7704 = vpack.c.b16 %v7657, %v7656
        %v7705 = vpack.c.b16 %v7659, %v7658
        %v7706 = vpack.c.b16 %v7661, %v7660
        %v7707 = vpack.c.b16 %v7663, %v7662
        %v7708 = vpack.c.b16 %v7665, %v7664
        %v7709 = vpack.c.b16 %v7667, %v7666
        %v7710 = vpack.c.b16 %v7669, %v7668
        %v7711 = vpack.c.b16 %v7671, %v7670
        %v7712 = vpack.c.b16 %v7673, %v7672
        %v7713 = vpack.c.b16 %v7675, %v7674
        %v7714 = vpack.c.b16 %v7677, %v7676
        %v7715 = vpack.c.b16 %v7679, %v7678
        %7752 = vmatpush.bf16.msra.mxu0 %v7687
        %7753 = vmatpush.bf16.msra.mxu0 %v7686
        %7754 = vmatpush.bf16.msra.mxu0 %v7685
        %7755 = vmatpush.bf16.msra.mxu0 %v7684
        %7756 = vmatpush.bf16.msra.mxu0 %v7683
        %7757 = vmatpush.bf16.msra.mxu0 %v7682
        %7758 = vmatpush.bf16.msra.mxu0 %v7681
        %7759 = vmatpush.bf16.msra.mxu0 %v7680
        %7760 = vmatmul.bf16.gmra.mxu0 %v1429
        %v7761 = vpop.f32.mrf.mxu0
        %v7762 = vadd.f32 %v5763, %v7761
        %v7763 = vpop.f32.mrf.mxu0
        %v7764 = vadd.f32 %v5763, %v7763
        %7765 = vmatmul.bf16.gmra.mxu0 %v1434
        %v7766 = vpop.f32.mrf.mxu0
        %v7767 = vadd.f32 %v5763, %v7766
        %v7768 = vpop.f32.mrf.mxu0
        %v7769 = vadd.f32 %v5763, %v7768
        %7770 = vmatmul.bf16.gmra.mxu0 %v1439
        %v7771 = vpop.f32.mrf.mxu0
        %v7772 = vadd.f32 %v5763, %v7771
        %v7773 = vpop.f32.mrf.mxu0
        %v7774 = vadd.f32 %v5763, %v7773
        %7775 = vmatmul.bf16.gmra.mxu0 %v1444
        %v7776 = vpop.f32.mrf.mxu0
        %v7777 = vadd.f32 %v5763, %v7776
        %v7778 = vpop.f32.mrf.mxu0
        %v7779 = vadd.f32 %v5763, %v7778
        %7780 = vdwg.mxu0
        %7781 = vmatpush.bf16.msra.mxu0 %v7695
        %7782 = vmatpush.bf16.msra.mxu0 %v7694
        %7783 = vmatpush.bf16.msra.mxu0 %v7693
        %7784 = vmatpush.bf16.msra.mxu0 %v7692
        %7785 = vmatpush.bf16.msra.mxu0 %v7691
        %7786 = vmatpush.bf16.msra.mxu0 %v7690
        %7787 = vmatpush.bf16.msra.mxu0 %v7689
        %7788 = vmatpush.bf16.msra.mxu0 %v7688
        %7789 = vmatmul.bf16.gmra.mxu0 %v1430
        %v7790 = vpop.f32.mrf.mxu0
        %v7791 = vadd.f32 %v7762, %v7790
        %v7792 = vpop.f32.mrf.mxu0
        %v7793 = vadd.f32 %v7764, %v7792
        %7794 = vmatmul.bf16.gmra.mxu0 %v1435
        %v7795 = vpop.f32.mrf.mxu0
        %v7796 = vadd.f32 %v7767, %v7795
        %v7797 = vpop.f32.mrf.mxu0
        %v7798 = vadd.f32 %v7769, %v7797
        %7799 = vmatmul.bf16.gmra.mxu0 %v1440
        %v7800 = vpop.f32.mrf.mxu0
        %v7801 = vadd.f32 %v7772, %v7800
        %v7802 = vpop.f32.mrf.mxu0
        %v7803 = vadd.f32 %v7774, %v7802
        %7804 = vmatmul.bf16.gmra.mxu0 %v1445
        %v7805 = vpop.f32.mrf.mxu0
        %v7806 = vadd.f32 %v7777, %v7805
        %v7807 = vpop.f32.mrf.mxu0
        %v7808 = vadd.f32 %v7779, %v7807
        %7809 = vdwg.mxu0
        %7810 = vmatpush.bf16.msra.mxu0 %v7703
        %7811 = vmatpush.bf16.msra.mxu0 %v7702
        %7812 = vmatpush.bf16.msra.mxu0 %v7701
        %7813 = vmatpush.bf16.msra.mxu0 %v7700
        %7814 = vmatpush.bf16.msra.mxu0 %v7699
        %7815 = vmatpush.bf16.msra.mxu0 %v7698
        %7816 = vmatpush.bf16.msra.mxu0 %v7697
        %7817 = vmatpush.bf16.msra.mxu0 %v7696
        %7818 = vmatmul.bf16.gmra.mxu0 %v1431
        %v7819 = vpop.f32.mrf.mxu0
        %v7820 = vadd.f32 %v7791, %v7819
        %v7821 = vpop.f32.mrf.mxu0
        %v7822 = vadd.f32 %v7793, %v7821
        %7823 = vmatmul.bf16.gmra.mxu0 %v1436
        %v7824 = vpop.f32.mrf.mxu0
        %v7825 = vadd.f32 %v7796, %v7824
        %v7826 = vpop.f32.mrf.mxu0
        %v7827 = vadd.f32 %v7798, %v7826
        %7828 = vmatmul.bf16.gmra.mxu0 %v1441
        %v7829 = vpop.f32.mrf.mxu0
        %v7830 = vadd.f32 %v7801, %v7829
        %v7831 = vpop.f32.mrf.mxu0
        %v7832 = vadd.f32 %v7803, %v7831
        %7833 = vmatmul.bf16.gmra.mxu0 %v1446
        %v7834 = vpop.f32.mrf.mxu0
        %v7835 = vadd.f32 %v7806, %v7834
        %v7836 = vpop.f32.mrf.mxu0
        %v7837 = vadd.f32 %v7808, %v7836
        %7838 = vdwg.mxu0
        %7839 = vmatpush.bf16.msra.mxu0 %v7711
        %7840 = vmatpush.bf16.msra.mxu0 %v7710
        %7841 = vmatpush.bf16.msra.mxu0 %v7709
        %7842 = vmatpush.bf16.msra.mxu0 %v7708
        %7843 = vmatpush.bf16.msra.mxu0 %v7707
        %7844 = vmatpush.bf16.msra.mxu0 %v7706
        %7845 = vmatpush.bf16.msra.mxu0 %v7705
        %7846 = vmatpush.bf16.msra.mxu0 %v7704
        %7847 = vmatmul.bf16.gmra.mxu0 %v1432
        %v7848 = vpop.f32.mrf.mxu0
        %v7849 = vadd.f32 %v7820, %v7848
        %v7850 = vpop.f32.mrf.mxu0
        %v7851 = vadd.f32 %v7822, %v7850
        %7852 = vmatmul.bf16.gmra.mxu0 %v1437
        %v7853 = vpop.f32.mrf.mxu0
        %v7854 = vadd.f32 %v7825, %v7853
        %v7855 = vpop.f32.mrf.mxu0
        %v7856 = vadd.f32 %v7827, %v7855
        %7857 = vmatmul.bf16.gmra.mxu0 %v1442
        %v7858 = vpop.f32.mrf.mxu0
        %v7859 = vadd.f32 %v7830, %v7858
        %v7860 = vpop.f32.mrf.mxu0
        %v7861 = vadd.f32 %v7832, %v7860
        %7862 = vmatmul.bf16.gmra.mxu0 %v1447
        %v7863 = vpop.f32.mrf.mxu0
        %v7864 = vadd.f32 %v7835, %v7863
        %v7865 = vpop.f32.mrf.mxu0
        %v7866 = vadd.f32 %v7837, %v7865
        %7867 = vdwg.mxu0
        %7868 = vmatpush.bf16.msra.mxu0 0
        %7869 = vmatpush.bf16.msra.mxu0 0
        %7870 = vmatpush.bf16.msra.mxu0 0
        %7871 = vmatpush.bf16.msra.mxu0 0
        %7872 = vmatpush.bf16.msra.mxu0 %v7715
        %7873 = vmatpush.bf16.msra.mxu0 %v7714
        %7874 = vmatpush.bf16.msra.mxu0 %v7713
        %7875 = vmatpush.bf16.msra.mxu0 %v7712
        %7876 = vmatmul.bf16.gmra.mxu0 %v1682
        %v7877 = vpop.f32.mrf.mxu0
        %v7878 = vadd.f32 %v7849, %v7877
        %v7879 = vpop.f32.mrf.mxu0
        %v7880 = vadd.f32 %v7851, %v7879
        %7881 = vmatmul.bf16.gmra.mxu0 %v1685
        %v7882 = vpop.f32.mrf.mxu0
        %v7883 = vadd.f32 %v7854, %v7882
        %v7884 = vpop.f32.mrf.mxu0
        %v7885 = vadd.f32 %v7856, %v7884
        %7886 = vmatmul.bf16.gmra.mxu0 %v1688
        %v7887 = vpop.f32.mrf.mxu0
        %v7888 = vadd.f32 %v7859, %v7887
        %v7889 = vpop.f32.mrf.mxu0
        %v7890 = vadd.f32 %v7861, %v7889
        %7891 = vmatmul.bf16.gmra.mxu0 %v1691
        %v7892 = vpop.f32.mrf.mxu0
        %v7893 = vadd.f32 %v7864, %v7892
        %v7894 = vpop.f32.mrf.mxu0
        %v7895 = vadd.f32 %v7866, %v7894
        %7896 = vdwg.mxu0
        %v7897 = vmul.f32 %v7878, %v6138
        %v7898 = vmul.f32 %v7880, %v6138
        %v7899 = vmul.f32 %v7883, %v6138
        %v7900 = vmul.f32 %v7885, %v6138
        %v7901 = vmul.f32 %v7888, %v6138
        %v7902 = vmul.f32 %v7890, %v6138
        %v7903 = vmul.f32 %v7893, %v6138
        %v7904 = vmul.f32 %v7895, %v6138
        %v7905 = vmul.f32 %v7878, %v6139
        %v7906 = vmul.f32 %v7880, %v6139
        %v7907 = vmul.f32 %v7883, %v6139
        %v7908 = vmul.f32 %v7885, %v6139
        %v7909 = vmul.f32 %v7888, %v6139
        %v7910 = vmul.f32 %v7890, %v6139
        %v7911 = vmul.f32 %v7893, %v6139
        %v7912 = vmul.f32 %v7895, %v6139
        %v7913 = vmul.f32 %v7878, %v6140
        %v7914 = vmul.f32 %v7880, %v6140
        %v7915 = vmul.f32 %v7883, %v6140
        %v7916 = vmul.f32 %v7885, %v6140
        %v7917 = vmul.f32 %v7888, %v6140
        %v7918 = vmul.f32 %v7890, %v6140
        %v7919 = vmul.f32 %v7893, %v6140
        %v7920 = vmul.f32 %v7895, %v6140
        %v7921 = vmul.f32 %v7878, %v6141
        %v7922 = vmul.f32 %v7880, %v6141
        %v7923 = vmul.f32 %v7883, %v6141
        %v7924 = vmul.f32 %v7885, %v6141
        %v7925 = vmul.f32 %v7888, %v6141
        %v7926 = vmul.f32 %v7890, %v6141
        %v7927 = vmul.f32 %v7893, %v6141
        %v7928 = vmul.f32 %v7895, %v6141
        %v7929 = vmul.f32 %v7878, %v6142
        %v7930 = vmul.f32 %v7880, %v6142
        %v7931 = vmul.f32 %v7883, %v6142
        %v7932 = vmul.f32 %v7885, %v6142
        %v7933 = vmul.f32 %v7888, %v6142
        %v7934 = vmul.f32 %v7890, %v6142
        %v7935 = vmul.f32 %v7893, %v6142
        %v7936 = vmul.f32 %v7895, %v6142
        %v7937 = vmul.f32 %v7878, %v6143
        %v7938 = vmul.f32 %v7880, %v6143
        %v7939 = vmul.f32 %v7883, %v6143
        %v7940 = vmul.f32 %v7885, %v6143
        %v7941 = vmul.f32 %v7888, %v6143
        %v7942 = vmul.f32 %v7890, %v6143
        %v7943 = vmul.f32 %v7893, %v6143
        %v7944 = vmul.f32 %v7895, %v6143
        %v7945 = vmul.f32 %v7878, %v6144
        %v7946 = vmul.f32 %v7880, %v6144
        %v7947 = vmul.f32 %v7883, %v6144
        %v7948 = vmul.f32 %v7885, %v6144
        %v7949 = vmul.f32 %v7888, %v6144
        %v7950 = vmul.f32 %v7890, %v6144
        %v7951 = vmul.f32 %v7893, %v6144
        %v7952 = vmul.f32 %v7895, %v6144
        %v7953 = vmul.f32 %v7878, %v6145
        %v7954 = vmul.f32 %v7880, %v6145
        %v7955 = vmul.f32 %v7883, %v6145
        %v7956 = vmul.f32 %v7885, %v6145
        %v7957 = vmul.f32 %v7888, %v6145
        %v7958 = vmul.f32 %v7890, %v6145
        %v7959 = vmul.f32 %v7893, %v6145
        %v7960 = vmul.f32 %v7895, %v6145
        %v7961 = vmul.f32 %v7878, %v6146
        %v7962 = vmul.f32 %v7880, %v6146
        %v7963 = vmul.f32 %v7883, %v6146
        %v7964 = vmul.f32 %v7885, %v6146
        %v7965 = vmul.f32 %v7888, %v6146
        %v7966 = vmul.f32 %v7890, %v6146
        %v7967 = vmul.f32 %v7893, %v6146
        %v7968 = vmul.f32 %v7895, %v6146
        %v7969 = vpack.c.bf16 %v7897, %v7897
        %v7970 = vpack.c.bf16 %v7898, %v7898
        %v7971 = vpack.c.bf16 %v7899, %v7899
        %v7972 = vpack.c.bf16 %v7900, %v7900
        %v7973 = vpack.c.bf16 %v7901, %v7901
        %v7974 = vpack.c.bf16 %v7902, %v7902
        %v7975 = vpack.c.bf16 %v7903, %v7903
        %v7976 = vpack.c.bf16 %v7904, %v7904
        %v7977 = vpack.c.bf16 %v7905, %v7905
        %v7978 = vpack.c.bf16 %v7906, %v7906
        %v7979 = vpack.c.bf16 %v7907, %v7907
        %v7980 = vpack.c.bf16 %v7908, %v7908
        %v7981 = vpack.c.bf16 %v7909, %v7909
        %v7982 = vpack.c.bf16 %v7910, %v7910
        %v7983 = vpack.c.bf16 %v7911, %v7911
        %v7984 = vpack.c.bf16 %v7912, %v7912
        %v7985 = vpack.c.bf16 %v7913, %v7913
        %v7986 = vpack.c.bf16 %v7914, %v7914
        %v7987 = vpack.c.bf16 %v7915, %v7915
        %v7988 = vpack.c.bf16 %v7916, %v7916
        %v7989 = vpack.c.bf16 %v7917, %v7917
        %v7990 = vpack.c.bf16 %v7918, %v7918
        %v7991 = vpack.c.bf16 %v7919, %v7919
        %v7992 = vpack.c.bf16 %v7920, %v7920
        %v7993 = vpack.c.bf16 %v7921, %v7921
        %v7994 = vpack.c.bf16 %v7922, %v7922
        %v7995 = vpack.c.bf16 %v7923, %v7923
        %v7996 = vpack.c.bf16 %v7924, %v7924
        %v7997 = vpack.c.bf16 %v7925, %v7925
        %v7998 = vpack.c.bf16 %v7926, %v7926
        %v7999 = vpack.c.bf16 %v7927, %v7927
        %v8000 = vpack.c.bf16 %v7928, %v7928
        %v8001 = vpack.c.bf16 %v7929, %v7929
        %v8002 = vpack.c.bf16 %v7930, %v7930
        %v8003 = vpack.c.bf16 %v7931, %v7931
        %v8004 = vpack.c.bf16 %v7932, %v7932
        %v8005 = vpack.c.bf16 %v7933, %v7933
        %v8006 = vpack.c.bf16 %v7934, %v7934
        %v8007 = vpack.c.bf16 %v7935, %v7935
        %v8008 = vpack.c.bf16 %v7936, %v7936
        %v8009 = vpack.c.bf16 %v7937, %v7937
        %v8010 = vpack.c.bf16 %v7938, %v7938
        %v8011 = vpack.c.bf16 %v7939, %v7939
        %v8012 = vpack.c.bf16 %v7940, %v7940
        %v8013 = vpack.c.bf16 %v7941, %v7941
        %v8014 = vpack.c.bf16 %v7942, %v7942
        %v8015 = vpack.c.bf16 %v7943, %v7943
        %v8016 = vpack.c.bf16 %v7944, %v7944
        %v8017 = vpack.c.bf16 %v7945, %v7945
        %v8018 = vpack.c.bf16 %v7946, %v7946
        %v8019 = vpack.c.bf16 %v7947, %v7947
        %v8020 = vpack.c.bf16 %v7948, %v7948
        %v8021 = vpack.c.bf16 %v7949, %v7949
        %v8022 = vpack.c.bf16 %v7950, %v7950
        %v8023 = vpack.c.bf16 %v7951, %v7951
        %v8024 = vpack.c.bf16 %v7952, %v7952
        %v8025 = vpack.c.bf16 %v7953, %v7953
        %v8026 = vpack.c.bf16 %v7954, %v7954
        %v8027 = vpack.c.bf16 %v7955, %v7955
        %v8028 = vpack.c.bf16 %v7956, %v7956
        %v8029 = vpack.c.bf16 %v7957, %v7957
        %v8030 = vpack.c.bf16 %v7958, %v7958
        %v8031 = vpack.c.bf16 %v7959, %v7959
        %v8032 = vpack.c.bf16 %v7960, %v7960
        %v8033 = vpack.c.bf16 %v7961, %v7961
        %v8034 = vpack.c.bf16 %v7962, %v7962
        %v8035 = vpack.c.bf16 %v7963, %v7963
        %v8036 = vpack.c.bf16 %v7964, %v7964
        %v8037 = vpack.c.bf16 %v7965, %v7965
        %v8038 = vpack.c.bf16 %v7966, %v7966
        %v8039 = vpack.c.bf16 %v7967, %v7967
        %v8040 = vpack.c.bf16 %v7968, %v7968
        %v8113 = vunpack.c.l.b16 %v7969
        %v8114 = vunpack.c.l.b16 %v7970
        %v8115 = vunpack.c.l.b16 %v7971
        %v8116 = vunpack.c.l.b16 %v7972
        %v8117 = vunpack.c.l.b16 %v7973
        %v8118 = vunpack.c.l.b16 %v7974
        %v8119 = vunpack.c.l.b16 %v7975
        %v8120 = vunpack.c.l.b16 %v7976
        %v8121 = vunpack.c.l.b16 %v7977
        %v8122 = vunpack.c.l.b16 %v7978
        %v8123 = vunpack.c.l.b16 %v7979
        %v8124 = vunpack.c.l.b16 %v7980
        %v8125 = vunpack.c.l.b16 %v7981
        %v8126 = vunpack.c.l.b16 %v7982
        %v8127 = vunpack.c.l.b16 %v7983
        %v8128 = vunpack.c.l.b16 %v7984
        %v8129 = vunpack.c.l.b16 %v7985
        %v8130 = vunpack.c.l.b16 %v7986
        %v8131 = vunpack.c.l.b16 %v7987
        %v8132 = vunpack.c.l.b16 %v7988
        %v8133 = vunpack.c.l.b16 %v7989
        %v8134 = vunpack.c.l.b16 %v7990
        %v8135 = vunpack.c.l.b16 %v7991
        %v8136 = vunpack.c.l.b16 %v7992
        %v8137 = vunpack.c.l.b16 %v7993
        %v8138 = vunpack.c.l.b16 %v7994
        %v8139 = vunpack.c.l.b16 %v7995
        %v8140 = vunpack.c.l.b16 %v7996
        %v8141 = vunpack.c.l.b16 %v7997
        %v8142 = vunpack.c.l.b16 %v7998
        %v8143 = vunpack.c.l.b16 %v7999
        %v8144 = vunpack.c.l.b16 %v8000
        %v8145 = vunpack.c.l.b16 %v8001
        %v8146 = vunpack.c.l.b16 %v8002
        %v8147 = vunpack.c.l.b16 %v8003
        %v8148 = vunpack.c.l.b16 %v8004
        %v8149 = vunpack.c.l.b16 %v8005
        %v8150 = vunpack.c.l.b16 %v8006
        %v8151 = vunpack.c.l.b16 %v8007
        %v8152 = vunpack.c.l.b16 %v8008
        %v8153 = vunpack.c.l.b16 %v8009
        %v8154 = vunpack.c.l.b16 %v8010
        %v8155 = vunpack.c.l.b16 %v8011
        %v8156 = vunpack.c.l.b16 %v8012
        %v8157 = vunpack.c.l.b16 %v8013
        %v8158 = vunpack.c.l.b16 %v8014
        %v8159 = vunpack.c.l.b16 %v8015
        %v8160 = vunpack.c.l.b16 %v8016
        %v8161 = vunpack.c.l.b16 %v8017
        %v8162 = vunpack.c.l.b16 %v8018
        %v8163 = vunpack.c.l.b16 %v8019
        %v8164 = vunpack.c.l.b16 %v8020
        %v8165 = vunpack.c.l.b16 %v8021
        %v8166 = vunpack.c.l.b16 %v8022
        %v8167 = vunpack.c.l.b16 %v8023
        %v8168 = vunpack.c.l.b16 %v8024
        %v8169 = vunpack.c.l.b16 %v8025
        %v8170 = vunpack.c.l.b16 %v8026
        %v8171 = vunpack.c.l.b16 %v8027
        %v8172 = vunpack.c.l.b16 %v8028
        %v8173 = vunpack.c.l.b16 %v8029
        %v8174 = vunpack.c.l.b16 %v8030
        %v8175 = vunpack.c.l.b16 %v8031
        %v8176 = vunpack.c.l.b16 %v8032
        %v8177 = vunpack.c.l.b16 %v8033
        %v8178 = vunpack.c.l.b16 %v8034
        %v8179 = vunpack.c.l.b16 %v8035
        %v8180 = vunpack.c.l.b16 %v8036
        %v8181 = vunpack.c.l.b16 %v8037
        %v8182 = vunpack.c.l.b16 %v8038
        %v8183 = vunpack.c.l.b16 %v8039
        %v8184 = vunpack.c.l.b16 %v8040
        %v8185 = vpack.c.b16 %v8114, %v8113
        %v8186 = vpack.c.b16 %v8116, %v8115
        %v8187 = vpack.c.b16 %v8118, %v8117
        %v8188 = vpack.c.b16 %v8120, %v8119
        %v8189 = vpack.c.b16 %v8122, %v8121
        %v8190 = vpack.c.b16 %v8124, %v8123
        %v8191 = vpack.c.b16 %v8126, %v8125
        %v8192 = vpack.c.b16 %v8128, %v8127
        %v8193 = vpack.c.b16 %v8130, %v8129
        %v8194 = vpack.c.b16 %v8132, %v8131
        %v8195 = vpack.c.b16 %v8134, %v8133
        %v8196 = vpack.c.b16 %v8136, %v8135
        %v8197 = vpack.c.b16 %v8138, %v8137
        %v8198 = vpack.c.b16 %v8140, %v8139
        %v8199 = vpack.c.b16 %v8142, %v8141
        %v8200 = vpack.c.b16 %v8144, %v8143
        %v8201 = vpack.c.b16 %v8146, %v8145
        %v8202 = vpack.c.b16 %v8148, %v8147
        %v8203 = vpack.c.b16 %v8150, %v8149
        %v8204 = vpack.c.b16 %v8152, %v8151
        %v8205 = vpack.c.b16 %v8154, %v8153
        %v8206 = vpack.c.b16 %v8156, %v8155
        %v8207 = vpack.c.b16 %v8158, %v8157
        %v8208 = vpack.c.b16 %v8160, %v8159
        %v8209 = vpack.c.b16 %v8162, %v8161
        %v8210 = vpack.c.b16 %v8164, %v8163
        %v8211 = vpack.c.b16 %v8166, %v8165
        %v8212 = vpack.c.b16 %v8168, %v8167
        %v8213 = vpack.c.b16 %v8170, %v8169
        %v8214 = vpack.c.b16 %v8172, %v8171
        %v8215 = vpack.c.b16 %v8174, %v8173
        %v8216 = vpack.c.b16 %v8176, %v8175
        %v8217 = vpack.c.b16 %v8178, %v8177
        %v8218 = vpack.c.b16 %v8180, %v8179
        %v8219 = vpack.c.b16 %v8182, %v8181
        %v8220 = vpack.c.b16 %v8184, %v8183
        %8257 = vmatpush.bf16.msra.mxu0 %v8192
        %8258 = vmatpush.bf16.msra.mxu0 %v8191
        %8259 = vmatpush.bf16.msra.mxu0 %v8190
        %8260 = vmatpush.bf16.msra.mxu0 %v8189
        %8261 = vmatpush.bf16.msra.mxu0 %v8188
        %8262 = vmatpush.bf16.msra.mxu0 %v8187
        %8263 = vmatpush.bf16.msra.mxu0 %v8186
        %8264 = vmatpush.bf16.msra.mxu0 %v8185
        %8265 = vmatmul.bf16.gmra.mxu0 %v1429
        %v8266 = vpop.f32.mrf.mxu0
        %v8267 = vadd.f32 %v6300, %v8266
        %v8268 = vpop.f32.mrf.mxu0
        %v8269 = vadd.f32 %v6300, %v8268
        %8270 = vmatmul.bf16.gmra.mxu0 %v1434
        %v8271 = vpop.f32.mrf.mxu0
        %v8272 = vadd.f32 %v6300, %v8271
        %v8273 = vpop.f32.mrf.mxu0
        %v8274 = vadd.f32 %v6300, %v8273
        %8275 = vmatmul.bf16.gmra.mxu0 %v1439
        %v8276 = vpop.f32.mrf.mxu0
        %v8277 = vadd.f32 %v6300, %v8276
        %v8278 = vpop.f32.mrf.mxu0
        %v8279 = vadd.f32 %v6300, %v8278
        %8280 = vmatmul.bf16.gmra.mxu0 %v1444
        %v8281 = vpop.f32.mrf.mxu0
        %v8282 = vadd.f32 %v6300, %v8281
        %v8283 = vpop.f32.mrf.mxu0
        %v8284 = vadd.f32 %v6300, %v8283
        %8285 = vdwg.mxu0
        %8286 = vmatpush.bf16.msra.mxu0 %v8200
        %8287 = vmatpush.bf16.msra.mxu0 %v8199
        %8288 = vmatpush.bf16.msra.mxu0 %v8198
        %8289 = vmatpush.bf16.msra.mxu0 %v8197
        %8290 = vmatpush.bf16.msra.mxu0 %v8196
        %8291 = vmatpush.bf16.msra.mxu0 %v8195
        %8292 = vmatpush.bf16.msra.mxu0 %v8194
        %8293 = vmatpush.bf16.msra.mxu0 %v8193
        %8294 = vmatmul.bf16.gmra.mxu0 %v1430
        %v8295 = vpop.f32.mrf.mxu0
        %v8296 = vadd.f32 %v8267, %v8295
        %v8297 = vpop.f32.mrf.mxu0
        %v8298 = vadd.f32 %v8269, %v8297
        %8299 = vmatmul.bf16.gmra.mxu0 %v1435
        %v8300 = vpop.f32.mrf.mxu0
        %v8301 = vadd.f32 %v8272, %v8300
        %v8302 = vpop.f32.mrf.mxu0
        %v8303 = vadd.f32 %v8274, %v8302
        %8304 = vmatmul.bf16.gmra.mxu0 %v1440
        %v8305 = vpop.f32.mrf.mxu0
        %v8306 = vadd.f32 %v8277, %v8305
        %v8307 = vpop.f32.mrf.mxu0
        %v8308 = vadd.f32 %v8279, %v8307
        %8309 = vmatmul.bf16.gmra.mxu0 %v1445
        %v8310 = vpop.f32.mrf.mxu0
        %v8311 = vadd.f32 %v8282, %v8310
        %v8312 = vpop.f32.mrf.mxu0
        %v8313 = vadd.f32 %v8284, %v8312
        %8314 = vdwg.mxu0
        %8315 = vmatpush.bf16.msra.mxu0 %v8208
        %8316 = vmatpush.bf16.msra.mxu0 %v8207
        %8317 = vmatpush.bf16.msra.mxu0 %v8206
        %8318 = vmatpush.bf16.msra.mxu0 %v8205
        %8319 = vmatpush.bf16.msra.mxu0 %v8204
        %8320 = vmatpush.bf16.msra.mxu0 %v8203
        %8321 = vmatpush.bf16.msra.mxu0 %v8202
        %8322 = vmatpush.bf16.msra.mxu0 %v8201
        %8323 = vmatmul.bf16.gmra.mxu0 %v1431
        %v8324 = vpop.f32.mrf.mxu0
        %v8325 = vadd.f32 %v8296, %v8324
        %v8326 = vpop.f32.mrf.mxu0
        %v8327 = vadd.f32 %v8298, %v8326
        %8328 = vmatmul.bf16.gmra.mxu0 %v1436
        %v8329 = vpop.f32.mrf.mxu0
        %v8330 = vadd.f32 %v8301, %v8329
        %v8331 = vpop.f32.mrf.mxu0
        %v8332 = vadd.f32 %v8303, %v8331
        %8333 = vmatmul.bf16.gmra.mxu0 %v1441
        %v8334 = vpop.f32.mrf.mxu0
        %v8335 = vadd.f32 %v8306, %v8334
        %v8336 = vpop.f32.mrf.mxu0
        %v8337 = vadd.f32 %v8308, %v8336
        %8338 = vmatmul.bf16.gmra.mxu0 %v1446
        %v8339 = vpop.f32.mrf.mxu0
        %v8340 = vadd.f32 %v8311, %v8339
        %v8341 = vpop.f32.mrf.mxu0
        %v8342 = vadd.f32 %v8313, %v8341
        %8343 = vdwg.mxu0
        %8344 = vmatpush.bf16.msra.mxu0 %v8216
        %8345 = vmatpush.bf16.msra.mxu0 %v8215
        %8346 = vmatpush.bf16.msra.mxu0 %v8214
        %8347 = vmatpush.bf16.msra.mxu0 %v8213
        %8348 = vmatpush.bf16.msra.mxu0 %v8212
        %8349 = vmatpush.bf16.msra.mxu0 %v8211
        %8350 = vmatpush.bf16.msra.mxu0 %v8210
        %8351 = vmatpush.bf16.msra.mxu0 %v8209
        %8352 = vmatmul.bf16.gmra.mxu0 %v1432
        %v8353 = vpop.f32.mrf.mxu0
        %v8354 = vadd.f32 %v8325, %v8353
        %v8355 = vpop.f32.mrf.mxu0
        %v8356 = vadd.f32 %v8327, %v8355
        %8357 = vmatmul.bf16.gmra.mxu0 %v1437
        %v8358 = vpop.f32.mrf.mxu0
        %v8359 = vadd.f32 %v8330, %v8358
        %v8360 = vpop.f32.mrf.mxu0
        %v8361 = vadd.f32 %v8332, %v8360
        %8362 = vmatmul.bf16.gmra.mxu0 %v1442
        %v8363 = vpop.f32.mrf.mxu0
        %v8364 = vadd.f32 %v8335, %v8363
        %v8365 = vpop.f32.mrf.mxu0
        %v8366 = vadd.f32 %v8337, %v8365
        %8367 = vmatmul.bf16.gmra.mxu0 %v1447
        %v8368 = vpop.f32.mrf.mxu0
        %v8369 = vadd.f32 %v8340, %v8368
        %v8370 = vpop.f32.mrf.mxu0
        %v8371 = vadd.f32 %v8342, %v8370
        %8372 = vdwg.mxu0
        %8373 = vmatpush.bf16.msra.mxu0 0
        %8374 = vmatpush.bf16.msra.mxu0 0
        %8375 = vmatpush.bf16.msra.mxu0 0
        %8376 = vmatpush.bf16.msra.mxu0 0
        %8377 = vmatpush.bf16.msra.mxu0 %v8220
        %8378 = vmatpush.bf16.msra.mxu0 %v8219
        %8379 = vmatpush.bf16.msra.mxu0 %v8218
        %8380 = vmatpush.bf16.msra.mxu0 %v8217
        %8381 = vmatmul.bf16.gmra.mxu0 %v1682
        %v8382 = vpop.f32.mrf.mxu0
        %v8383 = vadd.f32 %v8354, %v8382
        %v8384 = vpop.f32.mrf.mxu0
        %v8385 = vadd.f32 %v8356, %v8384
        %8386 = vmatmul.bf16.gmra.mxu0 %v1685
        %v8387 = vpop.f32.mrf.mxu0
        %v8388 = vadd.f32 %v8359, %v8387
        %v8389 = vpop.f32.mrf.mxu0
        %v8390 = vadd.f32 %v8361, %v8389
        %8391 = vmatmul.bf16.gmra.mxu0 %v1688
        %v8392 = vpop.f32.mrf.mxu0
        %v8393 = vadd.f32 %v8364, %v8392
        %v8394 = vpop.f32.mrf.mxu0
        %v8395 = vadd.f32 %v8366, %v8394
        %8396 = vmatmul.bf16.gmra.mxu0 %v1691
        %v8397 = vpop.f32.mrf.mxu0
        %v8398 = vadd.f32 %v8369, %v8397
        %v8399 = vpop.f32.mrf.mxu0
        %v8400 = vadd.f32 %v8371, %v8399
        %8401 = vdwg.mxu0
        %v8402 = vadd.f32 %v8383, %v7878
        %v8403 = vadd.f32 %v8385, %v7880
        %v8404 = vadd.f32 %v8388, %v7883
        %v8405 = vadd.f32 %v8390, %v7885
        %v8406 = vadd.f32 %v8393, %v7888
        %v8407 = vadd.f32 %v8395, %v7890
        %v8408 = vadd.f32 %v8398, %v7893
        %v8409 = vadd.f32 %v8400, %v7895
        %s8410 = scalar_lea.vmem %s9, 128
        %v8411 = vld [vmem:[%s8410] sm:$0xf]
        %v8412 = vld [vmem:[%s8410 + $0x4] sm:$0xf]
        %v8413 = vld [vmem:[%s8410 + $0x8] sm:$0xf]
        %v8414 = vld [vmem:[%s8410 + $0xc] sm:$0xf]
        %v8415 = vld [vmem:[%s8410 + $0x10] sm:$0xf]
        %v8416 = vld [vmem:[%s8410 + $0x14] sm:$0xf]
        %v8417 = vld [vmem:[%s8410 + $0x18] sm:$0xf]
        %v8418 = vld [vmem:[%s8410 + $0x1c] sm:$0xf]
        %v8419 = vld [vmem:[%s8410 + $0x20] sm:$0xf]
        %v8420 = vld [vmem:[%s8410 + $0x24] sm:$0xf]
        %v8421 = vld [vmem:[%s8410 + $0x28] sm:$0xf]
        %v8422 = vld [vmem:[%s8410 + $0x2c] sm:$0xf]
        %v8423 = vld [vmem:[%s8410 + $0x30] sm:$0xf]
        %v8424 = vld [vmem:[%s8410 + $0x34] sm:$0xf]
        %v8425 = vld [vmem:[%s8410 + $0x38] sm:$0xf]
        %v8426 = vld [vmem:[%s8410 + $0x3c] sm:$0xf]
        %v8427 = vpack.c.bf16 %v6663, %v6662
        %v8428 = vpack.c.bf16 %v6665, %v6664
        %v8429 = vpack.c.bf16 %v6667, %v6666
        %v8430 = vpack.c.bf16 %v6669, %v6668
        %v8431 = vpack.c.bf16 %v8403, %v8402
        %v8432 = vpack.c.bf16 %v8405, %v8404
        %v8433 = vpack.c.bf16 %v8407, %v8406
        %v8434 = vpack.c.bf16 %v8409, %v8408
        %v8435 = vld [vmem:[%s15 + $0x3] sm:$0x1]
        %v8436 = vperm.slane %v8435, 0
        %v8453 = vunpack.c.l.b16 %v8411
        %v8454 = vunpack.c.l.b16 %v8412
        %v8455 = vunpack.c.l.b16 %v8413
        %v8456 = vunpack.c.l.b16 %v8414
        %v8457 = vunpack.c.l.b16 %v8415
        %v8458 = vunpack.c.l.b16 %v8416
        %v8459 = vunpack.c.l.b16 %v8417
        %v8460 = vunpack.c.l.b16 %v8418
        %v8461 = vunpack.c.l.b16 %v8419
        %v8462 = vunpack.c.l.b16 %v8420
        %v8463 = vunpack.c.l.b16 %v8421
        %v8464 = vunpack.c.l.b16 %v8422
        %v8465 = vunpack.c.l.b16 %v8423
        %v8466 = vunpack.c.l.b16 %v8424
        %v8467 = vunpack.c.l.b16 %v8425
        %v8468 = vunpack.c.l.b16 %v8426
        %v8469 = vpack.c.b16 %v8454, %v8453
        %v8470 = vpack.c.b16 %v8456, %v8455
        %v8471 = vpack.c.b16 %v8458, %v8457
        %v8472 = vpack.c.b16 %v8460, %v8459
        %v8473 = vpack.c.b16 %v8462, %v8461
        %v8474 = vpack.c.b16 %v8464, %v8463
        %v8475 = vpack.c.b16 %v8466, %v8465
        %v8476 = vpack.c.b16 %v8468, %v8467
        %8485 = vmatpush.bf16.msra.mxu0 %v8476
        %8486 = vmatpush.bf16.msra.mxu0 %v8475
        %8487 = vmatpush.bf16.msra.mxu0 %v8474
        %8488 = vmatpush.bf16.msra.mxu0 %v8473
        %8489 = vmatpush.bf16.msra.mxu0 %v8472
        %8490 = vmatpush.bf16.msra.mxu0 %v8471
        %8491 = vmatpush.bf16.msra.mxu0 %v8470
        %8492 = vmatpush.bf16.msra.mxu0 %v8469
        %8493 = vmatmul.bf16.gmra.mxu0 %v8427
        %v8494 = vpop.f32.mrf.mxu0
        %v8495 = vadd.f32 %v8436, %v8494
        %v8496 = vpop.f32.mrf.mxu0
        %v8497 = vadd.f32 %v8436, %v8496
        %8498 = vmatmul.bf16.gmra.mxu0 %v8428
        %v8499 = vpop.f32.mrf.mxu0
        %v8500 = vadd.f32 %v8436, %v8499
        %v8501 = vpop.f32.mrf.mxu0
        %v8502 = vadd.f32 %v8436, %v8501
        %8503 = vmatmul.bf16.gmra.mxu0 %v8429
        %v8504 = vpop.f32.mrf.mxu0
        %v8505 = vadd.f32 %v8436, %v8504
        %v8506 = vpop.f32.mrf.mxu0
        %v8507 = vadd.f32 %v8436, %v8506
        %8508 = vmatmul.bf16.gmra.mxu0 %v8430
        %v8509 = vpop.f32.mrf.mxu0
        %v8510 = vadd.f32 %v8436, %v8509
        %v8511 = vpop.f32.mrf.mxu0
        %v8512 = vadd.f32 %v8436, %v8511
        %8513 = vmatmul.bf16.gmra.mxu0 %v8431
        %v8514 = vpop.f32.mrf.mxu0
        %v8515 = vadd.f32 %v8436, %v8514
        %v8516 = vpop.f32.mrf.mxu0
        %v8517 = vadd.f32 %v8436, %v8516
        %8518 = vmatmul.bf16.gmra.mxu0 %v8432
        %v8519 = vpop.f32.mrf.mxu0
        %v8520 = vadd.f32 %v8436, %v8519
        %v8521 = vpop.f32.mrf.mxu0
        %v8522 = vadd.f32 %v8436, %v8521
        %8523 = vmatmul.bf16.gmra.mxu0 %v8433
        %v8524 = vpop.f32.mrf.mxu0
        %v8525 = vadd.f32 %v8436, %v8524
        %v8526 = vpop.f32.mrf.mxu0
        %v8527 = vadd.f32 %v8436, %v8526
        %8528 = vmatmul.bf16.gmra.mxu0 %v8434
        %v8529 = vpop.f32.mrf.mxu0
        %v8530 = vadd.f32 %v8436, %v8529
        %v8531 = vpop.f32.mrf.mxu0
        %v8532 = vadd.f32 %v8436, %v8531
        %8533 = vdwg.mxu0
        %v8534 = vxor.u32 %v8495, 2147483648
        %v8535 = vxor.u32 %v8497, 2147483648
        %v8536 = vxor.u32 %v8500, 2147483648
        %v8537 = vxor.u32 %v8502, 2147483648
        %v8538 = vxor.u32 %v8505, 2147483648
        %v8539 = vxor.u32 %v8507, 2147483648
        %v8540 = vxor.u32 %v8510, 2147483648
        %v8541 = vxor.u32 %v8512, 2147483648
        %v8542 = vxor.u32 %v8515, 2147483648
        %v8543 = vxor.u32 %v8517, 2147483648
        %v8544 = vxor.u32 %v8520, 2147483648
        %v8545 = vxor.u32 %v8522, 2147483648
        %v8546 = vxor.u32 %v8525, 2147483648
        %v8547 = vxor.u32 %v8527, 2147483648
        %v8548 = vxor.u32 %v8530, 2147483648
        %v8549 = vxor.u32 %v8532, 2147483648
        %v8550 = vmul.f32 %v8534, 1.442695
        %v8551 = vpow.pop %v8550
        %v8552 = vmul.f32 %v8535, 1.442695
        %v8553 = vpow.pop %v8552
        %v8554 = vmul.f32 %v8536, 1.442695
        %v8555 = vpow.pop %v8554
        %v8556 = vmul.f32 %v8537, 1.442695
        %v8557 = vpow.pop %v8556
        %v8558 = vmul.f32 %v8538, 1.442695
        %v8559 = vpow.pop %v8558
        %v8560 = vmul.f32 %v8539, 1.442695
        %v8561 = vpow.pop %v8560
        %v8562 = vmul.f32 %v8540, 1.442695
        %v8563 = vpow.pop %v8562
        %v8564 = vmul.f32 %v8541, 1.442695
        %v8565 = vpow.pop %v8564
        %v8566 = vmul.f32 %v8542, 1.442695
        %v8567 = vpow.pop %v8566
        %v8568 = vmul.f32 %v8543, 1.442695
        %v8569 = vpow.pop %v8568
        %v8570 = vmul.f32 %v8544, 1.442695
        %v8571 = vpow.pop %v8570
        %v8572 = vmul.f32 %v8545, 1.442695
        %v8573 = vpow.pop %v8572
        %v8574 = vmul.f32 %v8546, 1.442695
        %v8575 = vpow.pop %v8574
        %v8576 = vmul.f32 %v8547, 1.442695
        %v8577 = vpow.pop %v8576
        %v8578 = vmul.f32 %v8548, 1.442695
        %v8579 = vpow.pop %v8578
        %v8580 = vmul.f32 %v8549, 1.442695
        %v8581 = vpow.pop %v8580
        %v8582 = vadd.f32 %v8551, 1.0
        %v8583 = vadd.f32 %v8553, 1.0
        %v8584 = vadd.f32 %v8555, 1.0
        %v8585 = vadd.f32 %v8557, 1.0
        %v8586 = vadd.f32 %v8559, 1.0
        %v8587 = vadd.f32 %v8561, 1.0
        %v8588 = vadd.f32 %v8563, 1.0
        %v8589 = vadd.f32 %v8565, 1.0
        %v8590 = vadd.f32 %v8567, 1.0
        %v8591 = vadd.f32 %v8569, 1.0
        %v8592 = vadd.f32 %v8571, 1.0
        %v8593 = vadd.f32 %v8573, 1.0
        %v8594 = vadd.f32 %v8575, 1.0
        %v8595 = vadd.f32 %v8577, 1.0
        %v8596 = vadd.f32 %v8579, 1.0
        %v8597 = vadd.f32 %v8581, 1.0
        %v8598 = vrcp.pop %v8582
        %v8599 = vmul.f32 %v8582, %v8598
        %v8600 = vsub.f32 1.0, %v8599
        %v8601 = vmul.f32 %v8598, %v8600
        %v8602 = vadd.f32 %v8598, %v8601
        %vm8603 = vweird.f32 %v8582
        %vm8604 = vweird.f32 %v8598
        %vm8605 = vmor %vm8603, %vm8604
        %v8606 = vsel %vm8605, %v8598, %v8602
        %v8607 = vand.u32 2147483647, %v8582
        %vm8608 = vcmp.eq.f32.partialorder %v8607, 8.507059e+37
        %v8609 = vand.u32 %v8582, 2147483648
        %v8610 = vor.u32 1.1754944e-38, %v8609
        %v8611 = vsel %vm8608, %v8610, %v8606
        %v8612 = vmul.f32 1.0, %v8611
        %v8613 = vrcp.pop %v8583
        %v8614 = vmul.f32 %v8583, %v8613
        %v8615 = vsub.f32 1.0, %v8614
        %v8616 = vmul.f32 %v8613, %v8615
        %v8617 = vadd.f32 %v8613, %v8616
        %vm8618 = vweird.f32 %v8583
        %vm8619 = vweird.f32 %v8613
        %vm8620 = vmor %vm8618, %vm8619
        %v8621 = vsel %vm8620, %v8613, %v8617
        %v8622 = vand.u32 2147483647, %v8583
        %vm8623 = vcmp.eq.f32.partialorder %v8622, 8.507059e+37
        %v8624 = vand.u32 %v8583, 2147483648
        %v8625 = vor.u32 1.1754944e-38, %v8624
        %v8626 = vsel %vm8623, %v8625, %v8621
        %v8627 = vmul.f32 1.0, %v8626
        %v8628 = vrcp.pop %v8584
        %v8629 = vmul.f32 %v8584, %v8628
        %v8630 = vsub.f32 1.0, %v8629
        %v8631 = vmul.f32 %v8628, %v8630
        %v8632 = vadd.f32 %v8628, %v8631
        %vm8633 = vweird.f32 %v8584
        %vm8634 = vweird.f32 %v8628
        %vm8635 = vmor %vm8633, %vm8634
        %v8636 = vsel %vm8635, %v8628, %v8632
        %v8637 = vand.u32 2147483647, %v8584
        %vm8638 = vcmp.eq.f32.partialorder %v8637, 8.507059e+37
        %v8639 = vand.u32 %v8584, 2147483648
        %v8640 = vor.u32 1.1754944e-38, %v8639
        %v8641 = vsel %vm8638, %v8640, %v8636
        %v8642 = vmul.f32 1.0, %v8641
        %v8643 = vrcp.pop %v8585
        %v8644 = vmul.f32 %v8585, %v8643
        %v8645 = vsub.f32 1.0, %v8644
        %v8646 = vmul.f32 %v8643, %v8645
        %v8647 = vadd.f32 %v8643, %v8646
        %vm8648 = vweird.f32 %v8585
        %vm8649 = vweird.f32 %v8643
        %vm8650 = vmor %vm8648, %vm8649
        %v8651 = vsel %vm8650, %v8643, %v8647
        %v8652 = vand.u32 2147483647, %v8585
        %vm8653 = vcmp.eq.f32.partialorder %v8652, 8.507059e+37
        %v8654 = vand.u32 %v8585, 2147483648
        %v8655 = vor.u32 1.1754944e-38, %v8654
        %v8656 = vsel %vm8653, %v8655, %v8651
        %v8657 = vmul.f32 1.0, %v8656
        %v8658 = vrcp.pop %v8586
        %v8659 = vmul.f32 %v8586, %v8658
        %v8660 = vsub.f32 1.0, %v8659
        %v8661 = vmul.f32 %v8658, %v8660
        %v8662 = vadd.f32 %v8658, %v8661
        %vm8663 = vweird.f32 %v8586
        %vm8664 = vweird.f32 %v8658
        %vm8665 = vmor %vm8663, %vm8664
        %v8666 = vsel %vm8665, %v8658, %v8662
        %v8667 = vand.u32 2147483647, %v8586
        %vm8668 = vcmp.eq.f32.partialorder %v8667, 8.507059e+37
        %v8669 = vand.u32 %v8586, 2147483648
        %v8670 = vor.u32 1.1754944e-38, %v8669
        %v8671 = vsel %vm8668, %v8670, %v8666
        %v8672 = vmul.f32 1.0, %v8671
        %v8673 = vrcp.pop %v8587
        %v8674 = vmul.f32 %v8587, %v8673
        %v8675 = vsub.f32 1.0, %v8674
        %v8676 = vmul.f32 %v8673, %v8675
        %v8677 = vadd.f32 %v8673, %v8676
        %vm8678 = vweird.f32 %v8587
        %vm8679 = vweird.f32 %v8673
        %vm8680 = vmor %vm8678, %vm8679
        %v8681 = vsel %vm8680, %v8673, %v8677
        %v8682 = vand.u32 2147483647, %v8587
        %vm8683 = vcmp.eq.f32.partialorder %v8682, 8.507059e+37
        %v8684 = vand.u32 %v8587, 2147483648
        %v8685 = vor.u32 1.1754944e-38, %v8684
        %v8686 = vsel %vm8683, %v8685, %v8681
        %v8687 = vmul.f32 1.0, %v8686
        %v8688 = vrcp.pop %v8588
        %v8689 = vmul.f32 %v8588, %v8688
        %v8690 = vsub.f32 1.0, %v8689
        %v8691 = vmul.f32 %v8688, %v8690
        %v8692 = vadd.f32 %v8688, %v8691
        %vm8693 = vweird.f32 %v8588
        %vm8694 = vweird.f32 %v8688
        %vm8695 = vmor %vm8693, %vm8694
        %v8696 = vsel %vm8695, %v8688, %v8692
        %v8697 = vand.u32 2147483647, %v8588
        %vm8698 = vcmp.eq.f32.partialorder %v8697, 8.507059e+37
        %v8699 = vand.u32 %v8588, 2147483648
        %v8700 = vor.u32 1.1754944e-38, %v8699
        %v8701 = vsel %vm8698, %v8700, %v8696
        %v8702 = vmul.f32 1.0, %v8701
        %v8703 = vrcp.pop %v8589
        %v8704 = vmul.f32 %v8589, %v8703
        %v8705 = vsub.f32 1.0, %v8704
        %v8706 = vmul.f32 %v8703, %v8705
        %v8707 = vadd.f32 %v8703, %v8706
        %vm8708 = vweird.f32 %v8589
        %vm8709 = vweird.f32 %v8703
        %vm8710 = vmor %vm8708, %vm8709
        %v8711 = vsel %vm8710, %v8703, %v8707
        %v8712 = vand.u32 2147483647, %v8589
        %vm8713 = vcmp.eq.f32.partialorder %v8712, 8.507059e+37
        %v8714 = vand.u32 %v8589, 2147483648
        %v8715 = vor.u32 1.1754944e-38, %v8714
        %v8716 = vsel %vm8713, %v8715, %v8711
        %v8717 = vmul.f32 1.0, %v8716
        %v8718 = vrcp.pop %v8590
        %v8719 = vmul.f32 %v8590, %v8718
        %v8720 = vsub.f32 1.0, %v8719
        %v8721 = vmul.f32 %v8718, %v8720
        %v8722 = vadd.f32 %v8718, %v8721
        %vm8723 = vweird.f32 %v8590
        %vm8724 = vweird.f32 %v8718
        %vm8725 = vmor %vm8723, %vm8724
        %v8726 = vsel %vm8725, %v8718, %v8722
        %v8727 = vand.u32 2147483647, %v8590
        %vm8728 = vcmp.eq.f32.partialorder %v8727, 8.507059e+37
        %v8729 = vand.u32 %v8590, 2147483648
        %v8730 = vor.u32 1.1754944e-38, %v8729
        %v8731 = vsel %vm8728, %v8730, %v8726
        %v8732 = vmul.f32 1.0, %v8731
        %v8733 = vrcp.pop %v8591
        %v8734 = vmul.f32 %v8591, %v8733
        %v8735 = vsub.f32 1.0, %v8734
        %v8736 = vmul.f32 %v8733, %v8735
        %v8737 = vadd.f32 %v8733, %v8736
        %vm8738 = vweird.f32 %v8591
        %vm8739 = vweird.f32 %v8733
        %vm8740 = vmor %vm8738, %vm8739
        %v8741 = vsel %vm8740, %v8733, %v8737
        %v8742 = vand.u32 2147483647, %v8591
        %vm8743 = vcmp.eq.f32.partialorder %v8742, 8.507059e+37
        %v8744 = vand.u32 %v8591, 2147483648
        %v8745 = vor.u32 1.1754944e-38, %v8744
        %v8746 = vsel %vm8743, %v8745, %v8741
        %v8747 = vmul.f32 1.0, %v8746
        %v8748 = vrcp.pop %v8592
        %v8749 = vmul.f32 %v8592, %v8748
        %v8750 = vsub.f32 1.0, %v8749
        %v8751 = vmul.f32 %v8748, %v8750
        %v8752 = vadd.f32 %v8748, %v8751
        %vm8753 = vweird.f32 %v8592
        %vm8754 = vweird.f32 %v8748
        %vm8755 = vmor %vm8753, %vm8754
        %v8756 = vsel %vm8755, %v8748, %v8752
        %v8757 = vand.u32 2147483647, %v8592
        %vm8758 = vcmp.eq.f32.partialorder %v8757, 8.507059e+37
        %v8759 = vand.u32 %v8592, 2147483648
        %v8760 = vor.u32 1.1754944e-38, %v8759
        %v8761 = vsel %vm8758, %v8760, %v8756
        %v8762 = vmul.f32 1.0, %v8761
        %v8763 = vrcp.pop %v8593
        %v8764 = vmul.f32 %v8593, %v8763
        %v8765 = vsub.f32 1.0, %v8764
        %v8766 = vmul.f32 %v8763, %v8765
        %v8767 = vadd.f32 %v8763, %v8766
        %vm8768 = vweird.f32 %v8593
        %vm8769 = vweird.f32 %v8763
        %vm8770 = vmor %vm8768, %vm8769
        %v8771 = vsel %vm8770, %v8763, %v8767
        %v8772 = vand.u32 2147483647, %v8593
        %vm8773 = vcmp.eq.f32.partialorder %v8772, 8.507059e+37
        %v8774 = vand.u32 %v8593, 2147483648
        %v8775 = vor.u32 1.1754944e-38, %v8774
        %v8776 = vsel %vm8773, %v8775, %v8771
        %v8777 = vmul.f32 1.0, %v8776
        %v8778 = vrcp.pop %v8594
        %v8779 = vmul.f32 %v8594, %v8778
        %v8780 = vsub.f32 1.0, %v8779
        %v8781 = vmul.f32 %v8778, %v8780
        %v8782 = vadd.f32 %v8778, %v8781
        %vm8783 = vweird.f32 %v8594
        %vm8784 = vweird.f32 %v8778
        %vm8785 = vmor %vm8783, %vm8784
        %v8786 = vsel %vm8785, %v8778, %v8782
        %v8787 = vand.u32 2147483647, %v8594
        %vm8788 = vcmp.eq.f32.partialorder %v8787, 8.507059e+37
        %v8789 = vand.u32 %v8594, 2147483648
        %v8790 = vor.u32 1.1754944e-38, %v8789
        %v8791 = vsel %vm8788, %v8790, %v8786
        %v8792 = vmul.f32 1.0, %v8791
        %v8793 = vrcp.pop %v8595
        %v8794 = vmul.f32 %v8595, %v8793
        %v8795 = vsub.f32 1.0, %v8794
        %v8796 = vmul.f32 %v8793, %v8795
        %v8797 = vadd.f32 %v8793, %v8796
        %vm8798 = vweird.f32 %v8595
        %vm8799 = vweird.f32 %v8793
        %vm8800 = vmor %vm8798, %vm8799
        %v8801 = vsel %vm8800, %v8793, %v8797
        %v8802 = vand.u32 2147483647, %v8595
        %vm8803 = vcmp.eq.f32.partialorder %v8802, 8.507059e+37
        %v8804 = vand.u32 %v8595, 2147483648
        %v8805 = vor.u32 1.1754944e-38, %v8804
        %v8806 = vsel %vm8803, %v8805, %v8801
        %v8807 = vmul.f32 1.0, %v8806
        %v8808 = vrcp.pop %v8596
        %v8809 = vmul.f32 %v8596, %v8808
        %v8810 = vsub.f32 1.0, %v8809
        %v8811 = vmul.f32 %v8808, %v8810
        %v8812 = vadd.f32 %v8808, %v8811
        %vm8813 = vweird.f32 %v8596
        %vm8814 = vweird.f32 %v8808
        %vm8815 = vmor %vm8813, %vm8814
        %v8816 = vsel %vm8815, %v8808, %v8812
        %v8817 = vand.u32 2147483647, %v8596
        %vm8818 = vcmp.eq.f32.partialorder %v8817, 8.507059e+37
        %v8819 = vand.u32 %v8596, 2147483648
        %v8820 = vor.u32 1.1754944e-38, %v8819
        %v8821 = vsel %vm8818, %v8820, %v8816
        %v8822 = vmul.f32 1.0, %v8821
        %v8823 = vrcp.pop %v8597
        %v8824 = vmul.f32 %v8597, %v8823
        %v8825 = vsub.f32 1.0, %v8824
        %v8826 = vmul.f32 %v8823, %v8825
        %v8827 = vadd.f32 %v8823, %v8826
        %vm8828 = vweird.f32 %v8597
        %vm8829 = vweird.f32 %v8823
        %vm8830 = vmor %vm8828, %vm8829
        %v8831 = vsel %vm8830, %v8823, %v8827
        %v8832 = vand.u32 2147483647, %v8597
        %vm8833 = vcmp.eq.f32.partialorder %v8832, 8.507059e+37
        %v8834 = vand.u32 %v8597, 2147483648
        %v8835 = vor.u32 1.1754944e-38, %v8834
        %v8836 = vsel %vm8833, %v8835, %v8831
        %v8837 = vmul.f32 1.0, %v8836
        %v8838 = vmul.f32 %v8612, %v527
        %v8839 = vmul.f32 %v8627, %v528
        %v8840 = vmul.f32 %v8642, %v529
        %v8841 = vmul.f32 %v8657, %v530
        %v8842 = vmul.f32 %v8672, %v531
        %v8843 = vmul.f32 %v8687, %v532
        %v8844 = vmul.f32 %v8702, %v533
        %v8845 = vmul.f32 %v8717, %v534
        %v8846 = vmul.f32 %v8732, %v535
        %v8847 = vmul.f32 %v8747, %v536
        %v8848 = vmul.f32 %v8762, %v537
        %v8849 = vmul.f32 %v8777, %v538
        %v8850 = vmul.f32 %v8792, %v539
        %v8851 = vmul.f32 %v8807, %v540
        %v8852 = vmul.f32 %v8822, %v541
        %v8853 = vmul.f32 %v8837, %v542
        %v8854 = vadd.f32 %v8838, %v6662
        %v8855 = vadd.f32 %v8839, %v6663
        %v8856 = vadd.f32 %v8840, %v6664
        %v8857 = vadd.f32 %v8841, %v6665
        %v8858 = vadd.f32 %v8842, %v6666
        %v8859 = vadd.f32 %v8843, %v6667
        %v8860 = vadd.f32 %v8844, %v6668
        %v8861 = vadd.f32 %v8845, %v6669
        %v8862 = vadd.f32 %v8846, %v8402
        %v8863 = vadd.f32 %v8847, %v8403
        %v8864 = vadd.f32 %v8848, %v8404
        %v8865 = vadd.f32 %v8849, %v8405
        %v8866 = vadd.f32 %v8850, %v8406
        %v8867 = vadd.f32 %v8851, %v8407
        %v8868 = vadd.f32 %v8852, %v8408
        %v8869 = vadd.f32 %v8853, %v8409
        %v8870 = vadd.f32 %v8854, %v8855
        %v8871 = vadd.f32 %v8870, %v8856
        %v8872 = vadd.f32 %v8871, %v8857
        %v8873 = vadd.f32 %v8872, %v8858
        %v8874 = vadd.f32 %v8873, %v8859
        %v8875 = vadd.f32 %v8874, %v8860
        %v8876 = vadd.f32 %v8875, %v8861
        %v8877 = vrot.slane %v8876, 4
        %v8878 = vadd.f32 %v8876, %v8877
        %v8879 = vrot.slane %v8878, 2
        %v8880 = vadd.f32 %v8878, %v8879
        %v8881 = vrot.slane %v8880, 1
        %v8882 = vadd.f32 %v8880, %v8881
        %v8883 = vadd.f32 %v8862, %v8863
        %v8884 = vadd.f32 %v8883, %v8864
        %v8885 = vadd.f32 %v8884, %v8865
        %v8886 = vadd.f32 %v8885, %v8866
        %v8887 = vadd.f32 %v8886, %v8867
        %v8888 = vadd.f32 %v8887, %v8868
        %v8889 = vadd.f32 %v8888, %v8869
        %v8890 = vrot.slane %v8889, 4
        %v8891 = vadd.f32 %v8889, %v8890
        %v8892 = vrot.slane %v8891, 2
        %v8893 = vadd.f32 %v8891, %v8892
        %v8894 = vrot.slane %v8893, 1
        %v8895 = vadd.f32 %v8893, %v8894
        %v8896 = vrcp.pop 64.0
        %v8897 = vmul.f32 64.0, %v8896
        %v8898 = vsub.f32 1.0, %v8897
        %v8899 = vmul.f32 %v8896, %v8898
        %v8900 = vadd.f32 %v8896, %v8899
        %vm8901 = vweird.f32 %v8896
        %v8902 = vsel %vm8901, %v8896, %v8900
        %v8903 = vmul.f32 %v8882, %v8902
        %v8904 = vmul.f32 %v8895, %v8902
        %v8905 = vld [vmem:[%s13] sm:$0xf]
        %v8906 = vld [vmem:[%s13 + $0x4] sm:$0xf]
        %v8907 = vld [vmem:[%s13 + $0x8] sm:$0xf]
        %v8908 = vld [vmem:[%s13 + $0xc] sm:$0xf]
        %v8909 = vld [vmem:[%s13 + $0x10] sm:$0xf]
        %v8910 = vld [vmem:[%s13 + $0x14] sm:$0xf]
        %v8911 = vld [vmem:[%s13 + $0x18] sm:$0xf]
        %v8912 = vld [vmem:[%s13 + $0x1c] sm:$0xf]
        %v8913 = vld [vmem:[%s13 + $0x20] sm:$0xf]
        %v8914 = vld [vmem:[%s13 + $0x24] sm:$0xf]
        %v8915 = vld [vmem:[%s13 + $0x28] sm:$0xf]
        %v8916 = vld [vmem:[%s13 + $0x2c] sm:$0xf]
        %v8917 = vld [vmem:[%s13 + $0x30] sm:$0xf]
        %v8918 = vld [vmem:[%s13 + $0x34] sm:$0xf]
        %v8919 = vld [vmem:[%s13 + $0x38] sm:$0xf]
        %v8920 = vld [vmem:[%s13 + $0x3c] sm:$0xf]
        %v8921 = vpack.c.bf16 %v8903, %v8903
        %v8922 = vpack.c.bf16 %v8904, %v8904
        %v8923 = vld [vmem:[%s15 + $0xf] sm:$0x1]
        %v8924 = vperm.slane %v8923, 0
        %v8927 = vunpack.c.l.b16 %v8921
        %v8928 = vunpack.c.l.b16 %v8922
        %vm8929 = vcmask 1041409
        %v8930 = vsel %vm8929, %v8928, %v8927
        %v8931 = vpack.c.b16 %v8930, %v8930
        %v8949 = vunpack.c.l.b16 %v8905
        %v8950 = vunpack.c.l.b16 %v8906
        %v8951 = vunpack.c.l.b16 %v8907
        %v8952 = vunpack.c.l.b16 %v8908
        %v8953 = vunpack.c.l.b16 %v8909
        %v8954 = vunpack.c.l.b16 %v8910
        %v8955 = vunpack.c.l.b16 %v8911
        %v8956 = vunpack.c.l.b16 %v8912
        %v8957 = vunpack.c.l.b16 %v8913
        %v8958 = vunpack.c.l.b16 %v8914
        %v8959 = vunpack.c.l.b16 %v8915
        %v8960 = vunpack.c.l.b16 %v8916
        %v8961 = vunpack.c.l.b16 %v8917
        %v8962 = vunpack.c.l.b16 %v8918
        %v8963 = vunpack.c.l.b16 %v8919
        %v8964 = vunpack.c.l.b16 %v8920
        %v8965 = vpack.c.b16 %v8950, %v8949
        %v8966 = vpack.c.b16 %v8952, %v8951
        %v8967 = vpack.c.b16 %v8954, %v8953
        %v8968 = vpack.c.b16 %v8956, %v8955
        %v8969 = vpack.c.b16 %v8958, %v8957
        %v8970 = vpack.c.b16 %v8960, %v8959
        %v8971 = vpack.c.b16 %v8962, %v8961
        %v8972 = vpack.c.b16 %v8964, %v8963
        %8981 = vmatpush.bf16.msra.mxu0 %v8972
        %8982 = vmatpush.bf16.msra.mxu0 %v8971
        %8983 = vmatpush.bf16.msra.mxu0 %v8970
        %8984 = vmatpush.bf16.msra.mxu0 %v8969
        %8985 = vmatpush.bf16.msra.mxu0 %v8968
        %8986 = vmatpush.bf16.msra.mxu0 %v8967
        %8987 = vmatpush.bf16.msra.mxu0 %v8966
        %8988 = vmatpush.bf16.msra.mxu0 %v8965
        %8989 = vmatmul.bf16.gmra.mxu0 %v8931
        %v8990 = vpop.f32.mrf.mxu0
        %v8991 = vadd.f32 %v8924, %v8990
        %v8992 = vpop.f32.mrf.mxu0
        %8993 = vdwg.mxu0
        %v8994 = vmul.f32 %v8991, %v8991
        %v8995 = vmul.f32 %v8991, %v8994
        %v8996 = vmul.f32 %v8995, 0.044715
        %v8997 = vadd.f32 %v8991, %v8996
        %v8998 = vmul.f32 %v8997, 0.7978846
        %v8999 = vtanh.pop %v8998
        %v9000 = vadd.f32 %v8999, 1.0
        %v9001 = vmul.f32 %v9000, 0.5
        %v9002 = vmul.f32 %v8991, %v9001
        %v9003 = vld [vmem:[%s14] sm:$0xf]
        %v9004 = vld [vmem:[%s14 + $0x4] sm:$0xf]
        %v9005 = vld [vmem:[%s14 + $0x8] sm:$0xf]
        %v9006 = vld [vmem:[%s14 + $0xc] sm:$0xf]
        %v9007 = vpack.c.bf16 %v9002, %v9002
        %v9008 = vld [vmem:[%s15 + $0x10] sm:$0x1]
        %v9009 = vperm.slane %v9008, 0
        %v9014 = vunpack.c.l.b16 %v9003
        %v9015 = vunpack.c.l.b16 %v9004
        %v9016 = vunpack.c.l.b16 %v9005
        %v9017 = vunpack.c.l.b16 %v9006
        %v9018 = vpack.c.b16 %v9015, %v9014
        %v9019 = vpack.c.b16 %v9017, %v9016
        %vm9022 = vcmask 261120
        %v9024 = vsel %vm9022, %v9007, 0
        %9026 = vmatpush.bf16.msra.mxu0 0
        %9027 = vmatpush.bf16.msra.mxu0 0
        %9028 = vmatpush.bf16.msra.mxu0 0
        %9029 = vmatpush.bf16.msra.mxu0 0
        %9030 = vmatpush.bf16.msra.mxu0 0
        %9031 = vmatpush.bf16.msra.mxu0 0
        %9032 = vmatpush.bf16.msra.mxu0 %v9019
        %9033 = vmatpush.bf16.msra.mxu0 %v9018
        %9034 = vmatmul.bf16.gmra.mxu0 %v9024
        %v9035 = vpop.f32.mrf.mxu0
        %v9036 = vadd.f32 %v9009, %v9035
        %v9037 = vpop.f32.mrf.mxu0
        %9038 = vdwg.mxu0
        %v9039 = vxor.u32 %v9036, 2147483648
        %v9040 = vmul.f32 %v9039, 1.442695
        %v9041 = vpow.pop %v9040
        %v9042 = vadd.f32 %v9041, 1.0
        %v9043 = vrcp.pop %v9042
        %v9044 = vmul.f32 %v9042, %v9043
        %v9045 = vsub.f32 1.0, %v9044
        %v9046 = vmul.f32 %v9043, %v9045
        %v9047 = vadd.f32 %v9043, %v9046
        %vm9048 = vweird.f32 %v9042
        %vm9049 = vweird.f32 %v9043
        %vm9050 = vmor %vm9048, %vm9049
        %v9051 = vsel %vm9050, %v9043, %v9047
        %v9052 = vand.u32 2147483647, %v9042
        %vm9053 = vcmp.eq.f32.partialorder %v9052, 8.507059e+37
        %v9054 = vand.u32 %v9042, 2147483648
        %v9055 = vor.u32 1.1754944e-38, %v9054
        %v9056 = vsel %vm9053, %v9055, %v9051
        %v9057 = vmul.f32 1.0, %v9056
        %v9059 = vrot.slane %v9057, 1
        %v9060 = vperm.slane %v9057, 0
        %v9061 = vperm.slane %v9059, 0
        %v9064 = vmul.f32 %v8854, %v9060
        %v9065 = vmul.f32 %v8855, %v9060
        %v9066 = vmul.f32 %v8856, %v9060
        %v9067 = vmul.f32 %v8857, %v9060
        %v9068 = vmul.f32 %v8858, %v9060
        %v9069 = vmul.f32 %v8859, %v9060
        %v9070 = vmul.f32 %v8860, %v9060
        %v9071 = vmul.f32 %v8861, %v9060
        %v9072 = vmul.f32 %v8862, %v9061
        %v9073 = vmul.f32 %v8863, %v9061
        %v9074 = vmul.f32 %v8864, %v9061
        %v9075 = vmul.f32 %v8865, %v9061
        %v9076 = vmul.f32 %v8866, %v9061
        %v9077 = vmul.f32 %v8867, %v9061
        %v9078 = vmul.f32 %v8868, %v9061
        %v9079 = vmul.f32 %v8869, %v9061
        %9080 = vst [vmem:[%s517] sm:$0xff] %v9064
        %9081 = vst [vmem:[%s517 + $0x8] sm:$0xff] %v9065
        %9082 = vst [vmem:[%s517 + $0x10] sm:$0xff] %v9066
        %9083 = vst [vmem:[%s517 + $0x18] sm:$0xff] %v9067
        %9084 = vst [vmem:[%s517 + $0x20] sm:$0xff] %v9068
        %9085 = vst [vmem:[%s517 + $0x28] sm:$0xff] %v9069
        %9086 = vst [vmem:[%s517 + $0x30] sm:$0xff] %v9070
        %9087 = vst [vmem:[%s517 + $0x38] sm:$0xff] %v9071
        %9088 = vst [vmem:[%s517 + $0x40] sm:$0xff] %v9072
        %9089 = vst [vmem:[%s517 + $0x48] sm:$0xff] %v9073
        %9090 = vst [vmem:[%s517 + $0x50] sm:$0xff] %v9074
        %9091 = vst [vmem:[%s517 + $0x58] sm:$0xff] %v9075
        %9092 = vst [vmem:[%s517 + $0x60] sm:$0xff] %v9076
        %9093 = vst [vmem:[%s517 + $0x68] sm:$0xff] %v9077
        %9094 = vst [vmem:[%s517 + $0x70] sm:$0xff] %v9078
        %9095 = vst [vmem:[%s517 + $0x78] sm:$0xff] %v9079
        %s9096 = sand.u32 %s379, 1
        %s9097 = scalar_lea.sflag [#allocation3], %s9096
        %s9098 = sand.u32 %s379, 1
        %s9099 = smul.addr %s9098, 128
        %s9100 = scalar_lea.vmem [#allocation2], %s9099
        // Predicated region
        $region85: #{feature_extraction_forward.1} parent=83 // pred_check
          %p9101 = pneg %p389
        $region86: #{feature_extraction_forward.1} parent=83 // pred_check_branch
          %9103 = sbr.rel (%p9101) target = $region88
        $region87: #{feature_extraction_forward.1} parent=83 // pred_region
          %s9104 = smul.u32 2, %s30
          %9106 = vsyncadd %s9097, 0
          %s9107 = smul.addr %s9104, 8
          %s9108 = smul.addr %s9107, 8
          %s9109 = scalar_lea.hbm %s16, %s9108
          %s9110 = sshll.u32 %s9100, 4
          %s9111 = int_to_ptr.vmem [resolvable:$true] %s9110
          %s9112 = sshll.u32 %s9109, 4
          %s9113 = int_to_ptr.hbm [resolvable:$true] %s9112
          %9118 = dma.vmem_to_hbm [thread:$0]  %s9111, 2048, %s9113, %s9097, 128, 128, 8
        $region88: #{feature_extraction_forward.1} parent=83 // pred_fallthru
          _
      $region84: #{feature_extraction_forward.1} parent=5 // pred_fallthru
        _
      %p9119 = scmp.le.s32.totalorder 2, %s25
      // Predicated region
      $region89: #{feature_extraction_forward.1} parent=5 // pred_check
        %p9120 = pneg %p9119
      $region90: #{feature_extraction_forward.1} parent=5 // pred_check_branch
        %9122 = sbr.rel (%p9120) target = $region92
      $region91: #{feature_extraction_forward.1} parent=5 // pred_region
        %s9123 = ssub.s32 %s25, 2
        // Predicated region
        $region93: #{feature_extraction_forward.1} parent=91 // pred_check
          %p9124 = pneg %p395
        $region94: #{feature_extraction_forward.1} parent=91 // pred_check_branch
          %9126 = sbr.rel (%p9124) target = $region96
        $region95: #{feature_extraction_forward.1} parent=91 // pred_region
          %s9127 = sand.u32 %s380, 1
          %s9128 = scalar_lea.sflag [#allocation3], %s9127
          %s9129 = sand.u32 %s380, 1
          %s9130 = smul.addr %s9129, 128
          %s9131 = scalar_lea.vmem [#allocation2], %s9130
          %9133 = dma.done %s9128, 2048
        $region96: #{feature_extraction_forward.1} parent=91 // pred_fallthru
          _
      $region92: #{feature_extraction_forward.1} parent=5 // pred_fallthru
        _
    $region6: #{feature_extraction_forward.1} parent=1 // loop_footer
      %s29 = sadd.s32 1, %s25
    $region7: #{feature_extraction_forward.1} parent=1 // loop_footer_branch
      %24 = sbr.rel target = $region3
    $region8: #{feature_extraction_forward.1} parent=1 // loop_exit
      _
    %9134 = vsyncpa [#allocation3], 1
    %s9135 = scalar_lea.sflag [#allocation3], 1
    %9136 = vsyncpa %s9135, 1

</llo_original>
